<compile_context>
chip_gen: v6e
topology: v6e:2x2x1
jax: 0.10.0
libtpu: 0.0.40
codegen_flags: <defaults>
</compile_context>

<pallas_src>
import functools

import jax
import jax.numpy as jnp
from jax import lax
from jax.experimental import pallas as pl
from jax.experimental.pallas import tpu as pltpu

_LANES = 128
_SUBLANES = 8


def _round_up(n, m):
    return ((n + m - 1) // m) * m


# ---------------------------------------------------------------------------
# Fused Pallas kernel: 3 LSTM layers + FC head for one batch tile.
# ---------------------------------------------------------------------------
def discriminator_kernel(
    x_ref, cond_ref,
    wx0_ref, wc0_ref, wh0_ref, b0_ref,
    wi1_ref, wh1_ref, b1_ref,
    wi2_ref, wh2_ref, b2_ref,
    fw1_ref, fb1_ref, fw2_ref, fb2_ref, fw3_ref, fb3_ref,
    out_ref,
    gx_ref, seq_ref,
):
    T, TB, _ = x_ref.shape
    H = wh0_ref.shape[0]

    def gates(pre, c):
        # pre: (TB, 4H) f32 pre-activation; c: (TB, H) f32 cell state.
        # Lane-aligned slices when H % 128 == 0.
        i_g = jax.nn.sigmoid(pre[:, 0 * H:1 * H])
        f_g = jax.nn.sigmoid(pre[:, 1 * H:2 * H])
        g_g = jnp.tanh(pre[:, 2 * H:3 * H])
        o_g = jax.nn.sigmoid(pre[:, 3 * H:4 * H])
        c_new = f_g * c + i_g * g_g
        h_new = o_g * jnp.tanh(c_new)
        return h_new, c_new

    def recurrence(whh_ref, write_seq):
        """LSTM recurrence over gx_ref (T, TB, 4H); optionally writes h_t into seq_ref.

        Returns the final hidden state (TB, H) in f32. One fused (TB,H)x(H,4H) MXU
        matmul per step; per-step live set is a single timestep of gx.
        """
        whh = whh_ref[...]                                   # (H, 4H) bf16

        # t = 0 peeled: h0 == c0 == 0 -> recurrent matmul vanishes exactly.
        pre0 = gx_ref[0].astype(jnp.float32)
        h, c = gates(pre0, jnp.zeros((TB, H), jnp.float32))
        if write_seq:
            seq_ref[0] = h.astype(seq_ref.dtype)

        def body(t, carry):
            h, c = carry
            pre = gx_ref[t].astype(jnp.float32) + jnp.dot(
                h.astype(jnp.bfloat16), whh, preferred_element_type=jnp.float32)
            h, c = gates(pre, c)
            if write_seq:
                seq_ref[t] = h.astype(seq_ref.dtype)
            return (h, c)

        h, c = lax.fori_loop(1, T, body, (h, c), unroll=True)
        return h

    # ---- Layer 0: hoisted input projection; condition folded into a (TB,4H) bias.
    x = x_ref[...]                                           # (T, TB, Din) bf16
    gx0 = jnp.dot(x.reshape(T * TB, x.shape[2]), wx0_ref[...],
                  preferred_element_type=jnp.float32)        # (T*TB, 4H) f32
    cond_bias = (jnp.dot(cond_ref[...], wc0_ref[...],
                         preferred_element_type=jnp.float32) + b0_ref[...])   # (TB, 4H)
    gx_ref[...] = (gx0.reshape(T, TB, 4 * H) + cond_bias[None, :, :]).astype(gx_ref.dtype)
    recurrence(wh0_ref, write_seq=True)

    # ---- Layer 1 (input sequence read from VMEM scratch; seq_ref then reused for its output).
    s1 = seq_ref[...].reshape(T * TB, H)                     # bf16
    gx1 = jnp.dot(s1, wi1_ref[...], preferred_element_type=jnp.float32)
    gx_ref[...] = (gx1.reshape(T, TB, 4 * H) + b1_ref[...]).astype(gx_ref.dtype)
    recurrence(wh1_ref, write_seq=True)

    # ---- Layer 2 (only the last hidden state is needed -> no sequence writes).
    s2 = seq_ref[...].reshape(T * TB, H)
    gx2 = jnp.dot(s2, wi2_ref[...], preferred_element_type=jnp.float32)
    gx_ref[...] = (gx2.reshape(T, TB, 4 * H) + b2_ref[...]).astype(gx_ref.dtype)
    h_last = recurrence(wh2_ref, write_seq=False)            # (TB, H) f32

    # ---- FC head: BN folded into the linears; Dropout = identity (eval). f32 elementwise.
    slope = jnp.float32(0.2)
    h = jnp.dot(h_last.astype(jnp.bfloat16), fw1_ref[...],
                preferred_element_type=jnp.float32) + fb1_ref[...]
    h = jnp.where(h >= 0, h, slope * h)
    h = jnp.dot(h.astype(jnp.bfloat16), fw2_ref[...],
                preferred_element_type=jnp.float32) + fb2_ref[...]
    h = jnp.where(h >= 0, h, slope * h)
    out_ref[...] = (jnp.dot(h.astype(jnp.bfloat16), fw3_ref[...],
                            preferred_element_type=jnp.float32) + fb3_ref[...]
                    ).astype(out_ref.dtype)


# ---------------------------------------------------------------------------
# Wrapper
# ---------------------------------------------------------------------------
@functools.partial(jax.jit, static_argnames=("batch_tile",))
def discriminator_forward(x, condition, params, *, batch_tile=8):
    """x: (B, T, F), condition: (B, C) -> (B, 1)."""
    (wx0, wc0, wh0, b0,
     wi1, wh1, b1,
     wi2, wh2, b2,
     fw1, fb1, fw2, fb2, fw3, fb3) = params

    B, T, Din = x.shape
    H = wh0.shape[0]
    Np = fw3.shape[1]                                        # lane-dense head width (128)
    C = condition.shape[1]

    TB = _round_up(max(batch_tile, _SUBLANES), _SUBLANES)    # batch tile (sublane multiple)
    Bp = _round_up(max(B, TB), TB)
    n_tiles = Bp // TB

    # Time-major layout + pad batch; bf16 MXU operands.
    x_t = jnp.transpose(x.astype(jnp.bfloat16), (1, 0, 2))   # (T, B, Din)
    x_t = jnp.pad(x_t, ((0, 0), (0, Bp - B), (0, 0)))
    cond_p = jnp.pad(condition.astype(jnp.bfloat16), ((0, Bp - B), (0, 0)))

    def weight_spec(w):
        # Same (whole-array) block for every grid step -> stays VMEM-resident.
        return pl.BlockSpec(w.shape, lambda i: (0, 0))

    grid_spec = pltpu.PrefetchScalarGridSpec(
        num_scalar_prefetch=0,
        grid=(n_tiles,),
        in_specs=[
            pl.BlockSpec((T, TB, Din), lambda i: (0, i, 0)),
            pl.BlockSpec((TB, C), lambda i: (i, 0)),
        ] + [weight_spec(w) for w in params],
        out_specs=pl.BlockSpec((TB, Np), lambda i: (i, 0)),
        scratch_shapes=[
            pltpu.VMEM((T, TB, 4 * H), jnp.bfloat16),   # gx staging (shared by all 3 layers)
            pltpu.VMEM((T, TB, H), jnp.bfloat16),       # layer output sequence (reused in place)
        ],
    )

    out = pl.pallas_call(
        discriminator_kernel,
        out_shape=jax.ShapeDtypeStruct((Bp, Np), jnp.float32),
        grid_spec=grid_spec,
        compiler_params=pltpu.CompilerParams(
            dimension_semantics=("parallel",),
            vmem_limit_bytes=64 * 1024 * 1024,
        ),
    )(x_t, cond_p, *params)
    return out[:B, :1]


# ---------------------------------------------------------------------------
# Deterministic parameter init (PyTorch default init bounds), kernel-ready layout.
# Matmul weights in bf16 (MXU operands), biases in f32.
# ---------------------------------------------------------------------------
def init_params(key, input_dim, condition_dim, hidden_dim, num_layers=3):
    assert num_layers == 3, "kernel is specialized for num_layers=3"
    keys = iter(jax.random.split(key, 64))

    def uniform(shape, bound):
        return jax.random.uniform(next(keys), shape, jnp.float32, -bound, bound)

    H = hidden_dim
    k = 1.0 / float(H) ** 0.5

    def lstm_layer(in_d):
        w_ih = uniform((4 * H, in_d), k)            # PyTorch layout (4H, in_d)
        w_hh = uniform((4 * H, H), k)
        b_ih = uniform((4 * H,), k)
        b_hh = uniform((4 * H,), k)
        return w_ih, w_hh, (b_ih + b_hh).reshape(1, 4 * H)

    bf16 = jnp.bfloat16

    # Layer 0: split the input weight into x-part and condition-part (the condition
    # is a time-invariant bias inside the kernel).
    w_ih0, w_hh0, b0 = lstm_layer(input_dim + condition_dim)
    wx0 = w_ih0[:, :input_dim].T.astype(bf16)       # (Din, 4H)
    wc0 = w_ih0[:, input_dim:].T.astype(bf16)       # (C,   4H)
    wh0 = w_hh0.T.astype(bf16)                      # (H,   4H)

    w_ih1, w_hh1, b1 = lstm_layer(H)
    w_ih2, w_hh2, b2 = lstm_layer(H)
    wi1, wh1 = w_ih1.T.astype(bf16), w_hh1.T.astype(bf16)
    wi2, wh2 = w_ih2.T.astype(bf16), w_hh2.T.astype(bf16)

    def linear(in_f, out_f):
        bound = 1.0 / float(in_f) ** 0.5
        w = uniform((out_f, in_f), bound)
        b = uniform((out_f,), bound)
        return w.T, b.reshape(1, out_f)             # (in_f, out_f), (1, out_f)

    def bn(feat):
        return (jnp.ones((1, feat), jnp.float32),   # gamma
                jnp.zeros((1, feat), jnp.float32),  # beta
                jnp.zeros((1, feat), jnp.float32),  # running mean
                jnp.ones((1, feat), jnp.float32))   # running var

    def fold_bn(w, b, gamma, beta, rm, rv, eps=1e-5):
        # Eval-mode BN folded into the preceding Linear: exact (done in f32).
        scale = gamma * lax.rsqrt(rv + eps)         # (1, out_f)
        return w * scale, (b - rm) * scale + beta

    w1, bb1 = linear(H, H)
    fw1, fb1 = fold_bn(w1, bb1, *bn(H))
    w2, bb2 = linear(H, H)
    fw2, fb2 = fold_bn(w2, bb2, *bn(H))
    w3, bb3 = linear(H, 1)                          # (H, 1), (1, 1)

    # Lane-dense output slab: pad the scalar head to 128 output columns (zeros).
    fw3 = jnp.pad(w3, ((0, 0), (0, _LANES - 1)))
    fb3 = jnp.pad(bb3, ((0, 0), (0, _LANES - 1)))

    return (wx0, wc0, wh0, b0.astype(jnp.float32),
            wi1, wh1, b1.astype(jnp.float32),
            wi2, wh2, b2.astype(jnp.float32),
            fw1.astype(bf16), fb1, fw2.astype(bf16), fb2,
            fw3.astype(bf16), fb3)


# ---------------------------------------------------------------------------
if __name__ == "__main__":
    # Small shapes consistent with the module (scaled-down dims; H kept lane-aligned).
    batch, seq_len = 4, 8
    input_dim, condition_dim, hidden_dim, num_layers = 16, 4, 128, 3

    key = jax.random.PRNGKey(0)
    kx, kc, kp = jax.random.split(key, 3)

    x = jax.random.normal(kx, (batch, seq_len, input_dim), jnp.float32)
    condition = jax.random.normal(kc, (batch, condition_dim), jnp.float32)

    params = init_params(kp, input_dim, condition_dim, hidden_dim, num_layers)

    out = discriminator_forward(x, condition, params)
    out = jax.block_until_ready(out)
    assert out.shape == (batch, 1), out.shape
    assert bool(jnp.all(jnp.isfinite(out)))
    print("KERNEL_OK")
</pallas_src>

<mosaic_0001>
module attributes {stable_mosaic.version = 11 : i64} {
  func.func @discriminator_kernel(%arg0: i32, %arg1: memref<8x8x16xbf16, #tpu.memory_space<vmem>>, %arg2: memref<8x4xbf16, #tpu.memory_space<vmem>>, %arg3: memref<16x512xbf16, #tpu.memory_space<vmem>>, %arg4: memref<4x512xbf16, #tpu.memory_space<vmem>>, %arg5: memref<128x512xbf16, #tpu.memory_space<vmem>>, %arg6: memref<1x512xf32, #tpu.memory_space<vmem>>, %arg7: memref<128x512xbf16, #tpu.memory_space<vmem>>, %arg8: memref<128x512xbf16, #tpu.memory_space<vmem>>, %arg9: memref<1x512xf32, #tpu.memory_space<vmem>>, %arg10: memref<128x512xbf16, #tpu.memory_space<vmem>>, %arg11: memref<128x512xbf16, #tpu.memory_space<vmem>>, %arg12: memref<1x512xf32, #tpu.memory_space<vmem>>, %arg13: memref<128x128xbf16, #tpu.memory_space<vmem>>, %arg14: memref<1x128xf32, #tpu.memory_space<vmem>>, %arg15: memref<128x128xbf16, #tpu.memory_space<vmem>>, %arg16: memref<1x128xf32, #tpu.memory_space<vmem>>, %arg17: memref<128x128xbf16, #tpu.memory_space<vmem>>, %arg18: memref<1x128xf32, #tpu.memory_space<vmem>>, %arg19: memref<8x128xf32, #tpu.memory_space<vmem>>, %arg20: memref<8x8x512xbf16, #tpu.memory_space<vmem>>, %arg21: memref<8x8x128xbf16, #tpu.memory_space<vmem>>) attributes {dimension_semantics = [#tpu.dimension_semantics<parallel>], iteration_bounds = array<i64: 1>, scalar_prefetch = 0 : i64, scratch_operands = 2 : i64, tpu.core_type = #tpu.core_type<tc>, window_params = [{transform_indices = @transform_0, window_bounds = array<i64: 8, 8, 16>}, {transform_indices = @transform_1, window_bounds = array<i64: 8, 4>}, {pipeline_mode = #tpu.pipeline_mode<synchronous>, transform_indices = @transform_2, window_bounds = array<i64: 16, 512>}, {pipeline_mode = #tpu.pipeline_mode<synchronous>, transform_indices = @transform_3, window_bounds = array<i64: 4, 512>}, {pipeline_mode = #tpu.pipeline_mode<synchronous>, transform_indices = @transform_4, window_bounds = array<i64: 128, 512>}, {pipeline_mode = #tpu.pipeline_mode<synchronous>, transform_indices = @transform_5, window_bounds = array<i64: 1, 512>}, {pipeline_mode = #tpu.pipeline_mode<synchronous>, transform_indices = @transform_6, window_bounds = array<i64: 128, 512>}, {pipeline_mode = #tpu.pipeline_mode<synchronous>, transform_indices = @transform_7, window_bounds = array<i64: 128, 512>}, {pipeline_mode = #tpu.pipeline_mode<synchronous>, transform_indices = @transform_8, window_bounds = array<i64: 1, 512>}, {pipeline_mode = #tpu.pipeline_mode<synchronous>, transform_indices = @transform_9, window_bounds = array<i64: 128, 512>}, {pipeline_mode = #tpu.pipeline_mode<synchronous>, transform_indices = @transform_10, window_bounds = array<i64: 128, 512>}, {pipeline_mode = #tpu.pipeline_mode<synchronous>, transform_indices = @transform_11, window_bounds = array<i64: 1, 512>}, {pipeline_mode = #tpu.pipeline_mode<synchronous>, transform_indices = @transform_12, window_bounds = array<i64: 128, 128>}, {pipeline_mode = #tpu.pipeline_mode<synchronous>, transform_indices = @transform_13, window_bounds = array<i64: 1, 128>}, {pipeline_mode = #tpu.pipeline_mode<synchronous>, transform_indices = @transform_14, window_bounds = array<i64: 128, 128>}, {pipeline_mode = #tpu.pipeline_mode<synchronous>, transform_indices = @transform_15, window_bounds = array<i64: 1, 128>}, {pipeline_mode = #tpu.pipeline_mode<synchronous>, transform_indices = @transform_16, window_bounds = array<i64: 128, 128>}, {pipeline_mode = #tpu.pipeline_mode<synchronous>, transform_indices = @transform_17, window_bounds = array<i64: 1, 128>}, {transform_indices = @transform_18, window_bounds = array<i64: 8, 128>}]} {
    %c0 = arith.constant 0 : index
    %c0_0 = arith.constant 0 : index
    %c0_1 = arith.constant 0 : index
    %0 = vector.load %arg1[%c0, %c0_0, %c0_1] : memref<8x8x16xbf16, #tpu.memory_space<vmem>>, vector<8x8x16xbf16>
    %1 = vector.shape_cast %0 : vector<8x8x16xbf16> to vector<64x16xbf16>
    %c0_2 = arith.constant 0 : index
    %c0_3 = arith.constant 0 : index
    %2 = vector.load %arg3[%c0_2, %c0_3] : memref<16x512xbf16, #tpu.memory_space<vmem>>, vector<16x512xbf16>
    %cst = arith.constant dense<0.000000e+00> : vector<64x512xf32>
    %3 = tpu.matmul %1, %2, %cst {dimension_numbers = #tpu.dot_dimension_numbers<[1], [0], [0], [1], [0, 0, 1, 1], [], []>} : vector<64x16xbf16>, vector<16x512xbf16>, vector<64x512xf32> -> vector<64x512xf32>
    %c0_4 = arith.constant 0 : index
    %c0_5 = arith.constant 0 : index
    %4 = vector.load %arg2[%c0_4, %c0_5] : memref<8x4xbf16, #tpu.memory_space<vmem>>, vector<8x4xbf16>
    %c0_6 = arith.constant 0 : index
    %c0_7 = arith.constant 0 : index
    %5 = vector.load %arg4[%c0_6, %c0_7] : memref<4x512xbf16, #tpu.memory_space<vmem>>, vector<4x512xbf16>
    %cst_8 = arith.constant dense<0.000000e+00> : vector<8x512xf32>
    %6 = tpu.matmul %4, %5, %cst_8 {dimension_numbers = #tpu.dot_dimension_numbers<[1], [0], [0], [1], [0, 0, 1, 1], [], []>} : vector<8x4xbf16>, vector<4x512xbf16>, vector<8x512xf32> -> vector<8x512xf32>
    %c0_9 = arith.constant 0 : index
    %c0_10 = arith.constant 0 : index
    %7 = vector.load %arg6[%c0_9, %c0_10] : memref<1x512xf32, #tpu.memory_space<vmem>>, vector<1x512xf32>
    %8 = vector.broadcast %7 : vector<1x512xf32> to vector<8x512xf32>
    %9 = arith.addf %6, %8 : vector<8x512xf32>
    %10 = vector.shape_cast %3 : vector<64x512xf32> to vector<8x8x512xf32>
    %11 = vector.shape_cast %9 : vector<8x512xf32> to vector<1x8x512xf32>
    %12 = vector.broadcast %11 : vector<1x8x512xf32> to vector<8x8x512xf32>
    %13 = arith.addf %10, %12 : vector<8x8x512xf32>
    %14 = arith.truncf %13 : vector<8x8x512xf32> to vector<8x8x512xbf16>
    %c0_11 = arith.constant 0 : index
    %c0_12 = arith.constant 0 : index
    %c0_13 = arith.constant 0 : index
    %15 = vector.load %arg20[%c0_11, %c0_12, %c0_13] : memref<8x8x512xbf16, #tpu.memory_space<vmem>>, vector<8x8x512xbf16>
    tpu.vector_store %arg20[%c0_11, %c0_12, %c0_13], %14 {strides = array<i32>} : memref<8x8x512xbf16, #tpu.memory_space<vmem>>, vector<8x8x512xbf16>,
    %c0_14 = arith.constant 0 : index
    %c0_15 = arith.constant 0 : index
    %16 = vector.load %arg5[%c0_14, %c0_15] : memref<128x512xbf16, #tpu.memory_space<vmem>>, vector<128x512xbf16>
    %c0_16 = arith.constant 0 : index
    %c0_17 = arith.constant 0 : index
    %c0_18 = arith.constant 0 : index
    %17 = vector.load %arg20[%c0_16, %c0_17, %c0_18] : memref<8x8x512xbf16, #tpu.memory_space<vmem>>, vector<1x8x512xbf16>
    %18 = vector.shape_cast %17 : vector<1x8x512xbf16> to vector<8x512xbf16>
    %19 = arith.extf %18 : vector<8x512xbf16> to vector<8x512xf32>
    %cst_19 = arith.constant 0.000000e+00 : f32
    %20 = vector.broadcast %cst_19 : f32 to vector<8x128xf32>
    %21 = vector.extract_strided_slice %19 {offsets = [0, 0], sizes = [8, 128], strides = [1, 1]} : vector<8x512xf32> to vector<8x128xf32>
    %22 = arith.negf %21 : vector<8x128xf32>
    %23 = math.exp %22 : vector<8x128xf32>
    %cst_20 = arith.constant 1.000000e+00 : f32
    %24 = vector.broadcast %cst_20 : f32 to vector<8x128xf32>
    %25 = arith.addf %24, %23 : vector<8x128xf32>
    %26 = arith.divf %24, %25 : vector<8x128xf32>
    %27 = vector.extract_strided_slice %19 {offsets = [0, 128], sizes = [8, 128], strides = [1, 1]} : vector<8x512xf32> to vector<8x128xf32>
    %28 = arith.negf %27 : vector<8x128xf32>
    %29 = math.exp %28 : vector<8x128xf32>
    %cst_21 = arith.constant 1.000000e+00 : f32
    %30 = vector.broadcast %cst_21 : f32 to vector<8x128xf32>
    %31 = arith.addf %30, %29 : vector<8x128xf32>
    %32 = arith.divf %30, %31 : vector<8x128xf32>
    %33 = vector.extract_strided_slice %19 {offsets = [0, 256], sizes = [8, 128], strides = [1, 1]} : vector<8x512xf32> to vector<8x128xf32>
    %34 = math.tanh %33 : vector<8x128xf32>
    %35 = vector.extract_strided_slice %19 {offsets = [0, 384], sizes = [8, 128], strides = [1, 1]} : vector<8x512xf32> to vector<8x128xf32>
    %36 = arith.negf %35 : vector<8x128xf32>
    %37 = math.exp %36 : vector<8x128xf32>
    %cst_22 = arith.constant 1.000000e+00 : f32
    %38 = vector.broadcast %cst_22 : f32 to vector<8x128xf32>
    %39 = arith.addf %38, %37 : vector<8x128xf32>
    %40 = arith.divf %38, %39 : vector<8x128xf32>
    %41 = arith.mulf %32, %20 : vector<8x128xf32>
    %42 = arith.mulf %26, %34 : vector<8x128xf32>
    %43 = arith.addf %41, %42 : vector<8x128xf32>
    %44 = math.tanh %43 : vector<8x128xf32>
    %45 = arith.mulf %40, %44 : vector<8x128xf32>
    %46 = arith.truncf %45 : vector<8x128xf32> to vector<8x128xbf16>
    %c0_23 = arith.constant 0 : index
    %c0_24 = arith.constant 0 : index
    %c0_25 = arith.constant 0 : index
    %47 = vector.load %arg21[%c0_23, %c0_24, %c0_25] : memref<8x8x128xbf16, #tpu.memory_space<vmem>>, vector<1x8x128xbf16>
    %48 = vector.shape_cast %47 : vector<1x8x128xbf16> to vector<8x128xbf16>
    %49 = vector.shape_cast %46 : vector<8x128xbf16> to vector<1x8x128xbf16>
    tpu.vector_store %arg21[%c0_23, %c0_24, %c0_25], %49 {strides = array<i32>} : memref<8x8x128xbf16, #tpu.memory_space<vmem>>, vector<1x8x128xbf16>,
    %c1_i32 = arith.constant 1 : i32
    %50 = arith.index_cast %c1_i32 : i32 to index
    %c0_26 = arith.constant 0 : index
    %c0_27 = arith.constant 0 : index
    %51 = vector.load %arg20[%50, %c0_26, %c0_27] : memref<8x8x512xbf16, #tpu.memory_space<vmem>>, vector<1x8x512xbf16>
    %52 = vector.shape_cast %51 : vector<1x8x512xbf16> to vector<8x512xbf16>
    %53 = arith.extf %52 : vector<8x512xbf16> to vector<8x512xf32>
    %54 = arith.truncf %45 : vector<8x128xf32> to vector<8x128xbf16>
    %cst_28 = arith.constant dense<0.000000e+00> : vector<8x512xf32>
    %55 = tpu.matmul %54, %16, %cst_28 {dimension_numbers = #tpu.dot_dimension_numbers<[1], [0], [0], [1], [0, 0, 1, 1], [], []>} : vector<8x128xbf16>, vector<128x512xbf16>, vector<8x512xf32> -> vector<8x512xf32>
    %56 = arith.addf %53, %55 : vector<8x512xf32>
    %57 = vector.extract_strided_slice %56 {offsets = [0, 0], sizes = [8, 128], strides = [1, 1]} : vector<8x512xf32> to vector<8x128xf32>
    %58 = arith.negf %57 : vector<8x128xf32>
    %59 = math.exp %58 : vector<8x128xf32>
    %cst_29 = arith.constant 1.000000e+00 : f32
    %60 = vector.broadcast %cst_29 : f32 to vector<8x128xf32>
    %61 = arith.addf %60, %59 : vector<8x128xf32>
    %62 = arith.divf %60, %61 : vector<8x128xf32>
    %63 = vector.extract_strided_slice %56 {offsets = [0, 128], sizes = [8, 128], strides = [1, 1]} : vector<8x512xf32> to vector<8x128xf32>
    %64 = arith.negf %63 : vector<8x128xf32>
    %65 = math.exp %64 : vector<8x128xf32>
    %cst_30 = arith.constant 1.000000e+00 : f32
    %66 = vector.broadcast %cst_30 : f32 to vector<8x128xf32>
    %67 = arith.addf %66, %65 : vector<8x128xf32>
    %68 = arith.divf %66, %67 : vector<8x128xf32>
    %69 = vector.extract_strided_slice %56 {offsets = [0, 256], sizes = [8, 128], strides = [1, 1]} : vector<8x512xf32> to vector<8x128xf32>
    %70 = math.tanh %69 : vector<8x128xf32>
    %71 = vector.extract_strided_slice %56 {offsets = [0, 384], sizes = [8, 128], strides = [1, 1]} : vector<8x512xf32> to vector<8x128xf32>
    %72 = arith.negf %71 : vector<8x128xf32>
    %73 = math.exp %72 : vector<8x128xf32>
    %cst_31 = arith.constant 1.000000e+00 : f32
    %74 = vector.broadcast %cst_31 : f32 to vector<8x128xf32>
    %75 = arith.addf %74, %73 : vector<8x128xf32>
    %76 = arith.divf %74, %75 : vector<8x128xf32>
    %77 = arith.mulf %68, %43 : vector<8x128xf32>
    %78 = arith.mulf %62, %70 : vector<8x128xf32>
    %79 = arith.addf %77, %78 : vector<8x128xf32>
    %80 = math.tanh %79 : vector<8x128xf32>
    %81 = arith.mulf %76, %80 : vector<8x128xf32>
    %82 = arith.truncf %81 : vector<8x128xf32> to vector<8x128xbf16>
    %83 = arith.index_cast %c1_i32 : i32 to index
    %c0_32 = arith.constant 0 : index
    %c0_33 = arith.constant 0 : index
    %84 = vector.load %arg21[%83, %c0_32, %c0_33] : memref<8x8x128xbf16, #tpu.memory_space<vmem>>, vector<1x8x128xbf16>
    %85 = vector.shape_cast %84 : vector<1x8x128xbf16> to vector<8x128xbf16>
    %86 = vector.shape_cast %82 : vector<8x128xbf16> to vector<1x8x128xbf16>
    tpu.vector_store %arg21[%83, %c0_32, %c0_33], %86 {strides = array<i32>} : memref<8x8x128xbf16, #tpu.memory_space<vmem>>, vector<1x8x128xbf16>,
    %c2_i32 = arith.constant 2 : i32
    %87 = arith.index_cast %c2_i32 : i32 to index
    %c0_34 = arith.constant 0 : index
    %c0_35 = arith.constant 0 : index
    %88 = vector.load %arg20[%87, %c0_34, %c0_35] : memref<8x8x512xbf16, #tpu.memory_space<vmem>>, vector<1x8x512xbf16>
    %89 = vector.shape_cast %88 : vector<1x8x512xbf16> to vector<8x512xbf16>
    %90 = arith.extf %89 : vector<8x512xbf16> to vector<8x512xf32>
    %91 = arith.truncf %81 : vector<8x128xf32> to vector<8x128xbf16>
    %cst_36 = arith.constant dense<0.000000e+00> : vector<8x512xf32>
    %92 = tpu.matmul %91, %16, %cst_36 {dimension_numbers = #tpu.dot_dimension_numbers<[1], [0], [0], [1], [0, 0, 1, 1], [], []>} : vector<8x128xbf16>, vector<128x512xbf16>, vector<8x512xf32> -> vector<8x512xf32>
    %93 = arith.addf %90, %92 : vector<8x512xf32>
    %94 = vector.extract_strided_slice %93 {offsets = [0, 0], sizes = [8, 128], strides = [1, 1]} : vector<8x512xf32> to vector<8x128xf32>
    %95 = arith.negf %94 : vector<8x128xf32>
    %96 = math.exp %95 : vector<8x128xf32>
    %cst_37 = arith.constant 1.000000e+00 : f32
    %97 = vector.broadcast %cst_37 : f32 to vector<8x128xf32>
    %98 = arith.addf %97, %96 : vector<8x128xf32>
    %99 = arith.divf %97, %98 : vector<8x128xf32>
    %100 = vector.extract_strided_slice %93 {offsets = [0, 128], sizes = [8, 128], strides = [1, 1]} : vector<8x512xf32> to vector<8x128xf32>
    %101 = arith.negf %100 : vector<8x128xf32>
    %102 = math.exp %101 : vector<8x128xf32>
    %cst_38 = arith.constant 1.000000e+00 : f32
    %103 = vector.broadcast %cst_38 : f32 to vector<8x128xf32>
    %104 = arith.addf %103, %102 : vector<8x128xf32>
    %105 = arith.divf %103, %104 : vector<8x128xf32>
    %106 = vector.extract_strided_slice %93 {offsets = [0, 256], sizes = [8, 128], strides = [1, 1]} : vector<8x512xf32> to vector<8x128xf32>
    %107 = math.tanh %106 : vector<8x128xf32>
    %108 = vector.extract_strided_slice %93 {offsets = [0, 384], sizes = [8, 128], strides = [1, 1]} : vector<8x512xf32> to vector<8x128xf32>
    %109 = arith.negf %108 : vector<8x128xf32>
    %110 = math.exp %109 : vector<8x128xf32>
    %cst_39 = arith.constant 1.000000e+00 : f32
    %111 = vector.broadcast %cst_39 : f32 to vector<8x128xf32>
    %112 = arith.addf %111, %110 : vector<8x128xf32>
    %113 = arith.divf %111, %112 : vector<8x128xf32>
    %114 = arith.mulf %105, %79 : vector<8x128xf32>
    %115 = arith.mulf %99, %107 : vector<8x128xf32>
    %116 = arith.addf %114, %115 : vector<8x128xf32>
    %117 = math.tanh %116 : vector<8x128xf32>
    %118 = arith.mulf %113, %117 : vector<8x128xf32>
    %119 = arith.truncf %118 : vector<8x128xf32> to vector<8x128xbf16>
    %120 = arith.index_cast %c2_i32 : i32 to index
    %c0_40 = arith.constant 0 : index
    %c0_41 = arith.constant 0 : index
    %121 = vector.load %arg21[%120, %c0_40, %c0_41] : memref<8x8x128xbf16, #tpu.memory_space<vmem>>, vector<1x8x128xbf16>
    %122 = vector.shape_cast %121 : vector<1x8x128xbf16> to vector<8x128xbf16>
    %123 = vector.shape_cast %119 : vector<8x128xbf16> to vector<1x8x128xbf16>
    tpu.vector_store %arg21[%120, %c0_40, %c0_41], %123 {strides = array<i32>} : memref<8x8x128xbf16, #tpu.memory_space<vmem>>, vector<1x8x128xbf16>,
    %c3_i32 = arith.constant 3 : i32
    %124 = arith.index_cast %c3_i32 : i32 to index
    %c0_42 = arith.constant 0 : index
    %c0_43 = arith.constant 0 : index
    %125 = vector.load %arg20[%124, %c0_42, %c0_43] : memref<8x8x512xbf16, #tpu.memory_space<vmem>>, vector<1x8x512xbf16>
    %126 = vector.shape_cast %125 : vector<1x8x512xbf16> to vector<8x512xbf16>
    %127 = arith.extf %126 : vector<8x512xbf16> to vector<8x512xf32>
    %128 = arith.truncf %118 : vector<8x128xf32> to vector<8x128xbf16>
    %cst_44 = arith.constant dense<0.000000e+00> : vector<8x512xf32>
    %129 = tpu.matmul %128, %16, %cst_44 {dimension_numbers = #tpu.dot_dimension_numbers<[1], [0], [0], [1], [0, 0, 1, 1], [], []>} : vector<8x128xbf16>, vector<128x512xbf16>, vector<8x512xf32> -> vector<8x512xf32>
    %130 = arith.addf %127, %129 : vector<8x512xf32>
    %131 = vector.extract_strided_slice %130 {offsets = [0, 0], sizes = [8, 128], strides = [1, 1]} : vector<8x512xf32> to vector<8x128xf32>
    %132 = arith.negf %131 : vector<8x128xf32>
    %133 = math.exp %132 : vector<8x128xf32>
    %cst_45 = arith.constant 1.000000e+00 : f32
    %134 = vector.broadcast %cst_45 : f32 to vector<8x128xf32>
    %135 = arith.addf %134, %133 : vector<8x128xf32>
    %136 = arith.divf %134, %135 : vector<8x128xf32>
    %137 = vector.extract_strided_slice %130 {offsets = [0, 128], sizes = [8, 128], strides = [1, 1]} : vector<8x512xf32> to vector<8x128xf32>
    %138 = arith.negf %137 : vector<8x128xf32>
    %139 = math.exp %138 : vector<8x128xf32>
    %cst_46 = arith.constant 1.000000e+00 : f32
    %140 = vector.broadcast %cst_46 : f32 to vector<8x128xf32>
    %141 = arith.addf %140, %139 : vector<8x128xf32>
    %142 = arith.divf %140, %141 : vector<8x128xf32>
    %143 = vector.extract_strided_slice %130 {offsets = [0, 256], sizes = [8, 128], strides = [1, 1]} : vector<8x512xf32> to vector<8x128xf32>
    %144 = math.tanh %143 : vector<8x128xf32>
    %145 = vector.extract_strided_slice %130 {offsets = [0, 384], sizes = [8, 128], strides = [1, 1]} : vector<8x512xf32> to vector<8x128xf32>
    %146 = arith.negf %145 : vector<8x128xf32>
    %147 = math.exp %146 : vector<8x128xf32>
    %cst_47 = arith.constant 1.000000e+00 : f32
    %148 = vector.broadcast %cst_47 : f32 to vector<8x128xf32>
    %149 = arith.addf %148, %147 : vector<8x128xf32>
    %150 = arith.divf %148, %149 : vector<8x128xf32>
    %151 = arith.mulf %142, %116 : vector<8x128xf32>
    %152 = arith.mulf %136, %144 : vector<8x128xf32>
    %153 = arith.addf %151, %152 : vector<8x128xf32>
    %154 = math.tanh %153 : vector<8x128xf32>
    %155 = arith.mulf %150, %154 : vector<8x128xf32>
    %156 = arith.truncf %155 : vector<8x128xf32> to vector<8x128xbf16>
    %157 = arith.index_cast %c3_i32 : i32 to index
    %c0_48 = arith.constant 0 : index
    %c0_49 = arith.constant 0 : index
    %158 = vector.load %arg21[%157, %c0_48, %c0_49] : memref<8x8x128xbf16, #tpu.memory_space<vmem>>, vector<1x8x128xbf16>
    %159 = vector.shape_cast %158 : vector<1x8x128xbf16> to vector<8x128xbf16>
    %160 = vector.shape_cast %156 : vector<8x128xbf16> to vector<1x8x128xbf16>
    tpu.vector_store %arg21[%157, %c0_48, %c0_49], %160 {strides = array<i32>} : memref<8x8x128xbf16, #tpu.memory_space<vmem>>, vector<1x8x128xbf16>,
    %c4_i32 = arith.constant 4 : i32
    %161 = arith.index_cast %c4_i32 : i32 to index
    %c0_50 = arith.constant 0 : index
    %c0_51 = arith.constant 0 : index
    %162 = vector.load %arg20[%161, %c0_50, %c0_51] : memref<8x8x512xbf16, #tpu.memory_space<vmem>>, vector<1x8x512xbf16>
    %163 = vector.shape_cast %162 : vector<1x8x512xbf16> to vector<8x512xbf16>
    %164 = arith.extf %163 : vector<8x512xbf16> to vector<8x512xf32>
    %165 = arith.truncf %155 : vector<8x128xf32> to vector<8x128xbf16>
    %cst_52 = arith.constant dense<0.000000e+00> : vector<8x512xf32>
    %166 = tpu.matmul %165, %16, %cst_52 {dimension_numbers = #tpu.dot_dimension_numbers<[1], [0], [0], [1], [0, 0, 1, 1], [], []>} : vector<8x128xbf16>, vector<128x512xbf16>, vector<8x512xf32> -> vector<8x512xf32>
    %167 = arith.addf %164, %166 : vector<8x512xf32>
    %168 = vector.extract_strided_slice %167 {offsets = [0, 0], sizes = [8, 128], strides = [1, 1]} : vector<8x512xf32> to vector<8x128xf32>
    %169 = arith.negf %168 : vector<8x128xf32>
    %170 = math.exp %169 : vector<8x128xf32>
    %cst_53 = arith.constant 1.000000e+00 : f32
    %171 = vector.broadcast %cst_53 : f32 to vector<8x128xf32>
    %172 = arith.addf %171, %170 : vector<8x128xf32>
    %173 = arith.divf %171, %172 : vector<8x128xf32>
    %174 = vector.extract_strided_slice %167 {offsets = [0, 128], sizes = [8, 128], strides = [1, 1]} : vector<8x512xf32> to vector<8x128xf32>
    %175 = arith.negf %174 : vector<8x128xf32>
    %176 = math.exp %175 : vector<8x128xf32>
    %cst_54 = arith.constant 1.000000e+00 : f32
    %177 = vector.broadcast %cst_54 : f32 to vector<8x128xf32>
    %178 = arith.addf %177, %176 : vector<8x128xf32>
    %179 = arith.divf %177, %178 : vector<8x128xf32>
    %180 = vector.extract_strided_slice %167 {offsets = [0, 256], sizes = [8, 128], strides = [1, 1]} : vector<8x512xf32> to vector<8x128xf32>
    %181 = math.tanh %180 : vector<8x128xf32>
    %182 = vector.extract_strided_slice %167 {offsets = [0, 384], sizes = [8, 128], strides = [1, 1]} : vector<8x512xf32> to vector<8x128xf32>
    %183 = arith.negf %182 : vector<8x128xf32>
    %184 = math.exp %183 : vector<8x128xf32>
    %cst_55 = arith.constant 1.000000e+00 : f32
    %185 = vector.broadcast %cst_55 : f32 to vector<8x128xf32>
    %186 = arith.addf %185, %184 : vector<8x128xf32>
    %187 = arith.divf %185, %186 : vector<8x128xf32>
    %188 = arith.mulf %179, %153 : vector<8x128xf32>
    %189 = arith.mulf %173, %181 : vector<8x128xf32>
    %190 = arith.addf %188, %189 : vector<8x128xf32>
    %191 = math.tanh %190 : vector<8x128xf32>
    %192 = arith.mulf %187, %191 : vector<8x128xf32>
    %193 = arith.truncf %192 : vector<8x128xf32> to vector<8x128xbf16>
    %194 = arith.index_cast %c4_i32 : i32 to index
    %c0_56 = arith.constant 0 : index
    %c0_57 = arith.constant 0 : index
    %195 = vector.load %arg21[%194, %c0_56, %c0_57] : memref<8x8x128xbf16, #tpu.memory_space<vmem>>, vector<1x8x128xbf16>
    %196 = vector.shape_cast %195 : vector<1x8x128xbf16> to vector<8x128xbf16>
    %197 = vector.shape_cast %193 : vector<8x128xbf16> to vector<1x8x128xbf16>
    tpu.vector_store %arg21[%194, %c0_56, %c0_57], %197 {strides = array<i32>} : memref<8x8x128xbf16, #tpu.memory_space<vmem>>, vector<1x8x128xbf16>,
    %c5_i32 = arith.constant 5 : i32
    %198 = arith.index_cast %c5_i32 : i32 to index
    %c0_58 = arith.constant 0 : index
    %c0_59 = arith.constant 0 : index
    %199 = vector.load %arg20[%198, %c0_58, %c0_59] : memref<8x8x512xbf16, #tpu.memory_space<vmem>>, vector<1x8x512xbf16>
    %200 = vector.shape_cast %199 : vector<1x8x512xbf16> to vector<8x512xbf16>
    %201 = arith.extf %200 : vector<8x512xbf16> to vector<8x512xf32>
    %202 = arith.truncf %192 : vector<8x128xf32> to vector<8x128xbf16>
    %cst_60 = arith.constant dense<0.000000e+00> : vector<8x512xf32>
    %203 = tpu.matmul %202, %16, %cst_60 {dimension_numbers = #tpu.dot_dimension_numbers<[1], [0], [0], [1], [0, 0, 1, 1], [], []>} : vector<8x128xbf16>, vector<128x512xbf16>, vector<8x512xf32> -> vector<8x512xf32>
    %204 = arith.addf %201, %203 : vector<8x512xf32>
    %205 = vector.extract_strided_slice %204 {offsets = [0, 0], sizes = [8, 128], strides = [1, 1]} : vector<8x512xf32> to vector<8x128xf32>
    %206 = arith.negf %205 : vector<8x128xf32>
    %207 = math.exp %206 : vector<8x128xf32>
    %cst_61 = arith.constant 1.000000e+00 : f32
    %208 = vector.broadcast %cst_61 : f32 to vector<8x128xf32>
    %209 = arith.addf %208, %207 : vector<8x128xf32>
    %210 = arith.divf %208, %209 : vector<8x128xf32>
    %211 = vector.extract_strided_slice %204 {offsets = [0, 128], sizes = [8, 128], strides = [1, 1]} : vector<8x512xf32> to vector<8x128xf32>
    %212 = arith.negf %211 : vector<8x128xf32>
    %213 = math.exp %212 : vector<8x128xf32>
    %cst_62 = arith.constant 1.000000e+00 : f32
    %214 = vector.broadcast %cst_62 : f32 to vector<8x128xf32>
    %215 = arith.addf %214, %213 : vector<8x128xf32>
    %216 = arith.divf %214, %215 : vector<8x128xf32>
    %217 = vector.extract_strided_slice %204 {offsets = [0, 256], sizes = [8, 128], strides = [1, 1]} : vector<8x512xf32> to vector<8x128xf32>
    %218 = math.tanh %217 : vector<8x128xf32>
    %219 = vector.extract_strided_slice %204 {offsets = [0, 384], sizes = [8, 128], strides = [1, 1]} : vector<8x512xf32> to vector<8x128xf32>
    %220 = arith.negf %219 : vector<8x128xf32>
    %221 = math.exp %220 : vector<8x128xf32>
    %cst_63 = arith.constant 1.000000e+00 : f32
    %222 = vector.broadcast %cst_63 : f32 to vector<8x128xf32>
    %223 = arith.addf %222, %221 : vector<8x128xf32>
    %224 = arith.divf %222, %223 : vector<8x128xf32>
    %225 = arith.mulf %216, %190 : vector<8x128xf32>
    %226 = arith.mulf %210, %218 : vector<8x128xf32>
    %227 = arith.addf %225, %226 : vector<8x128xf32>
    %228 = math.tanh %227 : vector<8x128xf32>
    %229 = arith.mulf %224, %228 : vector<8x128xf32>
    %230 = arith.truncf %229 : vector<8x128xf32> to vector<8x128xbf16>
    %231 = arith.index_cast %c5_i32 : i32 to index
    %c0_64 = arith.constant 0 : index
    %c0_65 = arith.constant 0 : index
    %232 = vector.load %arg21[%231, %c0_64, %c0_65] : memref<8x8x128xbf16, #tpu.memory_space<vmem>>, vector<1x8x128xbf16>
    %233 = vector.shape_cast %232 : vector<1x8x128xbf16> to vector<8x128xbf16>
    %234 = vector.shape_cast %230 : vector<8x128xbf16> to vector<1x8x128xbf16>
    tpu.vector_store %arg21[%231, %c0_64, %c0_65], %234 {strides = array<i32>} : memref<8x8x128xbf16, #tpu.memory_space<vmem>>, vector<1x8x128xbf16>,
    %c6_i32 = arith.constant 6 : i32
    %235 = arith.index_cast %c6_i32 : i32 to index
    %c0_66 = arith.constant 0 : index
    %c0_67 = arith.constant 0 : index
    %236 = vector.load %arg20[%235, %c0_66, %c0_67] : memref<8x8x512xbf16, #tpu.memory_space<vmem>>, vector<1x8x512xbf16>
    %237 = vector.shape_cast %236 : vector<1x8x512xbf16> to vector<8x512xbf16>
    %238 = arith.extf %237 : vector<8x512xbf16> to vector<8x512xf32>
    %239 = arith.truncf %229 : vector<8x128xf32> to vector<8x128xbf16>
    %cst_68 = arith.constant dense<0.000000e+00> : vector<8x512xf32>
    %240 = tpu.matmul %239, %16, %cst_68 {dimension_numbers = #tpu.dot_dimension_numbers<[1], [0], [0], [1], [0, 0, 1, 1], [], []>} : vector<8x128xbf16>, vector<128x512xbf16>, vector<8x512xf32> -> vector<8x512xf32>
    %241 = arith.addf %238, %240 : vector<8x512xf32>
    %242 = vector.extract_strided_slice %241 {offsets = [0, 0], sizes = [8, 128], strides = [1, 1]} : vector<8x512xf32> to vector<8x128xf32>
    %243 = arith.negf %242 : vector<8x128xf32>
    %244 = math.exp %243 : vector<8x128xf32>
    %cst_69 = arith.constant 1.000000e+00 : f32
    %245 = vector.broadcast %cst_69 : f32 to vector<8x128xf32>
    %246 = arith.addf %245, %244 : vector<8x128xf32>
    %247 = arith.divf %245, %246 : vector<8x128xf32>
    %248 = vector.extract_strided_slice %241 {offsets = [0, 128], sizes = [8, 128], strides = [1, 1]} : vector<8x512xf32> to vector<8x128xf32>
    %249 = arith.negf %248 : vector<8x128xf32>
    %250 = math.exp %249 : vector<8x128xf32>
    %cst_70 = arith.constant 1.000000e+00 : f32
    %251 = vector.broadcast %cst_70 : f32 to vector<8x128xf32>
    %252 = arith.addf %251, %250 : vector<8x128xf32>
    %253 = arith.divf %251, %252 : vector<8x128xf32>
    %254 = vector.extract_strided_slice %241 {offsets = [0, 256], sizes = [8, 128], strides = [1, 1]} : vector<8x512xf32> to vector<8x128xf32>
    %255 = math.tanh %254 : vector<8x128xf32>
    %256 = vector.extract_strided_slice %241 {offsets = [0, 384], sizes = [8, 128], strides = [1, 1]} : vector<8x512xf32> to vector<8x128xf32>
    %257 = arith.negf %256 : vector<8x128xf32>
    %258 = math.exp %257 : vector<8x128xf32>
    %cst_71 = arith.constant 1.000000e+00 : f32
    %259 = vector.broadcast %cst_71 : f32 to vector<8x128xf32>
    %260 = arith.addf %259, %258 : vector<8x128xf32>
    %261 = arith.divf %259, %260 : vector<8x128xf32>
    %262 = arith.mulf %253, %227 : vector<8x128xf32>
    %263 = arith.mulf %247, %255 : vector<8x128xf32>
    %264 = arith.addf %262, %263 : vector<8x128xf32>
    %265 = math.tanh %264 : vector<8x128xf32>
    %266 = arith.mulf %261, %265 : vector<8x128xf32>
    %267 = arith.truncf %266 : vector<8x128xf32> to vector<8x128xbf16>
    %268 = arith.index_cast %c6_i32 : i32 to index
    %c0_72 = arith.constant 0 : index
    %c0_73 = arith.constant 0 : index
    %269 = vector.load %arg21[%268, %c0_72, %c0_73] : memref<8x8x128xbf16, #tpu.memory_space<vmem>>, vector<1x8x128xbf16>
    %270 = vector.shape_cast %269 : vector<1x8x128xbf16> to vector<8x128xbf16>
    %271 = vector.shape_cast %267 : vector<8x128xbf16> to vector<1x8x128xbf16>
    tpu.vector_store %arg21[%268, %c0_72, %c0_73], %271 {strides = array<i32>} : memref<8x8x128xbf16, #tpu.memory_space<vmem>>, vector<1x8x128xbf16>,
    %c7_i32 = arith.constant 7 : i32
    %272 = arith.index_cast %c7_i32 : i32 to index
    %c0_74 = arith.constant 0 : index
    %c0_75 = arith.constant 0 : index
    %273 = vector.load %arg20[%272, %c0_74, %c0_75] : memref<8x8x512xbf16, #tpu.memory_space<vmem>>, vector<1x8x512xbf16>
    %274 = vector.shape_cast %273 : vector<1x8x512xbf16> to vector<8x512xbf16>
    %275 = arith.extf %274 : vector<8x512xbf16> to vector<8x512xf32>
    %276 = arith.truncf %266 : vector<8x128xf32> to vector<8x128xbf16>
    %cst_76 = arith.constant dense<0.000000e+00> : vector<8x512xf32>
    %277 = tpu.matmul %276, %16, %cst_76 {dimension_numbers = #tpu.dot_dimension_numbers<[1], [0], [0], [1], [0, 0, 1, 1], [], []>} : vector<8x128xbf16>, vector<128x512xbf16>, vector<8x512xf32> -> vector<8x512xf32>
    %278 = arith.addf %275, %277 : vector<8x512xf32>
    %279 = vector.extract_strided_slice %278 {offsets = [0, 0], sizes = [8, 128], strides = [1, 1]} : vector<8x512xf32> to vector<8x128xf32>
    %280 = arith.negf %279 : vector<8x128xf32>
    %281 = math.exp %280 : vector<8x128xf32>
    %cst_77 = arith.constant 1.000000e+00 : f32
    %282 = vector.broadcast %cst_77 : f32 to vector<8x128xf32>
    %283 = arith.addf %282, %281 : vector<8x128xf32>
    %284 = arith.divf %282, %283 : vector<8x128xf32>
    %285 = vector.extract_strided_slice %278 {offsets = [0, 128], sizes = [8, 128], strides = [1, 1]} : vector<8x512xf32> to vector<8x128xf32>
    %286 = arith.negf %285 : vector<8x128xf32>
    %287 = math.exp %286 : vector<8x128xf32>
    %cst_78 = arith.constant 1.000000e+00 : f32
    %288 = vector.broadcast %cst_78 : f32 to vector<8x128xf32>
    %289 = arith.addf %288, %287 : vector<8x128xf32>
    %290 = arith.divf %288, %289 : vector<8x128xf32>
    %291 = vector.extract_strided_slice %278 {offsets = [0, 256], sizes = [8, 128], strides = [1, 1]} : vector<8x512xf32> to vector<8x128xf32>
    %292 = math.tanh %291 : vector<8x128xf32>
    %293 = vector.extract_strided_slice %278 {offsets = [0, 384], sizes = [8, 128], strides = [1, 1]} : vector<8x512xf32> to vector<8x128xf32>
    %294 = arith.negf %293 : vector<8x128xf32>
    %295 = math.exp %294 : vector<8x128xf32>
    %cst_79 = arith.constant 1.000000e+00 : f32
    %296 = vector.broadcast %cst_79 : f32 to vector<8x128xf32>
    %297 = arith.addf %296, %295 : vector<8x128xf32>
    %298 = arith.divf %296, %297 : vector<8x128xf32>
    %299 = arith.mulf %290, %264 : vector<8x128xf32>
    %300 = arith.mulf %284, %292 : vector<8x128xf32>
    %301 = arith.addf %299, %300 : vector<8x128xf32>
    %302 = math.tanh %301 : vector<8x128xf32>
    %303 = arith.mulf %298, %302 : vector<8x128xf32>
    %304 = arith.truncf %303 : vector<8x128xf32> to vector<8x128xbf16>
    %305 = arith.index_cast %c7_i32 : i32 to index
    %c0_80 = arith.constant 0 : index
    %c0_81 = arith.constant 0 : index
    %306 = vector.load %arg21[%305, %c0_80, %c0_81] : memref<8x8x128xbf16, #tpu.memory_space<vmem>>, vector<1x8x128xbf16>
    %307 = vector.shape_cast %306 : vector<1x8x128xbf16> to vector<8x128xbf16>
    %308 = vector.shape_cast %304 : vector<8x128xbf16> to vector<1x8x128xbf16>
    tpu.vector_store %arg21[%305, %c0_80, %c0_81], %308 {strides = array<i32>} : memref<8x8x128xbf16, #tpu.memory_space<vmem>>, vector<1x8x128xbf16>,
    %c7_i32_82 = arith.constant 7 : i32
    %c0_83 = arith.constant 0 : index
    %c0_84 = arith.constant 0 : index
    %c0_85 = arith.constant 0 : index
    %309 = vector.load %arg21[%c0_83, %c0_84, %c0_85] : memref<8x8x128xbf16, #tpu.memory_space<vmem>>, vector<8x8x128xbf16>
    %310 = vector.shape_cast %309 : vector<8x8x128xbf16> to vector<64x128xbf16>
    %c0_86 = arith.constant 0 : index
    %c0_87 = arith.constant 0 : index
    %311 = vector.load %arg7[%c0_86, %c0_87] : memref<128x512xbf16, #tpu.memory_space<vmem>>, vector<128x512xbf16>
    %cst_88 = arith.constant dense<0.000000e+00> : vector<64x512xf32>
    %312 = tpu.matmul %310, %311, %cst_88 {dimension_numbers = #tpu.dot_dimension_numbers<[1], [0], [0], [1], [0, 0, 1, 1], [], []>} : vector<64x128xbf16>, vector<128x512xbf16>, vector<64x512xf32> -> vector<64x512xf32>
    %313 = vector.shape_cast %312 : vector<64x512xf32> to vector<8x8x512xf32>
    %c0_89 = arith.constant 0 : index
    %c0_90 = arith.constant 0 : index
    %314 = vector.load %arg9[%c0_89, %c0_90] : memref<1x512xf32, #tpu.memory_space<vmem>>, vector<1x512xf32>
    %315 = vector.shape_cast %314 : vector<1x512xf32> to vector<1x1x512xf32>
    %316 = vector.broadcast %315 : vector<1x1x512xf32> to vector<8x8x512xf32>
    %317 = arith.addf %313, %316 : vector<8x8x512xf32>
    %318 = arith.truncf %317 : vector<8x8x512xf32> to vector<8x8x512xbf16>
    %c0_91 = arith.constant 0 : index
    %c0_92 = arith.constant 0 : index
    %c0_93 = arith.constant 0 : index
    %319 = vector.load %arg20[%c0_91, %c0_92, %c0_93] : memref<8x8x512xbf16, #tpu.memory_space<vmem>>, vector<8x8x512xbf16>
    tpu.vector_store %arg20[%c0_91, %c0_92, %c0_93], %318 {strides = array<i32>} : memref<8x8x512xbf16, #tpu.memory_space<vmem>>, vector<8x8x512xbf16>,
    %c0_94 = arith.constant 0 : index
    %c0_95 = arith.constant 0 : index
    %320 = vector.load %arg8[%c0_94, %c0_95] : memref<128x512xbf16, #tpu.memory_space<vmem>>, vector<128x512xbf16>
    %c0_96 = arith.constant 0 : index
    %c0_97 = arith.constant 0 : index
    %c0_98 = arith.constant 0 : index
    %321 = vector.load %arg20[%c0_96, %c0_97, %c0_98] : memref<8x8x512xbf16, #tpu.memory_space<vmem>>, vector<1x8x512xbf16>
    %322 = vector.shape_cast %321 : vector<1x8x512xbf16> to vector<8x512xbf16>
    %323 = arith.extf %322 : vector<8x512xbf16> to vector<8x512xf32>
    %cst_99 = arith.constant 0.000000e+00 : f32
    %324 = vector.broadcast %cst_99 : f32 to vector<8x128xf32>
    %325 = vector.extract_strided_slice %323 {offsets = [0, 0], sizes = [8, 128], strides = [1, 1]} : vector<8x512xf32> to vector<8x128xf32>
    %326 = arith.negf %325 : vector<8x128xf32>
    %327 = math.exp %326 : vector<8x128xf32>
    %cst_100 = arith.constant 1.000000e+00 : f32
    %328 = vector.broadcast %cst_100 : f32 to vector<8x128xf32>
    %329 = arith.addf %328, %327 : vector<8x128xf32>
    %330 = arith.divf %328, %329 : vector<8x128xf32>
    %331 = vector.extract_strided_slice %323 {offsets = [0, 128], sizes = [8, 128], strides = [1, 1]} : vector<8x512xf32> to vector<8x128xf32>
    %332 = arith.negf %331 : vector<8x128xf32>
    %333 = math.exp %332 : vector<8x128xf32>
    %cst_101 = arith.constant 1.000000e+00 : f32
    %334 = vector.broadcast %cst_101 : f32 to vector<8x128xf32>
    %335 = arith.addf %334, %333 : vector<8x128xf32>
    %336 = arith.divf %334, %335 : vector<8x128xf32>
    %337 = vector.extract_strided_slice %323 {offsets = [0, 256], sizes = [8, 128], strides = [1, 1]} : vector<8x512xf32> to vector<8x128xf32>
    %338 = math.tanh %337 : vector<8x128xf32>
    %339 = vector.extract_strided_slice %323 {offsets = [0, 384], sizes = [8, 128], strides = [1, 1]} : vector<8x512xf32> to vector<8x128xf32>
    %340 = arith.negf %339 : vector<8x128xf32>
    %341 = math.exp %340 : vector<8x128xf32>
    %cst_102 = arith.constant 1.000000e+00 : f32
    %342 = vector.broadcast %cst_102 : f32 to vector<8x128xf32>
    %343 = arith.addf %342, %341 : vector<8x128xf32>
    %344 = arith.divf %342, %343 : vector<8x128xf32>
    %345 = arith.mulf %336, %324 : vector<8x128xf32>
    %346 = arith.mulf %330, %338 : vector<8x128xf32>
    %347 = arith.addf %345, %346 : vector<8x128xf32>
    %348 = math.tanh %347 : vector<8x128xf32>
    %349 = arith.mulf %344, %348 : vector<8x128xf32>
    %350 = arith.truncf %349 : vector<8x128xf32> to vector<8x128xbf16>
    %c0_103 = arith.constant 0 : index
    %c0_104 = arith.constant 0 : index
    %c0_105 = arith.constant 0 : index
    %351 = vector.load %arg21[%c0_103, %c0_104, %c0_105] : memref<8x8x128xbf16, #tpu.memory_space<vmem>>, vector<1x8x128xbf16>
    %352 = vector.shape_cast %351 : vector<1x8x128xbf16> to vector<8x128xbf16>
    %353 = vector.shape_cast %350 : vector<8x128xbf16> to vector<1x8x128xbf16>
    tpu.vector_store %arg21[%c0_103, %c0_104, %c0_105], %353 {strides = array<i32>} : memref<8x8x128xbf16, #tpu.memory_space<vmem>>, vector<1x8x128xbf16>,
    %c1_i32_106 = arith.constant 1 : i32
    %354 = arith.index_cast %c1_i32_106 : i32 to index
    %c0_107 = arith.constant 0 : index
    %c0_108 = arith.constant 0 : index
    %355 = vector.load %arg20[%354, %c0_107, %c0_108] : memref<8x8x512xbf16, #tpu.memory_space<vmem>>, vector<1x8x512xbf16>
    %356 = vector.shape_cast %355 : vector<1x8x512xbf16> to vector<8x512xbf16>
    %357 = arith.extf %356 : vector<8x512xbf16> to vector<8x512xf32>
    %358 = arith.truncf %349 : vector<8x128xf32> to vector<8x128xbf16>
    %cst_109 = arith.constant dense<0.000000e+00> : vector<8x512xf32>
    %359 = tpu.matmul %358, %320, %cst_109 {dimension_numbers = #tpu.dot_dimension_numbers<[1], [0], [0], [1], [0, 0, 1, 1], [], []>} : vector<8x128xbf16>, vector<128x512xbf16>, vector<8x512xf32> -> vector<8x512xf32>
    %360 = arith.addf %357, %359 : vector<8x512xf32>
    %361 = vector.extract_strided_slice %360 {offsets = [0, 0], sizes = [8, 128], strides = [1, 1]} : vector<8x512xf32> to vector<8x128xf32>
    %362 = arith.negf %361 : vector<8x128xf32>
    %363 = math.exp %362 : vector<8x128xf32>
    %cst_110 = arith.constant 1.000000e+00 : f32
    %364 = vector.broadcast %cst_110 : f32 to vector<8x128xf32>
    %365 = arith.addf %364, %363 : vector<8x128xf32>
    %366 = arith.divf %364, %365 : vector<8x128xf32>
    %367 = vector.extract_strided_slice %360 {offsets = [0, 128], sizes = [8, 128], strides = [1, 1]} : vector<8x512xf32> to vector<8x128xf32>
    %368 = arith.negf %367 : vector<8x128xf32>
    %369 = math.exp %368 : vector<8x128xf32>
    %cst_111 = arith.constant 1.000000e+00 : f32
    %370 = vector.broadcast %cst_111 : f32 to vector<8x128xf32>
    %371 = arith.addf %370, %369 : vector<8x128xf32>
    %372 = arith.divf %370, %371 : vector<8x128xf32>
    %373 = vector.extract_strided_slice %360 {offsets = [0, 256], sizes = [8, 128], strides = [1, 1]} : vector<8x512xf32> to vector<8x128xf32>
    %374 = math.tanh %373 : vector<8x128xf32>
    %375 = vector.extract_strided_slice %360 {offsets = [0, 384], sizes = [8, 128], strides = [1, 1]} : vector<8x512xf32> to vector<8x128xf32>
    %376 = arith.negf %375 : vector<8x128xf32>
    %377 = math.exp %376 : vector<8x128xf32>
    %cst_112 = arith.constant 1.000000e+00 : f32
    %378 = vector.broadcast %cst_112 : f32 to vector<8x128xf32>
    %379 = arith.addf %378, %377 : vector<8x128xf32>
    %380 = arith.divf %378, %379 : vector<8x128xf32>
    %381 = arith.mulf %372, %347 : vector<8x128xf32>
    %382 = arith.mulf %366, %374 : vector<8x128xf32>
    %383 = arith.addf %381, %382 : vector<8x128xf32>
    %384 = math.tanh %383 : vector<8x128xf32>
    %385 = arith.mulf %380, %384 : vector<8x128xf32>
    %386 = arith.truncf %385 : vector<8x128xf32> to vector<8x128xbf16>
    %387 = arith.index_cast %c1_i32_106 : i32 to index
    %c0_113 = arith.constant 0 : index
    %c0_114 = arith.constant 0 : index
    %388 = vector.load %arg21[%387, %c0_113, %c0_114] : memref<8x8x128xbf16, #tpu.memory_space<vmem>>, vector<1x8x128xbf16>
    %389 = vector.shape_cast %388 : vector<1x8x128xbf16> to vector<8x128xbf16>
    %390 = vector.shape_cast %386 : vector<8x128xbf16> to vector<1x8x128xbf16>
    tpu.vector_store %arg21[%387, %c0_113, %c0_114], %390 {strides = array<i32>} : memref<8x8x128xbf16, #tpu.memory_space<vmem>>, vector<1x8x128xbf16>,
    %c2_i32_115 = arith.constant 2 : i32
    %391 = arith.index_cast %c2_i32_115 : i32 to index
    %c0_116 = arith.constant 0 : index
    %c0_117 = arith.constant 0 : index
    %392 = vector.load %arg20[%391, %c0_116, %c0_117] : memref<8x8x512xbf16, #tpu.memory_space<vmem>>, vector<1x8x512xbf16>
    %393 = vector.shape_cast %392 : vector<1x8x512xbf16> to vector<8x512xbf16>
    %394 = arith.extf %393 : vector<8x512xbf16> to vector<8x512xf32>
    %395 = arith.truncf %385 : vector<8x128xf32> to vector<8x128xbf16>
    %cst_118 = arith.constant dense<0.000000e+00> : vector<8x512xf32>
    %396 = tpu.matmul %395, %320, %cst_118 {dimension_numbers = #tpu.dot_dimension_numbers<[1], [0], [0], [1], [0, 0, 1, 1], [], []>} : vector<8x128xbf16>, vector<128x512xbf16>, vector<8x512xf32> -> vector<8x512xf32>
    %397 = arith.addf %394, %396 : vector<8x512xf32>
    %398 = vector.extract_strided_slice %397 {offsets = [0, 0], sizes = [8, 128], strides = [1, 1]} : vector<8x512xf32> to vector<8x128xf32>
    %399 = arith.negf %398 : vector<8x128xf32>
    %400 = math.exp %399 : vector<8x128xf32>
    %cst_119 = arith.constant 1.000000e+00 : f32
    %401 = vector.broadcast %cst_119 : f32 to vector<8x128xf32>
    %402 = arith.addf %401, %400 : vector<8x128xf32>
    %403 = arith.divf %401, %402 : vector<8x128xf32>
    %404 = vector.extract_strided_slice %397 {offsets = [0, 128], sizes = [8, 128], strides = [1, 1]} : vector<8x512xf32> to vector<8x128xf32>
    %405 = arith.negf %404 : vector<8x128xf32>
    %406 = math.exp %405 : vector<8x128xf32>
    %cst_120 = arith.constant 1.000000e+00 : f32
    %407 = vector.broadcast %cst_120 : f32 to vector<8x128xf32>
    %408 = arith.addf %407, %406 : vector<8x128xf32>
    %409 = arith.divf %407, %408 : vector<8x128xf32>
    %410 = vector.extract_strided_slice %397 {offsets = [0, 256], sizes = [8, 128], strides = [1, 1]} : vector<8x512xf32> to vector<8x128xf32>
    %411 = math.tanh %410 : vector<8x128xf32>
    %412 = vector.extract_strided_slice %397 {offsets = [0, 384], sizes = [8, 128], strides = [1, 1]} : vector<8x512xf32> to vector<8x128xf32>
    %413 = arith.negf %412 : vector<8x128xf32>
    %414 = math.exp %413 : vector<8x128xf32>
    %cst_121 = arith.constant 1.000000e+00 : f32
    %415 = vector.broadcast %cst_121 : f32 to vector<8x128xf32>
    %416 = arith.addf %415, %414 : vector<8x128xf32>
    %417 = arith.divf %415, %416 : vector<8x128xf32>
    %418 = arith.mulf %409, %383 : vector<8x128xf32>
    %419 = arith.mulf %403, %411 : vector<8x128xf32>
    %420 = arith.addf %418, %419 : vector<8x128xf32>
    %421 = math.tanh %420 : vector<8x128xf32>
    %422 = arith.mulf %417, %421 : vector<8x128xf32>
    %423 = arith.truncf %422 : vector<8x128xf32> to vector<8x128xbf16>
    %424 = arith.index_cast %c2_i32_115 : i32 to index
    %c0_122 = arith.constant 0 : index
    %c0_123 = arith.constant 0 : index
    %425 = vector.load %arg21[%424, %c0_122, %c0_123] : memref<8x8x128xbf16, #tpu.memory_space<vmem>>, vector<1x8x128xbf16>
    %426 = vector.shape_cast %425 : vector<1x8x128xbf16> to vector<8x128xbf16>
    %427 = vector.shape_cast %423 : vector<8x128xbf16> to vector<1x8x128xbf16>
    tpu.vector_store %arg21[%424, %c0_122, %c0_123], %427 {strides = array<i32>} : memref<8x8x128xbf16, #tpu.memory_space<vmem>>, vector<1x8x128xbf16>,
    %c3_i32_124 = arith.constant 3 : i32
    %428 = arith.index_cast %c3_i32_124 : i32 to index
    %c0_125 = arith.constant 0 : index
    %c0_126 = arith.constant 0 : index
    %429 = vector.load %arg20[%428, %c0_125, %c0_126] : memref<8x8x512xbf16, #tpu.memory_space<vmem>>, vector<1x8x512xbf16>
    %430 = vector.shape_cast %429 : vector<1x8x512xbf16> to vector<8x512xbf16>
    %431 = arith.extf %430 : vector<8x512xbf16> to vector<8x512xf32>
    %432 = arith.truncf %422 : vector<8x128xf32> to vector<8x128xbf16>
    %cst_127 = arith.constant dense<0.000000e+00> : vector<8x512xf32>
    %433 = tpu.matmul %432, %320, %cst_127 {dimension_numbers = #tpu.dot_dimension_numbers<[1], [0], [0], [1], [0, 0, 1, 1], [], []>} : vector<8x128xbf16>, vector<128x512xbf16>, vector<8x512xf32> -> vector<8x512xf32>
    %434 = arith.addf %431, %433 : vector<8x512xf32>
    %435 = vector.extract_strided_slice %434 {offsets = [0, 0], sizes = [8, 128], strides = [1, 1]} : vector<8x512xf32> to vector<8x128xf32>
    %436 = arith.negf %435 : vector<8x128xf32>
    %437 = math.exp %436 : vector<8x128xf32>
    %cst_128 = arith.constant 1.000000e+00 : f32
    %438 = vector.broadcast %cst_128 : f32 to vector<8x128xf32>
    %439 = arith.addf %438, %437 : vector<8x128xf32>
    %440 = arith.divf %438, %439 : vector<8x128xf32>
    %441 = vector.extract_strided_slice %434 {offsets = [0, 128], sizes = [8, 128], strides = [1, 1]} : vector<8x512xf32> to vector<8x128xf32>
    %442 = arith.negf %441 : vector<8x128xf32>
    %443 = math.exp %442 : vector<8x128xf32>
    %cst_129 = arith.constant 1.000000e+00 : f32
    %444 = vector.broadcast %cst_129 : f32 to vector<8x128xf32>
    %445 = arith.addf %444, %443 : vector<8x128xf32>
    %446 = arith.divf %444, %445 : vector<8x128xf32>
    %447 = vector.extract_strided_slice %434 {offsets = [0, 256], sizes = [8, 128], strides = [1, 1]} : vector<8x512xf32> to vector<8x128xf32>
    %448 = math.tanh %447 : vector<8x128xf32>
    %449 = vector.extract_strided_slice %434 {offsets = [0, 384], sizes = [8, 128], strides = [1, 1]} : vector<8x512xf32> to vector<8x128xf32>
    %450 = arith.negf %449 : vector<8x128xf32>
    %451 = math.exp %450 : vector<8x128xf32>
    %cst_130 = arith.constant 1.000000e+00 : f32
    %452 = vector.broadcast %cst_130 : f32 to vector<8x128xf32>
    %453 = arith.addf %452, %451 : vector<8x128xf32>
    %454 = arith.divf %452, %453 : vector<8x128xf32>
    %455 = arith.mulf %446, %420 : vector<8x128xf32>
    %456 = arith.mulf %440, %448 : vector<8x128xf32>
    %457 = arith.addf %455, %456 : vector<8x128xf32>
    %458 = math.tanh %457 : vector<8x128xf32>
    %459 = arith.mulf %454, %458 : vector<8x128xf32>
    %460 = arith.truncf %459 : vector<8x128xf32> to vector<8x128xbf16>
    %461 = arith.index_cast %c3_i32_124 : i32 to index
    %c0_131 = arith.constant 0 : index
    %c0_132 = arith.constant 0 : index
    %462 = vector.load %arg21[%461, %c0_131, %c0_132] : memref<8x8x128xbf16, #tpu.memory_space<vmem>>, vector<1x8x128xbf16>
    %463 = vector.shape_cast %462 : vector<1x8x128xbf16> to vector<8x128xbf16>
    %464 = vector.shape_cast %460 : vector<8x128xbf16> to vector<1x8x128xbf16>
    tpu.vector_store %arg21[%461, %c0_131, %c0_132], %464 {strides = array<i32>} : memref<8x8x128xbf16, #tpu.memory_space<vmem>>, vector<1x8x128xbf16>,
    %c4_i32_133 = arith.constant 4 : i32
    %465 = arith.index_cast %c4_i32_133 : i32 to index
    %c0_134 = arith.constant 0 : index
    %c0_135 = arith.constant 0 : index
    %466 = vector.load %arg20[%465, %c0_134, %c0_135] : memref<8x8x512xbf16, #tpu.memory_space<vmem>>, vector<1x8x512xbf16>
    %467 = vector.shape_cast %466 : vector<1x8x512xbf16> to vector<8x512xbf16>
    %468 = arith.extf %467 : vector<8x512xbf16> to vector<8x512xf32>
    %469 = arith.truncf %459 : vector<8x128xf32> to vector<8x128xbf16>
    %cst_136 = arith.constant dense<0.000000e+00> : vector<8x512xf32>
    %470 = tpu.matmul %469, %320, %cst_136 {dimension_numbers = #tpu.dot_dimension_numbers<[1], [0], [0], [1], [0, 0, 1, 1], [], []>} : vector<8x128xbf16>, vector<128x512xbf16>, vector<8x512xf32> -> vector<8x512xf32>
    %471 = arith.addf %468, %470 : vector<8x512xf32>
    %472 = vector.extract_strided_slice %471 {offsets = [0, 0], sizes = [8, 128], strides = [1, 1]} : vector<8x512xf32> to vector<8x128xf32>
    %473 = arith.negf %472 : vector<8x128xf32>
    %474 = math.exp %473 : vector<8x128xf32>
    %cst_137 = arith.constant 1.000000e+00 : f32
    %475 = vector.broadcast %cst_137 : f32 to vector<8x128xf32>
    %476 = arith.addf %475, %474 : vector<8x128xf32>
    %477 = arith.divf %475, %476 : vector<8x128xf32>
    %478 = vector.extract_strided_slice %471 {offsets = [0, 128], sizes = [8, 128], strides = [1, 1]} : vector<8x512xf32> to vector<8x128xf32>
    %479 = arith.negf %478 : vector<8x128xf32>
    %480 = math.exp %479 : vector<8x128xf32>
    %cst_138 = arith.constant 1.000000e+00 : f32
    %481 = vector.broadcast %cst_138 : f32 to vector<8x128xf32>
    %482 = arith.addf %481, %480 : vector<8x128xf32>
    %483 = arith.divf %481, %482 : vector<8x128xf32>
    %484 = vector.extract_strided_slice %471 {offsets = [0, 256], sizes = [8, 128], strides = [1, 1]} : vector<8x512xf32> to vector<8x128xf32>
    %485 = math.tanh %484 : vector<8x128xf32>
    %486 = vector.extract_strided_slice %471 {offsets = [0, 384], sizes = [8, 128], strides = [1, 1]} : vector<8x512xf32> to vector<8x128xf32>
    %487 = arith.negf %486 : vector<8x128xf32>
    %488 = math.exp %487 : vector<8x128xf32>
    %cst_139 = arith.constant 1.000000e+00 : f32
    %489 = vector.broadcast %cst_139 : f32 to vector<8x128xf32>
    %490 = arith.addf %489, %488 : vector<8x128xf32>
    %491 = arith.divf %489, %490 : vector<8x128xf32>
    %492 = arith.mulf %483, %457 : vector<8x128xf32>
    %493 = arith.mulf %477, %485 : vector<8x128xf32>
    %494 = arith.addf %492, %493 : vector<8x128xf32>
    %495 = math.tanh %494 : vector<8x128xf32>
    %496 = arith.mulf %491, %495 : vector<8x128xf32>
    %497 = arith.truncf %496 : vector<8x128xf32> to vector<8x128xbf16>
    %498 = arith.index_cast %c4_i32_133 : i32 to index
    %c0_140 = arith.constant 0 : index
    %c0_141 = arith.constant 0 : index
    %499 = vector.load %arg21[%498, %c0_140, %c0_141] : memref<8x8x128xbf16, #tpu.memory_space<vmem>>, vector<1x8x128xbf16>
    %500 = vector.shape_cast %499 : vector<1x8x128xbf16> to vector<8x128xbf16>
    %501 = vector.shape_cast %497 : vector<8x128xbf16> to vector<1x8x128xbf16>
    tpu.vector_store %arg21[%498, %c0_140, %c0_141], %501 {strides = array<i32>} : memref<8x8x128xbf16, #tpu.memory_space<vmem>>, vector<1x8x128xbf16>,
    %c5_i32_142 = arith.constant 5 : i32
    %502 = arith.index_cast %c5_i32_142 : i32 to index
    %c0_143 = arith.constant 0 : index
    %c0_144 = arith.constant 0 : index
    %503 = vector.load %arg20[%502, %c0_143, %c0_144] : memref<8x8x512xbf16, #tpu.memory_space<vmem>>, vector<1x8x512xbf16>
    %504 = vector.shape_cast %503 : vector<1x8x512xbf16> to vector<8x512xbf16>
    %505 = arith.extf %504 : vector<8x512xbf16> to vector<8x512xf32>
    %506 = arith.truncf %496 : vector<8x128xf32> to vector<8x128xbf16>
    %cst_145 = arith.constant dense<0.000000e+00> : vector<8x512xf32>
    %507 = tpu.matmul %506, %320, %cst_145 {dimension_numbers = #tpu.dot_dimension_numbers<[1], [0], [0], [1], [0, 0, 1, 1], [], []>} : vector<8x128xbf16>, vector<128x512xbf16>, vector<8x512xf32> -> vector<8x512xf32>
    %508 = arith.addf %505, %507 : vector<8x512xf32>
    %509 = vector.extract_strided_slice %508 {offsets = [0, 0], sizes = [8, 128], strides = [1, 1]} : vector<8x512xf32> to vector<8x128xf32>
    %510 = arith.negf %509 : vector<8x128xf32>
    %511 = math.exp %510 : vector<8x128xf32>
    %cst_146 = arith.constant 1.000000e+00 : f32
    %512 = vector.broadcast %cst_146 : f32 to vector<8x128xf32>
    %513 = arith.addf %512, %511 : vector<8x128xf32>
    %514 = arith.divf %512, %513 : vector<8x128xf32>
    %515 = vector.extract_strided_slice %508 {offsets = [0, 128], sizes = [8, 128], strides = [1, 1]} : vector<8x512xf32> to vector<8x128xf32>
    %516 = arith.negf %515 : vector<8x128xf32>
    %517 = math.exp %516 : vector<8x128xf32>
    %cst_147 = arith.constant 1.000000e+00 : f32
    %518 = vector.broadcast %cst_147 : f32 to vector<8x128xf32>
    %519 = arith.addf %518, %517 : vector<8x128xf32>
    %520 = arith.divf %518, %519 : vector<8x128xf32>
    %521 = vector.extract_strided_slice %508 {offsets = [0, 256], sizes = [8, 128], strides = [1, 1]} : vector<8x512xf32> to vector<8x128xf32>
    %522 = math.tanh %521 : vector<8x128xf32>
    %523 = vector.extract_strided_slice %508 {offsets = [0, 384], sizes = [8, 128], strides = [1, 1]} : vector<8x512xf32> to vector<8x128xf32>
    %524 = arith.negf %523 : vector<8x128xf32>
    %525 = math.exp %524 : vector<8x128xf32>
    %cst_148 = arith.constant 1.000000e+00 : f32
    %526 = vector.broadcast %cst_148 : f32 to vector<8x128xf32>
    %527 = arith.addf %526, %525 : vector<8x128xf32>
    %528 = arith.divf %526, %527 : vector<8x128xf32>
    %529 = arith.mulf %520, %494 : vector<8x128xf32>
    %530 = arith.mulf %514, %522 : vector<8x128xf32>
    %531 = arith.addf %529, %530 : vector<8x128xf32>
    %532 = math.tanh %531 : vector<8x128xf32>
    %533 = arith.mulf %528, %532 : vector<8x128xf32>
    %534 = arith.truncf %533 : vector<8x128xf32> to vector<8x128xbf16>
    %535 = arith.index_cast %c5_i32_142 : i32 to index
    %c0_149 = arith.constant 0 : index
    %c0_150 = arith.constant 0 : index
    %536 = vector.load %arg21[%535, %c0_149, %c0_150] : memref<8x8x128xbf16, #tpu.memory_space<vmem>>, vector<1x8x128xbf16>
    %537 = vector.shape_cast %536 : vector<1x8x128xbf16> to vector<8x128xbf16>
    %538 = vector.shape_cast %534 : vector<8x128xbf16> to vector<1x8x128xbf16>
    tpu.vector_store %arg21[%535, %c0_149, %c0_150], %538 {strides = array<i32>} : memref<8x8x128xbf16, #tpu.memory_space<vmem>>, vector<1x8x128xbf16>,
    %c6_i32_151 = arith.constant 6 : i32
    %539 = arith.index_cast %c6_i32_151 : i32 to index
    %c0_152 = arith.constant 0 : index
    %c0_153 = arith.constant 0 : index
    %540 = vector.load %arg20[%539, %c0_152, %c0_153] : memref<8x8x512xbf16, #tpu.memory_space<vmem>>, vector<1x8x512xbf16>
    %541 = vector.shape_cast %540 : vector<1x8x512xbf16> to vector<8x512xbf16>
    %542 = arith.extf %541 : vector<8x512xbf16> to vector<8x512xf32>
    %543 = arith.truncf %533 : vector<8x128xf32> to vector<8x128xbf16>
    %cst_154 = arith.constant dense<0.000000e+00> : vector<8x512xf32>
    %544 = tpu.matmul %543, %320, %cst_154 {dimension_numbers = #tpu.dot_dimension_numbers<[1], [0], [0], [1], [0, 0, 1, 1], [], []>} : vector<8x128xbf16>, vector<128x512xbf16>, vector<8x512xf32> -> vector<8x512xf32>
    %545 = arith.addf %542, %544 : vector<8x512xf32>
    %546 = vector.extract_strided_slice %545 {offsets = [0, 0], sizes = [8, 128], strides = [1, 1]} : vector<8x512xf32> to vector<8x128xf32>
    %547 = arith.negf %546 : vector<8x128xf32>
    %548 = math.exp %547 : vector<8x128xf32>
    %cst_155 = arith.constant 1.000000e+00 : f32
    %549 = vector.broadcast %cst_155 : f32 to vector<8x128xf32>
    %550 = arith.addf %549, %548 : vector<8x128xf32>
    %551 = arith.divf %549, %550 : vector<8x128xf32>
    %552 = vector.extract_strided_slice %545 {offsets = [0, 128], sizes = [8, 128], strides = [1, 1]} : vector<8x512xf32> to vector<8x128xf32>
    %553 = arith.negf %552 : vector<8x128xf32>
    %554 = math.exp %553 : vector<8x128xf32>
    %cst_156 = arith.constant 1.000000e+00 : f32
    %555 = vector.broadcast %cst_156 : f32 to vector<8x128xf32>
    %556 = arith.addf %555, %554 : vector<8x128xf32>
    %557 = arith.divf %555, %556 : vector<8x128xf32>
    %558 = vector.extract_strided_slice %545 {offsets = [0, 256], sizes = [8, 128], strides = [1, 1]} : vector<8x512xf32> to vector<8x128xf32>
    %559 = math.tanh %558 : vector<8x128xf32>
    %560 = vector.extract_strided_slice %545 {offsets = [0, 384], sizes = [8, 128], strides = [1, 1]} : vector<8x512xf32> to vector<8x128xf32>
    %561 = arith.negf %560 : vector<8x128xf32>
    %562 = math.exp %561 : vector<8x128xf32>
    %cst_157 = arith.constant 1.000000e+00 : f32
    %563 = vector.broadcast %cst_157 : f32 to vector<8x128xf32>
    %564 = arith.addf %563, %562 : vector<8x128xf32>
    %565 = arith.divf %563, %564 : vector<8x128xf32>
    %566 = arith.mulf %557, %531 : vector<8x128xf32>
    %567 = arith.mulf %551, %559 : vector<8x128xf32>
    %568 = arith.addf %566, %567 : vector<8x128xf32>
    %569 = math.tanh %568 : vector<8x128xf32>
    %570 = arith.mulf %565, %569 : vector<8x128xf32>
    %571 = arith.truncf %570 : vector<8x128xf32> to vector<8x128xbf16>
    %572 = arith.index_cast %c6_i32_151 : i32 to index
    %c0_158 = arith.constant 0 : index
    %c0_159 = arith.constant 0 : index
    %573 = vector.load %arg21[%572, %c0_158, %c0_159] : memref<8x8x128xbf16, #tpu.memory_space<vmem>>, vector<1x8x128xbf16>
    %574 = vector.shape_cast %573 : vector<1x8x128xbf16> to vector<8x128xbf16>
    %575 = vector.shape_cast %571 : vector<8x128xbf16> to vector<1x8x128xbf16>
    tpu.vector_store %arg21[%572, %c0_158, %c0_159], %575 {strides = array<i32>} : memref<8x8x128xbf16, #tpu.memory_space<vmem>>, vector<1x8x128xbf16>,
    %c7_i32_160 = arith.constant 7 : i32
    %576 = arith.index_cast %c7_i32_160 : i32 to index
    %c0_161 = arith.constant 0 : index
    %c0_162 = arith.constant 0 : index
    %577 = vector.load %arg20[%576, %c0_161, %c0_162] : memref<8x8x512xbf16, #tpu.memory_space<vmem>>, vector<1x8x512xbf16>
    %578 = vector.shape_cast %577 : vector<1x8x512xbf16> to vector<8x512xbf16>
    %579 = arith.extf %578 : vector<8x512xbf16> to vector<8x512xf32>
    %580 = arith.truncf %570 : vector<8x128xf32> to vector<8x128xbf16>
    %cst_163 = arith.constant dense<0.000000e+00> : vector<8x512xf32>
    %581 = tpu.matmul %580, %320, %cst_163 {dimension_numbers = #tpu.dot_dimension_numbers<[1], [0], [0], [1], [0, 0, 1, 1], [], []>} : vector<8x128xbf16>, vector<128x512xbf16>, vector<8x512xf32> -> vector<8x512xf32>
    %582 = arith.addf %579, %581 : vector<8x512xf32>
    %583 = vector.extract_strided_slice %582 {offsets = [0, 0], sizes = [8, 128], strides = [1, 1]} : vector<8x512xf32> to vector<8x128xf32>
    %584 = arith.negf %583 : vector<8x128xf32>
    %585 = math.exp %584 : vector<8x128xf32>
    %cst_164 = arith.constant 1.000000e+00 : f32
    %586 = vector.broadcast %cst_164 : f32 to vector<8x128xf32>
    %587 = arith.addf %586, %585 : vector<8x128xf32>
    %588 = arith.divf %586, %587 : vector<8x128xf32>
    %589 = vector.extract_strided_slice %582 {offsets = [0, 128], sizes = [8, 128], strides = [1, 1]} : vector<8x512xf32> to vector<8x128xf32>
    %590 = arith.negf %589 : vector<8x128xf32>
    %591 = math.exp %590 : vector<8x128xf32>
    %cst_165 = arith.constant 1.000000e+00 : f32
    %592 = vector.broadcast %cst_165 : f32 to vector<8x128xf32>
    %593 = arith.addf %592, %591 : vector<8x128xf32>
    %594 = arith.divf %592, %593 : vector<8x128xf32>
    %595 = vector.extract_strided_slice %582 {offsets = [0, 256], sizes = [8, 128], strides = [1, 1]} : vector<8x512xf32> to vector<8x128xf32>
    %596 = math.tanh %595 : vector<8x128xf32>
    %597 = vector.extract_strided_slice %582 {offsets = [0, 384], sizes = [8, 128], strides = [1, 1]} : vector<8x512xf32> to vector<8x128xf32>
    %598 = arith.negf %597 : vector<8x128xf32>
    %599 = math.exp %598 : vector<8x128xf32>
    %cst_166 = arith.constant 1.000000e+00 : f32
    %600 = vector.broadcast %cst_166 : f32 to vector<8x128xf32>
    %601 = arith.addf %600, %599 : vector<8x128xf32>
    %602 = arith.divf %600, %601 : vector<8x128xf32>
    %603 = arith.mulf %594, %568 : vector<8x128xf32>
    %604 = arith.mulf %588, %596 : vector<8x128xf32>
    %605 = arith.addf %603, %604 : vector<8x128xf32>
    %606 = math.tanh %605 : vector<8x128xf32>
    %607 = arith.mulf %602, %606 : vector<8x128xf32>
    %608 = arith.truncf %607 : vector<8x128xf32> to vector<8x128xbf16>
    %609 = arith.index_cast %c7_i32_160 : i32 to index
    %c0_167 = arith.constant 0 : index
    %c0_168 = arith.constant 0 : index
    %610 = vector.load %arg21[%609, %c0_167, %c0_168] : memref<8x8x128xbf16, #tpu.memory_space<vmem>>, vector<1x8x128xbf16>
    %611 = vector.shape_cast %610 : vector<1x8x128xbf16> to vector<8x128xbf16>
    %612 = vector.shape_cast %608 : vector<8x128xbf16> to vector<1x8x128xbf16>
    tpu.vector_store %arg21[%609, %c0_167, %c0_168], %612 {strides = array<i32>} : memref<8x8x128xbf16, #tpu.memory_space<vmem>>, vector<1x8x128xbf16>,
    %c7_i32_169 = arith.constant 7 : i32
    %c0_170 = arith.constant 0 : index
    %c0_171 = arith.constant 0 : index
    %c0_172 = arith.constant 0 : index
    %613 = vector.load %arg21[%c0_170, %c0_171, %c0_172] : memref<8x8x128xbf16, #tpu.memory_space<vmem>>, vector<8x8x128xbf16>
    %614 = vector.shape_cast %613 : vector<8x8x128xbf16> to vector<64x128xbf16>
    %c0_173 = arith.constant 0 : index
    %c0_174 = arith.constant 0 : index
    %615 = vector.load %arg10[%c0_173, %c0_174] : memref<128x512xbf16, #tpu.memory_space<vmem>>, vector<128x512xbf16>
    %cst_175 = arith.constant dense<0.000000e+00> : vector<64x512xf32>
    %616 = tpu.matmul %614, %615, %cst_175 {dimension_numbers = #tpu.dot_dimension_numbers<[1], [0], [0], [1], [0, 0, 1, 1], [], []>} : vector<64x128xbf16>, vector<128x512xbf16>, vector<64x512xf32> -> vector<64x512xf32>
    %617 = vector.shape_cast %616 : vector<64x512xf32> to vector<8x8x512xf32>
    %c0_176 = arith.constant 0 : index
    %c0_177 = arith.constant 0 : index
    %618 = vector.load %arg12[%c0_176, %c0_177] : memref<1x512xf32, #tpu.memory_space<vmem>>, vector<1x512xf32>
    %619 = vector.shape_cast %618 : vector<1x512xf32> to vector<1x1x512xf32>
    %620 = vector.broadcast %619 : vector<1x1x512xf32> to vector<8x8x512xf32>
    %621 = arith.addf %617, %620 : vector<8x8x512xf32>
    %622 = arith.truncf %621 : vector<8x8x512xf32> to vector<8x8x512xbf16>
    %c0_178 = arith.constant 0 : index
    %c0_179 = arith.constant 0 : index
    %c0_180 = arith.constant 0 : index
    %623 = vector.load %arg20[%c0_178, %c0_179, %c0_180] : memref<8x8x512xbf16, #tpu.memory_space<vmem>>, vector<8x8x512xbf16>
    tpu.vector_store %arg20[%c0_178, %c0_179, %c0_180], %622 {strides = array<i32>} : memref<8x8x512xbf16, #tpu.memory_space<vmem>>, vector<8x8x512xbf16>,
    %c0_181 = arith.constant 0 : index
    %c0_182 = arith.constant 0 : index
    %624 = vector.load %arg11[%c0_181, %c0_182] : memref<128x512xbf16, #tpu.memory_space<vmem>>, vector<128x512xbf16>
    %c0_183 = arith.constant 0 : index
    %c0_184 = arith.constant 0 : index
    %c0_185 = arith.constant 0 : index
    %625 = vector.load %arg20[%c0_183, %c0_184, %c0_185] : memref<8x8x512xbf16, #tpu.memory_space<vmem>>, vector<1x8x512xbf16>
    %626 = vector.shape_cast %625 : vector<1x8x512xbf16> to vector<8x512xbf16>
    %627 = arith.extf %626 : vector<8x512xbf16> to vector<8x512xf32>
    %cst_186 = arith.constant 0.000000e+00 : f32
    %628 = vector.broadcast %cst_186 : f32 to vector<8x128xf32>
    %629 = vector.extract_strided_slice %627 {offsets = [0, 0], sizes = [8, 128], strides = [1, 1]} : vector<8x512xf32> to vector<8x128xf32>
    %630 = arith.negf %629 : vector<8x128xf32>
    %631 = math.exp %630 : vector<8x128xf32>
    %cst_187 = arith.constant 1.000000e+00 : f32
    %632 = vector.broadcast %cst_187 : f32 to vector<8x128xf32>
    %633 = arith.addf %632, %631 : vector<8x128xf32>
    %634 = arith.divf %632, %633 : vector<8x128xf32>
    %635 = vector.extract_strided_slice %627 {offsets = [0, 128], sizes = [8, 128], strides = [1, 1]} : vector<8x512xf32> to vector<8x128xf32>
    %636 = arith.negf %635 : vector<8x128xf32>
    %637 = math.exp %636 : vector<8x128xf32>
    %cst_188 = arith.constant 1.000000e+00 : f32
    %638 = vector.broadcast %cst_188 : f32 to vector<8x128xf32>
    %639 = arith.addf %638, %637 : vector<8x128xf32>
    %640 = arith.divf %638, %639 : vector<8x128xf32>
    %641 = vector.extract_strided_slice %627 {offsets = [0, 256], sizes = [8, 128], strides = [1, 1]} : vector<8x512xf32> to vector<8x128xf32>
    %642 = math.tanh %641 : vector<8x128xf32>
    %643 = vector.extract_strided_slice %627 {offsets = [0, 384], sizes = [8, 128], strides = [1, 1]} : vector<8x512xf32> to vector<8x128xf32>
    %644 = arith.negf %643 : vector<8x128xf32>
    %645 = math.exp %644 : vector<8x128xf32>
    %cst_189 = arith.constant 1.000000e+00 : f32
    %646 = vector.broadcast %cst_189 : f32 to vector<8x128xf32>
    %647 = arith.addf %646, %645 : vector<8x128xf32>
    %648 = arith.divf %646, %647 : vector<8x128xf32>
    %649 = arith.mulf %640, %628 : vector<8x128xf32>
    %650 = arith.mulf %634, %642 : vector<8x128xf32>
    %651 = arith.addf %649, %650 : vector<8x128xf32>
    %652 = math.tanh %651 : vector<8x128xf32>
    %653 = arith.mulf %648, %652 : vector<8x128xf32>
    %c1_i32_190 = arith.constant 1 : i32
    %654 = arith.index_cast %c1_i32_190 : i32 to index
    %c0_191 = arith.constant 0 : index
    %c0_192 = arith.constant 0 : index
    %655 = vector.load %arg20[%654, %c0_191, %c0_192] : memref<8x8x512xbf16, #tpu.memory_space<vmem>>, vector<1x8x512xbf16>
    %656 = vector.shape_cast %655 : vector<1x8x512xbf16> to vector<8x512xbf16>
    %657 = arith.extf %656 : vector<8x512xbf16> to vector<8x512xf32>
    %658 = arith.truncf %653 : vector<8x128xf32> to vector<8x128xbf16>
    %cst_193 = arith.constant dense<0.000000e+00> : vector<8x512xf32>
    %659 = tpu.matmul %658, %624, %cst_193 {dimension_numbers = #tpu.dot_dimension_numbers<[1], [0], [0], [1], [0, 0, 1, 1], [], []>} : vector<8x128xbf16>, vector<128x512xbf16>, vector<8x512xf32> -> vector<8x512xf32>
    %660 = arith.addf %657, %659 : vector<8x512xf32>
    %661 = vector.extract_strided_slice %660 {offsets = [0, 0], sizes = [8, 128], strides = [1, 1]} : vector<8x512xf32> to vector<8x128xf32>
    %662 = arith.negf %661 : vector<8x128xf32>
    %663 = math.exp %662 : vector<8x128xf32>
    %cst_194 = arith.constant 1.000000e+00 : f32
    %664 = vector.broadcast %cst_194 : f32 to vector<8x128xf32>
    %665 = arith.addf %664, %663 : vector<8x128xf32>
    %666 = arith.divf %664, %665 : vector<8x128xf32>
    %667 = vector.extract_strided_slice %660 {offsets = [0, 128], sizes = [8, 128], strides = [1, 1]} : vector<8x512xf32> to vector<8x128xf32>
    %668 = arith.negf %667 : vector<8x128xf32>
    %669 = math.exp %668 : vector<8x128xf32>
    %cst_195 = arith.constant 1.000000e+00 : f32
    %670 = vector.broadcast %cst_195 : f32 to vector<8x128xf32>
    %671 = arith.addf %670, %669 : vector<8x128xf32>
    %672 = arith.divf %670, %671 : vector<8x128xf32>
    %673 = vector.extract_strided_slice %660 {offsets = [0, 256], sizes = [8, 128], strides = [1, 1]} : vector<8x512xf32> to vector<8x128xf32>
    %674 = math.tanh %673 : vector<8x128xf32>
    %675 = vector.extract_strided_slice %660 {offsets = [0, 384], sizes = [8, 128], strides = [1, 1]} : vector<8x512xf32> to vector<8x128xf32>
    %676 = arith.negf %675 : vector<8x128xf32>
    %677 = math.exp %676 : vector<8x128xf32>
    %cst_196 = arith.constant 1.000000e+00 : f32
    %678 = vector.broadcast %cst_196 : f32 to vector<8x128xf32>
    %679 = arith.addf %678, %677 : vector<8x128xf32>
    %680 = arith.divf %678, %679 : vector<8x128xf32>
    %681 = arith.mulf %672, %651 : vector<8x128xf32>
    %682 = arith.mulf %666, %674 : vector<8x128xf32>
    %683 = arith.addf %681, %682 : vector<8x128xf32>
    %684 = math.tanh %683 : vector<8x128xf32>
    %685 = arith.mulf %680, %684 : vector<8x128xf32>
    %c2_i32_197 = arith.constant 2 : i32
    %686 = arith.index_cast %c2_i32_197 : i32 to index
    %c0_198 = arith.constant 0 : index
    %c0_199 = arith.constant 0 : index
    %687 = vector.load %arg20[%686, %c0_198, %c0_199] : memref<8x8x512xbf16, #tpu.memory_space<vmem>>, vector<1x8x512xbf16>
    %688 = vector.shape_cast %687 : vector<1x8x512xbf16> to vector<8x512xbf16>
    %689 = arith.extf %688 : vector<8x512xbf16> to vector<8x512xf32>
    %690 = arith.truncf %685 : vector<8x128xf32> to vector<8x128xbf16>
    %cst_200 = arith.constant dense<0.000000e+00> : vector<8x512xf32>
    %691 = tpu.matmul %690, %624, %cst_200 {dimension_numbers = #tpu.dot_dimension_numbers<[1], [0], [0], [1], [0, 0, 1, 1], [], []>} : vector<8x128xbf16>, vector<128x512xbf16>, vector<8x512xf32> -> vector<8x512xf32>
    %692 = arith.addf %689, %691 : vector<8x512xf32>
    %693 = vector.extract_strided_slice %692 {offsets = [0, 0], sizes = [8, 128], strides = [1, 1]} : vector<8x512xf32> to vector<8x128xf32>
    %694 = arith.negf %693 : vector<8x128xf32>
    %695 = math.exp %694 : vector<8x128xf32>
    %cst_201 = arith.constant 1.000000e+00 : f32
    %696 = vector.broadcast %cst_201 : f32 to vector<8x128xf32>
    %697 = arith.addf %696, %695 : vector<8x128xf32>
    %698 = arith.divf %696, %697 : vector<8x128xf32>
    %699 = vector.extract_strided_slice %692 {offsets = [0, 128], sizes = [8, 128], strides = [1, 1]} : vector<8x512xf32> to vector<8x128xf32>
    %700 = arith.negf %699 : vector<8x128xf32>
    %701 = math.exp %700 : vector<8x128xf32>
    %cst_202 = arith.constant 1.000000e+00 : f32
    %702 = vector.broadcast %cst_202 : f32 to vector<8x128xf32>
    %703 = arith.addf %702, %701 : vector<8x128xf32>
    %704 = arith.divf %702, %703 : vector<8x128xf32>
    %705 = vector.extract_strided_slice %692 {offsets = [0, 256], sizes = [8, 128], strides = [1, 1]} : vector<8x512xf32> to vector<8x128xf32>
    %706 = math.tanh %705 : vector<8x128xf32>
    %707 = vector.extract_strided_slice %692 {offsets = [0, 384], sizes = [8, 128], strides = [1, 1]} : vector<8x512xf32> to vector<8x128xf32>
    %708 = arith.negf %707 : vector<8x128xf32>
    %709 = math.exp %708 : vector<8x128xf32>
    %cst_203 = arith.constant 1.000000e+00 : f32
    %710 = vector.broadcast %cst_203 : f32 to vector<8x128xf32>
    %711 = arith.addf %710, %709 : vector<8x128xf32>
    %712 = arith.divf %710, %711 : vector<8x128xf32>
    %713 = arith.mulf %704, %683 : vector<8x128xf32>
    %714 = arith.mulf %698, %706 : vector<8x128xf32>
    %715 = arith.addf %713, %714 : vector<8x128xf32>
    %716 = math.tanh %715 : vector<8x128xf32>
    %717 = arith.mulf %712, %716 : vector<8x128xf32>
    %c3_i32_204 = arith.constant 3 : i32
    %718 = arith.index_cast %c3_i32_204 : i32 to index
    %c0_205 = arith.constant 0 : index
    %c0_206 = arith.constant 0 : index
    %719 = vector.load %arg20[%718, %c0_205, %c0_206] : memref<8x8x512xbf16, #tpu.memory_space<vmem>>, vector<1x8x512xbf16>
    %720 = vector.shape_cast %719 : vector<1x8x512xbf16> to vector<8x512xbf16>
    %721 = arith.extf %720 : vector<8x512xbf16> to vector<8x512xf32>
    %722 = arith.truncf %717 : vector<8x128xf32> to vector<8x128xbf16>
    %cst_207 = arith.constant dense<0.000000e+00> : vector<8x512xf32>
    %723 = tpu.matmul %722, %624, %cst_207 {dimension_numbers = #tpu.dot_dimension_numbers<[1], [0], [0], [1], [0, 0, 1, 1], [], []>} : vector<8x128xbf16>, vector<128x512xbf16>, vector<8x512xf32> -> vector<8x512xf32>
    %724 = arith.addf %721, %723 : vector<8x512xf32>
    %725 = vector.extract_strided_slice %724 {offsets = [0, 0], sizes = [8, 128], strides = [1, 1]} : vector<8x512xf32> to vector<8x128xf32>
    %726 = arith.negf %725 : vector<8x128xf32>
    %727 = math.exp %726 : vector<8x128xf32>
    %cst_208 = arith.constant 1.000000e+00 : f32
    %728 = vector.broadcast %cst_208 : f32 to vector<8x128xf32>
    %729 = arith.addf %728, %727 : vector<8x128xf32>
    %730 = arith.divf %728, %729 : vector<8x128xf32>
    %731 = vector.extract_strided_slice %724 {offsets = [0, 128], sizes = [8, 128], strides = [1, 1]} : vector<8x512xf32> to vector<8x128xf32>
    %732 = arith.negf %731 : vector<8x128xf32>
    %733 = math.exp %732 : vector<8x128xf32>
    %cst_209 = arith.constant 1.000000e+00 : f32
    %734 = vector.broadcast %cst_209 : f32 to vector<8x128xf32>
    %735 = arith.addf %734, %733 : vector<8x128xf32>
    %736 = arith.divf %734, %735 : vector<8x128xf32>
    %737 = vector.extract_strided_slice %724 {offsets = [0, 256], sizes = [8, 128], strides = [1, 1]} : vector<8x512xf32> to vector<8x128xf32>
    %738 = math.tanh %737 : vector<8x128xf32>
    %739 = vector.extract_strided_slice %724 {offsets = [0, 384], sizes = [8, 128], strides = [1, 1]} : vector<8x512xf32> to vector<8x128xf32>
    %740 = arith.negf %739 : vector<8x128xf32>
    %741 = math.exp %740 : vector<8x128xf32>
    %cst_210 = arith.constant 1.000000e+00 : f32
    %742 = vector.broadcast %cst_210 : f32 to vector<8x128xf32>
    %743 = arith.addf %742, %741 : vector<8x128xf32>
    %744 = arith.divf %742, %743 : vector<8x128xf32>
    %745 = arith.mulf %736, %715 : vector<8x128xf32>
    %746 = arith.mulf %730, %738 : vector<8x128xf32>
    %747 = arith.addf %745, %746 : vector<8x128xf32>
    %748 = math.tanh %747 : vector<8x128xf32>
    %749 = arith.mulf %744, %748 : vector<8x128xf32>
    %c4_i32_211 = arith.constant 4 : i32
    %750 = arith.index_cast %c4_i32_211 : i32 to index
    %c0_212 = arith.constant 0 : index
    %c0_213 = arith.constant 0 : index
    %751 = vector.load %arg20[%750, %c0_212, %c0_213] : memref<8x8x512xbf16, #tpu.memory_space<vmem>>, vector<1x8x512xbf16>
    %752 = vector.shape_cast %751 : vector<1x8x512xbf16> to vector<8x512xbf16>
    %753 = arith.extf %752 : vector<8x512xbf16> to vector<8x512xf32>
    %754 = arith.truncf %749 : vector<8x128xf32> to vector<8x128xbf16>
    %cst_214 = arith.constant dense<0.000000e+00> : vector<8x512xf32>
    %755 = tpu.matmul %754, %624, %cst_214 {dimension_numbers = #tpu.dot_dimension_numbers<[1], [0], [0], [1], [0, 0, 1, 1], [], []>} : vector<8x128xbf16>, vector<128x512xbf16>, vector<8x512xf32> -> vector<8x512xf32>
    %756 = arith.addf %753, %755 : vector<8x512xf32>
    %757 = vector.extract_strided_slice %756 {offsets = [0, 0], sizes = [8, 128], strides = [1, 1]} : vector<8x512xf32> to vector<8x128xf32>
    %758 = arith.negf %757 : vector<8x128xf32>
    %759 = math.exp %758 : vector<8x128xf32>
    %cst_215 = arith.constant 1.000000e+00 : f32
    %760 = vector.broadcast %cst_215 : f32 to vector<8x128xf32>
    %761 = arith.addf %760, %759 : vector<8x128xf32>
    %762 = arith.divf %760, %761 : vector<8x128xf32>
    %763 = vector.extract_strided_slice %756 {offsets = [0, 128], sizes = [8, 128], strides = [1, 1]} : vector<8x512xf32> to vector<8x128xf32>
    %764 = arith.negf %763 : vector<8x128xf32>
    %765 = math.exp %764 : vector<8x128xf32>
    %cst_216 = arith.constant 1.000000e+00 : f32
    %766 = vector.broadcast %cst_216 : f32 to vector<8x128xf32>
    %767 = arith.addf %766, %765 : vector<8x128xf32>
    %768 = arith.divf %766, %767 : vector<8x128xf32>
    %769 = vector.extract_strided_slice %756 {offsets = [0, 256], sizes = [8, 128], strides = [1, 1]} : vector<8x512xf32> to vector<8x128xf32>
    %770 = math.tanh %769 : vector<8x128xf32>
    %771 = vector.extract_strided_slice %756 {offsets = [0, 384], sizes = [8, 128], strides = [1, 1]} : vector<8x512xf32> to vector<8x128xf32>
    %772 = arith.negf %771 : vector<8x128xf32>
    %773 = math.exp %772 : vector<8x128xf32>
    %cst_217 = arith.constant 1.000000e+00 : f32
    %774 = vector.broadcast %cst_217 : f32 to vector<8x128xf32>
    %775 = arith.addf %774, %773 : vector<8x128xf32>
    %776 = arith.divf %774, %775 : vector<8x128xf32>
    %777 = arith.mulf %768, %747 : vector<8x128xf32>
    %778 = arith.mulf %762, %770 : vector<8x128xf32>
    %779 = arith.addf %777, %778 : vector<8x128xf32>
    %780 = math.tanh %779 : vector<8x128xf32>
    %781 = arith.mulf %776, %780 : vector<8x128xf32>
    %c5_i32_218 = arith.constant 5 : i32
    %782 = arith.index_cast %c5_i32_218 : i32 to index
    %c0_219 = arith.constant 0 : index
    %c0_220 = arith.constant 0 : index
    %783 = vector.load %arg20[%782, %c0_219, %c0_220] : memref<8x8x512xbf16, #tpu.memory_space<vmem>>, vector<1x8x512xbf16>
    %784 = vector.shape_cast %783 : vector<1x8x512xbf16> to vector<8x512xbf16>
    %785 = arith.extf %784 : vector<8x512xbf16> to vector<8x512xf32>
    %786 = arith.truncf %781 : vector<8x128xf32> to vector<8x128xbf16>
    %cst_221 = arith.constant dense<0.000000e+00> : vector<8x512xf32>
    %787 = tpu.matmul %786, %624, %cst_221 {dimension_numbers = #tpu.dot_dimension_numbers<[1], [0], [0], [1], [0, 0, 1, 1], [], []>} : vector<8x128xbf16>, vector<128x512xbf16>, vector<8x512xf32> -> vector<8x512xf32>
    %788 = arith.addf %785, %787 : vector<8x512xf32>
    %789 = vector.extract_strided_slice %788 {offsets = [0, 0], sizes = [8, 128], strides = [1, 1]} : vector<8x512xf32> to vector<8x128xf32>
    %790 = arith.negf %789 : vector<8x128xf32>
    %791 = math.exp %790 : vector<8x128xf32>
    %cst_222 = arith.constant 1.000000e+00 : f32
    %792 = vector.broadcast %cst_222 : f32 to vector<8x128xf32>
    %793 = arith.addf %792, %791 : vector<8x128xf32>
    %794 = arith.divf %792, %793 : vector<8x128xf32>
    %795 = vector.extract_strided_slice %788 {offsets = [0, 128], sizes = [8, 128], strides = [1, 1]} : vector<8x512xf32> to vector<8x128xf32>
    %796 = arith.negf %795 : vector<8x128xf32>
    %797 = math.exp %796 : vector<8x128xf32>
    %cst_223 = arith.constant 1.000000e+00 : f32
    %798 = vector.broadcast %cst_223 : f32 to vector<8x128xf32>
    %799 = arith.addf %798, %797 : vector<8x128xf32>
    %800 = arith.divf %798, %799 : vector<8x128xf32>
    %801 = vector.extract_strided_slice %788 {offsets = [0, 256], sizes = [8, 128], strides = [1, 1]} : vector<8x512xf32> to vector<8x128xf32>
    %802 = math.tanh %801 : vector<8x128xf32>
    %803 = vector.extract_strided_slice %788 {offsets = [0, 384], sizes = [8, 128], strides = [1, 1]} : vector<8x512xf32> to vector<8x128xf32>
    %804 = arith.negf %803 : vector<8x128xf32>
    %805 = math.exp %804 : vector<8x128xf32>
    %cst_224 = arith.constant 1.000000e+00 : f32
    %806 = vector.broadcast %cst_224 : f32 to vector<8x128xf32>
    %807 = arith.addf %806, %805 : vector<8x128xf32>
    %808 = arith.divf %806, %807 : vector<8x128xf32>
    %809 = arith.mulf %800, %779 : vector<8x128xf32>
    %810 = arith.mulf %794, %802 : vector<8x128xf32>
    %811 = arith.addf %809, %810 : vector<8x128xf32>
    %812 = math.tanh %811 : vector<8x128xf32>
    %813 = arith.mulf %808, %812 : vector<8x128xf32>
    %c6_i32_225 = arith.constant 6 : i32
    %814 = arith.index_cast %c6_i32_225 : i32 to index
    %c0_226 = arith.constant 0 : index
    %c0_227 = arith.constant 0 : index
    %815 = vector.load %arg20[%814, %c0_226, %c0_227] : memref<8x8x512xbf16, #tpu.memory_space<vmem>>, vector<1x8x512xbf16>
    %816 = vector.shape_cast %815 : vector<1x8x512xbf16> to vector<8x512xbf16>
    %817 = arith.extf %816 : vector<8x512xbf16> to vector<8x512xf32>
    %818 = arith.truncf %813 : vector<8x128xf32> to vector<8x128xbf16>
    %cst_228 = arith.constant dense<0.000000e+00> : vector<8x512xf32>
    %819 = tpu.matmul %818, %624, %cst_228 {dimension_numbers = #tpu.dot_dimension_numbers<[1], [0], [0], [1], [0, 0, 1, 1], [], []>} : vector<8x128xbf16>, vector<128x512xbf16>, vector<8x512xf32> -> vector<8x512xf32>
    %820 = arith.addf %817, %819 : vector<8x512xf32>
    %821 = vector.extract_strided_slice %820 {offsets = [0, 0], sizes = [8, 128], strides = [1, 1]} : vector<8x512xf32> to vector<8x128xf32>
    %822 = arith.negf %821 : vector<8x128xf32>
    %823 = math.exp %822 : vector<8x128xf32>
    %cst_229 = arith.constant 1.000000e+00 : f32
    %824 = vector.broadcast %cst_229 : f32 to vector<8x128xf32>
    %825 = arith.addf %824, %823 : vector<8x128xf32>
    %826 = arith.divf %824, %825 : vector<8x128xf32>
    %827 = vector.extract_strided_slice %820 {offsets = [0, 128], sizes = [8, 128], strides = [1, 1]} : vector<8x512xf32> to vector<8x128xf32>
    %828 = arith.negf %827 : vector<8x128xf32>
    %829 = math.exp %828 : vector<8x128xf32>
    %cst_230 = arith.constant 1.000000e+00 : f32
    %830 = vector.broadcast %cst_230 : f32 to vector<8x128xf32>
    %831 = arith.addf %830, %829 : vector<8x128xf32>
    %832 = arith.divf %830, %831 : vector<8x128xf32>
    %833 = vector.extract_strided_slice %820 {offsets = [0, 256], sizes = [8, 128], strides = [1, 1]} : vector<8x512xf32> to vector<8x128xf32>
    %834 = math.tanh %833 : vector<8x128xf32>
    %835 = vector.extract_strided_slice %820 {offsets = [0, 384], sizes = [8, 128], strides = [1, 1]} : vector<8x512xf32> to vector<8x128xf32>
    %836 = arith.negf %835 : vector<8x128xf32>
    %837 = math.exp %836 : vector<8x128xf32>
    %cst_231 = arith.constant 1.000000e+00 : f32
    %838 = vector.broadcast %cst_231 : f32 to vector<8x128xf32>
    %839 = arith.addf %838, %837 : vector<8x128xf32>
    %840 = arith.divf %838, %839 : vector<8x128xf32>
    %841 = arith.mulf %832, %811 : vector<8x128xf32>
    %842 = arith.mulf %826, %834 : vector<8x128xf32>
    %843 = arith.addf %841, %842 : vector<8x128xf32>
    %844 = math.tanh %843 : vector<8x128xf32>
    %845 = arith.mulf %840, %844 : vector<8x128xf32>
    %c7_i32_232 = arith.constant 7 : i32
    %846 = arith.index_cast %c7_i32_232 : i32 to index
    %c0_233 = arith.constant 0 : index
    %c0_234 = arith.constant 0 : index
    %847 = vector.load %arg20[%846, %c0_233, %c0_234] : memref<8x8x512xbf16, #tpu.memory_space<vmem>>, vector<1x8x512xbf16>
    %848 = vector.shape_cast %847 : vector<1x8x512xbf16> to vector<8x512xbf16>
    %849 = arith.extf %848 : vector<8x512xbf16> to vector<8x512xf32>
    %850 = arith.truncf %845 : vector<8x128xf32> to vector<8x128xbf16>
    %cst_235 = arith.constant dense<0.000000e+00> : vector<8x512xf32>
    %851 = tpu.matmul %850, %624, %cst_235 {dimension_numbers = #tpu.dot_dimension_numbers<[1], [0], [0], [1], [0, 0, 1, 1], [], []>} : vector<8x128xbf16>, vector<128x512xbf16>, vector<8x512xf32> -> vector<8x512xf32>
    %852 = arith.addf %849, %851 : vector<8x512xf32>
    %853 = vector.extract_strided_slice %852 {offsets = [0, 0], sizes = [8, 128], strides = [1, 1]} : vector<8x512xf32> to vector<8x128xf32>
    %854 = arith.negf %853 : vector<8x128xf32>
    %855 = math.exp %854 : vector<8x128xf32>
    %cst_236 = arith.constant 1.000000e+00 : f32
    %856 = vector.broadcast %cst_236 : f32 to vector<8x128xf32>
    %857 = arith.addf %856, %855 : vector<8x128xf32>
    %858 = arith.divf %856, %857 : vector<8x128xf32>
    %859 = vector.extract_strided_slice %852 {offsets = [0, 128], sizes = [8, 128], strides = [1, 1]} : vector<8x512xf32> to vector<8x128xf32>
    %860 = arith.negf %859 : vector<8x128xf32>
    %861 = math.exp %860 : vector<8x128xf32>
    %cst_237 = arith.constant 1.000000e+00 : f32
    %862 = vector.broadcast %cst_237 : f32 to vector<8x128xf32>
    %863 = arith.addf %862, %861 : vector<8x128xf32>
    %864 = arith.divf %862, %863 : vector<8x128xf32>
    %865 = vector.extract_strided_slice %852 {offsets = [0, 256], sizes = [8, 128], strides = [1, 1]} : vector<8x512xf32> to vector<8x128xf32>
    %866 = math.tanh %865 : vector<8x128xf32>
    %867 = vector.extract_strided_slice %852 {offsets = [0, 384], sizes = [8, 128], strides = [1, 1]} : vector<8x512xf32> to vector<8x128xf32>
    %868 = arith.negf %867 : vector<8x128xf32>
    %869 = math.exp %868 : vector<8x128xf32>
    %cst_238 = arith.constant 1.000000e+00 : f32
    %870 = vector.broadcast %cst_238 : f32 to vector<8x128xf32>
    %871 = arith.addf %870, %869 : vector<8x128xf32>
    %872 = arith.divf %870, %871 : vector<8x128xf32>
    %873 = arith.mulf %864, %843 : vector<8x128xf32>
    %874 = arith.mulf %858, %866 : vector<8x128xf32>
    %875 = arith.addf %873, %874 : vector<8x128xf32>
    %876 = math.tanh %875 : vector<8x128xf32>
    %877 = arith.mulf %872, %876 : vector<8x128xf32>
    %c7_i32_239 = arith.constant 7 : i32
    %878 = arith.truncf %877 : vector<8x128xf32> to vector<8x128xbf16>
    %c0_240 = arith.constant 0 : index
    %c0_241 = arith.constant 0 : index
    %879 = vector.load %arg13[%c0_240, %c0_241] : memref<128x128xbf16, #tpu.memory_space<vmem>>, vector<128x128xbf16>
    %cst_242 = arith.constant dense<0.000000e+00> : vector<8x128xf32>
    %880 = tpu.matmul %878, %879, %cst_242 {dimension_numbers = #tpu.dot_dimension_numbers<[1], [0], [0], [1], [0, 0, 1, 1], [], []>} : vector<8x128xbf16>, vector<128x128xbf16>, vector<8x128xf32> -> vector<8x128xf32>
    %c0_243 = arith.constant 0 : index
    %c0_244 = arith.constant 0 : index
    %881 = vector.load %arg14[%c0_243, %c0_244] : memref<1x128xf32, #tpu.memory_space<vmem>>, vector<1x128xf32>
    %882 = vector.broadcast %881 : vector<1x128xf32> to vector<8x128xf32>
    %883 = arith.addf %880, %882 : vector<8x128xf32>
    %cst_245 = arith.constant 0.000000e+00 : f32
    %884 = vector.broadcast %cst_245 : f32 to vector<8x128xf32>
    %885 = arith.cmpf oge, %883, %884 : vector<8x128xf32>
    %cst_246 = arith.constant 2.000000e-01 : f32
    %886 = vector.broadcast %cst_246 : f32 to vector<8x128xf32>
    %887 = arith.mulf %886, %883 : vector<8x128xf32>
    %888 = arith.select %885, %883, %887 : vector<8x128xi1>, vector<8x128xf32>
    %889 = arith.truncf %888 : vector<8x128xf32> to vector<8x128xbf16>
    %c0_247 = arith.constant 0 : index
    %c0_248 = arith.constant 0 : index
    %890 = vector.load %arg15[%c0_247, %c0_248] : memref<128x128xbf16, #tpu.memory_space<vmem>>, vector<128x128xbf16>
    %cst_249 = arith.constant dense<0.000000e+00> : vector<8x128xf32>
    %891 = tpu.matmul %889, %890, %cst_249 {dimension_numbers = #tpu.dot_dimension_numbers<[1], [0], [0], [1], [0, 0, 1, 1], [], []>} : vector<8x128xbf16>, vector<128x128xbf16>, vector<8x128xf32> -> vector<8x128xf32>
    %c0_250 = arith.constant 0 : index
    %c0_251 = arith.constant 0 : index
    %892 = vector.load %arg16[%c0_250, %c0_251] : memref<1x128xf32, #tpu.memory_space<vmem>>, vector<1x128xf32>
    %893 = vector.broadcast %892 : vector<1x128xf32> to vector<8x128xf32>
    %894 = arith.addf %891, %893 : vector<8x128xf32>
    %cst_252 = arith.constant 0.000000e+00 : f32
    %895 = vector.broadcast %cst_252 : f32 to vector<8x128xf32>
    %896 = arith.cmpf oge, %894, %895 : vector<8x128xf32>
    %cst_253 = arith.constant 2.000000e-01 : f32
    %897 = vector.broadcast %cst_253 : f32 to vector<8x128xf32>
    %898 = arith.mulf %897, %894 : vector<8x128xf32>
    %899 = arith.select %896, %894, %898 : vector<8x128xi1>, vector<8x128xf32>
    %900 = arith.truncf %899 : vector<8x128xf32> to vector<8x128xbf16>
    %c0_254 = arith.constant 0 : index
    %c0_255 = arith.constant 0 : index
    %901 = vector.load %arg17[%c0_254, %c0_255] : memref<128x128xbf16, #tpu.memory_space<vmem>>, vector<128x128xbf16>
    %cst_256 = arith.constant dense<0.000000e+00> : vector<8x128xf32>
    %902 = tpu.matmul %900, %901, %cst_256 {dimension_numbers = #tpu.dot_dimension_numbers<[1], [0], [0], [1], [0, 0, 1, 1], [], []>} : vector<8x128xbf16>, vector<128x128xbf16>, vector<8x128xf32> -> vector<8x128xf32>
    %c0_257 = arith.constant 0 : index
    %c0_258 = arith.constant 0 : index
    %903 = vector.load %arg18[%c0_257, %c0_258] : memref<1x128xf32, #tpu.memory_space<vmem>>, vector<1x128xf32>
    %904 = vector.broadcast %903 : vector<1x128xf32> to vector<8x128xf32>
    %905 = arith.addf %902, %904 : vector<8x128xf32>
    %c0_259 = arith.constant 0 : index
    %c0_260 = arith.constant 0 : index
    %906 = vector.load %arg19[%c0_259, %c0_260] : memref<8x128xf32, #tpu.memory_space<vmem>>, vector<8x128xf32>
    tpu.vector_store %arg19[%c0_259, %c0_260], %905 {strides = array<i32>} : memref<8x128xf32, #tpu.memory_space<vmem>>, vector<8x128xf32>,
    return
  }
  func.func @transform_0(%arg0: i32) -> (i32, i32, i32) {
    %c0_i32 = arith.constant 0 : i32
    %c0_i32_0 = arith.constant 0 : i32
    %c0_i32_1 = arith.constant 0 : i32
    return %c0_i32, %arg0, %c0_i32_0 : i32, i32, i32
  }
  func.func @transform_1(%arg0: i32) -> (i32, i32) {
    %c0_i32 = arith.constant 0 : i32
    %c0_i32_0 = arith.constant 0 : i32
    return %arg0, %c0_i32 : i32, i32
  }
  func.func @transform_2(%arg0: i32) -> (i32, i32) {
    %c0_i32 = arith.constant 0 : i32
    %c0_i32_0 = arith.constant 0 : i32
    %c0_i32_1 = arith.constant 0 : i32
    return %c0_i32, %c0_i32_0 : i32, i32
  }
  func.func @transform_3(%arg0: i32) -> (i32, i32) {
    %c0_i32 = arith.constant 0 : i32
    %c0_i32_0 = arith.constant 0 : i32
    %c0_i32_1 = arith.constant 0 : i32
    return %c0_i32, %c0_i32_0 : i32, i32
  }
  func.func @transform_4(%arg0: i32) -> (i32, i32) {
    %c0_i32 = arith.constant 0 : i32
    %c0_i32_0 = arith.constant 0 : i32
    %c0_i32_1 = arith.constant 0 : i32
    return %c0_i32, %c0_i32_0 : i32, i32
  }
  func.func @transform_5(%arg0: i32) -> (i32, i32) {
    %c0_i32 = arith.constant 0 : i32
    %c0_i32_0 = arith.constant 0 : i32
    %c0_i32_1 = arith.constant 0 : i32
    return %c0_i32, %c0_i32_0 : i32, i32
  }
  func.func @transform_6(%arg0: i32) -> (i32, i32) {
    %c0_i32 = arith.constant 0 : i32
    %c0_i32_0 = arith.constant 0 : i32
    %c0_i32_1 = arith.constant 0 : i32
    return %c0_i32, %c0_i32_0 : i32, i32
  }
  func.func @transform_7(%arg0: i32) -> (i32, i32) {
    %c0_i32 = arith.constant 0 : i32
    %c0_i32_0 = arith.constant 0 : i32
    %c0_i32_1 = arith.constant 0 : i32
    return %c0_i32, %c0_i32_0 : i32, i32
  }
  func.func @transform_8(%arg0: i32) -> (i32, i32) {
    %c0_i32 = arith.constant 0 : i32
    %c0_i32_0 = arith.constant 0 : i32
    %c0_i32_1 = arith.constant 0 : i32
    return %c0_i32, %c0_i32_0 : i32, i32
  }
  func.func @transform_9(%arg0: i32) -> (i32, i32) {
    %c0_i32 = arith.constant 0 : i32
    %c0_i32_0 = arith.constant 0 : i32
    %c0_i32_1 = arith.constant 0 : i32
    return %c0_i32, %c0_i32_0 : i32, i32
  }
  func.func @transform_10(%arg0: i32) -> (i32, i32) {
    %c0_i32 = arith.constant 0 : i32
    %c0_i32_0 = arith.constant 0 : i32
    %c0_i32_1 = arith.constant 0 : i32
    return %c0_i32, %c0_i32_0 : i32, i32
  }
  func.func @transform_11(%arg0: i32) -> (i32, i32) {
    %c0_i32 = arith.constant 0 : i32
    %c0_i32_0 = arith.constant 0 : i32
    %c0_i32_1 = arith.constant 0 : i32
    return %c0_i32, %c0_i32_0 : i32, i32
  }
  func.func @transform_12(%arg0: i32) -> (i32, i32) {
    %c0_i32 = arith.constant 0 : i32
    %c0_i32_0 = arith.constant 0 : i32
    %c0_i32_1 = arith.constant 0 : i32
    return %c0_i32, %c0_i32_0 : i32, i32
  }
  func.func @transform_13(%arg0: i32) -> (i32, i32) {
    %c0_i32 = arith.constant 0 : i32
    %c0_i32_0 = arith.constant 0 : i32
    %c0_i32_1 = arith.constant 0 : i32
    return %c0_i32, %c0_i32_0 : i32, i32
  }
  func.func @transform_14(%arg0: i32) -> (i32, i32) {
    %c0_i32 = arith.constant 0 : i32
    %c0_i32_0 = arith.constant 0 : i32
    %c0_i32_1 = arith.constant 0 : i32
    return %c0_i32, %c0_i32_0 : i32, i32
  }
  func.func @transform_15(%arg0: i32) -> (i32, i32) {
    %c0_i32 = arith.constant 0 : i32
    %c0_i32_0 = arith.constant 0 : i32
    %c0_i32_1 = arith.constant 0 : i32
    return %c0_i32, %c0_i32_0 : i32, i32
  }
  func.func @transform_16(%arg0: i32) -> (i32, i32) {
    %c0_i32 = arith.constant 0 : i32
    %c0_i32_0 = arith.constant 0 : i32
    %c0_i32_1 = arith.constant 0 : i32
    return %c0_i32, %c0_i32_0 : i32, i32
  }
  func.func @transform_17(%arg0: i32) -> (i32, i32) {
    %c0_i32 = arith.constant 0 : i32
    %c0_i32_0 = arith.constant 0 : i32
    %c0_i32_1 = arith.constant 0 : i32
    return %c0_i32, %c0_i32_0 : i32, i32
  }
  func.func @transform_18(%arg0: i32) -> (i32, i32) {
    %c0_i32 = arith.constant 0 : i32
    %c0_i32_0 = arith.constant 0 : i32
    return %arg0, %c0_i32 : i32, i32
  }
}

</mosaic_0001>

<llo_original>
// kernel: discriminator_forward.1
$region0: #{discriminator_forward.1}
  #allocation0 [shape = 'u32[]', space=smem, size = 0x4, offset = 0x4, fixed_abs, tag = 'smem constant byte address 0x4 - core index']
  #allocation1 [shape = 'u32[144,128]{1,0:T(1,128)}', space=vmem, size = 0x12000, scoped, tag = 'internal scratch']
  #allocation2 [shape = 'bf16[8,8,512]{2,1,0:T(8,128)(2,1)}', space=vmem, size = 0x10000, scoped, tag = 'scratch operand']
  #allocation3 [shape = 'bf16[8,8,128]{2,1,0:T(8,128)(2,1)}', space=vmem, size = 0x4000, scoped, tag = 'scratch operand']
  %s0 = inlined_call_operand.vmem [shape: bf16[8,8,16], index: 0, kind: input, shape index: {}]
  %s1 = inlined_call_operand.vmem [shape: bf16[8,4], index: 1, kind: input, shape index: {}]
  %s2 = inlined_call_operand.hbm [shape: bf16[16,512], index: 2, kind: input, shape index: {}]
  %s3 = inlined_call_operand.hbm [shape: bf16[4,512], index: 3, kind: input, shape index: {}]
  %s4 = inlined_call_operand.hbm [shape: bf16[128,512], index: 4, kind: input, shape index: {}]
  %s5 = inlined_call_operand.hbm [shape: f32[1,512], index: 5, kind: input, shape index: {}]
  %s6 = inlined_call_operand.hbm [shape: bf16[128,512], index: 6, kind: input, shape index: {}]
  %s7 = inlined_call_operand.hbm [shape: bf16[128,512], index: 7, kind: input, shape index: {}]
  %s8 = inlined_call_operand.hbm [shape: f32[1,512], index: 8, kind: input, shape index: {}]
  %s9 = inlined_call_operand.hbm [shape: bf16[128,512], index: 9, kind: input, shape index: {}]
  %s10 = inlined_call_operand.hbm [shape: bf16[128,512], index: 10, kind: input, shape index: {}]
  %s11 = inlined_call_operand.hbm [shape: f32[1,512], index: 11, kind: input, shape index: {}]
  %s12 = inlined_call_operand.vmem [shape: bf16[128,128], index: 12, kind: input, shape index: {}]
  %s13 = inlined_call_operand.vmem [shape: f32[1,128], index: 13, kind: input, shape index: {}]
  %s14 = inlined_call_operand.vmem [shape: bf16[128,128], index: 14, kind: input, shape index: {}]
  %s15 = inlined_call_operand.hbm [shape: f32[1,128], index: 15, kind: input, shape index: {}]
  %s16 = inlined_call_operand.hbm [shape: bf16[128,128], index: 16, kind: input, shape index: {}]
  %s17 = inlined_call_operand.hbm [shape: f32[1,128], index: 17, kind: input, shape index: {}]
  %s18 = inlined_call_operand.vmem [shape: f32[8,128], index: 18, kind: output, shape index: {}]
  %s19 = sld [smem:[#allocation0]]
  $region134: #{discriminator_forward.1} parent=0
    _
  %s21 = ssub.s32 1, %s19
  %s22 = scalar_select 0, %s21, %s19
  $region1: #{discriminator_forward.1} parent=0
    #allocation4 [shape = 'u8[16384]{0}', space=vmem, size = 0x4000, scoped, tag = 'input window, operand 2, single buffered']
    #allocation5 [shape = 's32[1]{0}', space=sflag, size = 0x4, scoped, tag = 'scoped memory for discriminator_forward.1']
    #allocation6 [shape = 'u8[4096]{0}', space=vmem, size = 0x1000, scoped, tag = 'input window, operand 3, single buffered']
    #allocation7 [shape = 's32[1]{0}', space=sflag, size = 0x4, scoped, tag = 'scoped memory for discriminator_forward.1']
    #allocation8 [shape = 'u8[131072]{0}', space=vmem, size = 0x20000, scoped, tag = 'input window, operand 4, single buffered']
    #allocation9 [shape = 'u8[2048]{0}', space=vmem, size = 0x800, scoped, tag = 'input window, operand 5, single buffered']
    #allocation10 [shape = 's32[1]{0}', space=sflag, size = 0x4, scoped, tag = 'scoped memory for discriminator_forward.1']
    #allocation11 [shape = 'u8[131072]{0}', space=vmem, size = 0x20000, scoped, tag = 'input window, operand 6, single buffered']
    #allocation12 [shape = 'u8[131072]{0}', space=vmem, size = 0x20000, scoped, tag = 'input window, operand 7, single buffered']
    #allocation13 [shape = 's32[1]{0}', space=sflag, size = 0x4, scoped, tag = 'scoped memory for discriminator_forward.1']
    #allocation14 [shape = 'u8[2048]{0}', space=vmem, size = 0x800, scoped, tag = 'input window, operand 8, single buffered']
    #allocation15 [shape = 'u8[131072]{0}', space=vmem, size = 0x20000, scoped, tag = 'input window, operand 9, single buffered']
    #allocation16 [shape = 's32[1]{0}', space=sflag, size = 0x4, scoped, tag = 'scoped memory for discriminator_forward.1']
    #allocation17 [shape = 'u8[131072]{0}', space=vmem, size = 0x20000, scoped, tag = 'input window, operand 10, single buffered']
    #allocation18 [shape = 'u8[2048]{0}', space=vmem, size = 0x800, scoped, tag = 'input window, operand 11, single buffered']
    #allocation19 [shape = 's32[1]{0}', space=sflag, size = 0x4, scoped, tag = 'scoped memory for discriminator_forward.1']
    #allocation20 [shape = 'u8[512]{0}', space=vmem, size = 0x400, scoped, tag = 'input window, operand 15, single buffered']
    #allocation21 [shape = 'u8[32768]{0}', space=vmem, size = 0x8000, scoped, tag = 'input window, operand 16, single buffered']
    #allocation22 [shape = 's32[1]{0}', space=sflag, size = 0x4, scoped, tag = 'scoped memory for discriminator_forward.1']
    #allocation23 [shape = 'u8[512]{0}', space=vmem, size = 0x400, scoped, tag = 'input window, operand 17, single buffered']
    %23 = vsyncpa [#allocation5], 0
    %24 = vsyncpa [#allocation7], 0
    %25 = vsyncpa [#allocation10], 0
    %26 = vsyncpa [#allocation13], 0
    %27 = vsyncpa [#allocation16], 0
    %28 = vsyncpa [#allocation19], 0
    %29 = vsyncpa [#allocation22], 0
    // Predicated region
    $region2: #{discriminator_forward.1} parent=1 // pred_check
      _
    $region3: #{discriminator_forward.1} parent=1 // pred_check_branch
      %31 = sbr.rel (0) target = $region5
    $region4: #{discriminator_forward.1} parent=1 // pred_region
      _
    $region5: #{discriminator_forward.1} parent=1 // pred_fallthru
      _
    // Predicated region
    $region6: #{discriminator_forward.1} parent=1 // pred_check
      _
    $region7: #{discriminator_forward.1} parent=1 // pred_check_branch
      %33 = sbr.rel (0) target = $region9
    $region8: #{discriminator_forward.1} parent=1 // pred_region
      _
    $region9: #{discriminator_forward.1} parent=1 // pred_fallthru
      _
    // Predicated region
    $region10: #{discriminator_forward.1} parent=1 // pred_check
      _
    $region11: #{discriminator_forward.1} parent=1 // pred_check_branch
      %35 = sbr.rel (0) target = $region13
    $region12: #{discriminator_forward.1} parent=1 // pred_region
      %s37 = ssub.s32 512, 512
      %38 = vsyncadd [#allocation5], %s37
      %s39 = sshll.u32 [#allocation4], 4
      %s40 = int_to_ptr.vmem [resolvable:$true] %s39
      %45 = dma.hbm_to_vmem [thread:$0]  %s2, 512, %s40, [#allocation5], 256, 256, 16
    $region13: #{discriminator_forward.1} parent=1 // pred_fallthru
      _
    // Predicated region
    $region14: #{discriminator_forward.1} parent=1 // pred_check
      _
    $region15: #{discriminator_forward.1} parent=1 // pred_check_branch
      %47 = sbr.rel (0) target = $region17
    $region16: #{discriminator_forward.1} parent=1 // pred_region
      %s49 = ssub.s32 128, 128
      %50 = vsyncadd [#allocation7], %s49
      %s52 = sshll.u32 [#allocation6], 4
      %s53 = int_to_ptr.vmem [resolvable:$true] %s52
      %55 = dma.hbm_to_vmem [thread:$0]  %s3, 128, %s53, [#allocation7]
    $region17: #{discriminator_forward.1} parent=1 // pred_fallthru
      _
    // Predicated region
    $region18: #{discriminator_forward.1} parent=1 // pred_check
      _
    $region19: #{discriminator_forward.1} parent=1 // pred_check_branch
      %57 = sbr.rel (0) target = $region21
    $region20: #{discriminator_forward.1} parent=1 // pred_region
      %s59 = ssub.s32 4096, 4096
      %60 = vsyncadd [#allocation7], %s59
      %s61 = sshll.u32 [#allocation8], 4
      %s62 = int_to_ptr.vmem [resolvable:$true] %s61
      %67 = dma.hbm_to_vmem [thread:$0]  %s4, 4096, %s62, [#allocation7], 256, 256, 16
    $region21: #{discriminator_forward.1} parent=1 // pred_fallthru
      _
    // Predicated region
    $region22: #{discriminator_forward.1} parent=1 // pred_check
      _
    $region23: #{discriminator_forward.1} parent=1 // pred_check_branch
      %69 = sbr.rel (0) target = $region25
    $region24: #{discriminator_forward.1} parent=1 // pred_region
      %s71 = ssub.s32 64, 64
      %72 = vsyncadd [#allocation10], %s71
      %s74 = sshll.u32 [#allocation9], 4
      %s75 = int_to_ptr.vmem [resolvable:$true] %s74
      %77 = dma.hbm_to_vmem [thread:$0]  %s5, 64, %s75, [#allocation10]
    $region25: #{discriminator_forward.1} parent=1 // pred_fallthru
      _
    // Predicated region
    $region26: #{discriminator_forward.1} parent=1 // pred_check
      _
    $region27: #{discriminator_forward.1} parent=1 // pred_check_branch
      %79 = sbr.rel (0) target = $region29
    $region28: #{discriminator_forward.1} parent=1 // pred_region
      %s81 = ssub.s32 4096, 4096
      %82 = vsyncadd [#allocation10], %s81
      %s83 = sshll.u32 [#allocation11], 4
      %s84 = int_to_ptr.vmem [resolvable:$true] %s83
      %89 = dma.hbm_to_vmem [thread:$0]  %s6, 4096, %s84, [#allocation10], 256, 256, 16
    $region29: #{discriminator_forward.1} parent=1 // pred_fallthru
      _
    // Predicated region
    $region30: #{discriminator_forward.1} parent=1 // pred_check
      _
    $region31: #{discriminator_forward.1} parent=1 // pred_check_branch
      %91 = sbr.rel (0) target = $region33
    $region32: #{discriminator_forward.1} parent=1 // pred_region
      %s93 = ssub.s32 4096, 4096
      %94 = vsyncadd [#allocation13], %s93
      %s95 = sshll.u32 [#allocation12], 4
      %s96 = int_to_ptr.vmem [resolvable:$true] %s95
      %101 = dma.hbm_to_vmem [thread:$0]  %s7, 4096, %s96, [#allocation13], 256, 256, 16
    $region33: #{discriminator_forward.1} parent=1 // pred_fallthru
      _
    // Predicated region
    $region34: #{discriminator_forward.1} parent=1 // pred_check
      _
    $region35: #{discriminator_forward.1} parent=1 // pred_check_branch
      %103 = sbr.rel (0) target = $region37
    $region36: #{discriminator_forward.1} parent=1 // pred_region
      %s105 = ssub.s32 64, 64
      %106 = vsyncadd [#allocation13], %s105
      %s108 = sshll.u32 [#allocation14], 4
      %s109 = int_to_ptr.vmem [resolvable:$true] %s108
      %111 = dma.hbm_to_vmem [thread:$0]  %s8, 64, %s109, [#allocation13]
    $region37: #{discriminator_forward.1} parent=1 // pred_fallthru
      _
    // Predicated region
    $region38: #{discriminator_forward.1} parent=1 // pred_check
      _
    $region39: #{discriminator_forward.1} parent=1 // pred_check_branch
      %113 = sbr.rel (0) target = $region41
    $region40: #{discriminator_forward.1} parent=1 // pred_region
      %s115 = ssub.s32 4096, 4096
      %116 = vsyncadd [#allocation16], %s115
      %s117 = sshll.u32 [#allocation15], 4
      %s118 = int_to_ptr.vmem [resolvable:$true] %s117
      %123 = dma.hbm_to_vmem [thread:$0]  %s9, 4096, %s118, [#allocation16], 256, 256, 16
    $region41: #{discriminator_forward.1} parent=1 // pred_fallthru
      _
    // Predicated region
    $region42: #{discriminator_forward.1} parent=1 // pred_check
      _
    $region43: #{discriminator_forward.1} parent=1 // pred_check_branch
      %125 = sbr.rel (0) target = $region45
    $region44: #{discriminator_forward.1} parent=1 // pred_region
      %s127 = ssub.s32 4096, 4096
      %128 = vsyncadd [#allocation16], %s127
      %s129 = sshll.u32 [#allocation17], 4
      %s130 = int_to_ptr.vmem [resolvable:$true] %s129
      %135 = dma.hbm_to_vmem [thread:$0]  %s10, 4096, %s130, [#allocation16], 256, 256, 16
    $region45: #{discriminator_forward.1} parent=1 // pred_fallthru
      _
    // Predicated region
    $region46: #{discriminator_forward.1} parent=1 // pred_check
      _
    $region47: #{discriminator_forward.1} parent=1 // pred_check_branch
      %137 = sbr.rel (0) target = $region49
    $region48: #{discriminator_forward.1} parent=1 // pred_region
      %s139 = ssub.s32 64, 64
      %140 = vsyncadd [#allocation19], %s139
      %s142 = sshll.u32 [#allocation18], 4
      %s143 = int_to_ptr.vmem [resolvable:$true] %s142
      %145 = dma.hbm_to_vmem [thread:$0]  %s11, 64, %s143, [#allocation19]
    $region49: #{discriminator_forward.1} parent=1 // pred_fallthru
      _
    // Predicated region
    $region50: #{discriminator_forward.1} parent=1 // pred_check
      _
    $region51: #{discriminator_forward.1} parent=1 // pred_check_branch
      %147 = sbr.rel (0) target = $region53
    $region52: #{discriminator_forward.1} parent=1 // pred_region
      _
    $region53: #{discriminator_forward.1} parent=1 // pred_fallthru
      _
    // Predicated region
    $region54: #{discriminator_forward.1} parent=1 // pred_check
      _
    $region55: #{discriminator_forward.1} parent=1 // pred_check_branch
      %149 = sbr.rel (0) target = $region57
    $region56: #{discriminator_forward.1} parent=1 // pred_region
      _
    $region57: #{discriminator_forward.1} parent=1 // pred_fallthru
      _
    // Predicated region
    $region58: #{discriminator_forward.1} parent=1 // pred_check
      _
    $region59: #{discriminator_forward.1} parent=1 // pred_check_branch
      %151 = sbr.rel (0) target = $region61
    $region60: #{discriminator_forward.1} parent=1 // pred_region
      _
    $region61: #{discriminator_forward.1} parent=1 // pred_fallthru
      _
    // Predicated region
    $region62: #{discriminator_forward.1} parent=1 // pred_check
      _
    $region63: #{discriminator_forward.1} parent=1 // pred_check_branch
      %153 = sbr.rel (0) target = $region65
    $region64: #{discriminator_forward.1} parent=1 // pred_region
      %s155 = ssub.s32 16, 16
      %156 = vsyncadd [#allocation19], %s155
      %s158 = sshll.u32 [#allocation20], 4
      %s159 = int_to_ptr.vmem [resolvable:$true] %s158
      %161 = dma.hbm_to_vmem [thread:$0]  %s15, 16, %s159, [#allocation19]
    $region65: #{discriminator_forward.1} parent=1 // pred_fallthru
      _
    // Predicated region
    $region66: #{discriminator_forward.1} parent=1 // pred_check
      _
    $region67: #{discriminator_forward.1} parent=1 // pred_check_branch
      %163 = sbr.rel (0) target = $region69
    $region68: #{discriminator_forward.1} parent=1 // pred_region
      %s165 = ssub.s32 1024, 1024
      %166 = vsyncadd [#allocation22], %s165
      %s167 = sshll.u32 [#allocation21], 4
      %s168 = int_to_ptr.vmem [resolvable:$true] %s167
      %173 = dma.hbm_to_vmem [thread:$0]  %s16, 1024, %s168, [#allocation22], 64, 64, 4
    $region69: #{discriminator_forward.1} parent=1 // pred_fallthru
      _
    // Predicated region
    $region70: #{discriminator_forward.1} parent=1 // pred_check
      _
    $region71: #{discriminator_forward.1} parent=1 // pred_check_branch
      %175 = sbr.rel (0) target = $region73
    $region72: #{discriminator_forward.1} parent=1 // pred_region
      %s177 = ssub.s32 16, 16
      %178 = vsyncadd [#allocation22], %s177
      %s180 = sshll.u32 [#allocation23], 4
      %s181 = int_to_ptr.vmem [resolvable:$true] %s180
      %183 = dma.hbm_to_vmem [thread:$0]  %s17, 16, %s181, [#allocation22]
    $region73: #{discriminator_forward.1} parent=1 // pred_fallthru
      _
    // Predicated region
    $region74: #{discriminator_forward.1} parent=1 // pred_check
      _
    $region75: #{discriminator_forward.1} parent=1 // pred_check_branch
      %185 = sbr.rel (0) target = $region77
    $region76: #{discriminator_forward.1} parent=1 // pred_region
      %186 = dma.done [#allocation5], 512
    $region77: #{discriminator_forward.1} parent=1 // pred_fallthru
      _
    // Predicated region
    $region78: #{discriminator_forward.1} parent=1 // pred_check
      _
    $region79: #{discriminator_forward.1} parent=1 // pred_check_branch
      %188 = sbr.rel (0) target = $region81
    $region80: #{discriminator_forward.1} parent=1 // pred_region
      %189 = dma.done [#allocation7], 128
    $region81: #{discriminator_forward.1} parent=1 // pred_fallthru
      _
    // Predicated region
    $region82: #{discriminator_forward.1} parent=1 // pred_check
      _
    $region83: #{discriminator_forward.1} parent=1 // pred_check_branch
      %191 = sbr.rel (0) target = $region85
    $region84: #{discriminator_forward.1} parent=1 // pred_region
      %192 = dma.done [#allocation7], 4096
    $region85: #{discriminator_forward.1} parent=1 // pred_fallthru
      _
    // Predicated region
    $region86: #{discriminator_forward.1} parent=1 // pred_check
      _
    $region87: #{discriminator_forward.1} parent=1 // pred_check_branch
      %194 = sbr.rel (0) target = $region89
    $region88: #{discriminator_forward.1} parent=1 // pred_region
      %195 = dma.done [#allocation10], 64
    $region89: #{discriminator_forward.1} parent=1 // pred_fallthru
      _
    // Predicated region
    $region90: #{discriminator_forward.1} parent=1 // pred_check
      _
    $region91: #{discriminator_forward.1} parent=1 // pred_check_branch
      %197 = sbr.rel (0) target = $region93
    $region92: #{discriminator_forward.1} parent=1 // pred_region
      %198 = dma.done [#allocation10], 4096
    $region93: #{discriminator_forward.1} parent=1 // pred_fallthru
      _
    // Predicated region
    $region94: #{discriminator_forward.1} parent=1 // pred_check
      _
    $region95: #{discriminator_forward.1} parent=1 // pred_check_branch
      %200 = sbr.rel (0) target = $region97
    $region96: #{discriminator_forward.1} parent=1 // pred_region
      %201 = dma.done [#allocation13], 4096
    $region97: #{discriminator_forward.1} parent=1 // pred_fallthru
      _
    // Predicated region
    $region98: #{discriminator_forward.1} parent=1 // pred_check
      _
    $region99: #{discriminator_forward.1} parent=1 // pred_check_branch
      %203 = sbr.rel (0) target = $region101
    $region100: #{discriminator_forward.1} parent=1 // pred_region
      %204 = dma.done [#allocation13], 64
    $region101: #{discriminator_forward.1} parent=1 // pred_fallthru
      _
    // Predicated region
    $region102: #{discriminator_forward.1} parent=1 // pred_check
      _
    $region103: #{discriminator_forward.1} parent=1 // pred_check_branch
      %206 = sbr.rel (0) target = $region105
    $region104: #{discriminator_forward.1} parent=1 // pred_region
      %207 = dma.done [#allocation16], 4096
    $region105: #{discriminator_forward.1} parent=1 // pred_fallthru
      _
    // Predicated region
    $region106: #{discriminator_forward.1} parent=1 // pred_check
      _
    $region107: #{discriminator_forward.1} parent=1 // pred_check_branch
      %209 = sbr.rel (0) target = $region109
    $region108: #{discriminator_forward.1} parent=1 // pred_region
      %210 = dma.done [#allocation16], 4096
    $region109: #{discriminator_forward.1} parent=1 // pred_fallthru
      _
    // Predicated region
    $region110: #{discriminator_forward.1} parent=1 // pred_check
      _
    $region111: #{discriminator_forward.1} parent=1 // pred_check_branch
      %212 = sbr.rel (0) target = $region113
    $region112: #{discriminator_forward.1} parent=1 // pred_region
      %213 = dma.done [#allocation19], 64
    $region113: #{discriminator_forward.1} parent=1 // pred_fallthru
      _
    // Predicated region
    $region114: #{discriminator_forward.1} parent=1 // pred_check
      _
    $region115: #{discriminator_forward.1} parent=1 // pred_check_branch
      %215 = sbr.rel (0) target = $region117
    $region116: #{discriminator_forward.1} parent=1 // pred_region
      %216 = dma.done [#allocation19], 16
    $region117: #{discriminator_forward.1} parent=1 // pred_fallthru
      _
    // Predicated region
    $region118: #{discriminator_forward.1} parent=1 // pred_check
      _
    $region119: #{discriminator_forward.1} parent=1 // pred_check_branch
      %218 = sbr.rel (0) target = $region121
    $region120: #{discriminator_forward.1} parent=1 // pred_region
      %219 = dma.done [#allocation22], 1024
    $region121: #{discriminator_forward.1} parent=1 // pred_fallthru
      _
    // Predicated region
    $region122: #{discriminator_forward.1} parent=1 // pred_check
      _
    $region123: #{discriminator_forward.1} parent=1 // pred_check_branch
      %221 = sbr.rel (0) target = $region125
    $region124: #{discriminator_forward.1} parent=1 // pred_region
      %222 = dma.done [#allocation22], 16
    $region125: #{discriminator_forward.1} parent=1 // pred_fallthru
      _
    %v224 = vld [vmem:[%s0] sm:$0xf]
    %v225 = vld [vmem:[%s0 + $0x4] sm:$0xf]
    %v226 = vld [vmem:[%s0 + $0x8] sm:$0xf]
    %v227 = vld [vmem:[%s0 + $0xc] sm:$0xf]
    %v228 = vld [vmem:[%s0 + $0x10] sm:$0xf]
    %v229 = vld [vmem:[%s0 + $0x14] sm:$0xf]
    %v230 = vld [vmem:[%s0 + $0x18] sm:$0xf]
    %v231 = vld [vmem:[%s0 + $0x1c] sm:$0xf]
    %v232 = vld [vmem:[#allocation4] sm:$0xff]
    %v233 = vld [vmem:[#allocation4 + $0x8] sm:$0xff]
    %v234 = vld [vmem:[#allocation4 + $0x10] sm:$0xff]
    %v235 = vld [vmem:[#allocation4 + $0x18] sm:$0xff]
    %v244 = vunpack.c.l.b16 %v224
    %v245 = vunpack.c.l.b16 %v225
    %v246 = vunpack.c.l.b16 %v226
    %v247 = vunpack.c.l.b16 %v227
    %v248 = vunpack.c.l.b16 %v228
    %v249 = vunpack.c.l.b16 %v229
    %v250 = vunpack.c.l.b16 %v230
    %v251 = vunpack.c.l.b16 %v231
    %v252 = vpack.c.b16 %v245, %v244
    %v253 = vpack.c.b16 %v247, %v246
    %v254 = vpack.c.b16 %v249, %v248
    %v255 = vpack.c.b16 %v251, %v250
    %v260 = vunpack.c.l.b16 %v232
    %v261 = vunpack.c.h.b16 %v232
    %v262 = vunpack.c.l.b16 %v233
    %v263 = vunpack.c.h.b16 %v233
    %v264 = vunpack.c.l.b16 %v234
    %v265 = vunpack.c.h.b16 %v234
    %v266 = vunpack.c.l.b16 %v235
    %v267 = vunpack.c.h.b16 %v235
    %v268 = vpack.c.b16 %v264, %v260
    %v269 = vpack.c.b16 %v265, %v261
    %v270 = vpack.c.b16 %v266, %v262
    %v271 = vpack.c.b16 %v267, %v263
    %vm276 = vcmask 130048
    %v278 = vsel %vm276, %v252, 0
    %v281 = vsel %vm276, %v253, 0
    %v284 = vsel %vm276, %v254, 0
    %v287 = vsel %vm276, %v255, 0
    %289 = vmatprep.subr.bf16.mxu0 0
    %290 = vmatpush1.bf16.msra.mxu0 0
    %291 = vmatprep.subr.bf16.mxu0 0
    %292 = vmatpush1.bf16.msra.mxu0 0
    %293 = vmatprep.subr.bf16.mxu0 0
    %294 = vmatpush1.bf16.msra.mxu0 0
    %295 = vmatprep.subr.bf16.mxu0 0
    %296 = vmatpush1.bf16.msra.mxu0 0
    %297 = vmatprep.subr.bf16.mxu0 0
    %298 = vmatpush1.bf16.msra.mxu0 0
    %299 = vmatprep.subr.bf16.mxu0 0
    %300 = vmatpush1.bf16.msra.mxu0 0
    %301 = vmatprep.subr.bf16.mxu0 0
    %302 = vmatpush1.bf16.msra.mxu0 0
    %303 = vmatprep.subr.bf16.mxu0 %v269
    %304 = vmatpush1.bf16.msra.mxu0 %v268
    %305 = vmatprep.subr.bf16.mxu0 0
    %306 = vmatpush2.bf16.msra.mxu0 0
    %307 = vmatprep.subr.bf16.mxu0 0
    %308 = vmatpush2.bf16.msra.mxu0 0
    %309 = vmatprep.subr.bf16.mxu0 0
    %310 = vmatpush2.bf16.msra.mxu0 0
    %311 = vmatprep.subr.bf16.mxu0 0
    %312 = vmatpush2.bf16.msra.mxu0 0
    %313 = vmatprep.subr.bf16.mxu0 0
    %314 = vmatpush2.bf16.msra.mxu0 0
    %315 = vmatprep.subr.bf16.mxu0 0
    %316 = vmatpush2.bf16.msra.mxu0 0
    %317 = vmatprep.subr.bf16.mxu0 0
    %318 = vmatpush2.bf16.msra.mxu0 0
    %319 = vmatprep.subr.bf16.mxu0 0
    %320 = vmatpush2.bf16.msra.mxu0 0
    %321 = vmatprep.mubr.bf16.mxu0 0
    %322 = vmatmul.mubr.bf16.gmra.mxu0 %v278
    %v323 = vpop.f32.mrf.mxu0
    %v324 = vadd.f32 0.0, %v323
    %v325 = vpop.f32.mrf.mxu0
    %v326 = vadd.f32 0.0, %v325
    %v327 = vpop.f32.mrf.mxu0
    %v328 = vadd.f32 0.0, %v327
    %v329 = vpop.f32.mrf.mxu0
    %v330 = vadd.f32 0.0, %v329
    %331 = vmatprep.mubr.bf16.mxu0 0
    %332 = vmatmul.mubr.bf16.gmra.mxu0 %v281
    %v333 = vpop.f32.mrf.mxu0
    %v334 = vadd.f32 0.0, %v333
    %v335 = vpop.f32.mrf.mxu0
    %v336 = vadd.f32 0.0, %v335
    %v337 = vpop.f32.mrf.mxu0
    %v338 = vadd.f32 0.0, %v337
    %v339 = vpop.f32.mrf.mxu0
    %v340 = vadd.f32 0.0, %v339
    %341 = vmatprep.mubr.bf16.mxu0 0
    %342 = vmatmul.mubr.bf16.gmra.mxu0 %v284
    %v343 = vpop.f32.mrf.mxu0
    %v344 = vadd.f32 0.0, %v343
    %v345 = vpop.f32.mrf.mxu0
    %v346 = vadd.f32 0.0, %v345
    %v347 = vpop.f32.mrf.mxu0
    %v348 = vadd.f32 0.0, %v347
    %v349 = vpop.f32.mrf.mxu0
    %v350 = vadd.f32 0.0, %v349
    %351 = vmatprep.mubr.bf16.mxu0 0
    %352 = vmatmul.mubr.bf16.gmra.mxu0 %v287
    %v353 = vpop.f32.mrf.mxu0
    %v354 = vadd.f32 0.0, %v353
    %v355 = vpop.f32.mrf.mxu0
    %v356 = vadd.f32 0.0, %v355
    %v357 = vpop.f32.mrf.mxu0
    %v358 = vadd.f32 0.0, %v357
    %v359 = vpop.f32.mrf.mxu0
    %v360 = vadd.f32 0.0, %v359
    %361 = vdwg.mxu0
    %362 = vmatprep.subr.bf16.mxu0 0
    %363 = vmatpush1.bf16.msra.mxu0 0
    %364 = vmatprep.subr.bf16.mxu0 0
    %365 = vmatpush1.bf16.msra.mxu0 0
    %366 = vmatprep.subr.bf16.mxu0 0
    %367 = vmatpush1.bf16.msra.mxu0 0
    %368 = vmatprep.subr.bf16.mxu0 0
    %369 = vmatpush1.bf16.msra.mxu0 0
    %370 = vmatprep.subr.bf16.mxu0 0
    %371 = vmatpush1.bf16.msra.mxu0 0
    %372 = vmatprep.subr.bf16.mxu0 0
    %373 = vmatpush1.bf16.msra.mxu0 0
    %374 = vmatprep.subr.bf16.mxu0 0
    %375 = vmatpush1.bf16.msra.mxu0 0
    %376 = vmatprep.subr.bf16.mxu0 %v271
    %377 = vmatpush1.bf16.msra.mxu0 %v270
    %378 = vmatprep.subr.bf16.mxu0 0
    %379 = vmatpush2.bf16.msra.mxu0 0
    %380 = vmatprep.subr.bf16.mxu0 0
    %381 = vmatpush2.bf16.msra.mxu0 0
    %382 = vmatprep.subr.bf16.mxu0 0
    %383 = vmatpush2.bf16.msra.mxu0 0
    %384 = vmatprep.subr.bf16.mxu0 0
    %385 = vmatpush2.bf16.msra.mxu0 0
    %386 = vmatprep.subr.bf16.mxu0 0
    %387 = vmatpush2.bf16.msra.mxu0 0
    %388 = vmatprep.subr.bf16.mxu0 0
    %389 = vmatpush2.bf16.msra.mxu0 0
    %390 = vmatprep.subr.bf16.mxu0 0
    %391 = vmatpush2.bf16.msra.mxu0 0
    %392 = vmatprep.subr.bf16.mxu0 0
    %393 = vmatpush2.bf16.msra.mxu0 0
    %394 = vmatprep.mubr.bf16.mxu0 0
    %395 = vmatmul.mubr.bf16.gmra.mxu0 %v278
    %v396 = vpop.f32.mrf.mxu0
    %v397 = vadd.f32 0.0, %v396
    %v398 = vpop.f32.mrf.mxu0
    %v399 = vadd.f32 0.0, %v398
    %v400 = vpop.f32.mrf.mxu0
    %v401 = vadd.f32 0.0, %v400
    %v402 = vpop.f32.mrf.mxu0
    %v403 = vadd.f32 0.0, %v402
    %404 = vmatprep.mubr.bf16.mxu0 0
    %405 = vmatmul.mubr.bf16.gmra.mxu0 %v281
    %v406 = vpop.f32.mrf.mxu0
    %v407 = vadd.f32 0.0, %v406
    %v408 = vpop.f32.mrf.mxu0
    %v409 = vadd.f32 0.0, %v408
    %v410 = vpop.f32.mrf.mxu0
    %v411 = vadd.f32 0.0, %v410
    %v412 = vpop.f32.mrf.mxu0
    %v413 = vadd.f32 0.0, %v412
    %414 = vmatprep.mubr.bf16.mxu0 0
    %415 = vmatmul.mubr.bf16.gmra.mxu0 %v284
    %v416 = vpop.f32.mrf.mxu0
    %v417 = vadd.f32 0.0, %v416
    %v418 = vpop.f32.mrf.mxu0
    %v419 = vadd.f32 0.0, %v418
    %v420 = vpop.f32.mrf.mxu0
    %v421 = vadd.f32 0.0, %v420
    %v422 = vpop.f32.mrf.mxu0
    %v423 = vadd.f32 0.0, %v422
    %424 = vmatprep.mubr.bf16.mxu0 0
    %425 = vmatmul.mubr.bf16.gmra.mxu0 %v287
    %v426 = vpop.f32.mrf.mxu0
    %v427 = vadd.f32 0.0, %v426
    %v428 = vpop.f32.mrf.mxu0
    %v429 = vadd.f32 0.0, %v428
    %v430 = vpop.f32.mrf.mxu0
    %v431 = vadd.f32 0.0, %v430
    %v432 = vpop.f32.mrf.mxu0
    %v433 = vadd.f32 0.0, %v432
    %434 = vdwg.mxu0
    %v435 = vld [vmem:[%s1] sm:$0xf]
    %v436 = vld [vmem:[#allocation6] sm:$0xff]
    %v437 = vld [vmem:[#allocation9] sm:$0xf]
    %v439 = vlaneseq
    %v440 = vshrl.u32 %v439, 7
    %v441 = vsub.s32 0, %v440
    %v442 = vrot.slane %v437, %v441
    %v443 = vlaneseq
    %v444 = vshrl.u32 %v443, 7
    %v445 = vsub.s32 1, %v444
    %v446 = vrot.slane %v437, %v445
    %v447 = vlaneseq
    %v448 = vshrl.u32 %v447, 7
    %v449 = vsub.s32 2, %v448
    %v450 = vrot.slane %v437, %v449
    %v451 = vlaneseq
    %v452 = vshrl.u32 %v451, 7
    %v453 = vsub.s32 3, %v452
    %v454 = vrot.slane %v437, %v453
    %v460 = vcombine.high %v436, %v436
    %v462 = vunpack.c.l.s4 1983009808
    %v463 = vunpack.c.0.s8 %v462
    %v464 = vlaneseq
    %v465 = vshrl.u32 %v464, 7
    %v466 = vsub.s32 %v463, %v465
    %v467 = vrot.slane %v436, %v466
    %v469 = vunpack.c.l.s4 1983009808
    %v470 = vunpack.c.0.s8 %v469
    %v471 = vlaneseq
    %v472 = vshrl.u32 %v471, 7
    %v473 = vsub.s32 %v470, %v472
    %v474 = vrot.slane %v460, %v473
    %v475 = vcombine.high %v467, %v467
    %v476 = vcombine.high %v474, %v474
    %vm477 = vcmask 31744
    %v479 = vsel %vm477, %v435, 0
    %vm481 = vcmask 1041408
    %v483 = vsel %vm481, %v467, 0
    %v486 = vsel %vm481, %v475, 0
    %v489 = vsel %vm481, %v474, 0
    %v492 = vsel %vm481, %v476, 0
    %494 = vmatprep.subr.bf16.mxu0 0
    %495 = vmatpush1.bf16.msra.mxu0 0
    %496 = vmatprep.subr.bf16.mxu0 0
    %497 = vmatpush1.bf16.msra.mxu0 0
    %498 = vmatprep.subr.bf16.mxu0 0
    %499 = vmatpush1.bf16.msra.mxu0 0
    %500 = vmatprep.subr.bf16.mxu0 0
    %501 = vmatpush1.bf16.msra.mxu0 0
    %502 = vmatprep.subr.bf16.mxu0 0
    %503 = vmatpush1.bf16.msra.mxu0 0
    %504 = vmatprep.subr.bf16.mxu0 0
    %505 = vmatpush1.bf16.msra.mxu0 0
    %506 = vmatprep.subr.bf16.mxu0 0
    %507 = vmatpush1.bf16.msra.mxu0 0
    %508 = vmatprep.subr.bf16.mxu0 %v486
    %509 = vmatpush1.bf16.msra.mxu0 %v483
    %510 = vmatprep.subr.bf16.mxu0 0
    %511 = vmatpush2.bf16.msra.mxu0 0
    %512 = vmatprep.subr.bf16.mxu0 0
    %513 = vmatpush2.bf16.msra.mxu0 0
    %514 = vmatprep.subr.bf16.mxu0 0
    %515 = vmatpush2.bf16.msra.mxu0 0
    %516 = vmatprep.subr.bf16.mxu0 0
    %517 = vmatpush2.bf16.msra.mxu0 0
    %518 = vmatprep.subr.bf16.mxu0 0
    %519 = vmatpush2.bf16.msra.mxu0 0
    %520 = vmatprep.subr.bf16.mxu0 0
    %521 = vmatpush2.bf16.msra.mxu0 0
    %522 = vmatprep.subr.bf16.mxu0 0
    %523 = vmatpush2.bf16.msra.mxu0 0
    %524 = vmatprep.subr.bf16.mxu0 0
    %525 = vmatpush2.bf16.msra.mxu0 0
    %526 = vmatprep.mubr.bf16.mxu0 0
    %527 = vmatmul.mubr.bf16.gmra.mxu0 %v479
    %v528 = vpop.f32.mrf.mxu0
    %v529 = vadd.f32 %v442, %v528
    %v530 = vpop.f32.mrf.mxu0
    %v531 = vadd.f32 %v446, %v530
    %v532 = vpop.f32.mrf.mxu0
    %v533 = vpop.f32.mrf.mxu0
    %534 = vdwg.mxu0
    %535 = vmatprep.subr.bf16.mxu0 0
    %536 = vmatpush1.bf16.msra.mxu0 0
    %537 = vmatprep.subr.bf16.mxu0 0
    %538 = vmatpush1.bf16.msra.mxu0 0
    %539 = vmatprep.subr.bf16.mxu0 0
    %540 = vmatpush1.bf16.msra.mxu0 0
    %541 = vmatprep.subr.bf16.mxu0 0
    %542 = vmatpush1.bf16.msra.mxu0 0
    %543 = vmatprep.subr.bf16.mxu0 0
    %544 = vmatpush1.bf16.msra.mxu0 0
    %545 = vmatprep.subr.bf16.mxu0 0
    %546 = vmatpush1.bf16.msra.mxu0 0
    %547 = vmatprep.subr.bf16.mxu0 0
    %548 = vmatpush1.bf16.msra.mxu0 0
    %549 = vmatprep.subr.bf16.mxu0 %v492
    %550 = vmatpush1.bf16.msra.mxu0 %v489
    %551 = vmatprep.subr.bf16.mxu0 0
    %552 = vmatpush2.bf16.msra.mxu0 0
    %553 = vmatprep.subr.bf16.mxu0 0
    %554 = vmatpush2.bf16.msra.mxu0 0
    %555 = vmatprep.subr.bf16.mxu0 0
    %556 = vmatpush2.bf16.msra.mxu0 0
    %557 = vmatprep.subr.bf16.mxu0 0
    %558 = vmatpush2.bf16.msra.mxu0 0
    %559 = vmatprep.subr.bf16.mxu0 0
    %560 = vmatpush2.bf16.msra.mxu0 0
    %561 = vmatprep.subr.bf16.mxu0 0
    %562 = vmatpush2.bf16.msra.mxu0 0
    %563 = vmatprep.subr.bf16.mxu0 0
    %564 = vmatpush2.bf16.msra.mxu0 0
    %565 = vmatprep.subr.bf16.mxu0 0
    %566 = vmatpush2.bf16.msra.mxu0 0
    %567 = vmatprep.mubr.bf16.mxu0 0
    %568 = vmatmul.mubr.bf16.gmra.mxu0 %v479
    %v569 = vpop.f32.mrf.mxu0
    %v570 = vadd.f32 %v450, %v569
    %v571 = vpop.f32.mrf.mxu0
    %v572 = vadd.f32 %v454, %v571
    %v573 = vpop.f32.mrf.mxu0
    %v574 = vpop.f32.mrf.mxu0
    %575 = vdwg.mxu0
    %v576 = vadd.f32 %v324, %v529
    %v577 = vadd.f32 %v326, %v531
    %v578 = vadd.f32 %v397, %v570
    %v579 = vadd.f32 %v399, %v572
    %v580 = vadd.f32 %v328, %v529
    %v581 = vadd.f32 %v330, %v531
    %v582 = vadd.f32 %v401, %v570
    %v583 = vadd.f32 %v403, %v572
    %v584 = vadd.f32 %v334, %v529
    %v585 = vadd.f32 %v336, %v531
    %v586 = vadd.f32 %v407, %v570
    %v587 = vadd.f32 %v409, %v572
    %v588 = vadd.f32 %v338, %v529
    %v589 = vadd.f32 %v340, %v531
    %v590 = vadd.f32 %v411, %v570
    %v591 = vadd.f32 %v413, %v572
    %v592 = vadd.f32 %v344, %v529
    %v593 = vadd.f32 %v346, %v531
    %v594 = vadd.f32 %v417, %v570
    %v595 = vadd.f32 %v419, %v572
    %v596 = vadd.f32 %v348, %v529
    %v597 = vadd.f32 %v350, %v531
    %v598 = vadd.f32 %v421, %v570
    %v599 = vadd.f32 %v423, %v572
    %v600 = vadd.f32 %v354, %v529
    %v601 = vadd.f32 %v356, %v531
    %v602 = vadd.f32 %v427, %v570
    %v603 = vadd.f32 %v429, %v572
    %v604 = vadd.f32 %v358, %v529
    %v605 = vadd.f32 %v360, %v531
    %v606 = vadd.f32 %v431, %v570
    %v607 = vadd.f32 %v433, %v572
    %v608 = vpack.c.bf16 %v576, %v576
    %v609 = vpack.c.bf16 %v577, %v577
    %v610 = vpack.c.bf16 %v578, %v578
    %v611 = vpack.c.bf16 %v579, %v579
    %v612 = vpack.c.bf16 %v580, %v580
    %v613 = vpack.c.bf16 %v581, %v581
    %v614 = vpack.c.bf16 %v582, %v582
    %v615 = vpack.c.bf16 %v583, %v583
    %v616 = vpack.c.bf16 %v584, %v584
    %v617 = vpack.c.bf16 %v585, %v585
    %v618 = vpack.c.bf16 %v586, %v586
    %v619 = vpack.c.bf16 %v587, %v587
    %v620 = vpack.c.bf16 %v588, %v588
    %v621 = vpack.c.bf16 %v589, %v589
    %v622 = vpack.c.bf16 %v590, %v590
    %v623 = vpack.c.bf16 %v591, %v591
    %v624 = vpack.c.bf16 %v592, %v592
    %v625 = vpack.c.bf16 %v593, %v593
    %v626 = vpack.c.bf16 %v594, %v594
    %v627 = vpack.c.bf16 %v595, %v595
    %v628 = vpack.c.bf16 %v596, %v596
    %v629 = vpack.c.bf16 %v597, %v597
    %v630 = vpack.c.bf16 %v598, %v598
    %v631 = vpack.c.bf16 %v599, %v599
    %v632 = vpack.c.bf16 %v600, %v600
    %v633 = vpack.c.bf16 %v601, %v601
    %v634 = vpack.c.bf16 %v602, %v602
    %v635 = vpack.c.bf16 %v603, %v603
    %v636 = vpack.c.bf16 %v604, %v604
    %v637 = vpack.c.bf16 %v605, %v605
    %v638 = vpack.c.bf16 %v606, %v606
    %v639 = vpack.c.bf16 %v607, %v607
    %v672 = vunpack.c.l.b16 %v608
    %v673 = vunpack.c.l.b16 %v609
    %v674 = vunpack.c.l.b16 %v610
    %v675 = vunpack.c.l.b16 %v611
    %v676 = vunpack.c.l.b16 %v612
    %v677 = vunpack.c.l.b16 %v613
    %v678 = vunpack.c.l.b16 %v614
    %v679 = vunpack.c.l.b16 %v615
    %v680 = vunpack.c.l.b16 %v616
    %v681 = vunpack.c.l.b16 %v617
    %v682 = vunpack.c.l.b16 %v618
    %v683 = vunpack.c.l.b16 %v619
    %v684 = vunpack.c.l.b16 %v620
    %v685 = vunpack.c.l.b16 %v621
    %v686 = vunpack.c.l.b16 %v622
    %v687 = vunpack.c.l.b16 %v623
    %v688 = vunpack.c.l.b16 %v624
    %v689 = vunpack.c.l.b16 %v625
    %v690 = vunpack.c.l.b16 %v626
    %v691 = vunpack.c.l.b16 %v627
    %v692 = vunpack.c.l.b16 %v628
    %v693 = vunpack.c.l.b16 %v629
    %v694 = vunpack.c.l.b16 %v630
    %v695 = vunpack.c.l.b16 %v631
    %v696 = vunpack.c.l.b16 %v632
    %v697 = vunpack.c.l.b16 %v633
    %v698 = vunpack.c.l.b16 %v634
    %v699 = vunpack.c.l.b16 %v635
    %v700 = vunpack.c.l.b16 %v636
    %v701 = vunpack.c.l.b16 %v637
    %v702 = vunpack.c.l.b16 %v638
    %v703 = vunpack.c.l.b16 %v639
    %v704 = vpack.c.b16 %v673, %v672
    %v705 = vpack.c.b16 %v675, %v674
    %v706 = vpack.c.b16 %v677, %v676
    %v707 = vpack.c.b16 %v679, %v678
    %v708 = vpack.c.b16 %v681, %v680
    %v709 = vpack.c.b16 %v683, %v682
    %v710 = vpack.c.b16 %v685, %v684
    %v711 = vpack.c.b16 %v687, %v686
    %v712 = vpack.c.b16 %v689, %v688
    %v713 = vpack.c.b16 %v691, %v690
    %v714 = vpack.c.b16 %v693, %v692
    %v715 = vpack.c.b16 %v695, %v694
    %v716 = vpack.c.b16 %v697, %v696
    %v717 = vpack.c.b16 %v699, %v698
    %v718 = vpack.c.b16 %v701, %v700
    %v719 = vpack.c.b16 %v703, %v702
    %736 = vst [vmem:[#allocation2] sm:$0xff] %v704
    %737 = vst [vmem:[#allocation2 + $0x8] sm:$0xff] %v705
    %738 = vst [vmem:[#allocation2 + $0x10] sm:$0xff] %v706
    %739 = vst [vmem:[#allocation2 + $0x18] sm:$0xff] %v707
    %740 = vst [vmem:[#allocation2 + $0x20] sm:$0xff] %v708
    %741 = vst [vmem:[#allocation2 + $0x28] sm:$0xff] %v709
    %742 = vst [vmem:[#allocation2 + $0x30] sm:$0xff] %v710
    %743 = vst [vmem:[#allocation2 + $0x38] sm:$0xff] %v711
    %744 = vst [vmem:[#allocation2 + $0x40] sm:$0xff] %v712
    %745 = vst [vmem:[#allocation2 + $0x48] sm:$0xff] %v713
    %746 = vst [vmem:[#allocation2 + $0x50] sm:$0xff] %v714
    %747 = vst [vmem:[#allocation2 + $0x58] sm:$0xff] %v715
    %748 = vst [vmem:[#allocation2 + $0x60] sm:$0xff] %v716
    %749 = vst [vmem:[#allocation2 + $0x68] sm:$0xff] %v717
    %750 = vst [vmem:[#allocation2 + $0x70] sm:$0xff] %v718
    %751 = vst [vmem:[#allocation2 + $0x78] sm:$0xff] %v719
    %v752 = vld [vmem:[#allocation8] sm:$0xff]
    %v753 = vld [vmem:[#allocation8 + $0x8] sm:$0xff]
    %v754 = vld [vmem:[#allocation8 + $0x10] sm:$0xff]
    %v755 = vld [vmem:[#allocation8 + $0x18] sm:$0xff]
    %v756 = vld [vmem:[#allocation8 + $0x20] sm:$0xff]
    %v757 = vld [vmem:[#allocation8 + $0x28] sm:$0xff]
    %v758 = vld [vmem:[#allocation8 + $0x30] sm:$0xff]
    %v759 = vld [vmem:[#allocation8 + $0x38] sm:$0xff]
    %v760 = vld [vmem:[#allocation8 + $0x40] sm:$0xff]
    %v761 = vld [vmem:[#allocation8 + $0x48] sm:$0xff]
    %v762 = vld [vmem:[#allocation8 + $0x50] sm:$0xff]
    %v763 = vld [vmem:[#allocation8 + $0x58] sm:$0xff]
    %v764 = vld [vmem:[#allocation8 + $0x60] sm:$0xff]
    %v765 = vld [vmem:[#allocation8 + $0x68] sm:$0xff]
    %v766 = vld [vmem:[#allocation8 + $0x70] sm:$0xff]
    %v767 = vld [vmem:[#allocation8 + $0x78] sm:$0xff]
    %v768 = vld [vmem:[#allocation8 + $0x80] sm:$0xff]
    %v769 = vld [vmem:[#allocation8 + $0x88] sm:$0xff]
    %v770 = vld [vmem:[#allocation8 + $0x90] sm:$0xff]
    %v771 = vld [vmem:[#allocation8 + $0x98] sm:$0xff]
    %v772 = vld [vmem:[#allocation8 + $0xa0] sm:$0xff]
    %v773 = vld [vmem:[#allocation8 + $0xa8] sm:$0xff]
    %v774 = vld [vmem:[#allocation8 + $0xb0] sm:$0xff]
    %v775 = vld [vmem:[#allocation8 + $0xb8] sm:$0xff]
    %v776 = vld [vmem:[#allocation8 + $0xc0] sm:$0xff]
    %v777 = vld [vmem:[#allocation8 + $0xc8] sm:$0xff]
    %v778 = vld [vmem:[#allocation8 + $0xd0] sm:$0xff]
    %v779 = vld [vmem:[#allocation8 + $0xd8] sm:$0xff]
    %v780 = vld [vmem:[#allocation8 + $0xe0] sm:$0xff]
    %v781 = vld [vmem:[#allocation8 + $0xe8] sm:$0xff]
    %v782 = vld [vmem:[#allocation8 + $0xf0] sm:$0xff]
    %v783 = vld [vmem:[#allocation8 + $0xf8] sm:$0xff]
    %v784 = vld [vmem:[#allocation2] sm:$0xff]
    %v785 = vld [vmem:[#allocation2 + $0x8] sm:$0xff]
    %v786 = vunpack.c.l.bf16 %v784
    %v787 = vunpack.c.h.bf16 %v784
    %v788 = vunpack.c.l.bf16 %v785
    %v789 = vunpack.c.h.bf16 %v785
    %v790 = vxor.u32 %v786, 2147483648
    %v791 = vmul.f32 %v790, 1.442695
    %v792 = vpow.pop %v791
    %v793 = vadd.f32 %v792, 1.0
    %v794 = vrcp.pop %v793
    %v795 = vmul.f32 1.0, %v794
    %v796 = vxor.u32 %v787, 2147483648
    %v797 = vmul.f32 %v796, 1.442695
    %v798 = vpow.pop %v797
    %v799 = vadd.f32 %v798, 1.0
    %v800 = vrcp.pop %v799
    %v801 = vmul.f32 1.0, %v800
    %v802 = vtanh.pop %v788
    %v803 = vxor.u32 %v789, 2147483648
    %v804 = vmul.f32 %v803, 1.442695
    %v805 = vpow.pop %v804
    %v806 = vadd.f32 %v805, 1.0
    %v807 = vrcp.pop %v806
    %v808 = vmul.f32 1.0, %v807
    %v809 = vmul.f32 %v801, 0.0
    %v810 = vmul.f32 %v795, %v802
    %v811 = vadd.f32 %v809, %v810
    %v812 = vtanh.pop %v811
    %v813 = vmul.f32 %v808, %v812
    %v814 = vpack.c.bf16 %v813, %v813
    %815 = vst [vmem:[#allocation3] sm:$0xf] %v814
    %s816 = scalar_lea.vmem [#allocation2], 16
    %v817 = vld [vmem:[%s816] sm:$0xff]
    %v818 = vld [vmem:[%s816 + $0x8] sm:$0xff]
    %v819 = vunpack.c.l.bf16 %v817
    %v820 = vunpack.c.h.bf16 %v817
    %v821 = vunpack.c.l.bf16 %v818
    %v822 = vunpack.c.h.bf16 %v818
    %v855 = vunpack.c.l.b16 %v752
    %v856 = vunpack.c.h.b16 %v752
    %v857 = vunpack.c.l.b16 %v753
    %v858 = vunpack.c.h.b16 %v753
    %v859 = vunpack.c.l.b16 %v754
    %v860 = vunpack.c.h.b16 %v754
    %v861 = vunpack.c.l.b16 %v755
    %v862 = vunpack.c.h.b16 %v755
    %v863 = vunpack.c.l.b16 %v756
    %v864 = vunpack.c.h.b16 %v756
    %v865 = vunpack.c.l.b16 %v757
    %v866 = vunpack.c.h.b16 %v757
    %v867 = vunpack.c.l.b16 %v758
    %v868 = vunpack.c.h.b16 %v758
    %v869 = vunpack.c.l.b16 %v759
    %v870 = vunpack.c.h.b16 %v759
    %v871 = vunpack.c.l.b16 %v760
    %v872 = vunpack.c.h.b16 %v760
    %v873 = vunpack.c.l.b16 %v761
    %v874 = vunpack.c.h.b16 %v761
    %v875 = vunpack.c.l.b16 %v762
    %v876 = vunpack.c.h.b16 %v762
    %v877 = vunpack.c.l.b16 %v763
    %v878 = vunpack.c.h.b16 %v763
    %v879 = vunpack.c.l.b16 %v764
    %v880 = vunpack.c.h.b16 %v764
    %v881 = vunpack.c.l.b16 %v765
    %v882 = vunpack.c.h.b16 %v765
    %v883 = vunpack.c.l.b16 %v766
    %v884 = vunpack.c.h.b16 %v766
    %v885 = vunpack.c.l.b16 %v767
    %v886 = vunpack.c.h.b16 %v767
    %v887 = vunpack.c.l.b16 %v768
    %v888 = vunpack.c.h.b16 %v768
    %v889 = vunpack.c.l.b16 %v769
    %v890 = vunpack.c.h.b16 %v769
    %v891 = vunpack.c.l.b16 %v770
    %v892 = vunpack.c.h.b16 %v770
    %v893 = vunpack.c.l.b16 %v771
    %v894 = vunpack.c.h.b16 %v771
    %v895 = vunpack.c.l.b16 %v772
    %v896 = vunpack.c.h.b16 %v772
    %v897 = vunpack.c.l.b16 %v773
    %v898 = vunpack.c.h.b16 %v773
    %v899 = vunpack.c.l.b16 %v774
    %v900 = vunpack.c.h.b16 %v774
    %v901 = vunpack.c.l.b16 %v775
    %v902 = vunpack.c.h.b16 %v775
    %v903 = vunpack.c.l.b16 %v776
    %v904 = vunpack.c.h.b16 %v776
    %v905 = vunpack.c.l.b16 %v777
    %v906 = vunpack.c.h.b16 %v777
    %v907 = vunpack.c.l.b16 %v778
    %v908 = vunpack.c.h.b16 %v778
    %v909 = vunpack.c.l.b16 %v779
    %v910 = vunpack.c.h.b16 %v779
    %v911 = vunpack.c.l.b16 %v780
    %v912 = vunpack.c.h.b16 %v780
    %v913 = vunpack.c.l.b16 %v781
    %v914 = vunpack.c.h.b16 %v781
    %v915 = vunpack.c.l.b16 %v782
    %v916 = vunpack.c.h.b16 %v782
    %v917 = vunpack.c.l.b16 %v783
    %v918 = vunpack.c.h.b16 %v783
    %v919 = vpack.c.b16 %v859, %v855
    %v920 = vpack.c.b16 %v860, %v856
    %v921 = vpack.c.b16 %v861, %v857
    %v922 = vpack.c.b16 %v862, %v858
    %v923 = vpack.c.b16 %v867, %v863
    %v924 = vpack.c.b16 %v868, %v864
    %v925 = vpack.c.b16 %v869, %v865
    %v926 = vpack.c.b16 %v870, %v866
    %v927 = vpack.c.b16 %v875, %v871
    %v928 = vpack.c.b16 %v876, %v872
    %v929 = vpack.c.b16 %v877, %v873
    %v930 = vpack.c.b16 %v878, %v874
    %v931 = vpack.c.b16 %v883, %v879
    %v932 = vpack.c.b16 %v884, %v880
    %v933 = vpack.c.b16 %v885, %v881
    %v934 = vpack.c.b16 %v886, %v882
    %v935 = vpack.c.b16 %v891, %v887
    %v936 = vpack.c.b16 %v892, %v888
    %v937 = vpack.c.b16 %v893, %v889
    %v938 = vpack.c.b16 %v894, %v890
    %v939 = vpack.c.b16 %v899, %v895
    %v940 = vpack.c.b16 %v900, %v896
    %v941 = vpack.c.b16 %v901, %v897
    %v942 = vpack.c.b16 %v902, %v898
    %v943 = vpack.c.b16 %v907, %v903
    %v944 = vpack.c.b16 %v908, %v904
    %v945 = vpack.c.b16 %v909, %v905
    %v946 = vpack.c.b16 %v910, %v906
    %v947 = vpack.c.b16 %v915, %v911
    %v948 = vpack.c.b16 %v916, %v912
    %v949 = vpack.c.b16 %v917, %v913
    %v950 = vpack.c.b16 %v918, %v914
    %983 = vmatprep.subr.bf16.mxu0 %v948
    %984 = vmatpush1.bf16.msra.mxu0 %v947
    %985 = vmatprep.subr.bf16.mxu0 %v944
    %986 = vmatpush1.bf16.msra.mxu0 %v943
    %987 = vmatprep.subr.bf16.mxu0 %v940
    %988 = vmatpush1.bf16.msra.mxu0 %v939
    %989 = vmatprep.subr.bf16.mxu0 %v936
    %990 = vmatpush1.bf16.msra.mxu0 %v935
    %991 = vmatprep.subr.bf16.mxu0 %v932
    %992 = vmatpush1.bf16.msra.mxu0 %v931
    %993 = vmatprep.subr.bf16.mxu0 %v928
    %994 = vmatpush1.bf16.msra.mxu0 %v927
    %995 = vmatprep.subr.bf16.mxu0 %v924
    %996 = vmatpush1.bf16.msra.mxu0 %v923
    %997 = vmatprep.subr.bf16.mxu0 %v920
    %998 = vmatpush1.bf16.msra.mxu0 %v919
    %999 = vmatprep.subr.bf16.mxu0 0
    %1000 = vmatpush2.bf16.msra.mxu0 0
    %1001 = vmatprep.subr.bf16.mxu0 0
    %1002 = vmatpush2.bf16.msra.mxu0 0
    %1003 = vmatprep.subr.bf16.mxu0 0
    %1004 = vmatpush2.bf16.msra.mxu0 0
    %1005 = vmatprep.subr.bf16.mxu0 0
    %1006 = vmatpush2.bf16.msra.mxu0 0
    %1007 = vmatprep.subr.bf16.mxu0 0
    %1008 = vmatpush2.bf16.msra.mxu0 0
    %1009 = vmatprep.subr.bf16.mxu0 0
    %1010 = vmatpush2.bf16.msra.mxu0 0
    %1011 = vmatprep.subr.bf16.mxu0 0
    %1012 = vmatpush2.bf16.msra.mxu0 0
    %1013 = vmatprep.subr.bf16.mxu0 0
    %1014 = vmatpush2.bf16.msra.mxu0 0
    %1015 = vmatprep.mubr.bf16.mxu0 0
    %1016 = vmatmul.mubr.bf16.gmra.mxu0 %v814
    %v1017 = vpop.f32.mrf.mxu0
    %v1018 = vadd.f32 0.0, %v1017
    %v1019 = vpop.f32.mrf.mxu0
    %v1020 = vadd.f32 0.0, %v1019
    %v1021 = vpop.f32.mrf.mxu0
    %v1022 = vpop.f32.mrf.mxu0
    %1023 = vdwg.mxu0
    %1024 = vmatprep.subr.bf16.mxu0 %v950
    %1025 = vmatpush1.bf16.msra.mxu0 %v949
    %1026 = vmatprep.subr.bf16.mxu0 %v946
    %1027 = vmatpush1.bf16.msra.mxu0 %v945
    %1028 = vmatprep.subr.bf16.mxu0 %v942
    %1029 = vmatpush1.bf16.msra.mxu0 %v941
    %1030 = vmatprep.subr.bf16.mxu0 %v938
    %1031 = vmatpush1.bf16.msra.mxu0 %v937
    %1032 = vmatprep.subr.bf16.mxu0 %v934
    %1033 = vmatpush1.bf16.msra.mxu0 %v933
    %1034 = vmatprep.subr.bf16.mxu0 %v930
    %1035 = vmatpush1.bf16.msra.mxu0 %v929
    %1036 = vmatprep.subr.bf16.mxu0 %v926
    %1037 = vmatpush1.bf16.msra.mxu0 %v925
    %1038 = vmatprep.subr.bf16.mxu0 %v922
    %1039 = vmatpush1.bf16.msra.mxu0 %v921
    %1040 = vmatprep.subr.bf16.mxu0 0
    %1041 = vmatpush2.bf16.msra.mxu0 0
    %1042 = vmatprep.subr.bf16.mxu0 0
    %1043 = vmatpush2.bf16.msra.mxu0 0
    %1044 = vmatprep.subr.bf16.mxu0 0
    %1045 = vmatpush2.bf16.msra.mxu0 0
    %1046 = vmatprep.subr.bf16.mxu0 0
    %1047 = vmatpush2.bf16.msra.mxu0 0
    %1048 = vmatprep.subr.bf16.mxu0 0
    %1049 = vmatpush2.bf16.msra.mxu0 0
    %1050 = vmatprep.subr.bf16.mxu0 0
    %1051 = vmatpush2.bf16.msra.mxu0 0
    %1052 = vmatprep.subr.bf16.mxu0 0
    %1053 = vmatpush2.bf16.msra.mxu0 0
    %1054 = vmatprep.subr.bf16.mxu0 0
    %1055 = vmatpush2.bf16.msra.mxu0 0
    %1056 = vmatprep.mubr.bf16.mxu0 0
    %1057 = vmatmul.mubr.bf16.gmra.mxu0 %v814
    %v1058 = vpop.f32.mrf.mxu0
    %v1059 = vadd.f32 0.0, %v1058
    %v1060 = vpop.f32.mrf.mxu0
    %v1061 = vadd.f32 0.0, %v1060
    %v1062 = vpop.f32.mrf.mxu0
    %v1063 = vpop.f32.mrf.mxu0
    %1064 = vdwg.mxu0
    %v1065 = vadd.f32 %v819, %v1018
    %v1066 = vadd.f32 %v820, %v1020
    %v1067 = vadd.f32 %v821, %v1059
    %v1068 = vadd.f32 %v822, %v1061
    %v1069 = vxor.u32 %v1065, 2147483648
    %v1070 = vmul.f32 %v1069, 1.442695
    %v1071 = vpow.pop %v1070
    %v1072 = vadd.f32 %v1071, 1.0
    %v1073 = vrcp.pop %v1072
    %v1074 = vmul.f32 1.0, %v1073
    %v1075 = vxor.u32 %v1066, 2147483648
    %v1076 = vmul.f32 %v1075, 1.442695
    %v1077 = vpow.pop %v1076
    %v1078 = vadd.f32 %v1077, 1.0
    %v1079 = vrcp.pop %v1078
    %v1080 = vmul.f32 1.0, %v1079
    %v1081 = vtanh.pop %v1067
    %v1082 = vxor.u32 %v1068, 2147483648
    %v1083 = vmul.f32 %v1082, 1.442695
    %v1084 = vpow.pop %v1083
    %v1085 = vadd.f32 %v1084, 1.0
    %v1086 = vrcp.pop %v1085
    %v1087 = vmul.f32 1.0, %v1086
    %v1088 = vmul.f32 %v1080, %v811
    %v1089 = vmul.f32 %v1074, %v1081
    %v1090 = vadd.f32 %v1088, %v1089
    %v1091 = vtanh.pop %v1090
    %v1092 = vmul.f32 %v1087, %v1091
    %v1093 = vpack.c.bf16 %v1092, %v1092
    %s1094 = scalar_lea.vmem [#allocation3], 4
    %1095 = vst [vmem:[%s1094] sm:$0xf] %v1093
    %s1096 = scalar_lea.vmem [#allocation2], 32
    %v1097 = vld [vmem:[%s1096] sm:$0xff]
    %v1098 = vld [vmem:[%s1096 + $0x8] sm:$0xff]
    %v1099 = vunpack.c.l.bf16 %v1097
    %v1100 = vunpack.c.h.bf16 %v1097
    %v1101 = vunpack.c.l.bf16 %v1098
    %v1102 = vunpack.c.h.bf16 %v1098
    %1103 = vmatprep.subr.bf16.mxu0 %v948
    %1104 = vmatpush1.bf16.msra.mxu0 %v947
    %1105 = vmatprep.subr.bf16.mxu0 %v944
    %1106 = vmatpush1.bf16.msra.mxu0 %v943
    %1107 = vmatprep.subr.bf16.mxu0 %v940
    %1108 = vmatpush1.bf16.msra.mxu0 %v939
    %1109 = vmatprep.subr.bf16.mxu0 %v936
    %1110 = vmatpush1.bf16.msra.mxu0 %v935
    %1111 = vmatprep.subr.bf16.mxu0 %v932
    %1112 = vmatpush1.bf16.msra.mxu0 %v931
    %1113 = vmatprep.subr.bf16.mxu0 %v928
    %1114 = vmatpush1.bf16.msra.mxu0 %v927
    %1115 = vmatprep.subr.bf16.mxu0 %v924
    %1116 = vmatpush1.bf16.msra.mxu0 %v923
    %1117 = vmatprep.subr.bf16.mxu0 %v920
    %1118 = vmatpush1.bf16.msra.mxu0 %v919
    %1119 = vmatprep.subr.bf16.mxu0 0
    %1120 = vmatpush2.bf16.msra.mxu0 0
    %1121 = vmatprep.subr.bf16.mxu0 0
    %1122 = vmatpush2.bf16.msra.mxu0 0
    %1123 = vmatprep.subr.bf16.mxu0 0
    %1124 = vmatpush2.bf16.msra.mxu0 0
    %1125 = vmatprep.subr.bf16.mxu0 0
    %1126 = vmatpush2.bf16.msra.mxu0 0
    %1127 = vmatprep.subr.bf16.mxu0 0
    %1128 = vmatpush2.bf16.msra.mxu0 0
    %1129 = vmatprep.subr.bf16.mxu0 0
    %1130 = vmatpush2.bf16.msra.mxu0 0
    %1131 = vmatprep.subr.bf16.mxu0 0
    %1132 = vmatpush2.bf16.msra.mxu0 0
    %1133 = vmatprep.subr.bf16.mxu0 0
    %1134 = vmatpush2.bf16.msra.mxu0 0
    %1135 = vmatprep.mubr.bf16.mxu0 0
    %1136 = vmatmul.mubr.bf16.gmra.mxu0 %v1093
    %v1137 = vpop.f32.mrf.mxu0
    %v1138 = vadd.f32 0.0, %v1137
    %v1139 = vpop.f32.mrf.mxu0
    %v1140 = vadd.f32 0.0, %v1139
    %v1141 = vpop.f32.mrf.mxu0
    %v1142 = vpop.f32.mrf.mxu0
    %1143 = vdwg.mxu0
    %1144 = vmatprep.subr.bf16.mxu0 %v950
    %1145 = vmatpush1.bf16.msra.mxu0 %v949
    %1146 = vmatprep.subr.bf16.mxu0 %v946
    %1147 = vmatpush1.bf16.msra.mxu0 %v945
    %1148 = vmatprep.subr.bf16.mxu0 %v942
    %1149 = vmatpush1.bf16.msra.mxu0 %v941
    %1150 = vmatprep.subr.bf16.mxu0 %v938
    %1151 = vmatpush1.bf16.msra.mxu0 %v937
    %1152 = vmatprep.subr.bf16.mxu0 %v934
    %1153 = vmatpush1.bf16.msra.mxu0 %v933
    %1154 = vmatprep.subr.bf16.mxu0 %v930
    %1155 = vmatpush1.bf16.msra.mxu0 %v929
    %1156 = vmatprep.subr.bf16.mxu0 %v926
    %1157 = vmatpush1.bf16.msra.mxu0 %v925
    %1158 = vmatprep.subr.bf16.mxu0 %v922
    %1159 = vmatpush1.bf16.msra.mxu0 %v921
    %1160 = vmatprep.subr.bf16.mxu0 0
    %1161 = vmatpush2.bf16.msra.mxu0 0
    %1162 = vmatprep.subr.bf16.mxu0 0
    %1163 = vmatpush2.bf16.msra.mxu0 0
    %1164 = vmatprep.subr.bf16.mxu0 0
    %1165 = vmatpush2.bf16.msra.mxu0 0
    %1166 = vmatprep.subr.bf16.mxu0 0
    %1167 = vmatpush2.bf16.msra.mxu0 0
    %1168 = vmatprep.subr.bf16.mxu0 0
    %1169 = vmatpush2.bf16.msra.mxu0 0
    %1170 = vmatprep.subr.bf16.mxu0 0
    %1171 = vmatpush2.bf16.msra.mxu0 0
    %1172 = vmatprep.subr.bf16.mxu0 0
    %1173 = vmatpush2.bf16.msra.mxu0 0
    %1174 = vmatprep.subr.bf16.mxu0 0
    %1175 = vmatpush2.bf16.msra.mxu0 0
    %1176 = vmatprep.mubr.bf16.mxu0 0
    %1177 = vmatmul.mubr.bf16.gmra.mxu0 %v1093
    %v1178 = vpop.f32.mrf.mxu0
    %v1179 = vadd.f32 0.0, %v1178
    %v1180 = vpop.f32.mrf.mxu0
    %v1181 = vadd.f32 0.0, %v1180
    %v1182 = vpop.f32.mrf.mxu0
    %v1183 = vpop.f32.mrf.mxu0
    %1184 = vdwg.mxu0
    %v1185 = vadd.f32 %v1099, %v1138
    %v1186 = vadd.f32 %v1100, %v1140
    %v1187 = vadd.f32 %v1101, %v1179
    %v1188 = vadd.f32 %v1102, %v1181
    %v1189 = vxor.u32 %v1185, 2147483648
    %v1190 = vmul.f32 %v1189, 1.442695
    %v1191 = vpow.pop %v1190
    %v1192 = vadd.f32 %v1191, 1.0
    %v1193 = vrcp.pop %v1192
    %v1194 = vmul.f32 1.0, %v1193
    %v1195 = vxor.u32 %v1186, 2147483648
    %v1196 = vmul.f32 %v1195, 1.442695
    %v1197 = vpow.pop %v1196
    %v1198 = vadd.f32 %v1197, 1.0
    %v1199 = vrcp.pop %v1198
    %v1200 = vmul.f32 1.0, %v1199
    %v1201 = vtanh.pop %v1187
    %v1202 = vxor.u32 %v1188, 2147483648
    %v1203 = vmul.f32 %v1202, 1.442695
    %v1204 = vpow.pop %v1203
    %v1205 = vadd.f32 %v1204, 1.0
    %v1206 = vrcp.pop %v1205
    %v1207 = vmul.f32 1.0, %v1206
    %v1208 = vmul.f32 %v1200, %v1090
    %v1209 = vmul.f32 %v1194, %v1201
    %v1210 = vadd.f32 %v1208, %v1209
    %v1211 = vtanh.pop %v1210
    %v1212 = vmul.f32 %v1207, %v1211
    %v1213 = vpack.c.bf16 %v1212, %v1212
    %s1214 = scalar_lea.vmem [#allocation3], 8
    %1215 = vst [vmem:[%s1214] sm:$0xf] %v1213
    %s1216 = scalar_lea.vmem [#allocation2], 48
    %v1217 = vld [vmem:[%s1216] sm:$0xff]
    %v1218 = vld [vmem:[%s1216 + $0x8] sm:$0xff]
    %v1219 = vunpack.c.l.bf16 %v1217
    %v1220 = vunpack.c.h.bf16 %v1217
    %v1221 = vunpack.c.l.bf16 %v1218
    %v1222 = vunpack.c.h.bf16 %v1218
    %1223 = vmatprep.subr.bf16.mxu0 %v948
    %1224 = vmatpush1.bf16.msra.mxu0 %v947
    %1225 = vmatprep.subr.bf16.mxu0 %v944
    %1226 = vmatpush1.bf16.msra.mxu0 %v943
    %1227 = vmatprep.subr.bf16.mxu0 %v940
    %1228 = vmatpush1.bf16.msra.mxu0 %v939
    %1229 = vmatprep.subr.bf16.mxu0 %v936
    %1230 = vmatpush1.bf16.msra.mxu0 %v935
    %1231 = vmatprep.subr.bf16.mxu0 %v932
    %1232 = vmatpush1.bf16.msra.mxu0 %v931
    %1233 = vmatprep.subr.bf16.mxu0 %v928
    %1234 = vmatpush1.bf16.msra.mxu0 %v927
    %1235 = vmatprep.subr.bf16.mxu0 %v924
    %1236 = vmatpush1.bf16.msra.mxu0 %v923
    %1237 = vmatprep.subr.bf16.mxu0 %v920
    %1238 = vmatpush1.bf16.msra.mxu0 %v919
    %1239 = vmatprep.subr.bf16.mxu0 0
    %1240 = vmatpush2.bf16.msra.mxu0 0
    %1241 = vmatprep.subr.bf16.mxu0 0
    %1242 = vmatpush2.bf16.msra.mxu0 0
    %1243 = vmatprep.subr.bf16.mxu0 0
    %1244 = vmatpush2.bf16.msra.mxu0 0
    %1245 = vmatprep.subr.bf16.mxu0 0
    %1246 = vmatpush2.bf16.msra.mxu0 0
    %1247 = vmatprep.subr.bf16.mxu0 0
    %1248 = vmatpush2.bf16.msra.mxu0 0
    %1249 = vmatprep.subr.bf16.mxu0 0
    %1250 = vmatpush2.bf16.msra.mxu0 0
    %1251 = vmatprep.subr.bf16.mxu0 0
    %1252 = vmatpush2.bf16.msra.mxu0 0
    %1253 = vmatprep.subr.bf16.mxu0 0
    %1254 = vmatpush2.bf16.msra.mxu0 0
    %1255 = vmatprep.mubr.bf16.mxu0 0
    %1256 = vmatmul.mubr.bf16.gmra.mxu0 %v1213
    %v1257 = vpop.f32.mrf.mxu0
    %v1258 = vadd.f32 0.0, %v1257
    %v1259 = vpop.f32.mrf.mxu0
    %v1260 = vadd.f32 0.0, %v1259
    %v1261 = vpop.f32.mrf.mxu0
    %v1262 = vpop.f32.mrf.mxu0
    %1263 = vdwg.mxu0
    %1264 = vmatprep.subr.bf16.mxu0 %v950
    %1265 = vmatpush1.bf16.msra.mxu0 %v949
    %1266 = vmatprep.subr.bf16.mxu0 %v946
    %1267 = vmatpush1.bf16.msra.mxu0 %v945
    %1268 = vmatprep.subr.bf16.mxu0 %v942
    %1269 = vmatpush1.bf16.msra.mxu0 %v941
    %1270 = vmatprep.subr.bf16.mxu0 %v938
    %1271 = vmatpush1.bf16.msra.mxu0 %v937
    %1272 = vmatprep.subr.bf16.mxu0 %v934
    %1273 = vmatpush1.bf16.msra.mxu0 %v933
    %1274 = vmatprep.subr.bf16.mxu0 %v930
    %1275 = vmatpush1.bf16.msra.mxu0 %v929
    %1276 = vmatprep.subr.bf16.mxu0 %v926
    %1277 = vmatpush1.bf16.msra.mxu0 %v925
    %1278 = vmatprep.subr.bf16.mxu0 %v922
    %1279 = vmatpush1.bf16.msra.mxu0 %v921
    %1280 = vmatprep.subr.bf16.mxu0 0
    %1281 = vmatpush2.bf16.msra.mxu0 0
    %1282 = vmatprep.subr.bf16.mxu0 0
    %1283 = vmatpush2.bf16.msra.mxu0 0
    %1284 = vmatprep.subr.bf16.mxu0 0
    %1285 = vmatpush2.bf16.msra.mxu0 0
    %1286 = vmatprep.subr.bf16.mxu0 0
    %1287 = vmatpush2.bf16.msra.mxu0 0
    %1288 = vmatprep.subr.bf16.mxu0 0
    %1289 = vmatpush2.bf16.msra.mxu0 0
    %1290 = vmatprep.subr.bf16.mxu0 0
    %1291 = vmatpush2.bf16.msra.mxu0 0
    %1292 = vmatprep.subr.bf16.mxu0 0
    %1293 = vmatpush2.bf16.msra.mxu0 0
    %1294 = vmatprep.subr.bf16.mxu0 0
    %1295 = vmatpush2.bf16.msra.mxu0 0
    %1296 = vmatprep.mubr.bf16.mxu0 0
    %1297 = vmatmul.mubr.bf16.gmra.mxu0 %v1213
    %v1298 = vpop.f32.mrf.mxu0
    %v1299 = vadd.f32 0.0, %v1298
    %v1300 = vpop.f32.mrf.mxu0
    %v1301 = vadd.f32 0.0, %v1300
    %v1302 = vpop.f32.mrf.mxu0
    %v1303 = vpop.f32.mrf.mxu0
    %1304 = vdwg.mxu0
    %v1305 = vadd.f32 %v1219, %v1258
    %v1306 = vadd.f32 %v1220, %v1260
    %v1307 = vadd.f32 %v1221, %v1299
    %v1308 = vadd.f32 %v1222, %v1301
    %v1309 = vxor.u32 %v1305, 2147483648
    %v1310 = vmul.f32 %v1309, 1.442695
    %v1311 = vpow.pop %v1310
    %v1312 = vadd.f32 %v1311, 1.0
    %v1313 = vrcp.pop %v1312
    %v1314 = vmul.f32 1.0, %v1313
    %v1315 = vxor.u32 %v1306, 2147483648
    %v1316 = vmul.f32 %v1315, 1.442695
    %v1317 = vpow.pop %v1316
    %v1318 = vadd.f32 %v1317, 1.0
    %v1319 = vrcp.pop %v1318
    %v1320 = vmul.f32 1.0, %v1319
    %v1321 = vtanh.pop %v1307
    %v1322 = vxor.u32 %v1308, 2147483648
    %v1323 = vmul.f32 %v1322, 1.442695
    %v1324 = vpow.pop %v1323
    %v1325 = vadd.f32 %v1324, 1.0
    %v1326 = vrcp.pop %v1325
    %v1327 = vmul.f32 1.0, %v1326
    %v1328 = vmul.f32 %v1320, %v1210
    %v1329 = vmul.f32 %v1314, %v1321
    %v1330 = vadd.f32 %v1328, %v1329
    %v1331 = vtanh.pop %v1330
    %v1332 = vmul.f32 %v1327, %v1331
    %v1333 = vpack.c.bf16 %v1332, %v1332
    %s1334 = scalar_lea.vmem [#allocation3], 12
    %1335 = vst [vmem:[%s1334] sm:$0xf] %v1333
    %s1336 = scalar_lea.vmem [#allocation2], 64
    %v1337 = vld [vmem:[%s1336] sm:$0xff]
    %v1338 = vld [vmem:[%s1336 + $0x8] sm:$0xff]
    %v1339 = vunpack.c.l.bf16 %v1337
    %v1340 = vunpack.c.h.bf16 %v1337
    %v1341 = vunpack.c.l.bf16 %v1338
    %v1342 = vunpack.c.h.bf16 %v1338
    %1343 = vmatprep.subr.bf16.mxu0 %v948
    %1344 = vmatpush1.bf16.msra.mxu0 %v947
    %1345 = vmatprep.subr.bf16.mxu0 %v944
    %1346 = vmatpush1.bf16.msra.mxu0 %v943
    %1347 = vmatprep.subr.bf16.mxu0 %v940
    %1348 = vmatpush1.bf16.msra.mxu0 %v939
    %1349 = vmatprep.subr.bf16.mxu0 %v936
    %1350 = vmatpush1.bf16.msra.mxu0 %v935
    %1351 = vmatprep.subr.bf16.mxu0 %v932
    %1352 = vmatpush1.bf16.msra.mxu0 %v931
    %1353 = vmatprep.subr.bf16.mxu0 %v928
    %1354 = vmatpush1.bf16.msra.mxu0 %v927
    %1355 = vmatprep.subr.bf16.mxu0 %v924
    %1356 = vmatpush1.bf16.msra.mxu0 %v923
    %1357 = vmatprep.subr.bf16.mxu0 %v920
    %1358 = vmatpush1.bf16.msra.mxu0 %v919
    %1359 = vmatprep.subr.bf16.mxu0 0
    %1360 = vmatpush2.bf16.msra.mxu0 0
    %1361 = vmatprep.subr.bf16.mxu0 0
    %1362 = vmatpush2.bf16.msra.mxu0 0
    %1363 = vmatprep.subr.bf16.mxu0 0
    %1364 = vmatpush2.bf16.msra.mxu0 0
    %1365 = vmatprep.subr.bf16.mxu0 0
    %1366 = vmatpush2.bf16.msra.mxu0 0
    %1367 = vmatprep.subr.bf16.mxu0 0
    %1368 = vmatpush2.bf16.msra.mxu0 0
    %1369 = vmatprep.subr.bf16.mxu0 0
    %1370 = vmatpush2.bf16.msra.mxu0 0
    %1371 = vmatprep.subr.bf16.mxu0 0
    %1372 = vmatpush2.bf16.msra.mxu0 0
    %1373 = vmatprep.subr.bf16.mxu0 0
    %1374 = vmatpush2.bf16.msra.mxu0 0
    %1375 = vmatprep.mubr.bf16.mxu0 0
    %1376 = vmatmul.mubr.bf16.gmra.mxu0 %v1333
    %v1377 = vpop.f32.mrf.mxu0
    %v1378 = vadd.f32 0.0, %v1377
    %v1379 = vpop.f32.mrf.mxu0
    %v1380 = vadd.f32 0.0, %v1379
    %v1381 = vpop.f32.mrf.mxu0
    %v1382 = vpop.f32.mrf.mxu0
    %1383 = vdwg.mxu0
    %1384 = vmatprep.subr.bf16.mxu0 %v950
    %1385 = vmatpush1.bf16.msra.mxu0 %v949
    %1386 = vmatprep.subr.bf16.mxu0 %v946
    %1387 = vmatpush1.bf16.msra.mxu0 %v945
    %1388 = vmatprep.subr.bf16.mxu0 %v942
    %1389 = vmatpush1.bf16.msra.mxu0 %v941
    %1390 = vmatprep.subr.bf16.mxu0 %v938
    %1391 = vmatpush1.bf16.msra.mxu0 %v937
    %1392 = vmatprep.subr.bf16.mxu0 %v934
    %1393 = vmatpush1.bf16.msra.mxu0 %v933
    %1394 = vmatprep.subr.bf16.mxu0 %v930
    %1395 = vmatpush1.bf16.msra.mxu0 %v929
    %1396 = vmatprep.subr.bf16.mxu0 %v926
    %1397 = vmatpush1.bf16.msra.mxu0 %v925
    %1398 = vmatprep.subr.bf16.mxu0 %v922
    %1399 = vmatpush1.bf16.msra.mxu0 %v921
    %1400 = vmatprep.subr.bf16.mxu0 0
    %1401 = vmatpush2.bf16.msra.mxu0 0
    %1402 = vmatprep.subr.bf16.mxu0 0
    %1403 = vmatpush2.bf16.msra.mxu0 0
    %1404 = vmatprep.subr.bf16.mxu0 0
    %1405 = vmatpush2.bf16.msra.mxu0 0
    %1406 = vmatprep.subr.bf16.mxu0 0
    %1407 = vmatpush2.bf16.msra.mxu0 0
    %1408 = vmatprep.subr.bf16.mxu0 0
    %1409 = vmatpush2.bf16.msra.mxu0 0
    %1410 = vmatprep.subr.bf16.mxu0 0
    %1411 = vmatpush2.bf16.msra.mxu0 0
    %1412 = vmatprep.subr.bf16.mxu0 0
    %1413 = vmatpush2.bf16.msra.mxu0 0
    %1414 = vmatprep.subr.bf16.mxu0 0
    %1415 = vmatpush2.bf16.msra.mxu0 0
    %1416 = vmatprep.mubr.bf16.mxu0 0
    %1417 = vmatmul.mubr.bf16.gmra.mxu0 %v1333
    %v1418 = vpop.f32.mrf.mxu0
    %v1419 = vadd.f32 0.0, %v1418
    %v1420 = vpop.f32.mrf.mxu0
    %v1421 = vadd.f32 0.0, %v1420
    %v1422 = vpop.f32.mrf.mxu0
    %v1423 = vpop.f32.mrf.mxu0
    %1424 = vdwg.mxu0
    %v1425 = vadd.f32 %v1339, %v1378
    %v1426 = vadd.f32 %v1340, %v1380
    %v1427 = vadd.f32 %v1341, %v1419
    %v1428 = vadd.f32 %v1342, %v1421
    %v1429 = vxor.u32 %v1425, 2147483648
    %v1430 = vmul.f32 %v1429, 1.442695
    %v1431 = vpow.pop %v1430
    %v1432 = vadd.f32 %v1431, 1.0
    %v1433 = vrcp.pop %v1432
    %v1434 = vmul.f32 1.0, %v1433
    %v1435 = vxor.u32 %v1426, 2147483648
    %v1436 = vmul.f32 %v1435, 1.442695
    %v1437 = vpow.pop %v1436
    %v1438 = vadd.f32 %v1437, 1.0
    %v1439 = vrcp.pop %v1438
    %v1440 = vmul.f32 1.0, %v1439
    %v1441 = vtanh.pop %v1427
    %v1442 = vxor.u32 %v1428, 2147483648
    %v1443 = vmul.f32 %v1442, 1.442695
    %v1444 = vpow.pop %v1443
    %v1445 = vadd.f32 %v1444, 1.0
    %v1446 = vrcp.pop %v1445
    %v1447 = vmul.f32 1.0, %v1446
    %v1448 = vmul.f32 %v1440, %v1330
    %v1449 = vmul.f32 %v1434, %v1441
    %v1450 = vadd.f32 %v1448, %v1449
    %v1451 = vtanh.pop %v1450
    %v1452 = vmul.f32 %v1447, %v1451
    %v1453 = vpack.c.bf16 %v1452, %v1452
    %s1454 = scalar_lea.vmem [#allocation3], 16
    %1455 = vst [vmem:[%s1454] sm:$0xf] %v1453
    %s1456 = scalar_lea.vmem [#allocation2], 80
    %v1457 = vld [vmem:[%s1456] sm:$0xff]
    %v1458 = vld [vmem:[%s1456 + $0x8] sm:$0xff]
    %v1459 = vunpack.c.l.bf16 %v1457
    %v1460 = vunpack.c.h.bf16 %v1457
    %v1461 = vunpack.c.l.bf16 %v1458
    %v1462 = vunpack.c.h.bf16 %v1458
    %1463 = vmatprep.subr.bf16.mxu0 %v948
    %1464 = vmatpush1.bf16.msra.mxu0 %v947
    %1465 = vmatprep.subr.bf16.mxu0 %v944
    %1466 = vmatpush1.bf16.msra.mxu0 %v943
    %1467 = vmatprep.subr.bf16.mxu0 %v940
    %1468 = vmatpush1.bf16.msra.mxu0 %v939
    %1469 = vmatprep.subr.bf16.mxu0 %v936
    %1470 = vmatpush1.bf16.msra.mxu0 %v935
    %1471 = vmatprep.subr.bf16.mxu0 %v932
    %1472 = vmatpush1.bf16.msra.mxu0 %v931
    %1473 = vmatprep.subr.bf16.mxu0 %v928
    %1474 = vmatpush1.bf16.msra.mxu0 %v927
    %1475 = vmatprep.subr.bf16.mxu0 %v924
    %1476 = vmatpush1.bf16.msra.mxu0 %v923
    %1477 = vmatprep.subr.bf16.mxu0 %v920
    %1478 = vmatpush1.bf16.msra.mxu0 %v919
    %1479 = vmatprep.subr.bf16.mxu0 0
    %1480 = vmatpush2.bf16.msra.mxu0 0
    %1481 = vmatprep.subr.bf16.mxu0 0
    %1482 = vmatpush2.bf16.msra.mxu0 0
    %1483 = vmatprep.subr.bf16.mxu0 0
    %1484 = vmatpush2.bf16.msra.mxu0 0
    %1485 = vmatprep.subr.bf16.mxu0 0
    %1486 = vmatpush2.bf16.msra.mxu0 0
    %1487 = vmatprep.subr.bf16.mxu0 0
    %1488 = vmatpush2.bf16.msra.mxu0 0
    %1489 = vmatprep.subr.bf16.mxu0 0
    %1490 = vmatpush2.bf16.msra.mxu0 0
    %1491 = vmatprep.subr.bf16.mxu0 0
    %1492 = vmatpush2.bf16.msra.mxu0 0
    %1493 = vmatprep.subr.bf16.mxu0 0
    %1494 = vmatpush2.bf16.msra.mxu0 0
    %1495 = vmatprep.mubr.bf16.mxu0 0
    %1496 = vmatmul.mubr.bf16.gmra.mxu0 %v1453
    %v1497 = vpop.f32.mrf.mxu0
    %v1498 = vadd.f32 0.0, %v1497
    %v1499 = vpop.f32.mrf.mxu0
    %v1500 = vadd.f32 0.0, %v1499
    %v1501 = vpop.f32.mrf.mxu0
    %v1502 = vpop.f32.mrf.mxu0
    %1503 = vdwg.mxu0
    %1504 = vmatprep.subr.bf16.mxu0 %v950
    %1505 = vmatpush1.bf16.msra.mxu0 %v949
    %1506 = vmatprep.subr.bf16.mxu0 %v946
    %1507 = vmatpush1.bf16.msra.mxu0 %v945
    %1508 = vmatprep.subr.bf16.mxu0 %v942
    %1509 = vmatpush1.bf16.msra.mxu0 %v941
    %1510 = vmatprep.subr.bf16.mxu0 %v938
    %1511 = vmatpush1.bf16.msra.mxu0 %v937
    %1512 = vmatprep.subr.bf16.mxu0 %v934
    %1513 = vmatpush1.bf16.msra.mxu0 %v933
    %1514 = vmatprep.subr.bf16.mxu0 %v930
    %1515 = vmatpush1.bf16.msra.mxu0 %v929
    %1516 = vmatprep.subr.bf16.mxu0 %v926
    %1517 = vmatpush1.bf16.msra.mxu0 %v925
    %1518 = vmatprep.subr.bf16.mxu0 %v922
    %1519 = vmatpush1.bf16.msra.mxu0 %v921
    %1520 = vmatprep.subr.bf16.mxu0 0
    %1521 = vmatpush2.bf16.msra.mxu0 0
    %1522 = vmatprep.subr.bf16.mxu0 0
    %1523 = vmatpush2.bf16.msra.mxu0 0
    %1524 = vmatprep.subr.bf16.mxu0 0
    %1525 = vmatpush2.bf16.msra.mxu0 0
    %1526 = vmatprep.subr.bf16.mxu0 0
    %1527 = vmatpush2.bf16.msra.mxu0 0
    %1528 = vmatprep.subr.bf16.mxu0 0
    %1529 = vmatpush2.bf16.msra.mxu0 0
    %1530 = vmatprep.subr.bf16.mxu0 0
    %1531 = vmatpush2.bf16.msra.mxu0 0
    %1532 = vmatprep.subr.bf16.mxu0 0
    %1533 = vmatpush2.bf16.msra.mxu0 0
    %1534 = vmatprep.subr.bf16.mxu0 0
    %1535 = vmatpush2.bf16.msra.mxu0 0
    %1536 = vmatprep.mubr.bf16.mxu0 0
    %1537 = vmatmul.mubr.bf16.gmra.mxu0 %v1453
    %v1538 = vpop.f32.mrf.mxu0
    %v1539 = vadd.f32 0.0, %v1538
    %v1540 = vpop.f32.mrf.mxu0
    %v1541 = vadd.f32 0.0, %v1540
    %v1542 = vpop.f32.mrf.mxu0
    %v1543 = vpop.f32.mrf.mxu0
    %1544 = vdwg.mxu0
    %v1545 = vadd.f32 %v1459, %v1498
    %v1546 = vadd.f32 %v1460, %v1500
    %v1547 = vadd.f32 %v1461, %v1539
    %v1548 = vadd.f32 %v1462, %v1541
    %v1549 = vxor.u32 %v1545, 2147483648
    %v1550 = vmul.f32 %v1549, 1.442695
    %v1551 = vpow.pop %v1550
    %v1552 = vadd.f32 %v1551, 1.0
    %v1553 = vrcp.pop %v1552
    %v1554 = vmul.f32 1.0, %v1553
    %v1555 = vxor.u32 %v1546, 2147483648
    %v1556 = vmul.f32 %v1555, 1.442695
    %v1557 = vpow.pop %v1556
    %v1558 = vadd.f32 %v1557, 1.0
    %v1559 = vrcp.pop %v1558
    %v1560 = vmul.f32 1.0, %v1559
    %v1561 = vtanh.pop %v1547
    %v1562 = vxor.u32 %v1548, 2147483648
    %v1563 = vmul.f32 %v1562, 1.442695
    %v1564 = vpow.pop %v1563
    %v1565 = vadd.f32 %v1564, 1.0
    %v1566 = vrcp.pop %v1565
    %v1567 = vmul.f32 1.0, %v1566
    %v1568 = vmul.f32 %v1560, %v1450
    %v1569 = vmul.f32 %v1554, %v1561
    %v1570 = vadd.f32 %v1568, %v1569
    %v1571 = vtanh.pop %v1570
    %v1572 = vmul.f32 %v1567, %v1571
    %v1573 = vpack.c.bf16 %v1572, %v1572
    %s1574 = scalar_lea.vmem [#allocation3], 20
    %1575 = vst [vmem:[%s1574] sm:$0xf] %v1573
    %s1576 = scalar_lea.vmem [#allocation2], 96
    %v1577 = vld [vmem:[%s1576] sm:$0xff]
    %v1578 = vld [vmem:[%s1576 + $0x8] sm:$0xff]
    %v1579 = vunpack.c.l.bf16 %v1577
    %v1580 = vunpack.c.h.bf16 %v1577
    %v1581 = vunpack.c.l.bf16 %v1578
    %v1582 = vunpack.c.h.bf16 %v1578
    %1583 = vmatprep.subr.bf16.mxu0 %v948
    %1584 = vmatpush1.bf16.msra.mxu0 %v947
    %1585 = vmatprep.subr.bf16.mxu0 %v944
    %1586 = vmatpush1.bf16.msra.mxu0 %v943
    %1587 = vmatprep.subr.bf16.mxu0 %v940
    %1588 = vmatpush1.bf16.msra.mxu0 %v939
    %1589 = vmatprep.subr.bf16.mxu0 %v936
    %1590 = vmatpush1.bf16.msra.mxu0 %v935
    %1591 = vmatprep.subr.bf16.mxu0 %v932
    %1592 = vmatpush1.bf16.msra.mxu0 %v931
    %1593 = vmatprep.subr.bf16.mxu0 %v928
    %1594 = vmatpush1.bf16.msra.mxu0 %v927
    %1595 = vmatprep.subr.bf16.mxu0 %v924
    %1596 = vmatpush1.bf16.msra.mxu0 %v923
    %1597 = vmatprep.subr.bf16.mxu0 %v920
    %1598 = vmatpush1.bf16.msra.mxu0 %v919
    %1599 = vmatprep.subr.bf16.mxu0 0
    %1600 = vmatpush2.bf16.msra.mxu0 0
    %1601 = vmatprep.subr.bf16.mxu0 0
    %1602 = vmatpush2.bf16.msra.mxu0 0
    %1603 = vmatprep.subr.bf16.mxu0 0
    %1604 = vmatpush2.bf16.msra.mxu0 0
    %1605 = vmatprep.subr.bf16.mxu0 0
    %1606 = vmatpush2.bf16.msra.mxu0 0
    %1607 = vmatprep.subr.bf16.mxu0 0
    %1608 = vmatpush2.bf16.msra.mxu0 0
    %1609 = vmatprep.subr.bf16.mxu0 0
    %1610 = vmatpush2.bf16.msra.mxu0 0
    %1611 = vmatprep.subr.bf16.mxu0 0
    %1612 = vmatpush2.bf16.msra.mxu0 0
    %1613 = vmatprep.subr.bf16.mxu0 0
    %1614 = vmatpush2.bf16.msra.mxu0 0
    %1615 = vmatprep.mubr.bf16.mxu0 0
    %1616 = vmatmul.mubr.bf16.gmra.mxu0 %v1573
    %v1617 = vpop.f32.mrf.mxu0
    %v1618 = vadd.f32 0.0, %v1617
    %v1619 = vpop.f32.mrf.mxu0
    %v1620 = vadd.f32 0.0, %v1619
    %v1621 = vpop.f32.mrf.mxu0
    %v1622 = vpop.f32.mrf.mxu0
    %1623 = vdwg.mxu0
    %1624 = vmatprep.subr.bf16.mxu0 %v950
    %1625 = vmatpush1.bf16.msra.mxu0 %v949
    %1626 = vmatprep.subr.bf16.mxu0 %v946
    %1627 = vmatpush1.bf16.msra.mxu0 %v945
    %1628 = vmatprep.subr.bf16.mxu0 %v942
    %1629 = vmatpush1.bf16.msra.mxu0 %v941
    %1630 = vmatprep.subr.bf16.mxu0 %v938
    %1631 = vmatpush1.bf16.msra.mxu0 %v937
    %1632 = vmatprep.subr.bf16.mxu0 %v934
    %1633 = vmatpush1.bf16.msra.mxu0 %v933
    %1634 = vmatprep.subr.bf16.mxu0 %v930
    %1635 = vmatpush1.bf16.msra.mxu0 %v929
    %1636 = vmatprep.subr.bf16.mxu0 %v926
    %1637 = vmatpush1.bf16.msra.mxu0 %v925
    %1638 = vmatprep.subr.bf16.mxu0 %v922
    %1639 = vmatpush1.bf16.msra.mxu0 %v921
    %1640 = vmatprep.subr.bf16.mxu0 0
    %1641 = vmatpush2.bf16.msra.mxu0 0
    %1642 = vmatprep.subr.bf16.mxu0 0
    %1643 = vmatpush2.bf16.msra.mxu0 0
    %1644 = vmatprep.subr.bf16.mxu0 0
    %1645 = vmatpush2.bf16.msra.mxu0 0
    %1646 = vmatprep.subr.bf16.mxu0 0
    %1647 = vmatpush2.bf16.msra.mxu0 0
    %1648 = vmatprep.subr.bf16.mxu0 0
    %1649 = vmatpush2.bf16.msra.mxu0 0
    %1650 = vmatprep.subr.bf16.mxu0 0
    %1651 = vmatpush2.bf16.msra.mxu0 0
    %1652 = vmatprep.subr.bf16.mxu0 0
    %1653 = vmatpush2.bf16.msra.mxu0 0
    %1654 = vmatprep.subr.bf16.mxu0 0
    %1655 = vmatpush2.bf16.msra.mxu0 0
    %1656 = vmatprep.mubr.bf16.mxu0 0
    %1657 = vmatmul.mubr.bf16.gmra.mxu0 %v1573
    %v1658 = vpop.f32.mrf.mxu0
    %v1659 = vadd.f32 0.0, %v1658
    %v1660 = vpop.f32.mrf.mxu0
    %v1661 = vadd.f32 0.0, %v1660
    %v1662 = vpop.f32.mrf.mxu0
    %v1663 = vpop.f32.mrf.mxu0
    %1664 = vdwg.mxu0
    %v1665 = vadd.f32 %v1579, %v1618
    %v1666 = vadd.f32 %v1580, %v1620
    %v1667 = vadd.f32 %v1581, %v1659
    %v1668 = vadd.f32 %v1582, %v1661
    %v1669 = vxor.u32 %v1665, 2147483648
    %v1670 = vmul.f32 %v1669, 1.442695
    %v1671 = vpow.pop %v1670
    %v1672 = vadd.f32 %v1671, 1.0
    %v1673 = vrcp.pop %v1672
    %v1674 = vmul.f32 1.0, %v1673
    %v1675 = vxor.u32 %v1666, 2147483648
    %v1676 = vmul.f32 %v1675, 1.442695
    %v1677 = vpow.pop %v1676
    %v1678 = vadd.f32 %v1677, 1.0
    %v1679 = vrcp.pop %v1678
    %v1680 = vmul.f32 1.0, %v1679
    %v1681 = vtanh.pop %v1667
    %v1682 = vxor.u32 %v1668, 2147483648
    %v1683 = vmul.f32 %v1682, 1.442695
    %v1684 = vpow.pop %v1683
    %v1685 = vadd.f32 %v1684, 1.0
    %v1686 = vrcp.pop %v1685
    %v1687 = vmul.f32 1.0, %v1686
    %v1688 = vmul.f32 %v1680, %v1570
    %v1689 = vmul.f32 %v1674, %v1681
    %v1690 = vadd.f32 %v1688, %v1689
    %v1691 = vtanh.pop %v1690
    %v1692 = vmul.f32 %v1687, %v1691
    %v1693 = vpack.c.bf16 %v1692, %v1692
    %s1694 = scalar_lea.vmem [#allocation3], 24
    %1695 = vst [vmem:[%s1694] sm:$0xf] %v1693
    %s1696 = scalar_lea.vmem [#allocation2], 112
    %v1697 = vld [vmem:[%s1696] sm:$0xff]
    %v1698 = vld [vmem:[%s1696 + $0x8] sm:$0xff]
    %v1699 = vunpack.c.l.bf16 %v1697
    %v1700 = vunpack.c.h.bf16 %v1697
    %v1701 = vunpack.c.l.bf16 %v1698
    %v1702 = vunpack.c.h.bf16 %v1698
    %1703 = vmatprep.subr.bf16.mxu0 %v948
    %1704 = vmatpush1.bf16.msra.mxu0 %v947
    %1705 = vmatprep.subr.bf16.mxu0 %v944
    %1706 = vmatpush1.bf16.msra.mxu0 %v943
    %1707 = vmatprep.subr.bf16.mxu0 %v940
    %1708 = vmatpush1.bf16.msra.mxu0 %v939
    %1709 = vmatprep.subr.bf16.mxu0 %v936
    %1710 = vmatpush1.bf16.msra.mxu0 %v935
    %1711 = vmatprep.subr.bf16.mxu0 %v932
    %1712 = vmatpush1.bf16.msra.mxu0 %v931
    %1713 = vmatprep.subr.bf16.mxu0 %v928
    %1714 = vmatpush1.bf16.msra.mxu0 %v927
    %1715 = vmatprep.subr.bf16.mxu0 %v924
    %1716 = vmatpush1.bf16.msra.mxu0 %v923
    %1717 = vmatprep.subr.bf16.mxu0 %v920
    %1718 = vmatpush1.bf16.msra.mxu0 %v919
    %1719 = vmatprep.subr.bf16.mxu0 0
    %1720 = vmatpush2.bf16.msra.mxu0 0
    %1721 = vmatprep.subr.bf16.mxu0 0
    %1722 = vmatpush2.bf16.msra.mxu0 0
    %1723 = vmatprep.subr.bf16.mxu0 0
    %1724 = vmatpush2.bf16.msra.mxu0 0
    %1725 = vmatprep.subr.bf16.mxu0 0
    %1726 = vmatpush2.bf16.msra.mxu0 0
    %1727 = vmatprep.subr.bf16.mxu0 0
    %1728 = vmatpush2.bf16.msra.mxu0 0
    %1729 = vmatprep.subr.bf16.mxu0 0
    %1730 = vmatpush2.bf16.msra.mxu0 0
    %1731 = vmatprep.subr.bf16.mxu0 0
    %1732 = vmatpush2.bf16.msra.mxu0 0
    %1733 = vmatprep.subr.bf16.mxu0 0
    %1734 = vmatpush2.bf16.msra.mxu0 0
    %1735 = vmatprep.mubr.bf16.mxu0 0
    %1736 = vmatmul.mubr.bf16.gmra.mxu0 %v1693
    %v1737 = vpop.f32.mrf.mxu0
    %v1738 = vadd.f32 0.0, %v1737
    %v1739 = vpop.f32.mrf.mxu0
    %v1740 = vadd.f32 0.0, %v1739
    %v1741 = vpop.f32.mrf.mxu0
    %v1742 = vpop.f32.mrf.mxu0
    %1743 = vdwg.mxu0
    %1744 = vmatprep.subr.bf16.mxu0 %v950
    %1745 = vmatpush1.bf16.msra.mxu0 %v949
    %1746 = vmatprep.subr.bf16.mxu0 %v946
    %1747 = vmatpush1.bf16.msra.mxu0 %v945
    %1748 = vmatprep.subr.bf16.mxu0 %v942
    %1749 = vmatpush1.bf16.msra.mxu0 %v941
    %1750 = vmatprep.subr.bf16.mxu0 %v938
    %1751 = vmatpush1.bf16.msra.mxu0 %v937
    %1752 = vmatprep.subr.bf16.mxu0 %v934
    %1753 = vmatpush1.bf16.msra.mxu0 %v933
    %1754 = vmatprep.subr.bf16.mxu0 %v930
    %1755 = vmatpush1.bf16.msra.mxu0 %v929
    %1756 = vmatprep.subr.bf16.mxu0 %v926
    %1757 = vmatpush1.bf16.msra.mxu0 %v925
    %1758 = vmatprep.subr.bf16.mxu0 %v922
    %1759 = vmatpush1.bf16.msra.mxu0 %v921
    %1760 = vmatprep.subr.bf16.mxu0 0
    %1761 = vmatpush2.bf16.msra.mxu0 0
    %1762 = vmatprep.subr.bf16.mxu0 0
    %1763 = vmatpush2.bf16.msra.mxu0 0
    %1764 = vmatprep.subr.bf16.mxu0 0
    %1765 = vmatpush2.bf16.msra.mxu0 0
    %1766 = vmatprep.subr.bf16.mxu0 0
    %1767 = vmatpush2.bf16.msra.mxu0 0
    %1768 = vmatprep.subr.bf16.mxu0 0
    %1769 = vmatpush2.bf16.msra.mxu0 0
    %1770 = vmatprep.subr.bf16.mxu0 0
    %1771 = vmatpush2.bf16.msra.mxu0 0
    %1772 = vmatprep.subr.bf16.mxu0 0
    %1773 = vmatpush2.bf16.msra.mxu0 0
    %1774 = vmatprep.subr.bf16.mxu0 0
    %1775 = vmatpush2.bf16.msra.mxu0 0
    %1776 = vmatprep.mubr.bf16.mxu0 0
    %1777 = vmatmul.mubr.bf16.gmra.mxu0 %v1693
    %v1778 = vpop.f32.mrf.mxu0
    %v1779 = vadd.f32 0.0, %v1778
    %v1780 = vpop.f32.mrf.mxu0
    %v1781 = vadd.f32 0.0, %v1780
    %v1782 = vpop.f32.mrf.mxu0
    %v1783 = vpop.f32.mrf.mxu0
    %1784 = vdwg.mxu0
    %v1785 = vadd.f32 %v1699, %v1738
    %v1786 = vadd.f32 %v1700, %v1740
    %v1787 = vadd.f32 %v1701, %v1779
    %v1788 = vadd.f32 %v1702, %v1781
    %v1789 = vxor.u32 %v1785, 2147483648
    %v1790 = vmul.f32 %v1789, 1.442695
    %v1791 = vpow.pop %v1790
    %v1792 = vadd.f32 %v1791, 1.0
    %v1793 = vrcp.pop %v1792
    %v1794 = vmul.f32 1.0, %v1793
    %v1795 = vxor.u32 %v1786, 2147483648
    %v1796 = vmul.f32 %v1795, 1.442695
    %v1797 = vpow.pop %v1796
    %v1798 = vadd.f32 %v1797, 1.0
    %v1799 = vrcp.pop %v1798
    %v1800 = vmul.f32 1.0, %v1799
    %v1801 = vtanh.pop %v1787
    %v1802 = vxor.u32 %v1788, 2147483648
    %v1803 = vmul.f32 %v1802, 1.442695
    %v1804 = vpow.pop %v1803
    %v1805 = vadd.f32 %v1804, 1.0
    %v1806 = vrcp.pop %v1805
    %v1807 = vmul.f32 1.0, %v1806
    %v1808 = vmul.f32 %v1800, %v1690
    %v1809 = vmul.f32 %v1794, %v1801
    %v1810 = vadd.f32 %v1808, %v1809
    %v1811 = vtanh.pop %v1810
    %v1812 = vmul.f32 %v1807, %v1811
    %v1813 = vpack.c.bf16 %v1812, %v1812
    %s1814 = scalar_lea.vmem [#allocation3], 28
    %1815 = vst [vmem:[%s1814] sm:$0xf] %v1813
    %v1816 = vld [vmem:[#allocation3] sm:$0xf]
    %v1817 = vld [vmem:[#allocation3 + $0x4] sm:$0xf]
    %v1818 = vld [vmem:[#allocation3 + $0x8] sm:$0xf]
    %v1819 = vld [vmem:[#allocation3 + $0xc] sm:$0xf]
    %v1820 = vld [vmem:[#allocation3 + $0x10] sm:$0xf]
    %v1821 = vld [vmem:[#allocation3 + $0x14] sm:$0xf]
    %v1822 = vld [vmem:[#allocation3 + $0x18] sm:$0xf]
    %v1823 = vld [vmem:[#allocation3 + $0x1c] sm:$0xf]
    %v1824 = vld [vmem:[#allocation11] sm:$0xff]
    %v1825 = vld [vmem:[#allocation11 + $0x8] sm:$0xff]
    %v1826 = vld [vmem:[#allocation11 + $0x10] sm:$0xff]
    %v1827 = vld [vmem:[#allocation11 + $0x18] sm:$0xff]
    %v1828 = vld [vmem:[#allocation11 + $0x20] sm:$0xff]
    %v1829 = vld [vmem:[#allocation11 + $0x28] sm:$0xff]
    %v1830 = vld [vmem:[#allocation11 + $0x30] sm:$0xff]
    %v1831 = vld [vmem:[#allocation11 + $0x38] sm:$0xff]
    %v1832 = vld [vmem:[#allocation11 + $0x40] sm:$0xff]
    %v1833 = vld [vmem:[#allocation11 + $0x48] sm:$0xff]
    %v1834 = vld [vmem:[#allocation11 + $0x50] sm:$0xff]
    %v1835 = vld [vmem:[#allocation11 + $0x58] sm:$0xff]
    %v1836 = vld [vmem:[#allocation11 + $0x60] sm:$0xff]
    %v1837 = vld [vmem:[#allocation11 + $0x68] sm:$0xff]
    %v1838 = vld [vmem:[#allocation11 + $0x70] sm:$0xff]
    %v1839 = vld [vmem:[#allocation11 + $0x78] sm:$0xff]
    %v1840 = vld [vmem:[#allocation11 + $0x80] sm:$0xff]
    %v1841 = vld [vmem:[#allocation11 + $0x88] sm:$0xff]
    %v1842 = vld [vmem:[#allocation11 + $0x90] sm:$0xff]
    %v1843 = vld [vmem:[#allocation11 + $0x98] sm:$0xff]
    %v1844 = vld [vmem:[#allocation11 + $0xa0] sm:$0xff]
    %v1845 = vld [vmem:[#allocation11 + $0xa8] sm:$0xff]
    %v1846 = vld [vmem:[#allocation11 + $0xb0] sm:$0xff]
    %v1847 = vld [vmem:[#allocation11 + $0xb8] sm:$0xff]
    %v1848 = vld [vmem:[#allocation11 + $0xc0] sm:$0xff]
    %v1849 = vld [vmem:[#allocation11 + $0xc8] sm:$0xff]
    %v1850 = vld [vmem:[#allocation11 + $0xd0] sm:$0xff]
    %v1851 = vld [vmem:[#allocation11 + $0xd8] sm:$0xff]
    %v1852 = vld [vmem:[#allocation11 + $0xe0] sm:$0xff]
    %v1853 = vld [vmem:[#allocation11 + $0xe8] sm:$0xff]
    %v1854 = vld [vmem:[#allocation11 + $0xf0] sm:$0xff]
    %v1855 = vld [vmem:[#allocation11 + $0xf8] sm:$0xff]
    %v1864 = vunpack.c.l.b16 %v1816
    %v1865 = vunpack.c.l.b16 %v1817
    %v1866 = vunpack.c.l.b16 %v1818
    %v1867 = vunpack.c.l.b16 %v1819
    %v1868 = vunpack.c.l.b16 %v1820
    %v1869 = vunpack.c.l.b16 %v1821
    %v1870 = vunpack.c.l.b16 %v1822
    %v1871 = vunpack.c.l.b16 %v1823
    %v1872 = vpack.c.b16 %v1865, %v1864
    %v1873 = vpack.c.b16 %v1867, %v1866
    %v1874 = vpack.c.b16 %v1869, %v1868
    %v1875 = vpack.c.b16 %v1871, %v1870
    %v1912 = vunpack.c.l.b16 %v1824
    %v1913 = vunpack.c.h.b16 %v1824
    %v1914 = vunpack.c.l.b16 %v1825
    %v1915 = vunpack.c.h.b16 %v1825
    %v1916 = vunpack.c.l.b16 %v1826
    %v1917 = vunpack.c.h.b16 %v1826
    %v1918 = vunpack.c.l.b16 %v1827
    %v1919 = vunpack.c.h.b16 %v1827
    %v1920 = vunpack.c.l.b16 %v1828
    %v1921 = vunpack.c.h.b16 %v1828
    %v1922 = vunpack.c.l.b16 %v1829
    %v1923 = vunpack.c.h.b16 %v1829
    %v1924 = vunpack.c.l.b16 %v1830
    %v1925 = vunpack.c.h.b16 %v1830
    %v1926 = vunpack.c.l.b16 %v1831
    %v1927 = vunpack.c.h.b16 %v1831
    %v1928 = vunpack.c.l.b16 %v1832
    %v1929 = vunpack.c.h.b16 %v1832
    %v1930 = vunpack.c.l.b16 %v1833
    %v1931 = vunpack.c.h.b16 %v1833
    %v1932 = vunpack.c.l.b16 %v1834
    %v1933 = vunpack.c.h.b16 %v1834
    %v1934 = vunpack.c.l.b16 %v1835
    %v1935 = vunpack.c.h.b16 %v1835
    %v1936 = vunpack.c.l.b16 %v1836
    %v1937 = vunpack.c.h.b16 %v1836
    %v1938 = vunpack.c.l.b16 %v1837
    %v1939 = vunpack.c.h.b16 %v1837
    %v1940 = vunpack.c.l.b16 %v1838
    %v1941 = vunpack.c.h.b16 %v1838
    %v1942 = vunpack.c.l.b16 %v1839
    %v1943 = vunpack.c.h.b16 %v1839
    %v1944 = vunpack.c.l.b16 %v1840
    %v1945 = vunpack.c.h.b16 %v1840
    %v1946 = vunpack.c.l.b16 %v1841
    %v1947 = vunpack.c.h.b16 %v1841
    %v1948 = vunpack.c.l.b16 %v1842
    %v1949 = vunpack.c.h.b16 %v1842
    %v1950 = vunpack.c.l.b16 %v1843
    %v1951 = vunpack.c.h.b16 %v1843
    %v1952 = vunpack.c.l.b16 %v1844
    %v1953 = vunpack.c.h.b16 %v1844
    %v1954 = vunpack.c.l.b16 %v1845
    %v1955 = vunpack.c.h.b16 %v1845
    %v1956 = vunpack.c.l.b16 %v1846
    %v1957 = vunpack.c.h.b16 %v1846
    %v1958 = vunpack.c.l.b16 %v1847
    %v1959 = vunpack.c.h.b16 %v1847
    %v1960 = vunpack.c.l.b16 %v1848
    %v1961 = vunpack.c.h.b16 %v1848
    %v1962 = vunpack.c.l.b16 %v1849
    %v1963 = vunpack.c.h.b16 %v1849
    %v1964 = vunpack.c.l.b16 %v1850
    %v1965 = vunpack.c.h.b16 %v1850
    %v1966 = vunpack.c.l.b16 %v1851
    %v1967 = vunpack.c.h.b16 %v1851
    %v1968 = vunpack.c.l.b16 %v1852
    %v1969 = vunpack.c.h.b16 %v1852
    %v1970 = vunpack.c.l.b16 %v1853
    %v1971 = vunpack.c.h.b16 %v1853
    %v1972 = vunpack.c.l.b16 %v1854
    %v1973 = vunpack.c.h.b16 %v1854
    %v1974 = vunpack.c.l.b16 %v1855
    %v1975 = vunpack.c.h.b16 %v1855
    %v1976 = vpack.c.b16 %v1916, %v1912
    %v1977 = vpack.c.b16 %v1917, %v1913
    %v1978 = vpack.c.b16 %v1918, %v1914
    %v1979 = vpack.c.b16 %v1919, %v1915
    %v1980 = vpack.c.b16 %v1924, %v1920
    %v1981 = vpack.c.b16 %v1925, %v1921
    %v1982 = vpack.c.b16 %v1926, %v1922
    %v1983 = vpack.c.b16 %v1927, %v1923
    %v1984 = vpack.c.b16 %v1932, %v1928
    %v1985 = vpack.c.b16 %v1933, %v1929
    %v1986 = vpack.c.b16 %v1934, %v1930
    %v1987 = vpack.c.b16 %v1935, %v1931
    %v1988 = vpack.c.b16 %v1940, %v1936
    %v1989 = vpack.c.b16 %v1941, %v1937
    %v1990 = vpack.c.b16 %v1942, %v1938
    %v1991 = vpack.c.b16 %v1943, %v1939
    %v1992 = vpack.c.b16 %v1948, %v1944
    %v1993 = vpack.c.b16 %v1949, %v1945
    %v1994 = vpack.c.b16 %v1950, %v1946
    %v1995 = vpack.c.b16 %v1951, %v1947
    %v1996 = vpack.c.b16 %v1956, %v1952
    %v1997 = vpack.c.b16 %v1957, %v1953
    %v1998 = vpack.c.b16 %v1958, %v1954
    %v1999 = vpack.c.b16 %v1959, %v1955
    %v2000 = vpack.c.b16 %v1964, %v1960
    %v2001 = vpack.c.b16 %v1965, %v1961
    %v2002 = vpack.c.b16 %v1966, %v1962
    %v2003 = vpack.c.b16 %v1967, %v1963
    %v2004 = vpack.c.b16 %v1972, %v1968
    %v2005 = vpack.c.b16 %v1973, %v1969
    %v2006 = vpack.c.b16 %v1974, %v1970
    %v2007 = vpack.c.b16 %v1975, %v1971
    %2040 = vmatprep.subr.bf16.mxu0 %v2005
    %2041 = vmatpush1.bf16.msra.mxu0 %v2004
    %2042 = vmatprep.subr.bf16.mxu0 %v2001
    %2043 = vmatpush1.bf16.msra.mxu0 %v2000
    %2044 = vmatprep.subr.bf16.mxu0 %v1997
    %2045 = vmatpush1.bf16.msra.mxu0 %v1996
    %2046 = vmatprep.subr.bf16.mxu0 %v1993
    %2047 = vmatpush1.bf16.msra.mxu0 %v1992
    %2048 = vmatprep.subr.bf16.mxu0 %v1989
    %2049 = vmatpush1.bf16.msra.mxu0 %v1988
    %2050 = vmatprep.subr.bf16.mxu0 %v1985
    %2051 = vmatpush1.bf16.msra.mxu0 %v1984
    %2052 = vmatprep.subr.bf16.mxu0 %v1981
    %2053 = vmatpush1.bf16.msra.mxu0 %v1980
    %2054 = vmatprep.subr.bf16.mxu0 %v1977
    %2055 = vmatpush1.bf16.msra.mxu0 %v1976
    %2056 = vmatprep.subr.bf16.mxu0 0
    %2057 = vmatpush2.bf16.msra.mxu0 0
    %2058 = vmatprep.subr.bf16.mxu0 0
    %2059 = vmatpush2.bf16.msra.mxu0 0
    %2060 = vmatprep.subr.bf16.mxu0 0
    %2061 = vmatpush2.bf16.msra.mxu0 0
    %2062 = vmatprep.subr.bf16.mxu0 0
    %2063 = vmatpush2.bf16.msra.mxu0 0
    %2064 = vmatprep.subr.bf16.mxu0 0
    %2065 = vmatpush2.bf16.msra.mxu0 0
    %2066 = vmatprep.subr.bf16.mxu0 0
    %2067 = vmatpush2.bf16.msra.mxu0 0
    %2068 = vmatprep.subr.bf16.mxu0 0
    %2069 = vmatpush2.bf16.msra.mxu0 0
    %2070 = vmatprep.subr.bf16.mxu0 0
    %2071 = vmatpush2.bf16.msra.mxu0 0
    %2072 = vmatprep.mubr.bf16.mxu0 0
    %2073 = vmatmul.mubr.bf16.gmra.mxu0 %v1872
    %v2074 = vpop.f32.mrf.mxu0
    %v2075 = vadd.f32 0.0, %v2074
    %v2076 = vpop.f32.mrf.mxu0
    %v2077 = vadd.f32 0.0, %v2076
    %v2078 = vpop.f32.mrf.mxu0
    %v2079 = vadd.f32 0.0, %v2078
    %v2080 = vpop.f32.mrf.mxu0
    %v2081 = vadd.f32 0.0, %v2080
    %2082 = vmatprep.mubr.bf16.mxu0 0
    %2083 = vmatmul.mubr.bf16.gmra.mxu0 %v1873
    %v2084 = vpop.f32.mrf.mxu0
    %v2085 = vadd.f32 0.0, %v2084
    %v2086 = vpop.f32.mrf.mxu0
    %v2087 = vadd.f32 0.0, %v2086
    %v2088 = vpop.f32.mrf.mxu0
    %v2089 = vadd.f32 0.0, %v2088
    %v2090 = vpop.f32.mrf.mxu0
    %v2091 = vadd.f32 0.0, %v2090
    %2092 = vmatprep.mubr.bf16.mxu0 0
    %2093 = vmatmul.mubr.bf16.gmra.mxu0 %v1874
    %v2094 = vpop.f32.mrf.mxu0
    %v2095 = vadd.f32 0.0, %v2094
    %v2096 = vpop.f32.mrf.mxu0
    %v2097 = vadd.f32 0.0, %v2096
    %v2098 = vpop.f32.mrf.mxu0
    %v2099 = vadd.f32 0.0, %v2098
    %v2100 = vpop.f32.mrf.mxu0
    %v2101 = vadd.f32 0.0, %v2100
    %2102 = vmatprep.mubr.bf16.mxu0 0
    %2103 = vmatmul.mubr.bf16.gmra.mxu0 %v1875
    %v2104 = vpop.f32.mrf.mxu0
    %v2105 = vadd.f32 0.0, %v2104
    %v2106 = vpop.f32.mrf.mxu0
    %v2107 = vadd.f32 0.0, %v2106
    %v2108 = vpop.f32.mrf.mxu0
    %v2109 = vadd.f32 0.0, %v2108
    %v2110 = vpop.f32.mrf.mxu0
    %v2111 = vadd.f32 0.0, %v2110
    %2112 = vdwg.mxu0
    %2113 = vmatprep.subr.bf16.mxu0 %v2007
    %2114 = vmatpush1.bf16.msra.mxu0 %v2006
    %2115 = vmatprep.subr.bf16.mxu0 %v2003
    %2116 = vmatpush1.bf16.msra.mxu0 %v2002
    %2117 = vmatprep.subr.bf16.mxu0 %v1999
    %2118 = vmatpush1.bf16.msra.mxu0 %v1998
    %2119 = vmatprep.subr.bf16.mxu0 %v1995
    %2120 = vmatpush1.bf16.msra.mxu0 %v1994
    %2121 = vmatprep.subr.bf16.mxu0 %v1991
    %2122 = vmatpush1.bf16.msra.mxu0 %v1990
    %2123 = vmatprep.subr.bf16.mxu0 %v1987
    %2124 = vmatpush1.bf16.msra.mxu0 %v1986
    %2125 = vmatprep.subr.bf16.mxu0 %v1983
    %2126 = vmatpush1.bf16.msra.mxu0 %v1982
    %2127 = vmatprep.subr.bf16.mxu0 %v1979
    %2128 = vmatpush1.bf16.msra.mxu0 %v1978
    %2129 = vmatprep.subr.bf16.mxu0 0
    %2130 = vmatpush2.bf16.msra.mxu0 0
    %2131 = vmatprep.subr.bf16.mxu0 0
    %2132 = vmatpush2.bf16.msra.mxu0 0
    %2133 = vmatprep.subr.bf16.mxu0 0
    %2134 = vmatpush2.bf16.msra.mxu0 0
    %2135 = vmatprep.subr.bf16.mxu0 0
    %2136 = vmatpush2.bf16.msra.mxu0 0
    %2137 = vmatprep.subr.bf16.mxu0 0
    %2138 = vmatpush2.bf16.msra.mxu0 0
    %2139 = vmatprep.subr.bf16.mxu0 0
    %2140 = vmatpush2.bf16.msra.mxu0 0
    %2141 = vmatprep.subr.bf16.mxu0 0
    %2142 = vmatpush2.bf16.msra.mxu0 0
    %2143 = vmatprep.subr.bf16.mxu0 0
    %2144 = vmatpush2.bf16.msra.mxu0 0
    %2145 = vmatprep.mubr.bf16.mxu0 0
    %2146 = vmatmul.mubr.bf16.gmra.mxu0 %v1872
    %v2147 = vpop.f32.mrf.mxu0
    %v2148 = vadd.f32 0.0, %v2147
    %v2149 = vpop.f32.mrf.mxu0
    %v2150 = vadd.f32 0.0, %v2149
    %v2151 = vpop.f32.mrf.mxu0
    %v2152 = vadd.f32 0.0, %v2151
    %v2153 = vpop.f32.mrf.mxu0
    %v2154 = vadd.f32 0.0, %v2153
    %2155 = vmatprep.mubr.bf16.mxu0 0
    %2156 = vmatmul.mubr.bf16.gmra.mxu0 %v1873
    %v2157 = vpop.f32.mrf.mxu0
    %v2158 = vadd.f32 0.0, %v2157
    %v2159 = vpop.f32.mrf.mxu0
    %v2160 = vadd.f32 0.0, %v2159
    %v2161 = vpop.f32.mrf.mxu0
    %v2162 = vadd.f32 0.0, %v2161
    %v2163 = vpop.f32.mrf.mxu0
    %v2164 = vadd.f32 0.0, %v2163
    %2165 = vmatprep.mubr.bf16.mxu0 0
    %2166 = vmatmul.mubr.bf16.gmra.mxu0 %v1874
    %v2167 = vpop.f32.mrf.mxu0
    %v2168 = vadd.f32 0.0, %v2167
    %v2169 = vpop.f32.mrf.mxu0
    %v2170 = vadd.f32 0.0, %v2169
    %v2171 = vpop.f32.mrf.mxu0
    %v2172 = vadd.f32 0.0, %v2171
    %v2173 = vpop.f32.mrf.mxu0
    %v2174 = vadd.f32 0.0, %v2173
    %2175 = vmatprep.mubr.bf16.mxu0 0
    %2176 = vmatmul.mubr.bf16.gmra.mxu0 %v1875
    %v2177 = vpop.f32.mrf.mxu0
    %v2178 = vadd.f32 0.0, %v2177
    %v2179 = vpop.f32.mrf.mxu0
    %v2180 = vadd.f32 0.0, %v2179
    %v2181 = vpop.f32.mrf.mxu0
    %v2182 = vadd.f32 0.0, %v2181
    %v2183 = vpop.f32.mrf.mxu0
    %v2184 = vadd.f32 0.0, %v2183
    %2185 = vdwg.mxu0
    %v2186 = vld [vmem:[#allocation14] sm:$0xf]
    %v2188 = vlaneseq
    %v2189 = vshrl.u32 %v2188, 7
    %v2190 = vsub.s32 0, %v2189
    %v2191 = vrot.slane %v2186, %v2190
    %v2192 = vlaneseq
    %v2193 = vshrl.u32 %v2192, 7
    %v2194 = vsub.s32 1, %v2193
    %v2195 = vrot.slane %v2186, %v2194
    %v2196 = vlaneseq
    %v2197 = vshrl.u32 %v2196, 7
    %v2198 = vsub.s32 2, %v2197
    %v2199 = vrot.slane %v2186, %v2198
    %v2200 = vlaneseq
    %v2201 = vshrl.u32 %v2200, 7
    %v2202 = vsub.s32 3, %v2201
    %v2203 = vrot.slane %v2186, %v2202
    %v2208 = vadd.f32 %v2075, %v2191
    %v2209 = vadd.f32 %v2077, %v2195
    %v2210 = vadd.f32 %v2148, %v2199
    %v2211 = vadd.f32 %v2150, %v2203
    %v2212 = vadd.f32 %v2079, %v2191
    %v2213 = vadd.f32 %v2081, %v2195
    %v2214 = vadd.f32 %v2152, %v2199
    %v2215 = vadd.f32 %v2154, %v2203
    %v2216 = vadd.f32 %v2085, %v2191
    %v2217 = vadd.f32 %v2087, %v2195
    %v2218 = vadd.f32 %v2158, %v2199
    %v2219 = vadd.f32 %v2160, %v2203
    %v2220 = vadd.f32 %v2089, %v2191
    %v2221 = vadd.f32 %v2091, %v2195
    %v2222 = vadd.f32 %v2162, %v2199
    %v2223 = vadd.f32 %v2164, %v2203
    %v2224 = vadd.f32 %v2095, %v2191
    %v2225 = vadd.f32 %v2097, %v2195
    %v2226 = vadd.f32 %v2168, %v2199
    %v2227 = vadd.f32 %v2170, %v2203
    %v2228 = vadd.f32 %v2099, %v2191
    %v2229 = vadd.f32 %v2101, %v2195
    %v2230 = vadd.f32 %v2172, %v2199
    %v2231 = vadd.f32 %v2174, %v2203
    %v2232 = vadd.f32 %v2105, %v2191
    %v2233 = vadd.f32 %v2107, %v2195
    %v2234 = vadd.f32 %v2178, %v2199
    %v2235 = vadd.f32 %v2180, %v2203
    %v2236 = vadd.f32 %v2109, %v2191
    %v2237 = vadd.f32 %v2111, %v2195
    %v2238 = vadd.f32 %v2182, %v2199
    %v2239 = vadd.f32 %v2184, %v2203
    %v2240 = vpack.c.bf16 %v2208, %v2208
    %v2241 = vpack.c.bf16 %v2209, %v2209
    %v2242 = vpack.c.bf16 %v2210, %v2210
    %v2243 = vpack.c.bf16 %v2211, %v2211
    %v2244 = vpack.c.bf16 %v2212, %v2212
    %v2245 = vpack.c.bf16 %v2213, %v2213
    %v2246 = vpack.c.bf16 %v2214, %v2214
    %v2247 = vpack.c.bf16 %v2215, %v2215
    %v2248 = vpack.c.bf16 %v2216, %v2216
    %v2249 = vpack.c.bf16 %v2217, %v2217
    %v2250 = vpack.c.bf16 %v2218, %v2218
    %v2251 = vpack.c.bf16 %v2219, %v2219
    %v2252 = vpack.c.bf16 %v2220, %v2220
    %v2253 = vpack.c.bf16 %v2221, %v2221
    %v2254 = vpack.c.bf16 %v2222, %v2222
    %v2255 = vpack.c.bf16 %v2223, %v2223
    %v2256 = vpack.c.bf16 %v2224, %v2224
    %v2257 = vpack.c.bf16 %v2225, %v2225
    %v2258 = vpack.c.bf16 %v2226, %v2226
    %v2259 = vpack.c.bf16 %v2227, %v2227
    %v2260 = vpack.c.bf16 %v2228, %v2228
    %v2261 = vpack.c.bf16 %v2229, %v2229
    %v2262 = vpack.c.bf16 %v2230, %v2230
    %v2263 = vpack.c.bf16 %v2231, %v2231
    %v2264 = vpack.c.bf16 %v2232, %v2232
    %v2265 = vpack.c.bf16 %v2233, %v2233
    %v2266 = vpack.c.bf16 %v2234, %v2234
    %v2267 = vpack.c.bf16 %v2235, %v2235
    %v2268 = vpack.c.bf16 %v2236, %v2236
    %v2269 = vpack.c.bf16 %v2237, %v2237
    %v2270 = vpack.c.bf16 %v2238, %v2238
    %v2271 = vpack.c.bf16 %v2239, %v2239
    %v2304 = vunpack.c.l.b16 %v2240
    %v2305 = vunpack.c.l.b16 %v2241
    %v2306 = vunpack.c.l.b16 %v2242
    %v2307 = vunpack.c.l.b16 %v2243
    %v2308 = vunpack.c.l.b16 %v2244
    %v2309 = vunpack.c.l.b16 %v2245
    %v2310 = vunpack.c.l.b16 %v2246
    %v2311 = vunpack.c.l.b16 %v2247
    %v2312 = vunpack.c.l.b16 %v2248
    %v2313 = vunpack.c.l.b16 %v2249
    %v2314 = vunpack.c.l.b16 %v2250
    %v2315 = vunpack.c.l.b16 %v2251
    %v2316 = vunpack.c.l.b16 %v2252
    %v2317 = vunpack.c.l.b16 %v2253
    %v2318 = vunpack.c.l.b16 %v2254
    %v2319 = vunpack.c.l.b16 %v2255
    %v2320 = vunpack.c.l.b16 %v2256
    %v2321 = vunpack.c.l.b16 %v2257
    %v2322 = vunpack.c.l.b16 %v2258
    %v2323 = vunpack.c.l.b16 %v2259
    %v2324 = vunpack.c.l.b16 %v2260
    %v2325 = vunpack.c.l.b16 %v2261
    %v2326 = vunpack.c.l.b16 %v2262
    %v2327 = vunpack.c.l.b16 %v2263
    %v2328 = vunpack.c.l.b16 %v2264
    %v2329 = vunpack.c.l.b16 %v2265
    %v2330 = vunpack.c.l.b16 %v2266
    %v2331 = vunpack.c.l.b16 %v2267
    %v2332 = vunpack.c.l.b16 %v2268
    %v2333 = vunpack.c.l.b16 %v2269
    %v2334 = vunpack.c.l.b16 %v2270
    %v2335 = vunpack.c.l.b16 %v2271
    %v2336 = vpack.c.b16 %v2305, %v2304
    %v2337 = vpack.c.b16 %v2307, %v2306
    %v2338 = vpack.c.b16 %v2309, %v2308
    %v2339 = vpack.c.b16 %v2311, %v2310
    %v2340 = vpack.c.b16 %v2313, %v2312
    %v2341 = vpack.c.b16 %v2315, %v2314
    %v2342 = vpack.c.b16 %v2317, %v2316
    %v2343 = vpack.c.b16 %v2319, %v2318
    %v2344 = vpack.c.b16 %v2321, %v2320
    %v2345 = vpack.c.b16 %v2323, %v2322
    %v2346 = vpack.c.b16 %v2325, %v2324
    %v2347 = vpack.c.b16 %v2327, %v2326
    %v2348 = vpack.c.b16 %v2329, %v2328
    %v2349 = vpack.c.b16 %v2331, %v2330
    %v2350 = vpack.c.b16 %v2333, %v2332
    %v2351 = vpack.c.b16 %v2335, %v2334
    %2368 = vst [vmem:[#allocation2] sm:$0xff] %v2336
    %2369 = vst [vmem:[#allocation2 + $0x8] sm:$0xff] %v2337
    %2370 = vst [vmem:[#allocation2 + $0x10] sm:$0xff] %v2338
    %2371 = vst [vmem:[#allocation2 + $0x18] sm:$0xff] %v2339
    %2372 = vst [vmem:[#allocation2 + $0x20] sm:$0xff] %v2340
    %2373 = vst [vmem:[#allocation2 + $0x28] sm:$0xff] %v2341
    %2374 = vst [vmem:[#allocation2 + $0x30] sm:$0xff] %v2342
    %2375 = vst [vmem:[#allocation2 + $0x38] sm:$0xff] %v2343
    %2376 = vst [vmem:[#allocation2 + $0x40] sm:$0xff] %v2344
    %2377 = vst [vmem:[#allocation2 + $0x48] sm:$0xff] %v2345
    %2378 = vst [vmem:[#allocation2 + $0x50] sm:$0xff] %v2346
    %2379 = vst [vmem:[#allocation2 + $0x58] sm:$0xff] %v2347
    %2380 = vst [vmem:[#allocation2 + $0x60] sm:$0xff] %v2348
    %2381 = vst [vmem:[#allocation2 + $0x68] sm:$0xff] %v2349
    %2382 = vst [vmem:[#allocation2 + $0x70] sm:$0xff] %v2350
    %2383 = vst [vmem:[#allocation2 + $0x78] sm:$0xff] %v2351
    %v2384 = vld [vmem:[#allocation12] sm:$0xff]
    %v2385 = vld [vmem:[#allocation12 + $0x8] sm:$0xff]
    %v2386 = vld [vmem:[#allocation12 + $0x10] sm:$0xff]
    %v2387 = vld [vmem:[#allocation12 + $0x18] sm:$0xff]
    %v2388 = vld [vmem:[#allocation12 + $0x20] sm:$0xff]
    %v2389 = vld [vmem:[#allocation12 + $0x28] sm:$0xff]
    %v2390 = vld [vmem:[#allocation12 + $0x30] sm:$0xff]
    %v2391 = vld [vmem:[#allocation12 + $0x38] sm:$0xff]
    %v2392 = vld [vmem:[#allocation12 + $0x40] sm:$0xff]
    %v2393 = vld [vmem:[#allocation12 + $0x48] sm:$0xff]
    %v2394 = vld [vmem:[#allocation12 + $0x50] sm:$0xff]
    %v2395 = vld [vmem:[#allocation12 + $0x58] sm:$0xff]
    %v2396 = vld [vmem:[#allocation12 + $0x60] sm:$0xff]
    %v2397 = vld [vmem:[#allocation12 + $0x68] sm:$0xff]
    %v2398 = vld [vmem:[#allocation12 + $0x70] sm:$0xff]
    %v2399 = vld [vmem:[#allocation12 + $0x78] sm:$0xff]
    %v2400 = vld [vmem:[#allocation12 + $0x80] sm:$0xff]
    %v2401 = vld [vmem:[#allocation12 + $0x88] sm:$0xff]
    %v2402 = vld [vmem:[#allocation12 + $0x90] sm:$0xff]
    %v2403 = vld [vmem:[#allocation12 + $0x98] sm:$0xff]
    %v2404 = vld [vmem:[#allocation12 + $0xa0] sm:$0xff]
    %v2405 = vld [vmem:[#allocation12 + $0xa8] sm:$0xff]
    %v2406 = vld [vmem:[#allocation12 + $0xb0] sm:$0xff]
    %v2407 = vld [vmem:[#allocation12 + $0xb8] sm:$0xff]
    %v2408 = vld [vmem:[#allocation12 + $0xc0] sm:$0xff]
    %v2409 = vld [vmem:[#allocation12 + $0xc8] sm:$0xff]
    %v2410 = vld [vmem:[#allocation12 + $0xd0] sm:$0xff]
    %v2411 = vld [vmem:[#allocation12 + $0xd8] sm:$0xff]
    %v2412 = vld [vmem:[#allocation12 + $0xe0] sm:$0xff]
    %v2413 = vld [vmem:[#allocation12 + $0xe8] sm:$0xff]
    %v2414 = vld [vmem:[#allocation12 + $0xf0] sm:$0xff]
    %v2415 = vld [vmem:[#allocation12 + $0xf8] sm:$0xff]
    %v2416 = vld [vmem:[#allocation2] sm:$0xff]
    %v2417 = vld [vmem:[#allocation2 + $0x8] sm:$0xff]
    %v2418 = vunpack.c.l.bf16 %v2416
    %v2419 = vunpack.c.h.bf16 %v2416
    %v2420 = vunpack.c.l.bf16 %v2417
    %v2421 = vunpack.c.h.bf16 %v2417
    %v2422 = vxor.u32 %v2418, 2147483648
    %v2423 = vmul.f32 %v2422, 1.442695
    %v2424 = vpow.pop %v2423
    %v2425 = vadd.f32 %v2424, 1.0
    %v2426 = vrcp.pop %v2425
    %v2427 = vmul.f32 1.0, %v2426
    %v2428 = vxor.u32 %v2419, 2147483648
    %v2429 = vmul.f32 %v2428, 1.442695
    %v2430 = vpow.pop %v2429
    %v2431 = vadd.f32 %v2430, 1.0
    %v2432 = vrcp.pop %v2431
    %v2433 = vmul.f32 1.0, %v2432
    %v2434 = vtanh.pop %v2420
    %v2435 = vxor.u32 %v2421, 2147483648
    %v2436 = vmul.f32 %v2435, 1.442695
    %v2437 = vpow.pop %v2436
    %v2438 = vadd.f32 %v2437, 1.0
    %v2439 = vrcp.pop %v2438
    %v2440 = vmul.f32 1.0, %v2439
    %v2441 = vmul.f32 %v2433, 0.0
    %v2442 = vmul.f32 %v2427, %v2434
    %v2443 = vadd.f32 %v2441, %v2442
    %v2444 = vtanh.pop %v2443
    %v2445 = vmul.f32 %v2440, %v2444
    %v2446 = vpack.c.bf16 %v2445, %v2445
    %2447 = vst [vmem:[#allocation3] sm:$0xf] %v2446
    %v2448 = vld [vmem:[%s816] sm:$0xff]
    %v2449 = vld [vmem:[%s816 + $0x8] sm:$0xff]
    %v2450 = vunpack.c.l.bf16 %v2448
    %v2451 = vunpack.c.h.bf16 %v2448
    %v2452 = vunpack.c.l.bf16 %v2449
    %v2453 = vunpack.c.h.bf16 %v2449
    %v2486 = vunpack.c.l.b16 %v2384
    %v2487 = vunpack.c.h.b16 %v2384
    %v2488 = vunpack.c.l.b16 %v2385
    %v2489 = vunpack.c.h.b16 %v2385
    %v2490 = vunpack.c.l.b16 %v2386
    %v2491 = vunpack.c.h.b16 %v2386
    %v2492 = vunpack.c.l.b16 %v2387
    %v2493 = vunpack.c.h.b16 %v2387
    %v2494 = vunpack.c.l.b16 %v2388
    %v2495 = vunpack.c.h.b16 %v2388
    %v2496 = vunpack.c.l.b16 %v2389
    %v2497 = vunpack.c.h.b16 %v2389
    %v2498 = vunpack.c.l.b16 %v2390
    %v2499 = vunpack.c.h.b16 %v2390
    %v2500 = vunpack.c.l.b16 %v2391
    %v2501 = vunpack.c.h.b16 %v2391
    %v2502 = vunpack.c.l.b16 %v2392
    %v2503 = vunpack.c.h.b16 %v2392
    %v2504 = vunpack.c.l.b16 %v2393
    %v2505 = vunpack.c.h.b16 %v2393
    %v2506 = vunpack.c.l.b16 %v2394
    %v2507 = vunpack.c.h.b16 %v2394
    %v2508 = vunpack.c.l.b16 %v2395
    %v2509 = vunpack.c.h.b16 %v2395
    %v2510 = vunpack.c.l.b16 %v2396
    %v2511 = vunpack.c.h.b16 %v2396
    %v2512 = vunpack.c.l.b16 %v2397
    %v2513 = vunpack.c.h.b16 %v2397
    %v2514 = vunpack.c.l.b16 %v2398
    %v2515 = vunpack.c.h.b16 %v2398
    %v2516 = vunpack.c.l.b16 %v2399
    %v2517 = vunpack.c.h.b16 %v2399
    %v2518 = vunpack.c.l.b16 %v2400
    %v2519 = vunpack.c.h.b16 %v2400
    %v2520 = vunpack.c.l.b16 %v2401
    %v2521 = vunpack.c.h.b16 %v2401
    %v2522 = vunpack.c.l.b16 %v2402
    %v2523 = vunpack.c.h.b16 %v2402
    %v2524 = vunpack.c.l.b16 %v2403
    %v2525 = vunpack.c.h.b16 %v2403
    %v2526 = vunpack.c.l.b16 %v2404
    %v2527 = vunpack.c.h.b16 %v2404
    %v2528 = vunpack.c.l.b16 %v2405
    %v2529 = vunpack.c.h.b16 %v2405
    %v2530 = vunpack.c.l.b16 %v2406
    %v2531 = vunpack.c.h.b16 %v2406
    %v2532 = vunpack.c.l.b16 %v2407
    %v2533 = vunpack.c.h.b16 %v2407
    %v2534 = vunpack.c.l.b16 %v2408
    %v2535 = vunpack.c.h.b16 %v2408
    %v2536 = vunpack.c.l.b16 %v2409
    %v2537 = vunpack.c.h.b16 %v2409
    %v2538 = vunpack.c.l.b16 %v2410
    %v2539 = vunpack.c.h.b16 %v2410
    %v2540 = vunpack.c.l.b16 %v2411
    %v2541 = vunpack.c.h.b16 %v2411
    %v2542 = vunpack.c.l.b16 %v2412
    %v2543 = vunpack.c.h.b16 %v2412
    %v2544 = vunpack.c.l.b16 %v2413
    %v2545 = vunpack.c.h.b16 %v2413
    %v2546 = vunpack.c.l.b16 %v2414
    %v2547 = vunpack.c.h.b16 %v2414
    %v2548 = vunpack.c.l.b16 %v2415
    %v2549 = vunpack.c.h.b16 %v2415
    %v2550 = vpack.c.b16 %v2490, %v2486
    %v2551 = vpack.c.b16 %v2491, %v2487
    %v2552 = vpack.c.b16 %v2492, %v2488
    %v2553 = vpack.c.b16 %v2493, %v2489
    %v2554 = vpack.c.b16 %v2498, %v2494
    %v2555 = vpack.c.b16 %v2499, %v2495
    %v2556 = vpack.c.b16 %v2500, %v2496
    %v2557 = vpack.c.b16 %v2501, %v2497
    %v2558 = vpack.c.b16 %v2506, %v2502
    %v2559 = vpack.c.b16 %v2507, %v2503
    %v2560 = vpack.c.b16 %v2508, %v2504
    %v2561 = vpack.c.b16 %v2509, %v2505
    %v2562 = vpack.c.b16 %v2514, %v2510
    %v2563 = vpack.c.b16 %v2515, %v2511
    %v2564 = vpack.c.b16 %v2516, %v2512
    %v2565 = vpack.c.b16 %v2517, %v2513
    %v2566 = vpack.c.b16 %v2522, %v2518
    %v2567 = vpack.c.b16 %v2523, %v2519
    %v2568 = vpack.c.b16 %v2524, %v2520
    %v2569 = vpack.c.b16 %v2525, %v2521
    %v2570 = vpack.c.b16 %v2530, %v2526
    %v2571 = vpack.c.b16 %v2531, %v2527
    %v2572 = vpack.c.b16 %v2532, %v2528
    %v2573 = vpack.c.b16 %v2533, %v2529
    %v2574 = vpack.c.b16 %v2538, %v2534
    %v2575 = vpack.c.b16 %v2539, %v2535
    %v2576 = vpack.c.b16 %v2540, %v2536
    %v2577 = vpack.c.b16 %v2541, %v2537
    %v2578 = vpack.c.b16 %v2546, %v2542
    %v2579 = vpack.c.b16 %v2547, %v2543
    %v2580 = vpack.c.b16 %v2548, %v2544
    %v2581 = vpack.c.b16 %v2549, %v2545
    %2614 = vmatprep.subr.bf16.mxu0 %v2579
    %2615 = vmatpush1.bf16.msra.mxu0 %v2578
    %2616 = vmatprep.subr.bf16.mxu0 %v2575
    %2617 = vmatpush1.bf16.msra.mxu0 %v2574
    %2618 = vmatprep.subr.bf16.mxu0 %v2571
    %2619 = vmatpush1.bf16.msra.mxu0 %v2570
    %2620 = vmatprep.subr.bf16.mxu0 %v2567
    %2621 = vmatpush1.bf16.msra.mxu0 %v2566
    %2622 = vmatprep.subr.bf16.mxu0 %v2563
    %2623 = vmatpush1.bf16.msra.mxu0 %v2562
    %2624 = vmatprep.subr.bf16.mxu0 %v2559
    %2625 = vmatpush1.bf16.msra.mxu0 %v2558
    %2626 = vmatprep.subr.bf16.mxu0 %v2555
    %2627 = vmatpush1.bf16.msra.mxu0 %v2554
    %2628 = vmatprep.subr.bf16.mxu0 %v2551
    %2629 = vmatpush1.bf16.msra.mxu0 %v2550
    %2630 = vmatprep.subr.bf16.mxu0 0
    %2631 = vmatpush2.bf16.msra.mxu0 0
    %2632 = vmatprep.subr.bf16.mxu0 0
    %2633 = vmatpush2.bf16.msra.mxu0 0
    %2634 = vmatprep.subr.bf16.mxu0 0
    %2635 = vmatpush2.bf16.msra.mxu0 0
    %2636 = vmatprep.subr.bf16.mxu0 0
    %2637 = vmatpush2.bf16.msra.mxu0 0
    %2638 = vmatprep.subr.bf16.mxu0 0
    %2639 = vmatpush2.bf16.msra.mxu0 0
    %2640 = vmatprep.subr.bf16.mxu0 0
    %2641 = vmatpush2.bf16.msra.mxu0 0
    %2642 = vmatprep.subr.bf16.mxu0 0
    %2643 = vmatpush2.bf16.msra.mxu0 0
    %2644 = vmatprep.subr.bf16.mxu0 0
    %2645 = vmatpush2.bf16.msra.mxu0 0
    %2646 = vmatprep.mubr.bf16.mxu0 0
    %2647 = vmatmul.mubr.bf16.gmra.mxu0 %v2446
    %v2648 = vpop.f32.mrf.mxu0
    %v2649 = vadd.f32 0.0, %v2648
    %v2650 = vpop.f32.mrf.mxu0
    %v2651 = vadd.f32 0.0, %v2650
    %v2652 = vpop.f32.mrf.mxu0
    %v2653 = vpop.f32.mrf.mxu0
    %2654 = vdwg.mxu0
    %2655 = vmatprep.subr.bf16.mxu0 %v2581
    %2656 = vmatpush1.bf16.msra.mxu0 %v2580
    %2657 = vmatprep.subr.bf16.mxu0 %v2577
    %2658 = vmatpush1.bf16.msra.mxu0 %v2576
    %2659 = vmatprep.subr.bf16.mxu0 %v2573
    %2660 = vmatpush1.bf16.msra.mxu0 %v2572
    %2661 = vmatprep.subr.bf16.mxu0 %v2569
    %2662 = vmatpush1.bf16.msra.mxu0 %v2568
    %2663 = vmatprep.subr.bf16.mxu0 %v2565
    %2664 = vmatpush1.bf16.msra.mxu0 %v2564
    %2665 = vmatprep.subr.bf16.mxu0 %v2561
    %2666 = vmatpush1.bf16.msra.mxu0 %v2560
    %2667 = vmatprep.subr.bf16.mxu0 %v2557
    %2668 = vmatpush1.bf16.msra.mxu0 %v2556
    %2669 = vmatprep.subr.bf16.mxu0 %v2553
    %2670 = vmatpush1.bf16.msra.mxu0 %v2552
    %2671 = vmatprep.subr.bf16.mxu0 0
    %2672 = vmatpush2.bf16.msra.mxu0 0
    %2673 = vmatprep.subr.bf16.mxu0 0
    %2674 = vmatpush2.bf16.msra.mxu0 0
    %2675 = vmatprep.subr.bf16.mxu0 0
    %2676 = vmatpush2.bf16.msra.mxu0 0
    %2677 = vmatprep.subr.bf16.mxu0 0
    %2678 = vmatpush2.bf16.msra.mxu0 0
    %2679 = vmatprep.subr.bf16.mxu0 0
    %2680 = vmatpush2.bf16.msra.mxu0 0
    %2681 = vmatprep.subr.bf16.mxu0 0
    %2682 = vmatpush2.bf16.msra.mxu0 0
    %2683 = vmatprep.subr.bf16.mxu0 0
    %2684 = vmatpush2.bf16.msra.mxu0 0
    %2685 = vmatprep.subr.bf16.mxu0 0
    %2686 = vmatpush2.bf16.msra.mxu0 0
    %2687 = vmatprep.mubr.bf16.mxu0 0
    %2688 = vmatmul.mubr.bf16.gmra.mxu0 %v2446
    %v2689 = vpop.f32.mrf.mxu0
    %v2690 = vadd.f32 0.0, %v2689
    %v2691 = vpop.f32.mrf.mxu0
    %v2692 = vadd.f32 0.0, %v2691
    %v2693 = vpop.f32.mrf.mxu0
    %v2694 = vpop.f32.mrf.mxu0
    %2695 = vdwg.mxu0
    %v2696 = vadd.f32 %v2450, %v2649
    %v2697 = vadd.f32 %v2451, %v2651
    %v2698 = vadd.f32 %v2452, %v2690
    %v2699 = vadd.f32 %v2453, %v2692
    %v2700 = vxor.u32 %v2696, 2147483648
    %v2701 = vmul.f32 %v2700, 1.442695
    %v2702 = vpow.pop %v2701
    %v2703 = vadd.f32 %v2702, 1.0
    %v2704 = vrcp.pop %v2703
    %v2705 = vmul.f32 1.0, %v2704
    %v2706 = vxor.u32 %v2697, 2147483648
    %v2707 = vmul.f32 %v2706, 1.442695
    %v2708 = vpow.pop %v2707
    %v2709 = vadd.f32 %v2708, 1.0
    %v2710 = vrcp.pop %v2709
    %v2711 = vmul.f32 1.0, %v2710
    %v2712 = vtanh.pop %v2698
    %v2713 = vxor.u32 %v2699, 2147483648
    %v2714 = vmul.f32 %v2713, 1.442695
    %v2715 = vpow.pop %v2714
    %v2716 = vadd.f32 %v2715, 1.0
    %v2717 = vrcp.pop %v2716
    %v2718 = vmul.f32 1.0, %v2717
    %v2719 = vmul.f32 %v2711, %v2443
    %v2720 = vmul.f32 %v2705, %v2712
    %v2721 = vadd.f32 %v2719, %v2720
    %v2722 = vtanh.pop %v2721
    %v2723 = vmul.f32 %v2718, %v2722
    %v2724 = vpack.c.bf16 %v2723, %v2723
    %2725 = vst [vmem:[%s1094] sm:$0xf] %v2724
    %v2726 = vld [vmem:[%s1096] sm:$0xff]
    %v2727 = vld [vmem:[%s1096 + $0x8] sm:$0xff]
    %v2728 = vunpack.c.l.bf16 %v2726
    %v2729 = vunpack.c.h.bf16 %v2726
    %v2730 = vunpack.c.l.bf16 %v2727
    %v2731 = vunpack.c.h.bf16 %v2727
    %2732 = vmatprep.subr.bf16.mxu0 %v2579
    %2733 = vmatpush1.bf16.msra.mxu0 %v2578
    %2734 = vmatprep.subr.bf16.mxu0 %v2575
    %2735 = vmatpush1.bf16.msra.mxu0 %v2574
    %2736 = vmatprep.subr.bf16.mxu0 %v2571
    %2737 = vmatpush1.bf16.msra.mxu0 %v2570
    %2738 = vmatprep.subr.bf16.mxu0 %v2567
    %2739 = vmatpush1.bf16.msra.mxu0 %v2566
    %2740 = vmatprep.subr.bf16.mxu0 %v2563
    %2741 = vmatpush1.bf16.msra.mxu0 %v2562
    %2742 = vmatprep.subr.bf16.mxu0 %v2559
    %2743 = vmatpush1.bf16.msra.mxu0 %v2558
    %2744 = vmatprep.subr.bf16.mxu0 %v2555
    %2745 = vmatpush1.bf16.msra.mxu0 %v2554
    %2746 = vmatprep.subr.bf16.mxu0 %v2551
    %2747 = vmatpush1.bf16.msra.mxu0 %v2550
    %2748 = vmatprep.subr.bf16.mxu0 0
    %2749 = vmatpush2.bf16.msra.mxu0 0
    %2750 = vmatprep.subr.bf16.mxu0 0
    %2751 = vmatpush2.bf16.msra.mxu0 0
    %2752 = vmatprep.subr.bf16.mxu0 0
    %2753 = vmatpush2.bf16.msra.mxu0 0
    %2754 = vmatprep.subr.bf16.mxu0 0
    %2755 = vmatpush2.bf16.msra.mxu0 0
    %2756 = vmatprep.subr.bf16.mxu0 0
    %2757 = vmatpush2.bf16.msra.mxu0 0
    %2758 = vmatprep.subr.bf16.mxu0 0
    %2759 = vmatpush2.bf16.msra.mxu0 0
    %2760 = vmatprep.subr.bf16.mxu0 0
    %2761 = vmatpush2.bf16.msra.mxu0 0
    %2762 = vmatprep.subr.bf16.mxu0 0
    %2763 = vmatpush2.bf16.msra.mxu0 0
    %2764 = vmatprep.mubr.bf16.mxu0 0
    %2765 = vmatmul.mubr.bf16.gmra.mxu0 %v2724
    %v2766 = vpop.f32.mrf.mxu0
    %v2767 = vadd.f32 0.0, %v2766
    %v2768 = vpop.f32.mrf.mxu0
    %v2769 = vadd.f32 0.0, %v2768
    %v2770 = vpop.f32.mrf.mxu0
    %v2771 = vpop.f32.mrf.mxu0
    %2772 = vdwg.mxu0
    %2773 = vmatprep.subr.bf16.mxu0 %v2581
    %2774 = vmatpush1.bf16.msra.mxu0 %v2580
    %2775 = vmatprep.subr.bf16.mxu0 %v2577
    %2776 = vmatpush1.bf16.msra.mxu0 %v2576
    %2777 = vmatprep.subr.bf16.mxu0 %v2573
    %2778 = vmatpush1.bf16.msra.mxu0 %v2572
    %2779 = vmatprep.subr.bf16.mxu0 %v2569
    %2780 = vmatpush1.bf16.msra.mxu0 %v2568
    %2781 = vmatprep.subr.bf16.mxu0 %v2565
    %2782 = vmatpush1.bf16.msra.mxu0 %v2564
    %2783 = vmatprep.subr.bf16.mxu0 %v2561
    %2784 = vmatpush1.bf16.msra.mxu0 %v2560
    %2785 = vmatprep.subr.bf16.mxu0 %v2557
    %2786 = vmatpush1.bf16.msra.mxu0 %v2556
    %2787 = vmatprep.subr.bf16.mxu0 %v2553
    %2788 = vmatpush1.bf16.msra.mxu0 %v2552
    %2789 = vmatprep.subr.bf16.mxu0 0
    %2790 = vmatpush2.bf16.msra.mxu0 0
    %2791 = vmatprep.subr.bf16.mxu0 0
    %2792 = vmatpush2.bf16.msra.mxu0 0
    %2793 = vmatprep.subr.bf16.mxu0 0
    %2794 = vmatpush2.bf16.msra.mxu0 0
    %2795 = vmatprep.subr.bf16.mxu0 0
    %2796 = vmatpush2.bf16.msra.mxu0 0
    %2797 = vmatprep.subr.bf16.mxu0 0
    %2798 = vmatpush2.bf16.msra.mxu0 0
    %2799 = vmatprep.subr.bf16.mxu0 0
    %2800 = vmatpush2.bf16.msra.mxu0 0
    %2801 = vmatprep.subr.bf16.mxu0 0
    %2802 = vmatpush2.bf16.msra.mxu0 0
    %2803 = vmatprep.subr.bf16.mxu0 0
    %2804 = vmatpush2.bf16.msra.mxu0 0
    %2805 = vmatprep.mubr.bf16.mxu0 0
    %2806 = vmatmul.mubr.bf16.gmra.mxu0 %v2724
    %v2807 = vpop.f32.mrf.mxu0
    %v2808 = vadd.f32 0.0, %v2807
    %v2809 = vpop.f32.mrf.mxu0
    %v2810 = vadd.f32 0.0, %v2809
    %v2811 = vpop.f32.mrf.mxu0
    %v2812 = vpop.f32.mrf.mxu0
    %2813 = vdwg.mxu0
    %v2814 = vadd.f32 %v2728, %v2767
    %v2815 = vadd.f32 %v2729, %v2769
    %v2816 = vadd.f32 %v2730, %v2808
    %v2817 = vadd.f32 %v2731, %v2810
    %v2818 = vxor.u32 %v2814, 2147483648
    %v2819 = vmul.f32 %v2818, 1.442695
    %v2820 = vpow.pop %v2819
    %v2821 = vadd.f32 %v2820, 1.0
    %v2822 = vrcp.pop %v2821
    %v2823 = vmul.f32 1.0, %v2822
    %v2824 = vxor.u32 %v2815, 2147483648
    %v2825 = vmul.f32 %v2824, 1.442695
    %v2826 = vpow.pop %v2825
    %v2827 = vadd.f32 %v2826, 1.0
    %v2828 = vrcp.pop %v2827
    %v2829 = vmul.f32 1.0, %v2828
    %v2830 = vtanh.pop %v2816
    %v2831 = vxor.u32 %v2817, 2147483648
    %v2832 = vmul.f32 %v2831, 1.442695
    %v2833 = vpow.pop %v2832
    %v2834 = vadd.f32 %v2833, 1.0
    %v2835 = vrcp.pop %v2834
    %v2836 = vmul.f32 1.0, %v2835
    %v2837 = vmul.f32 %v2829, %v2721
    %v2838 = vmul.f32 %v2823, %v2830
    %v2839 = vadd.f32 %v2837, %v2838
    %v2840 = vtanh.pop %v2839
    %v2841 = vmul.f32 %v2836, %v2840
    %v2842 = vpack.c.bf16 %v2841, %v2841
    %2843 = vst [vmem:[%s1214] sm:$0xf] %v2842
    %v2844 = vld [vmem:[%s1216] sm:$0xff]
    %v2845 = vld [vmem:[%s1216 + $0x8] sm:$0xff]
    %v2846 = vunpack.c.l.bf16 %v2844
    %v2847 = vunpack.c.h.bf16 %v2844
    %v2848 = vunpack.c.l.bf16 %v2845
    %v2849 = vunpack.c.h.bf16 %v2845
    %2850 = vmatprep.subr.bf16.mxu0 %v2579
    %2851 = vmatpush1.bf16.msra.mxu0 %v2578
    %2852 = vmatprep.subr.bf16.mxu0 %v2575
    %2853 = vmatpush1.bf16.msra.mxu0 %v2574
    %2854 = vmatprep.subr.bf16.mxu0 %v2571
    %2855 = vmatpush1.bf16.msra.mxu0 %v2570
    %2856 = vmatprep.subr.bf16.mxu0 %v2567
    %2857 = vmatpush1.bf16.msra.mxu0 %v2566
    %2858 = vmatprep.subr.bf16.mxu0 %v2563
    %2859 = vmatpush1.bf16.msra.mxu0 %v2562
    %2860 = vmatprep.subr.bf16.mxu0 %v2559
    %2861 = vmatpush1.bf16.msra.mxu0 %v2558
    %2862 = vmatprep.subr.bf16.mxu0 %v2555
    %2863 = vmatpush1.bf16.msra.mxu0 %v2554
    %2864 = vmatprep.subr.bf16.mxu0 %v2551
    %2865 = vmatpush1.bf16.msra.mxu0 %v2550
    %2866 = vmatprep.subr.bf16.mxu0 0
    %2867 = vmatpush2.bf16.msra.mxu0 0
    %2868 = vmatprep.subr.bf16.mxu0 0
    %2869 = vmatpush2.bf16.msra.mxu0 0
    %2870 = vmatprep.subr.bf16.mxu0 0
    %2871 = vmatpush2.bf16.msra.mxu0 0
    %2872 = vmatprep.subr.bf16.mxu0 0
    %2873 = vmatpush2.bf16.msra.mxu0 0
    %2874 = vmatprep.subr.bf16.mxu0 0
    %2875 = vmatpush2.bf16.msra.mxu0 0
    %2876 = vmatprep.subr.bf16.mxu0 0
    %2877 = vmatpush2.bf16.msra.mxu0 0
    %2878 = vmatprep.subr.bf16.mxu0 0
    %2879 = vmatpush2.bf16.msra.mxu0 0
    %2880 = vmatprep.subr.bf16.mxu0 0
    %2881 = vmatpush2.bf16.msra.mxu0 0
    %2882 = vmatprep.mubr.bf16.mxu0 0
    %2883 = vmatmul.mubr.bf16.gmra.mxu0 %v2842
    %v2884 = vpop.f32.mrf.mxu0
    %v2885 = vadd.f32 0.0, %v2884
    %v2886 = vpop.f32.mrf.mxu0
    %v2887 = vadd.f32 0.0, %v2886
    %v2888 = vpop.f32.mrf.mxu0
    %v2889 = vpop.f32.mrf.mxu0
    %2890 = vdwg.mxu0
    %2891 = vmatprep.subr.bf16.mxu0 %v2581
    %2892 = vmatpush1.bf16.msra.mxu0 %v2580
    %2893 = vmatprep.subr.bf16.mxu0 %v2577
    %2894 = vmatpush1.bf16.msra.mxu0 %v2576
    %2895 = vmatprep.subr.bf16.mxu0 %v2573
    %2896 = vmatpush1.bf16.msra.mxu0 %v2572
    %2897 = vmatprep.subr.bf16.mxu0 %v2569
    %2898 = vmatpush1.bf16.msra.mxu0 %v2568
    %2899 = vmatprep.subr.bf16.mxu0 %v2565
    %2900 = vmatpush1.bf16.msra.mxu0 %v2564
    %2901 = vmatprep.subr.bf16.mxu0 %v2561
    %2902 = vmatpush1.bf16.msra.mxu0 %v2560
    %2903 = vmatprep.subr.bf16.mxu0 %v2557
    %2904 = vmatpush1.bf16.msra.mxu0 %v2556
    %2905 = vmatprep.subr.bf16.mxu0 %v2553
    %2906 = vmatpush1.bf16.msra.mxu0 %v2552
    %2907 = vmatprep.subr.bf16.mxu0 0
    %2908 = vmatpush2.bf16.msra.mxu0 0
    %2909 = vmatprep.subr.bf16.mxu0 0
    %2910 = vmatpush2.bf16.msra.mxu0 0
    %2911 = vmatprep.subr.bf16.mxu0 0
    %2912 = vmatpush2.bf16.msra.mxu0 0
    %2913 = vmatprep.subr.bf16.mxu0 0
    %2914 = vmatpush2.bf16.msra.mxu0 0
    %2915 = vmatprep.subr.bf16.mxu0 0
    %2916 = vmatpush2.bf16.msra.mxu0 0
    %2917 = vmatprep.subr.bf16.mxu0 0
    %2918 = vmatpush2.bf16.msra.mxu0 0
    %2919 = vmatprep.subr.bf16.mxu0 0
    %2920 = vmatpush2.bf16.msra.mxu0 0
    %2921 = vmatprep.subr.bf16.mxu0 0
    %2922 = vmatpush2.bf16.msra.mxu0 0
    %2923 = vmatprep.mubr.bf16.mxu0 0
    %2924 = vmatmul.mubr.bf16.gmra.mxu0 %v2842
    %v2925 = vpop.f32.mrf.mxu0
    %v2926 = vadd.f32 0.0, %v2925
    %v2927 = vpop.f32.mrf.mxu0
    %v2928 = vadd.f32 0.0, %v2927
    %v2929 = vpop.f32.mrf.mxu0
    %v2930 = vpop.f32.mrf.mxu0
    %2931 = vdwg.mxu0
    %v2932 = vadd.f32 %v2846, %v2885
    %v2933 = vadd.f32 %v2847, %v2887
    %v2934 = vadd.f32 %v2848, %v2926
    %v2935 = vadd.f32 %v2849, %v2928
    %v2936 = vxor.u32 %v2932, 2147483648
    %v2937 = vmul.f32 %v2936, 1.442695
    %v2938 = vpow.pop %v2937
    %v2939 = vadd.f32 %v2938, 1.0
    %v2940 = vrcp.pop %v2939
    %v2941 = vmul.f32 1.0, %v2940
    %v2942 = vxor.u32 %v2933, 2147483648
    %v2943 = vmul.f32 %v2942, 1.442695
    %v2944 = vpow.pop %v2943
    %v2945 = vadd.f32 %v2944, 1.0
    %v2946 = vrcp.pop %v2945
    %v2947 = vmul.f32 1.0, %v2946
    %v2948 = vtanh.pop %v2934
    %v2949 = vxor.u32 %v2935, 2147483648
    %v2950 = vmul.f32 %v2949, 1.442695
    %v2951 = vpow.pop %v2950
    %v2952 = vadd.f32 %v2951, 1.0
    %v2953 = vrcp.pop %v2952
    %v2954 = vmul.f32 1.0, %v2953
    %v2955 = vmul.f32 %v2947, %v2839
    %v2956 = vmul.f32 %v2941, %v2948
    %v2957 = vadd.f32 %v2955, %v2956
    %v2958 = vtanh.pop %v2957
    %v2959 = vmul.f32 %v2954, %v2958
    %v2960 = vpack.c.bf16 %v2959, %v2959
    %2961 = vst [vmem:[%s1334] sm:$0xf] %v2960
    %v2962 = vld [vmem:[%s1336] sm:$0xff]
    %v2963 = vld [vmem:[%s1336 + $0x8] sm:$0xff]
    %v2964 = vunpack.c.l.bf16 %v2962
    %v2965 = vunpack.c.h.bf16 %v2962
    %v2966 = vunpack.c.l.bf16 %v2963
    %v2967 = vunpack.c.h.bf16 %v2963
    %2968 = vmatprep.subr.bf16.mxu0 %v2579
    %2969 = vmatpush1.bf16.msra.mxu0 %v2578
    %2970 = vmatprep.subr.bf16.mxu0 %v2575
    %2971 = vmatpush1.bf16.msra.mxu0 %v2574
    %2972 = vmatprep.subr.bf16.mxu0 %v2571
    %2973 = vmatpush1.bf16.msra.mxu0 %v2570
    %2974 = vmatprep.subr.bf16.mxu0 %v2567
    %2975 = vmatpush1.bf16.msra.mxu0 %v2566
    %2976 = vmatprep.subr.bf16.mxu0 %v2563
    %2977 = vmatpush1.bf16.msra.mxu0 %v2562
    %2978 = vmatprep.subr.bf16.mxu0 %v2559
    %2979 = vmatpush1.bf16.msra.mxu0 %v2558
    %2980 = vmatprep.subr.bf16.mxu0 %v2555
    %2981 = vmatpush1.bf16.msra.mxu0 %v2554
    %2982 = vmatprep.subr.bf16.mxu0 %v2551
    %2983 = vmatpush1.bf16.msra.mxu0 %v2550
    %2984 = vmatprep.subr.bf16.mxu0 0
    %2985 = vmatpush2.bf16.msra.mxu0 0
    %2986 = vmatprep.subr.bf16.mxu0 0
    %2987 = vmatpush2.bf16.msra.mxu0 0
    %2988 = vmatprep.subr.bf16.mxu0 0
    %2989 = vmatpush2.bf16.msra.mxu0 0
    %2990 = vmatprep.subr.bf16.mxu0 0
    %2991 = vmatpush2.bf16.msra.mxu0 0
    %2992 = vmatprep.subr.bf16.mxu0 0
    %2993 = vmatpush2.bf16.msra.mxu0 0
    %2994 = vmatprep.subr.bf16.mxu0 0
    %2995 = vmatpush2.bf16.msra.mxu0 0
    %2996 = vmatprep.subr.bf16.mxu0 0
    %2997 = vmatpush2.bf16.msra.mxu0 0
    %2998 = vmatprep.subr.bf16.mxu0 0
    %2999 = vmatpush2.bf16.msra.mxu0 0
    %3000 = vmatprep.mubr.bf16.mxu0 0
    %3001 = vmatmul.mubr.bf16.gmra.mxu0 %v2960
    %v3002 = vpop.f32.mrf.mxu0
    %v3003 = vadd.f32 0.0, %v3002
    %v3004 = vpop.f32.mrf.mxu0
    %v3005 = vadd.f32 0.0, %v3004
    %v3006 = vpop.f32.mrf.mxu0
    %v3007 = vpop.f32.mrf.mxu0
    %3008 = vdwg.mxu0
    %3009 = vmatprep.subr.bf16.mxu0 %v2581
    %3010 = vmatpush1.bf16.msra.mxu0 %v2580
    %3011 = vmatprep.subr.bf16.mxu0 %v2577
    %3012 = vmatpush1.bf16.msra.mxu0 %v2576
    %3013 = vmatprep.subr.bf16.mxu0 %v2573
    %3014 = vmatpush1.bf16.msra.mxu0 %v2572
    %3015 = vmatprep.subr.bf16.mxu0 %v2569
    %3016 = vmatpush1.bf16.msra.mxu0 %v2568
    %3017 = vmatprep.subr.bf16.mxu0 %v2565
    %3018 = vmatpush1.bf16.msra.mxu0 %v2564
    %3019 = vmatprep.subr.bf16.mxu0 %v2561
    %3020 = vmatpush1.bf16.msra.mxu0 %v2560
    %3021 = vmatprep.subr.bf16.mxu0 %v2557
    %3022 = vmatpush1.bf16.msra.mxu0 %v2556
    %3023 = vmatprep.subr.bf16.mxu0 %v2553
    %3024 = vmatpush1.bf16.msra.mxu0 %v2552
    %3025 = vmatprep.subr.bf16.mxu0 0
    %3026 = vmatpush2.bf16.msra.mxu0 0
    %3027 = vmatprep.subr.bf16.mxu0 0
    %3028 = vmatpush2.bf16.msra.mxu0 0
    %3029 = vmatprep.subr.bf16.mxu0 0
    %3030 = vmatpush2.bf16.msra.mxu0 0
    %3031 = vmatprep.subr.bf16.mxu0 0
    %3032 = vmatpush2.bf16.msra.mxu0 0
    %3033 = vmatprep.subr.bf16.mxu0 0
    %3034 = vmatpush2.bf16.msra.mxu0 0
    %3035 = vmatprep.subr.bf16.mxu0 0
    %3036 = vmatpush2.bf16.msra.mxu0 0
    %3037 = vmatprep.subr.bf16.mxu0 0
    %3038 = vmatpush2.bf16.msra.mxu0 0
    %3039 = vmatprep.subr.bf16.mxu0 0
    %3040 = vmatpush2.bf16.msra.mxu0 0
    %3041 = vmatprep.mubr.bf16.mxu0 0
    %3042 = vmatmul.mubr.bf16.gmra.mxu0 %v2960
    %v3043 = vpop.f32.mrf.mxu0
    %v3044 = vadd.f32 0.0, %v3043
    %v3045 = vpop.f32.mrf.mxu0
    %v3046 = vadd.f32 0.0, %v3045
    %v3047 = vpop.f32.mrf.mxu0
    %v3048 = vpop.f32.mrf.mxu0
    %3049 = vdwg.mxu0
    %v3050 = vadd.f32 %v2964, %v3003
    %v3051 = vadd.f32 %v2965, %v3005
    %v3052 = vadd.f32 %v2966, %v3044
    %v3053 = vadd.f32 %v2967, %v3046
    %v3054 = vxor.u32 %v3050, 2147483648
    %v3055 = vmul.f32 %v3054, 1.442695
    %v3056 = vpow.pop %v3055
    %v3057 = vadd.f32 %v3056, 1.0
    %v3058 = vrcp.pop %v3057
    %v3059 = vmul.f32 1.0, %v3058
    %v3060 = vxor.u32 %v3051, 2147483648
    %v3061 = vmul.f32 %v3060, 1.442695
    %v3062 = vpow.pop %v3061
    %v3063 = vadd.f32 %v3062, 1.0
    %v3064 = vrcp.pop %v3063
    %v3065 = vmul.f32 1.0, %v3064
    %v3066 = vtanh.pop %v3052
    %v3067 = vxor.u32 %v3053, 2147483648
    %v3068 = vmul.f32 %v3067, 1.442695
    %v3069 = vpow.pop %v3068
    %v3070 = vadd.f32 %v3069, 1.0
    %v3071 = vrcp.pop %v3070
    %v3072 = vmul.f32 1.0, %v3071
    %v3073 = vmul.f32 %v3065, %v2957
    %v3074 = vmul.f32 %v3059, %v3066
    %v3075 = vadd.f32 %v3073, %v3074
    %v3076 = vtanh.pop %v3075
    %v3077 = vmul.f32 %v3072, %v3076
    %v3078 = vpack.c.bf16 %v3077, %v3077
    %3079 = vst [vmem:[%s1454] sm:$0xf] %v3078
    %v3080 = vld [vmem:[%s1456] sm:$0xff]
    %v3081 = vld [vmem:[%s1456 + $0x8] sm:$0xff]
    %v3082 = vunpack.c.l.bf16 %v3080
    %v3083 = vunpack.c.h.bf16 %v3080
    %v3084 = vunpack.c.l.bf16 %v3081
    %v3085 = vunpack.c.h.bf16 %v3081
    %3086 = vmatprep.subr.bf16.mxu0 %v2579
    %3087 = vmatpush1.bf16.msra.mxu0 %v2578
    %3088 = vmatprep.subr.bf16.mxu0 %v2575
    %3089 = vmatpush1.bf16.msra.mxu0 %v2574
    %3090 = vmatprep.subr.bf16.mxu0 %v2571
    %3091 = vmatpush1.bf16.msra.mxu0 %v2570
    %3092 = vmatprep.subr.bf16.mxu0 %v2567
    %3093 = vmatpush1.bf16.msra.mxu0 %v2566
    %3094 = vmatprep.subr.bf16.mxu0 %v2563
    %3095 = vmatpush1.bf16.msra.mxu0 %v2562
    %3096 = vmatprep.subr.bf16.mxu0 %v2559
    %3097 = vmatpush1.bf16.msra.mxu0 %v2558
    %3098 = vmatprep.subr.bf16.mxu0 %v2555
    %3099 = vmatpush1.bf16.msra.mxu0 %v2554
    %3100 = vmatprep.subr.bf16.mxu0 %v2551
    %3101 = vmatpush1.bf16.msra.mxu0 %v2550
    %3102 = vmatprep.subr.bf16.mxu0 0
    %3103 = vmatpush2.bf16.msra.mxu0 0
    %3104 = vmatprep.subr.bf16.mxu0 0
    %3105 = vmatpush2.bf16.msra.mxu0 0
    %3106 = vmatprep.subr.bf16.mxu0 0
    %3107 = vmatpush2.bf16.msra.mxu0 0
    %3108 = vmatprep.subr.bf16.mxu0 0
    %3109 = vmatpush2.bf16.msra.mxu0 0
    %3110 = vmatprep.subr.bf16.mxu0 0
    %3111 = vmatpush2.bf16.msra.mxu0 0
    %3112 = vmatprep.subr.bf16.mxu0 0
    %3113 = vmatpush2.bf16.msra.mxu0 0
    %3114 = vmatprep.subr.bf16.mxu0 0
    %3115 = vmatpush2.bf16.msra.mxu0 0
    %3116 = vmatprep.subr.bf16.mxu0 0
    %3117 = vmatpush2.bf16.msra.mxu0 0
    %3118 = vmatprep.mubr.bf16.mxu0 0
    %3119 = vmatmul.mubr.bf16.gmra.mxu0 %v3078
    %v3120 = vpop.f32.mrf.mxu0
    %v3121 = vadd.f32 0.0, %v3120
    %v3122 = vpop.f32.mrf.mxu0
    %v3123 = vadd.f32 0.0, %v3122
    %v3124 = vpop.f32.mrf.mxu0
    %v3125 = vpop.f32.mrf.mxu0
    %3126 = vdwg.mxu0
    %3127 = vmatprep.subr.bf16.mxu0 %v2581
    %3128 = vmatpush1.bf16.msra.mxu0 %v2580
    %3129 = vmatprep.subr.bf16.mxu0 %v2577
    %3130 = vmatpush1.bf16.msra.mxu0 %v2576
    %3131 = vmatprep.subr.bf16.mxu0 %v2573
    %3132 = vmatpush1.bf16.msra.mxu0 %v2572
    %3133 = vmatprep.subr.bf16.mxu0 %v2569
    %3134 = vmatpush1.bf16.msra.mxu0 %v2568
    %3135 = vmatprep.subr.bf16.mxu0 %v2565
    %3136 = vmatpush1.bf16.msra.mxu0 %v2564
    %3137 = vmatprep.subr.bf16.mxu0 %v2561
    %3138 = vmatpush1.bf16.msra.mxu0 %v2560
    %3139 = vmatprep.subr.bf16.mxu0 %v2557
    %3140 = vmatpush1.bf16.msra.mxu0 %v2556
    %3141 = vmatprep.subr.bf16.mxu0 %v2553
    %3142 = vmatpush1.bf16.msra.mxu0 %v2552
    %3143 = vmatprep.subr.bf16.mxu0 0
    %3144 = vmatpush2.bf16.msra.mxu0 0
    %3145 = vmatprep.subr.bf16.mxu0 0
    %3146 = vmatpush2.bf16.msra.mxu0 0
    %3147 = vmatprep.subr.bf16.mxu0 0
    %3148 = vmatpush2.bf16.msra.mxu0 0
    %3149 = vmatprep.subr.bf16.mxu0 0
    %3150 = vmatpush2.bf16.msra.mxu0 0
    %3151 = vmatprep.subr.bf16.mxu0 0
    %3152 = vmatpush2.bf16.msra.mxu0 0
    %3153 = vmatprep.subr.bf16.mxu0 0
    %3154 = vmatpush2.bf16.msra.mxu0 0
    %3155 = vmatprep.subr.bf16.mxu0 0
    %3156 = vmatpush2.bf16.msra.mxu0 0
    %3157 = vmatprep.subr.bf16.mxu0 0
    %3158 = vmatpush2.bf16.msra.mxu0 0
    %3159 = vmatprep.mubr.bf16.mxu0 0
    %3160 = vmatmul.mubr.bf16.gmra.mxu0 %v3078
    %v3161 = vpop.f32.mrf.mxu0
    %v3162 = vadd.f32 0.0, %v3161
    %v3163 = vpop.f32.mrf.mxu0
    %v3164 = vadd.f32 0.0, %v3163
    %v3165 = vpop.f32.mrf.mxu0
    %v3166 = vpop.f32.mrf.mxu0
    %3167 = vdwg.mxu0
    %v3168 = vadd.f32 %v3082, %v3121
    %v3169 = vadd.f32 %v3083, %v3123
    %v3170 = vadd.f32 %v3084, %v3162
    %v3171 = vadd.f32 %v3085, %v3164
    %v3172 = vxor.u32 %v3168, 2147483648
    %v3173 = vmul.f32 %v3172, 1.442695
    %v3174 = vpow.pop %v3173
    %v3175 = vadd.f32 %v3174, 1.0
    %v3176 = vrcp.pop %v3175
    %v3177 = vmul.f32 1.0, %v3176
    %v3178 = vxor.u32 %v3169, 2147483648
    %v3179 = vmul.f32 %v3178, 1.442695
    %v3180 = vpow.pop %v3179
    %v3181 = vadd.f32 %v3180, 1.0
    %v3182 = vrcp.pop %v3181
    %v3183 = vmul.f32 1.0, %v3182
    %v3184 = vtanh.pop %v3170
    %v3185 = vxor.u32 %v3171, 2147483648
    %v3186 = vmul.f32 %v3185, 1.442695
    %v3187 = vpow.pop %v3186
    %v3188 = vadd.f32 %v3187, 1.0
    %v3189 = vrcp.pop %v3188
    %v3190 = vmul.f32 1.0, %v3189
    %v3191 = vmul.f32 %v3183, %v3075
    %v3192 = vmul.f32 %v3177, %v3184
    %v3193 = vadd.f32 %v3191, %v3192
    %v3194 = vtanh.pop %v3193
    %v3195 = vmul.f32 %v3190, %v3194
    %v3196 = vpack.c.bf16 %v3195, %v3195
    %3197 = vst [vmem:[%s1574] sm:$0xf] %v3196
    %v3198 = vld [vmem:[%s1576] sm:$0xff]
    %v3199 = vld [vmem:[%s1576 + $0x8] sm:$0xff]
    %v3200 = vunpack.c.l.bf16 %v3198
    %v3201 = vunpack.c.h.bf16 %v3198
    %v3202 = vunpack.c.l.bf16 %v3199
    %v3203 = vunpack.c.h.bf16 %v3199
    %3204 = vmatprep.subr.bf16.mxu0 %v2579
    %3205 = vmatpush1.bf16.msra.mxu0 %v2578
    %3206 = vmatprep.subr.bf16.mxu0 %v2575
    %3207 = vmatpush1.bf16.msra.mxu0 %v2574
    %3208 = vmatprep.subr.bf16.mxu0 %v2571
    %3209 = vmatpush1.bf16.msra.mxu0 %v2570
    %3210 = vmatprep.subr.bf16.mxu0 %v2567
    %3211 = vmatpush1.bf16.msra.mxu0 %v2566
    %3212 = vmatprep.subr.bf16.mxu0 %v2563
    %3213 = vmatpush1.bf16.msra.mxu0 %v2562
    %3214 = vmatprep.subr.bf16.mxu0 %v2559
    %3215 = vmatpush1.bf16.msra.mxu0 %v2558
    %3216 = vmatprep.subr.bf16.mxu0 %v2555
    %3217 = vmatpush1.bf16.msra.mxu0 %v2554
    %3218 = vmatprep.subr.bf16.mxu0 %v2551
    %3219 = vmatpush1.bf16.msra.mxu0 %v2550
    %3220 = vmatprep.subr.bf16.mxu0 0
    %3221 = vmatpush2.bf16.msra.mxu0 0
    %3222 = vmatprep.subr.bf16.mxu0 0
    %3223 = vmatpush2.bf16.msra.mxu0 0
    %3224 = vmatprep.subr.bf16.mxu0 0
    %3225 = vmatpush2.bf16.msra.mxu0 0
    %3226 = vmatprep.subr.bf16.mxu0 0
    %3227 = vmatpush2.bf16.msra.mxu0 0
    %3228 = vmatprep.subr.bf16.mxu0 0
    %3229 = vmatpush2.bf16.msra.mxu0 0
    %3230 = vmatprep.subr.bf16.mxu0 0
    %3231 = vmatpush2.bf16.msra.mxu0 0
    %3232 = vmatprep.subr.bf16.mxu0 0
    %3233 = vmatpush2.bf16.msra.mxu0 0
    %3234 = vmatprep.subr.bf16.mxu0 0
    %3235 = vmatpush2.bf16.msra.mxu0 0
    %3236 = vmatprep.mubr.bf16.mxu0 0
    %3237 = vmatmul.mubr.bf16.gmra.mxu0 %v3196
    %v3238 = vpop.f32.mrf.mxu0
    %v3239 = vadd.f32 0.0, %v3238
    %v3240 = vpop.f32.mrf.mxu0
    %v3241 = vadd.f32 0.0, %v3240
    %v3242 = vpop.f32.mrf.mxu0
    %v3243 = vpop.f32.mrf.mxu0
    %3244 = vdwg.mxu0
    %3245 = vmatprep.subr.bf16.mxu0 %v2581
    %3246 = vmatpush1.bf16.msra.mxu0 %v2580
    %3247 = vmatprep.subr.bf16.mxu0 %v2577
    %3248 = vmatpush1.bf16.msra.mxu0 %v2576
    %3249 = vmatprep.subr.bf16.mxu0 %v2573
    %3250 = vmatpush1.bf16.msra.mxu0 %v2572
    %3251 = vmatprep.subr.bf16.mxu0 %v2569
    %3252 = vmatpush1.bf16.msra.mxu0 %v2568
    %3253 = vmatprep.subr.bf16.mxu0 %v2565
    %3254 = vmatpush1.bf16.msra.mxu0 %v2564
    %3255 = vmatprep.subr.bf16.mxu0 %v2561
    %3256 = vmatpush1.bf16.msra.mxu0 %v2560
    %3257 = vmatprep.subr.bf16.mxu0 %v2557
    %3258 = vmatpush1.bf16.msra.mxu0 %v2556
    %3259 = vmatprep.subr.bf16.mxu0 %v2553
    %3260 = vmatpush1.bf16.msra.mxu0 %v2552
    %3261 = vmatprep.subr.bf16.mxu0 0
    %3262 = vmatpush2.bf16.msra.mxu0 0
    %3263 = vmatprep.subr.bf16.mxu0 0
    %3264 = vmatpush2.bf16.msra.mxu0 0
    %3265 = vmatprep.subr.bf16.mxu0 0
    %3266 = vmatpush2.bf16.msra.mxu0 0
    %3267 = vmatprep.subr.bf16.mxu0 0
    %3268 = vmatpush2.bf16.msra.mxu0 0
    %3269 = vmatprep.subr.bf16.mxu0 0
    %3270 = vmatpush2.bf16.msra.mxu0 0
    %3271 = vmatprep.subr.bf16.mxu0 0
    %3272 = vmatpush2.bf16.msra.mxu0 0
    %3273 = vmatprep.subr.bf16.mxu0 0
    %3274 = vmatpush2.bf16.msra.mxu0 0
    %3275 = vmatprep.subr.bf16.mxu0 0
    %3276 = vmatpush2.bf16.msra.mxu0 0
    %3277 = vmatprep.mubr.bf16.mxu0 0
    %3278 = vmatmul.mubr.bf16.gmra.mxu0 %v3196
    %v3279 = vpop.f32.mrf.mxu0
    %v3280 = vadd.f32 0.0, %v3279
    %v3281 = vpop.f32.mrf.mxu0
    %v3282 = vadd.f32 0.0, %v3281
    %v3283 = vpop.f32.mrf.mxu0
    %v3284 = vpop.f32.mrf.mxu0
    %3285 = vdwg.mxu0
    %v3286 = vadd.f32 %v3200, %v3239
    %v3287 = vadd.f32 %v3201, %v3241
    %v3288 = vadd.f32 %v3202, %v3280
    %v3289 = vadd.f32 %v3203, %v3282
    %v3290 = vxor.u32 %v3286, 2147483648
    %v3291 = vmul.f32 %v3290, 1.442695
    %v3292 = vpow.pop %v3291
    %v3293 = vadd.f32 %v3292, 1.0
    %v3294 = vrcp.pop %v3293
    %v3295 = vmul.f32 1.0, %v3294
    %v3296 = vxor.u32 %v3287, 2147483648
    %v3297 = vmul.f32 %v3296, 1.442695
    %v3298 = vpow.pop %v3297
    %v3299 = vadd.f32 %v3298, 1.0
    %v3300 = vrcp.pop %v3299
    %v3301 = vmul.f32 1.0, %v3300
    %v3302 = vtanh.pop %v3288
    %v3303 = vxor.u32 %v3289, 2147483648
    %v3304 = vmul.f32 %v3303, 1.442695
    %v3305 = vpow.pop %v3304
    %v3306 = vadd.f32 %v3305, 1.0
    %v3307 = vrcp.pop %v3306
    %v3308 = vmul.f32 1.0, %v3307
    %v3309 = vmul.f32 %v3301, %v3193
    %v3310 = vmul.f32 %v3295, %v3302
    %v3311 = vadd.f32 %v3309, %v3310
    %v3312 = vtanh.pop %v3311
    %v3313 = vmul.f32 %v3308, %v3312
    %v3314 = vpack.c.bf16 %v3313, %v3313
    %3315 = vst [vmem:[%s1694] sm:$0xf] %v3314
    %v3316 = vld [vmem:[%s1696] sm:$0xff]
    %v3317 = vld [vmem:[%s1696 + $0x8] sm:$0xff]
    %v3318 = vunpack.c.l.bf16 %v3316
    %v3319 = vunpack.c.h.bf16 %v3316
    %v3320 = vunpack.c.l.bf16 %v3317
    %v3321 = vunpack.c.h.bf16 %v3317
    %3322 = vmatprep.subr.bf16.mxu0 %v2579
    %3323 = vmatpush1.bf16.msra.mxu0 %v2578
    %3324 = vmatprep.subr.bf16.mxu0 %v2575
    %3325 = vmatpush1.bf16.msra.mxu0 %v2574
    %3326 = vmatprep.subr.bf16.mxu0 %v2571
    %3327 = vmatpush1.bf16.msra.mxu0 %v2570
    %3328 = vmatprep.subr.bf16.mxu0 %v2567
    %3329 = vmatpush1.bf16.msra.mxu0 %v2566
    %3330 = vmatprep.subr.bf16.mxu0 %v2563
    %3331 = vmatpush1.bf16.msra.mxu0 %v2562
    %3332 = vmatprep.subr.bf16.mxu0 %v2559
    %3333 = vmatpush1.bf16.msra.mxu0 %v2558
    %3334 = vmatprep.subr.bf16.mxu0 %v2555
    %3335 = vmatpush1.bf16.msra.mxu0 %v2554
    %3336 = vmatprep.subr.bf16.mxu0 %v2551
    %3337 = vmatpush1.bf16.msra.mxu0 %v2550
    %3338 = vmatprep.subr.bf16.mxu0 0
    %3339 = vmatpush2.bf16.msra.mxu0 0
    %3340 = vmatprep.subr.bf16.mxu0 0
    %3341 = vmatpush2.bf16.msra.mxu0 0
    %3342 = vmatprep.subr.bf16.mxu0 0
    %3343 = vmatpush2.bf16.msra.mxu0 0
    %3344 = vmatprep.subr.bf16.mxu0 0
    %3345 = vmatpush2.bf16.msra.mxu0 0
    %3346 = vmatprep.subr.bf16.mxu0 0
    %3347 = vmatpush2.bf16.msra.mxu0 0
    %3348 = vmatprep.subr.bf16.mxu0 0
    %3349 = vmatpush2.bf16.msra.mxu0 0
    %3350 = vmatprep.subr.bf16.mxu0 0
    %3351 = vmatpush2.bf16.msra.mxu0 0
    %3352 = vmatprep.subr.bf16.mxu0 0
    %3353 = vmatpush2.bf16.msra.mxu0 0
    %3354 = vmatprep.mubr.bf16.mxu0 0
    %3355 = vmatmul.mubr.bf16.gmra.mxu0 %v3314
    %v3356 = vpop.f32.mrf.mxu0
    %v3357 = vadd.f32 0.0, %v3356
    %v3358 = vpop.f32.mrf.mxu0
    %v3359 = vadd.f32 0.0, %v3358
    %v3360 = vpop.f32.mrf.mxu0
    %v3361 = vpop.f32.mrf.mxu0
    %3362 = vdwg.mxu0
    %3363 = vmatprep.subr.bf16.mxu0 %v2581
    %3364 = vmatpush1.bf16.msra.mxu0 %v2580
    %3365 = vmatprep.subr.bf16.mxu0 %v2577
    %3366 = vmatpush1.bf16.msra.mxu0 %v2576
    %3367 = vmatprep.subr.bf16.mxu0 %v2573
    %3368 = vmatpush1.bf16.msra.mxu0 %v2572
    %3369 = vmatprep.subr.bf16.mxu0 %v2569
    %3370 = vmatpush1.bf16.msra.mxu0 %v2568
    %3371 = vmatprep.subr.bf16.mxu0 %v2565
    %3372 = vmatpush1.bf16.msra.mxu0 %v2564
    %3373 = vmatprep.subr.bf16.mxu0 %v2561
    %3374 = vmatpush1.bf16.msra.mxu0 %v2560
    %3375 = vmatprep.subr.bf16.mxu0 %v2557
    %3376 = vmatpush1.bf16.msra.mxu0 %v2556
    %3377 = vmatprep.subr.bf16.mxu0 %v2553
    %3378 = vmatpush1.bf16.msra.mxu0 %v2552
    %3379 = vmatprep.subr.bf16.mxu0 0
    %3380 = vmatpush2.bf16.msra.mxu0 0
    %3381 = vmatprep.subr.bf16.mxu0 0
    %3382 = vmatpush2.bf16.msra.mxu0 0
    %3383 = vmatprep.subr.bf16.mxu0 0
    %3384 = vmatpush2.bf16.msra.mxu0 0
    %3385 = vmatprep.subr.bf16.mxu0 0
    %3386 = vmatpush2.bf16.msra.mxu0 0
    %3387 = vmatprep.subr.bf16.mxu0 0
    %3388 = vmatpush2.bf16.msra.mxu0 0
    %3389 = vmatprep.subr.bf16.mxu0 0
    %3390 = vmatpush2.bf16.msra.mxu0 0
    %3391 = vmatprep.subr.bf16.mxu0 0
    %3392 = vmatpush2.bf16.msra.mxu0 0
    %3393 = vmatprep.subr.bf16.mxu0 0
    %3394 = vmatpush2.bf16.msra.mxu0 0
    %3395 = vmatprep.mubr.bf16.mxu0 0
    %3396 = vmatmul.mubr.bf16.gmra.mxu0 %v3314
    %v3397 = vpop.f32.mrf.mxu0
    %v3398 = vadd.f32 0.0, %v3397
    %v3399 = vpop.f32.mrf.mxu0
    %v3400 = vadd.f32 0.0, %v3399
    %v3401 = vpop.f32.mrf.mxu0
    %v3402 = vpop.f32.mrf.mxu0
    %3403 = vdwg.mxu0
    %v3404 = vadd.f32 %v3318, %v3357
    %v3405 = vadd.f32 %v3319, %v3359
    %v3406 = vadd.f32 %v3320, %v3398
    %v3407 = vadd.f32 %v3321, %v3400
    %v3408 = vxor.u32 %v3404, 2147483648
    %v3409 = vmul.f32 %v3408, 1.442695
    %v3410 = vpow.pop %v3409
    %v3411 = vadd.f32 %v3410, 1.0
    %v3412 = vrcp.pop %v3411
    %v3413 = vmul.f32 1.0, %v3412
    %v3414 = vxor.u32 %v3405, 2147483648
    %v3415 = vmul.f32 %v3414, 1.442695
    %v3416 = vpow.pop %v3415
    %v3417 = vadd.f32 %v3416, 1.0
    %v3418 = vrcp.pop %v3417
    %v3419 = vmul.f32 1.0, %v3418
    %v3420 = vtanh.pop %v3406
    %v3421 = vxor.u32 %v3407, 2147483648
    %v3422 = vmul.f32 %v3421, 1.442695
    %v3423 = vpow.pop %v3422
    %v3424 = vadd.f32 %v3423, 1.0
    %v3425 = vrcp.pop %v3424
    %v3426 = vmul.f32 1.0, %v3425
    %v3427 = vmul.f32 %v3419, %v3311
    %v3428 = vmul.f32 %v3413, %v3420
    %v3429 = vadd.f32 %v3427, %v3428
    %v3430 = vtanh.pop %v3429
    %v3431 = vmul.f32 %v3426, %v3430
    %v3432 = vpack.c.bf16 %v3431, %v3431
    %3433 = vst [vmem:[%s1814] sm:$0xf] %v3432
    %v3434 = vld [vmem:[#allocation3] sm:$0xf]
    %v3435 = vld [vmem:[#allocation3 + $0x4] sm:$0xf]
    %v3436 = vld [vmem:[#allocation3 + $0x8] sm:$0xf]
    %v3437 = vld [vmem:[#allocation3 + $0xc] sm:$0xf]
    %v3438 = vld [vmem:[#allocation3 + $0x10] sm:$0xf]
    %v3439 = vld [vmem:[#allocation3 + $0x14] sm:$0xf]
    %v3440 = vld [vmem:[#allocation3 + $0x18] sm:$0xf]
    %v3441 = vld [vmem:[#allocation3 + $0x1c] sm:$0xf]
    %v3442 = vld [vmem:[#allocation15] sm:$0xff]
    %v3443 = vld [vmem:[#allocation15 + $0x8] sm:$0xff]
    %v3444 = vld [vmem:[#allocation15 + $0x10] sm:$0xff]
    %v3445 = vld [vmem:[#allocation15 + $0x18] sm:$0xff]
    %v3446 = vld [vmem:[#allocation15 + $0x20] sm:$0xff]
    %v3447 = vld [vmem:[#allocation15 + $0x28] sm:$0xff]
    %v3448 = vld [vmem:[#allocation15 + $0x30] sm:$0xff]
    %v3449 = vld [vmem:[#allocation15 + $0x38] sm:$0xff]
    %v3450 = vld [vmem:[#allocation15 + $0x40] sm:$0xff]
    %v3451 = vld [vmem:[#allocation15 + $0x48] sm:$0xff]
    %v3452 = vld [vmem:[#allocation15 + $0x50] sm:$0xff]
    %v3453 = vld [vmem:[#allocation15 + $0x58] sm:$0xff]
    %v3454 = vld [vmem:[#allocation15 + $0x60] sm:$0xff]
    %v3455 = vld [vmem:[#allocation15 + $0x68] sm:$0xff]
    %v3456 = vld [vmem:[#allocation15 + $0x70] sm:$0xff]
    %v3457 = vld [vmem:[#allocation15 + $0x78] sm:$0xff]
    %v3458 = vld [vmem:[#allocation15 + $0x80] sm:$0xff]
    %v3459 = vld [vmem:[#allocation15 + $0x88] sm:$0xff]
    %v3460 = vld [vmem:[#allocation15 + $0x90] sm:$0xff]
    %v3461 = vld [vmem:[#allocation15 + $0x98] sm:$0xff]
    %v3462 = vld [vmem:[#allocation15 + $0xa0] sm:$0xff]
    %v3463 = vld [vmem:[#allocation15 + $0xa8] sm:$0xff]
    %v3464 = vld [vmem:[#allocation15 + $0xb0] sm:$0xff]
    %v3465 = vld [vmem:[#allocation15 + $0xb8] sm:$0xff]
    %v3466 = vld [vmem:[#allocation15 + $0xc0] sm:$0xff]
    %v3467 = vld [vmem:[#allocation15 + $0xc8] sm:$0xff]
    %v3468 = vld [vmem:[#allocation15 + $0xd0] sm:$0xff]
    %v3469 = vld [vmem:[#allocation15 + $0xd8] sm:$0xff]
    %v3470 = vld [vmem:[#allocation15 + $0xe0] sm:$0xff]
    %v3471 = vld [vmem:[#allocation15 + $0xe8] sm:$0xff]
    %v3472 = vld [vmem:[#allocation15 + $0xf0] sm:$0xff]
    %v3473 = vld [vmem:[#allocation15 + $0xf8] sm:$0xff]
    %v3482 = vunpack.c.l.b16 %v3434
    %v3483 = vunpack.c.l.b16 %v3435
    %v3484 = vunpack.c.l.b16 %v3436
    %v3485 = vunpack.c.l.b16 %v3437
    %v3486 = vunpack.c.l.b16 %v3438
    %v3487 = vunpack.c.l.b16 %v3439
    %v3488 = vunpack.c.l.b16 %v3440
    %v3489 = vunpack.c.l.b16 %v3441
    %v3490 = vpack.c.b16 %v3483, %v3482
    %v3491 = vpack.c.b16 %v3485, %v3484
    %v3492 = vpack.c.b16 %v3487, %v3486
    %v3493 = vpack.c.b16 %v3489, %v3488
    %v3530 = vunpack.c.l.b16 %v3442
    %v3531 = vunpack.c.h.b16 %v3442
    %v3532 = vunpack.c.l.b16 %v3443
    %v3533 = vunpack.c.h.b16 %v3443
    %v3534 = vunpack.c.l.b16 %v3444
    %v3535 = vunpack.c.h.b16 %v3444
    %v3536 = vunpack.c.l.b16 %v3445
    %v3537 = vunpack.c.h.b16 %v3445
    %v3538 = vunpack.c.l.b16 %v3446
    %v3539 = vunpack.c.h.b16 %v3446
    %v3540 = vunpack.c.l.b16 %v3447
    %v3541 = vunpack.c.h.b16 %v3447
    %v3542 = vunpack.c.l.b16 %v3448
    %v3543 = vunpack.c.h.b16 %v3448
    %v3544 = vunpack.c.l.b16 %v3449
    %v3545 = vunpack.c.h.b16 %v3449
    %v3546 = vunpack.c.l.b16 %v3450
    %v3547 = vunpack.c.h.b16 %v3450
    %v3548 = vunpack.c.l.b16 %v3451
    %v3549 = vunpack.c.h.b16 %v3451
    %v3550 = vunpack.c.l.b16 %v3452
    %v3551 = vunpack.c.h.b16 %v3452
    %v3552 = vunpack.c.l.b16 %v3453
    %v3553 = vunpack.c.h.b16 %v3453
    %v3554 = vunpack.c.l.b16 %v3454
    %v3555 = vunpack.c.h.b16 %v3454
    %v3556 = vunpack.c.l.b16 %v3455
    %v3557 = vunpack.c.h.b16 %v3455
    %v3558 = vunpack.c.l.b16 %v3456
    %v3559 = vunpack.c.h.b16 %v3456
    %v3560 = vunpack.c.l.b16 %v3457
    %v3561 = vunpack.c.h.b16 %v3457
    %v3562 = vunpack.c.l.b16 %v3458
    %v3563 = vunpack.c.h.b16 %v3458
    %v3564 = vunpack.c.l.b16 %v3459
    %v3565 = vunpack.c.h.b16 %v3459
    %v3566 = vunpack.c.l.b16 %v3460
    %v3567 = vunpack.c.h.b16 %v3460
    %v3568 = vunpack.c.l.b16 %v3461
    %v3569 = vunpack.c.h.b16 %v3461
    %v3570 = vunpack.c.l.b16 %v3462
    %v3571 = vunpack.c.h.b16 %v3462
    %v3572 = vunpack.c.l.b16 %v3463
    %v3573 = vunpack.c.h.b16 %v3463
    %v3574 = vunpack.c.l.b16 %v3464
    %v3575 = vunpack.c.h.b16 %v3464
    %v3576 = vunpack.c.l.b16 %v3465
    %v3577 = vunpack.c.h.b16 %v3465
    %v3578 = vunpack.c.l.b16 %v3466
    %v3579 = vunpack.c.h.b16 %v3466
    %v3580 = vunpack.c.l.b16 %v3467
    %v3581 = vunpack.c.h.b16 %v3467
    %v3582 = vunpack.c.l.b16 %v3468
    %v3583 = vunpack.c.h.b16 %v3468
    %v3584 = vunpack.c.l.b16 %v3469
    %v3585 = vunpack.c.h.b16 %v3469
    %v3586 = vunpack.c.l.b16 %v3470
    %v3587 = vunpack.c.h.b16 %v3470
    %v3588 = vunpack.c.l.b16 %v3471
    %v3589 = vunpack.c.h.b16 %v3471
    %v3590 = vunpack.c.l.b16 %v3472
    %v3591 = vunpack.c.h.b16 %v3472
    %v3592 = vunpack.c.l.b16 %v3473
    %v3593 = vunpack.c.h.b16 %v3473
    %v3594 = vpack.c.b16 %v3534, %v3530
    %v3595 = vpack.c.b16 %v3535, %v3531
    %v3596 = vpack.c.b16 %v3536, %v3532
    %v3597 = vpack.c.b16 %v3537, %v3533
    %v3598 = vpack.c.b16 %v3542, %v3538
    %v3599 = vpack.c.b16 %v3543, %v3539
    %v3600 = vpack.c.b16 %v3544, %v3540
    %v3601 = vpack.c.b16 %v3545, %v3541
    %v3602 = vpack.c.b16 %v3550, %v3546
    %v3603 = vpack.c.b16 %v3551, %v3547
    %v3604 = vpack.c.b16 %v3552, %v3548
    %v3605 = vpack.c.b16 %v3553, %v3549
    %v3606 = vpack.c.b16 %v3558, %v3554
    %v3607 = vpack.c.b16 %v3559, %v3555
    %v3608 = vpack.c.b16 %v3560, %v3556
    %v3609 = vpack.c.b16 %v3561, %v3557
    %v3610 = vpack.c.b16 %v3566, %v3562
    %v3611 = vpack.c.b16 %v3567, %v3563
    %v3612 = vpack.c.b16 %v3568, %v3564
    %v3613 = vpack.c.b16 %v3569, %v3565
    %v3614 = vpack.c.b16 %v3574, %v3570
    %v3615 = vpack.c.b16 %v3575, %v3571
    %v3616 = vpack.c.b16 %v3576, %v3572
    %v3617 = vpack.c.b16 %v3577, %v3573
    %v3618 = vpack.c.b16 %v3582, %v3578
    %v3619 = vpack.c.b16 %v3583, %v3579
    %v3620 = vpack.c.b16 %v3584, %v3580
    %v3621 = vpack.c.b16 %v3585, %v3581
    %v3622 = vpack.c.b16 %v3590, %v3586
    %v3623 = vpack.c.b16 %v3591, %v3587
    %v3624 = vpack.c.b16 %v3592, %v3588
    %v3625 = vpack.c.b16 %v3593, %v3589
    %3658 = vmatprep.subr.bf16.mxu0 %v3623
    %3659 = vmatpush1.bf16.msra.mxu0 %v3622
    %3660 = vmatprep.subr.bf16.mxu0 %v3619
    %3661 = vmatpush1.bf16.msra.mxu0 %v3618
    %3662 = vmatprep.subr.bf16.mxu0 %v3615
    %3663 = vmatpush1.bf16.msra.mxu0 %v3614
    %3664 = vmatprep.subr.bf16.mxu0 %v3611
    %3665 = vmatpush1.bf16.msra.mxu0 %v3610
    %3666 = vmatprep.subr.bf16.mxu0 %v3607
    %3667 = vmatpush1.bf16.msra.mxu0 %v3606
    %3668 = vmatprep.subr.bf16.mxu0 %v3603
    %3669 = vmatpush1.bf16.msra.mxu0 %v3602
    %3670 = vmatprep.subr.bf16.mxu0 %v3599
    %3671 = vmatpush1.bf16.msra.mxu0 %v3598
    %3672 = vmatprep.subr.bf16.mxu0 %v3595
    %3673 = vmatpush1.bf16.msra.mxu0 %v3594
    %3674 = vmatprep.subr.bf16.mxu0 0
    %3675 = vmatpush2.bf16.msra.mxu0 0
    %3676 = vmatprep.subr.bf16.mxu0 0
    %3677 = vmatpush2.bf16.msra.mxu0 0
    %3678 = vmatprep.subr.bf16.mxu0 0
    %3679 = vmatpush2.bf16.msra.mxu0 0
    %3680 = vmatprep.subr.bf16.mxu0 0
    %3681 = vmatpush2.bf16.msra.mxu0 0
    %3682 = vmatprep.subr.bf16.mxu0 0
    %3683 = vmatpush2.bf16.msra.mxu0 0
    %3684 = vmatprep.subr.bf16.mxu0 0
    %3685 = vmatpush2.bf16.msra.mxu0 0
    %3686 = vmatprep.subr.bf16.mxu0 0
    %3687 = vmatpush2.bf16.msra.mxu0 0
    %3688 = vmatprep.subr.bf16.mxu0 0
    %3689 = vmatpush2.bf16.msra.mxu0 0
    %3690 = vmatprep.mubr.bf16.mxu0 0
    %3691 = vmatmul.mubr.bf16.gmra.mxu0 %v3490
    %v3692 = vpop.f32.mrf.mxu0
    %v3693 = vadd.f32 0.0, %v3692
    %v3694 = vpop.f32.mrf.mxu0
    %v3695 = vadd.f32 0.0, %v3694
    %v3696 = vpop.f32.mrf.mxu0
    %v3697 = vadd.f32 0.0, %v3696
    %v3698 = vpop.f32.mrf.mxu0
    %v3699 = vadd.f32 0.0, %v3698
    %3700 = vmatprep.mubr.bf16.mxu0 0
    %3701 = vmatmul.mubr.bf16.gmra.mxu0 %v3491
    %v3702 = vpop.f32.mrf.mxu0
    %v3703 = vadd.f32 0.0, %v3702
    %v3704 = vpop.f32.mrf.mxu0
    %v3705 = vadd.f32 0.0, %v3704
    %v3706 = vpop.f32.mrf.mxu0
    %v3707 = vadd.f32 0.0, %v3706
    %v3708 = vpop.f32.mrf.mxu0
    %v3709 = vadd.f32 0.0, %v3708
    %3710 = vmatprep.mubr.bf16.mxu0 0
    %3711 = vmatmul.mubr.bf16.gmra.mxu0 %v3492
    %v3712 = vpop.f32.mrf.mxu0
    %v3713 = vadd.f32 0.0, %v3712
    %v3714 = vpop.f32.mrf.mxu0
    %v3715 = vadd.f32 0.0, %v3714
    %v3716 = vpop.f32.mrf.mxu0
    %v3717 = vadd.f32 0.0, %v3716
    %v3718 = vpop.f32.mrf.mxu0
    %v3719 = vadd.f32 0.0, %v3718
    %3720 = vmatprep.mubr.bf16.mxu0 0
    %3721 = vmatmul.mubr.bf16.gmra.mxu0 %v3493
    %v3722 = vpop.f32.mrf.mxu0
    %v3723 = vadd.f32 0.0, %v3722
    %v3724 = vpop.f32.mrf.mxu0
    %v3725 = vadd.f32 0.0, %v3724
    %v3726 = vpop.f32.mrf.mxu0
    %v3727 = vadd.f32 0.0, %v3726
    %v3728 = vpop.f32.mrf.mxu0
    %v3729 = vadd.f32 0.0, %v3728
    %3730 = vdwg.mxu0
    %3731 = vmatprep.subr.bf16.mxu0 %v3625
    %3732 = vmatpush1.bf16.msra.mxu0 %v3624
    %3733 = vmatprep.subr.bf16.mxu0 %v3621
    %3734 = vmatpush1.bf16.msra.mxu0 %v3620
    %3735 = vmatprep.subr.bf16.mxu0 %v3617
    %3736 = vmatpush1.bf16.msra.mxu0 %v3616
    %3737 = vmatprep.subr.bf16.mxu0 %v3613
    %3738 = vmatpush1.bf16.msra.mxu0 %v3612
    %3739 = vmatprep.subr.bf16.mxu0 %v3609
    %3740 = vmatpush1.bf16.msra.mxu0 %v3608
    %3741 = vmatprep.subr.bf16.mxu0 %v3605
    %3742 = vmatpush1.bf16.msra.mxu0 %v3604
    %3743 = vmatprep.subr.bf16.mxu0 %v3601
    %3744 = vmatpush1.bf16.msra.mxu0 %v3600
    %3745 = vmatprep.subr.bf16.mxu0 %v3597
    %3746 = vmatpush1.bf16.msra.mxu0 %v3596
    %3747 = vmatprep.subr.bf16.mxu0 0
    %3748 = vmatpush2.bf16.msra.mxu0 0
    %3749 = vmatprep.subr.bf16.mxu0 0
    %3750 = vmatpush2.bf16.msra.mxu0 0
    %3751 = vmatprep.subr.bf16.mxu0 0
    %3752 = vmatpush2.bf16.msra.mxu0 0
    %3753 = vmatprep.subr.bf16.mxu0 0
    %3754 = vmatpush2.bf16.msra.mxu0 0
    %3755 = vmatprep.subr.bf16.mxu0 0
    %3756 = vmatpush2.bf16.msra.mxu0 0
    %3757 = vmatprep.subr.bf16.mxu0 0
    %3758 = vmatpush2.bf16.msra.mxu0 0
    %3759 = vmatprep.subr.bf16.mxu0 0
    %3760 = vmatpush2.bf16.msra.mxu0 0
    %3761 = vmatprep.subr.bf16.mxu0 0
    %3762 = vmatpush2.bf16.msra.mxu0 0
    %3763 = vmatprep.mubr.bf16.mxu0 0
    %3764 = vmatmul.mubr.bf16.gmra.mxu0 %v3490
    %v3765 = vpop.f32.mrf.mxu0
    %v3766 = vadd.f32 0.0, %v3765
    %v3767 = vpop.f32.mrf.mxu0
    %v3768 = vadd.f32 0.0, %v3767
    %v3769 = vpop.f32.mrf.mxu0
    %v3770 = vadd.f32 0.0, %v3769
    %v3771 = vpop.f32.mrf.mxu0
    %v3772 = vadd.f32 0.0, %v3771
    %3773 = vmatprep.mubr.bf16.mxu0 0
    %3774 = vmatmul.mubr.bf16.gmra.mxu0 %v3491
    %v3775 = vpop.f32.mrf.mxu0
    %v3776 = vadd.f32 0.0, %v3775
    %v3777 = vpop.f32.mrf.mxu0
    %v3778 = vadd.f32 0.0, %v3777
    %v3779 = vpop.f32.mrf.mxu0
    %v3780 = vadd.f32 0.0, %v3779
    %v3781 = vpop.f32.mrf.mxu0
    %v3782 = vadd.f32 0.0, %v3781
    %3783 = vmatprep.mubr.bf16.mxu0 0
    %3784 = vmatmul.mubr.bf16.gmra.mxu0 %v3492
    %v3785 = vpop.f32.mrf.mxu0
    %v3786 = vadd.f32 0.0, %v3785
    %v3787 = vpop.f32.mrf.mxu0
    %v3788 = vadd.f32 0.0, %v3787
    %v3789 = vpop.f32.mrf.mxu0
    %v3790 = vadd.f32 0.0, %v3789
    %v3791 = vpop.f32.mrf.mxu0
    %v3792 = vadd.f32 0.0, %v3791
    %3793 = vmatprep.mubr.bf16.mxu0 0
    %3794 = vmatmul.mubr.bf16.gmra.mxu0 %v3493
    %v3795 = vpop.f32.mrf.mxu0
    %v3796 = vadd.f32 0.0, %v3795
    %v3797 = vpop.f32.mrf.mxu0
    %v3798 = vadd.f32 0.0, %v3797
    %v3799 = vpop.f32.mrf.mxu0
    %v3800 = vadd.f32 0.0, %v3799
    %v3801 = vpop.f32.mrf.mxu0
    %v3802 = vadd.f32 0.0, %v3801
    %3803 = vdwg.mxu0
    %v3804 = vld [vmem:[#allocation18] sm:$0xf]
    %v3806 = vlaneseq
    %v3807 = vshrl.u32 %v3806, 7
    %v3808 = vsub.s32 0, %v3807
    %v3809 = vrot.slane %v3804, %v3808
    %v3810 = vlaneseq
    %v3811 = vshrl.u32 %v3810, 7
    %v3812 = vsub.s32 1, %v3811
    %v3813 = vrot.slane %v3804, %v3812
    %v3814 = vlaneseq
    %v3815 = vshrl.u32 %v3814, 7
    %v3816 = vsub.s32 2, %v3815
    %v3817 = vrot.slane %v3804, %v3816
    %v3818 = vlaneseq
    %v3819 = vshrl.u32 %v3818, 7
    %v3820 = vsub.s32 3, %v3819
    %v3821 = vrot.slane %v3804, %v3820
    %v3826 = vadd.f32 %v3693, %v3809
    %v3827 = vadd.f32 %v3695, %v3813
    %v3828 = vadd.f32 %v3766, %v3817
    %v3829 = vadd.f32 %v3768, %v3821
    %v3830 = vadd.f32 %v3697, %v3809
    %v3831 = vadd.f32 %v3699, %v3813
    %v3832 = vadd.f32 %v3770, %v3817
    %v3833 = vadd.f32 %v3772, %v3821
    %v3834 = vadd.f32 %v3703, %v3809
    %v3835 = vadd.f32 %v3705, %v3813
    %v3836 = vadd.f32 %v3776, %v3817
    %v3837 = vadd.f32 %v3778, %v3821
    %v3838 = vadd.f32 %v3707, %v3809
    %v3839 = vadd.f32 %v3709, %v3813
    %v3840 = vadd.f32 %v3780, %v3817
    %v3841 = vadd.f32 %v3782, %v3821
    %v3842 = vadd.f32 %v3713, %v3809
    %v3843 = vadd.f32 %v3715, %v3813
    %v3844 = vadd.f32 %v3786, %v3817
    %v3845 = vadd.f32 %v3788, %v3821
    %v3846 = vadd.f32 %v3717, %v3809
    %v3847 = vadd.f32 %v3719, %v3813
    %v3848 = vadd.f32 %v3790, %v3817
    %v3849 = vadd.f32 %v3792, %v3821
    %v3850 = vadd.f32 %v3723, %v3809
    %v3851 = vadd.f32 %v3725, %v3813
    %v3852 = vadd.f32 %v3796, %v3817
    %v3853 = vadd.f32 %v3798, %v3821
    %v3854 = vadd.f32 %v3727, %v3809
    %v3855 = vadd.f32 %v3729, %v3813
    %v3856 = vadd.f32 %v3800, %v3817
    %v3857 = vadd.f32 %v3802, %v3821
    %v3858 = vpack.c.bf16 %v3826, %v3826
    %v3859 = vpack.c.bf16 %v3827, %v3827
    %v3860 = vpack.c.bf16 %v3828, %v3828
    %v3861 = vpack.c.bf16 %v3829, %v3829
    %v3862 = vpack.c.bf16 %v3830, %v3830
    %v3863 = vpack.c.bf16 %v3831, %v3831
    %v3864 = vpack.c.bf16 %v3832, %v3832
    %v3865 = vpack.c.bf16 %v3833, %v3833
    %v3866 = vpack.c.bf16 %v3834, %v3834
    %v3867 = vpack.c.bf16 %v3835, %v3835
    %v3868 = vpack.c.bf16 %v3836, %v3836
    %v3869 = vpack.c.bf16 %v3837, %v3837
    %v3870 = vpack.c.bf16 %v3838, %v3838
    %v3871 = vpack.c.bf16 %v3839, %v3839
    %v3872 = vpack.c.bf16 %v3840, %v3840
    %v3873 = vpack.c.bf16 %v3841, %v3841
    %v3874 = vpack.c.bf16 %v3842, %v3842
    %v3875 = vpack.c.bf16 %v3843, %v3843
    %v3876 = vpack.c.bf16 %v3844, %v3844
    %v3877 = vpack.c.bf16 %v3845, %v3845
    %v3878 = vpack.c.bf16 %v3846, %v3846
    %v3879 = vpack.c.bf16 %v3847, %v3847
    %v3880 = vpack.c.bf16 %v3848, %v3848
    %v3881 = vpack.c.bf16 %v3849, %v3849
    %v3882 = vpack.c.bf16 %v3850, %v3850
    %v3883 = vpack.c.bf16 %v3851, %v3851
    %v3884 = vpack.c.bf16 %v3852, %v3852
    %v3885 = vpack.c.bf16 %v3853, %v3853
    %v3886 = vpack.c.bf16 %v3854, %v3854
    %v3887 = vpack.c.bf16 %v3855, %v3855
    %v3888 = vpack.c.bf16 %v3856, %v3856
    %v3889 = vpack.c.bf16 %v3857, %v3857
    %v3922 = vunpack.c.l.b16 %v3858
    %v3923 = vunpack.c.l.b16 %v3859
    %v3924 = vunpack.c.l.b16 %v3860
    %v3925 = vunpack.c.l.b16 %v3861
    %v3926 = vunpack.c.l.b16 %v3862
    %v3927 = vunpack.c.l.b16 %v3863
    %v3928 = vunpack.c.l.b16 %v3864
    %v3929 = vunpack.c.l.b16 %v3865
    %v3930 = vunpack.c.l.b16 %v3866
    %v3931 = vunpack.c.l.b16 %v3867
    %v3932 = vunpack.c.l.b16 %v3868
    %v3933 = vunpack.c.l.b16 %v3869
    %v3934 = vunpack.c.l.b16 %v3870
    %v3935 = vunpack.c.l.b16 %v3871
    %v3936 = vunpack.c.l.b16 %v3872
    %v3937 = vunpack.c.l.b16 %v3873
    %v3938 = vunpack.c.l.b16 %v3874
    %v3939 = vunpack.c.l.b16 %v3875
    %v3940 = vunpack.c.l.b16 %v3876
    %v3941 = vunpack.c.l.b16 %v3877
    %v3942 = vunpack.c.l.b16 %v3878
    %v3943 = vunpack.c.l.b16 %v3879
    %v3944 = vunpack.c.l.b16 %v3880
    %v3945 = vunpack.c.l.b16 %v3881
    %v3946 = vunpack.c.l.b16 %v3882
    %v3947 = vunpack.c.l.b16 %v3883
    %v3948 = vunpack.c.l.b16 %v3884
    %v3949 = vunpack.c.l.b16 %v3885
    %v3950 = vunpack.c.l.b16 %v3886
    %v3951 = vunpack.c.l.b16 %v3887
    %v3952 = vunpack.c.l.b16 %v3888
    %v3953 = vunpack.c.l.b16 %v3889
    %v3954 = vpack.c.b16 %v3923, %v3922
    %v3955 = vpack.c.b16 %v3925, %v3924
    %v3956 = vpack.c.b16 %v3927, %v3926
    %v3957 = vpack.c.b16 %v3929, %v3928
    %v3958 = vpack.c.b16 %v3931, %v3930
    %v3959 = vpack.c.b16 %v3933, %v3932
    %v3960 = vpack.c.b16 %v3935, %v3934
    %v3961 = vpack.c.b16 %v3937, %v3936
    %v3962 = vpack.c.b16 %v3939, %v3938
    %v3963 = vpack.c.b16 %v3941, %v3940
    %v3964 = vpack.c.b16 %v3943, %v3942
    %v3965 = vpack.c.b16 %v3945, %v3944
    %v3966 = vpack.c.b16 %v3947, %v3946
    %v3967 = vpack.c.b16 %v3949, %v3948
    %v3968 = vpack.c.b16 %v3951, %v3950
    %v3969 = vpack.c.b16 %v3953, %v3952
    %3986 = vst [vmem:[#allocation2] sm:$0xff] %v3954
    %3987 = vst [vmem:[#allocation2 + $0x8] sm:$0xff] %v3955
    %3988 = vst [vmem:[#allocation2 + $0x10] sm:$0xff] %v3956
    %3989 = vst [vmem:[#allocation2 + $0x18] sm:$0xff] %v3957
    %3990 = vst [vmem:[#allocation2 + $0x20] sm:$0xff] %v3958
    %3991 = vst [vmem:[#allocation2 + $0x28] sm:$0xff] %v3959
    %3992 = vst [vmem:[#allocation2 + $0x30] sm:$0xff] %v3960
    %3993 = vst [vmem:[#allocation2 + $0x38] sm:$0xff] %v3961
    %3994 = vst [vmem:[#allocation2 + $0x40] sm:$0xff] %v3962
    %3995 = vst [vmem:[#allocation2 + $0x48] sm:$0xff] %v3963
    %3996 = vst [vmem:[#allocation2 + $0x50] sm:$0xff] %v3964
    %3997 = vst [vmem:[#allocation2 + $0x58] sm:$0xff] %v3965
    %3998 = vst [vmem:[#allocation2 + $0x60] sm:$0xff] %v3966
    %3999 = vst [vmem:[#allocation2 + $0x68] sm:$0xff] %v3967
    %4000 = vst [vmem:[#allocation2 + $0x70] sm:$0xff] %v3968
    %4001 = vst [vmem:[#allocation2 + $0x78] sm:$0xff] %v3969
    %v4002 = vld [vmem:[#allocation17] sm:$0xff]
    %v4003 = vld [vmem:[#allocation17 + $0x8] sm:$0xff]
    %v4004 = vld [vmem:[#allocation17 + $0x10] sm:$0xff]
    %v4005 = vld [vmem:[#allocation17 + $0x18] sm:$0xff]
    %v4006 = vld [vmem:[#allocation17 + $0x20] sm:$0xff]
    %v4007 = vld [vmem:[#allocation17 + $0x28] sm:$0xff]
    %v4008 = vld [vmem:[#allocation17 + $0x30] sm:$0xff]
    %v4009 = vld [vmem:[#allocation17 + $0x38] sm:$0xff]
    %v4010 = vld [vmem:[#allocation17 + $0x40] sm:$0xff]
    %v4011 = vld [vmem:[#allocation17 + $0x48] sm:$0xff]
    %v4012 = vld [vmem:[#allocation17 + $0x50] sm:$0xff]
    %v4013 = vld [vmem:[#allocation17 + $0x58] sm:$0xff]
    %v4014 = vld [vmem:[#allocation17 + $0x60] sm:$0xff]
    %v4015 = vld [vmem:[#allocation17 + $0x68] sm:$0xff]
    %v4016 = vld [vmem:[#allocation17 + $0x70] sm:$0xff]
    %v4017 = vld [vmem:[#allocation17 + $0x78] sm:$0xff]
    %v4018 = vld [vmem:[#allocation17 + $0x80] sm:$0xff]
    %v4019 = vld [vmem:[#allocation17 + $0x88] sm:$0xff]
    %v4020 = vld [vmem:[#allocation17 + $0x90] sm:$0xff]
    %v4021 = vld [vmem:[#allocation17 + $0x98] sm:$0xff]
    %v4022 = vld [vmem:[#allocation17 + $0xa0] sm:$0xff]
    %v4023 = vld [vmem:[#allocation17 + $0xa8] sm:$0xff]
    %v4024 = vld [vmem:[#allocation17 + $0xb0] sm:$0xff]
    %v4025 = vld [vmem:[#allocation17 + $0xb8] sm:$0xff]
    %v4026 = vld [vmem:[#allocation17 + $0xc0] sm:$0xff]
    %v4027 = vld [vmem:[#allocation17 + $0xc8] sm:$0xff]
    %v4028 = vld [vmem:[#allocation17 + $0xd0] sm:$0xff]
    %v4029 = vld [vmem:[#allocation17 + $0xd8] sm:$0xff]
    %v4030 = vld [vmem:[#allocation17 + $0xe0] sm:$0xff]
    %v4031 = vld [vmem:[#allocation17 + $0xe8] sm:$0xff]
    %v4032 = vld [vmem:[#allocation17 + $0xf0] sm:$0xff]
    %v4033 = vld [vmem:[#allocation17 + $0xf8] sm:$0xff]
    %v4034 = vld [vmem:[#allocation2] sm:$0xff]
    %v4035 = vld [vmem:[#allocation2 + $0x8] sm:$0xff]
    %v4036 = vunpack.c.l.bf16 %v4034
    %v4037 = vunpack.c.h.bf16 %v4034
    %v4038 = vunpack.c.l.bf16 %v4035
    %v4039 = vunpack.c.h.bf16 %v4035
    %v4040 = vxor.u32 %v4036, 2147483648
    %v4041 = vmul.f32 %v4040, 1.442695
    %v4042 = vpow.pop %v4041
    %v4043 = vadd.f32 %v4042, 1.0
    %v4044 = vrcp.pop %v4043
    %v4045 = vmul.f32 1.0, %v4044
    %v4046 = vxor.u32 %v4037, 2147483648
    %v4047 = vmul.f32 %v4046, 1.442695
    %v4048 = vpow.pop %v4047
    %v4049 = vadd.f32 %v4048, 1.0
    %v4050 = vrcp.pop %v4049
    %v4051 = vmul.f32 1.0, %v4050
    %v4052 = vtanh.pop %v4038
    %v4053 = vxor.u32 %v4039, 2147483648
    %v4054 = vmul.f32 %v4053, 1.442695
    %v4055 = vpow.pop %v4054
    %v4056 = vadd.f32 %v4055, 1.0
    %v4057 = vrcp.pop %v4056
    %v4058 = vmul.f32 1.0, %v4057
    %v4059 = vmul.f32 %v4051, 0.0
    %v4060 = vmul.f32 %v4045, %v4052
    %v4061 = vadd.f32 %v4059, %v4060
    %v4062 = vtanh.pop %v4061
    %v4063 = vmul.f32 %v4058, %v4062
    %v4064 = vld [vmem:[%s816] sm:$0xff]
    %v4065 = vld [vmem:[%s816 + $0x8] sm:$0xff]
    %v4066 = vunpack.c.l.bf16 %v4064
    %v4067 = vunpack.c.h.bf16 %v4064
    %v4068 = vunpack.c.l.bf16 %v4065
    %v4069 = vunpack.c.h.bf16 %v4065
    %v4070 = vpack.c.bf16 %v4063, %v4063
    %v4103 = vunpack.c.l.b16 %v4002
    %v4104 = vunpack.c.h.b16 %v4002
    %v4105 = vunpack.c.l.b16 %v4003
    %v4106 = vunpack.c.h.b16 %v4003
    %v4107 = vunpack.c.l.b16 %v4004
    %v4108 = vunpack.c.h.b16 %v4004
    %v4109 = vunpack.c.l.b16 %v4005
    %v4110 = vunpack.c.h.b16 %v4005
    %v4111 = vunpack.c.l.b16 %v4006
    %v4112 = vunpack.c.h.b16 %v4006
    %v4113 = vunpack.c.l.b16 %v4007
    %v4114 = vunpack.c.h.b16 %v4007
    %v4115 = vunpack.c.l.b16 %v4008
    %v4116 = vunpack.c.h.b16 %v4008
    %v4117 = vunpack.c.l.b16 %v4009
    %v4118 = vunpack.c.h.b16 %v4009
    %v4119 = vunpack.c.l.b16 %v4010
    %v4120 = vunpack.c.h.b16 %v4010
    %v4121 = vunpack.c.l.b16 %v4011
    %v4122 = vunpack.c.h.b16 %v4011
    %v4123 = vunpack.c.l.b16 %v4012
    %v4124 = vunpack.c.h.b16 %v4012
    %v4125 = vunpack.c.l.b16 %v4013
    %v4126 = vunpack.c.h.b16 %v4013
    %v4127 = vunpack.c.l.b16 %v4014
    %v4128 = vunpack.c.h.b16 %v4014
    %v4129 = vunpack.c.l.b16 %v4015
    %v4130 = vunpack.c.h.b16 %v4015
    %v4131 = vunpack.c.l.b16 %v4016
    %v4132 = vunpack.c.h.b16 %v4016
    %v4133 = vunpack.c.l.b16 %v4017
    %v4134 = vunpack.c.h.b16 %v4017
    %v4135 = vunpack.c.l.b16 %v4018
    %v4136 = vunpack.c.h.b16 %v4018
    %v4137 = vunpack.c.l.b16 %v4019
    %v4138 = vunpack.c.h.b16 %v4019
    %v4139 = vunpack.c.l.b16 %v4020
    %v4140 = vunpack.c.h.b16 %v4020
    %v4141 = vunpack.c.l.b16 %v4021
    %v4142 = vunpack.c.h.b16 %v4021
    %v4143 = vunpack.c.l.b16 %v4022
    %v4144 = vunpack.c.h.b16 %v4022
    %v4145 = vunpack.c.l.b16 %v4023
    %v4146 = vunpack.c.h.b16 %v4023
    %v4147 = vunpack.c.l.b16 %v4024
    %v4148 = vunpack.c.h.b16 %v4024
    %v4149 = vunpack.c.l.b16 %v4025
    %v4150 = vunpack.c.h.b16 %v4025
    %v4151 = vunpack.c.l.b16 %v4026
    %v4152 = vunpack.c.h.b16 %v4026
    %v4153 = vunpack.c.l.b16 %v4027
    %v4154 = vunpack.c.h.b16 %v4027
    %v4155 = vunpack.c.l.b16 %v4028
    %v4156 = vunpack.c.h.b16 %v4028
    %v4157 = vunpack.c.l.b16 %v4029
    %v4158 = vunpack.c.h.b16 %v4029
    %v4159 = vunpack.c.l.b16 %v4030
    %v4160 = vunpack.c.h.b16 %v4030
    %v4161 = vunpack.c.l.b16 %v4031
    %v4162 = vunpack.c.h.b16 %v4031
    %v4163 = vunpack.c.l.b16 %v4032
    %v4164 = vunpack.c.h.b16 %v4032
    %v4165 = vunpack.c.l.b16 %v4033
    %v4166 = vunpack.c.h.b16 %v4033
    %v4167 = vpack.c.b16 %v4107, %v4103
    %v4168 = vpack.c.b16 %v4108, %v4104
    %v4169 = vpack.c.b16 %v4109, %v4105
    %v4170 = vpack.c.b16 %v4110, %v4106
    %v4171 = vpack.c.b16 %v4115, %v4111
    %v4172 = vpack.c.b16 %v4116, %v4112
    %v4173 = vpack.c.b16 %v4117, %v4113
    %v4174 = vpack.c.b16 %v4118, %v4114
    %v4175 = vpack.c.b16 %v4123, %v4119
    %v4176 = vpack.c.b16 %v4124, %v4120
    %v4177 = vpack.c.b16 %v4125, %v4121
    %v4178 = vpack.c.b16 %v4126, %v4122
    %v4179 = vpack.c.b16 %v4131, %v4127
    %v4180 = vpack.c.b16 %v4132, %v4128
    %v4181 = vpack.c.b16 %v4133, %v4129
    %v4182 = vpack.c.b16 %v4134, %v4130
    %v4183 = vpack.c.b16 %v4139, %v4135
    %v4184 = vpack.c.b16 %v4140, %v4136
    %v4185 = vpack.c.b16 %v4141, %v4137
    %v4186 = vpack.c.b16 %v4142, %v4138
    %v4187 = vpack.c.b16 %v4147, %v4143
    %v4188 = vpack.c.b16 %v4148, %v4144
    %v4189 = vpack.c.b16 %v4149, %v4145
    %v4190 = vpack.c.b16 %v4150, %v4146
    %v4191 = vpack.c.b16 %v4155, %v4151
    %v4192 = vpack.c.b16 %v4156, %v4152
    %v4193 = vpack.c.b16 %v4157, %v4153
    %v4194 = vpack.c.b16 %v4158, %v4154
    %v4195 = vpack.c.b16 %v4163, %v4159
    %v4196 = vpack.c.b16 %v4164, %v4160
    %v4197 = vpack.c.b16 %v4165, %v4161
    %v4198 = vpack.c.b16 %v4166, %v4162
    %4231 = vmatprep.subr.bf16.mxu0 %v4196
    %4232 = vmatpush1.bf16.msra.mxu0 %v4195
    %4233 = vmatprep.subr.bf16.mxu0 %v4192
    %4234 = vmatpush1.bf16.msra.mxu0 %v4191
    %4235 = vmatprep.subr.bf16.mxu0 %v4188
    %4236 = vmatpush1.bf16.msra.mxu0 %v4187
    %4237 = vmatprep.subr.bf16.mxu0 %v4184
    %4238 = vmatpush1.bf16.msra.mxu0 %v4183
    %4239 = vmatprep.subr.bf16.mxu0 %v4180
    %4240 = vmatpush1.bf16.msra.mxu0 %v4179
    %4241 = vmatprep.subr.bf16.mxu0 %v4176
    %4242 = vmatpush1.bf16.msra.mxu0 %v4175
    %4243 = vmatprep.subr.bf16.mxu0 %v4172
    %4244 = vmatpush1.bf16.msra.mxu0 %v4171
    %4245 = vmatprep.subr.bf16.mxu0 %v4168
    %4246 = vmatpush1.bf16.msra.mxu0 %v4167
    %4247 = vmatprep.subr.bf16.mxu0 0
    %4248 = vmatpush2.bf16.msra.mxu0 0
    %4249 = vmatprep.subr.bf16.mxu0 0
    %4250 = vmatpush2.bf16.msra.mxu0 0
    %4251 = vmatprep.subr.bf16.mxu0 0
    %4252 = vmatpush2.bf16.msra.mxu0 0
    %4253 = vmatprep.subr.bf16.mxu0 0
    %4254 = vmatpush2.bf16.msra.mxu0 0
    %4255 = vmatprep.subr.bf16.mxu0 0
    %4256 = vmatpush2.bf16.msra.mxu0 0
    %4257 = vmatprep.subr.bf16.mxu0 0
    %4258 = vmatpush2.bf16.msra.mxu0 0
    %4259 = vmatprep.subr.bf16.mxu0 0
    %4260 = vmatpush2.bf16.msra.mxu0 0
    %4261 = vmatprep.subr.bf16.mxu0 0
    %4262 = vmatpush2.bf16.msra.mxu0 0
    %4263 = vmatprep.mubr.bf16.mxu0 0
    %4264 = vmatmul.mubr.bf16.gmra.mxu0 %v4070
    %v4265 = vpop.f32.mrf.mxu0
    %v4266 = vadd.f32 0.0, %v4265
    %v4267 = vpop.f32.mrf.mxu0
    %v4268 = vadd.f32 0.0, %v4267
    %v4269 = vpop.f32.mrf.mxu0
    %v4270 = vpop.f32.mrf.mxu0
    %4271 = vdwg.mxu0
    %4272 = vmatprep.subr.bf16.mxu0 %v4198
    %4273 = vmatpush1.bf16.msra.mxu0 %v4197
    %4274 = vmatprep.subr.bf16.mxu0 %v4194
    %4275 = vmatpush1.bf16.msra.mxu0 %v4193
    %4276 = vmatprep.subr.bf16.mxu0 %v4190
    %4277 = vmatpush1.bf16.msra.mxu0 %v4189
    %4278 = vmatprep.subr.bf16.mxu0 %v4186
    %4279 = vmatpush1.bf16.msra.mxu0 %v4185
    %4280 = vmatprep.subr.bf16.mxu0 %v4182
    %4281 = vmatpush1.bf16.msra.mxu0 %v4181
    %4282 = vmatprep.subr.bf16.mxu0 %v4178
    %4283 = vmatpush1.bf16.msra.mxu0 %v4177
    %4284 = vmatprep.subr.bf16.mxu0 %v4174
    %4285 = vmatpush1.bf16.msra.mxu0 %v4173
    %4286 = vmatprep.subr.bf16.mxu0 %v4170
    %4287 = vmatpush1.bf16.msra.mxu0 %v4169
    %4288 = vmatprep.subr.bf16.mxu0 0
    %4289 = vmatpush2.bf16.msra.mxu0 0
    %4290 = vmatprep.subr.bf16.mxu0 0
    %4291 = vmatpush2.bf16.msra.mxu0 0
    %4292 = vmatprep.subr.bf16.mxu0 0
    %4293 = vmatpush2.bf16.msra.mxu0 0
    %4294 = vmatprep.subr.bf16.mxu0 0
    %4295 = vmatpush2.bf16.msra.mxu0 0
    %4296 = vmatprep.subr.bf16.mxu0 0
    %4297 = vmatpush2.bf16.msra.mxu0 0
    %4298 = vmatprep.subr.bf16.mxu0 0
    %4299 = vmatpush2.bf16.msra.mxu0 0
    %4300 = vmatprep.subr.bf16.mxu0 0
    %4301 = vmatpush2.bf16.msra.mxu0 0
    %4302 = vmatprep.subr.bf16.mxu0 0
    %4303 = vmatpush2.bf16.msra.mxu0 0
    %4304 = vmatprep.mubr.bf16.mxu0 0
    %4305 = vmatmul.mubr.bf16.gmra.mxu0 %v4070
    %v4306 = vpop.f32.mrf.mxu0
    %v4307 = vadd.f32 0.0, %v4306
    %v4308 = vpop.f32.mrf.mxu0
    %v4309 = vadd.f32 0.0, %v4308
    %v4310 = vpop.f32.mrf.mxu0
    %v4311 = vpop.f32.mrf.mxu0
    %4312 = vdwg.mxu0
    %v4313 = vadd.f32 %v4066, %v4266
    %v4314 = vadd.f32 %v4067, %v4268
    %v4315 = vadd.f32 %v4068, %v4307
    %v4316 = vadd.f32 %v4069, %v4309
    %v4317 = vxor.u32 %v4313, 2147483648
    %v4318 = vmul.f32 %v4317, 1.442695
    %v4319 = vpow.pop %v4318
    %v4320 = vadd.f32 %v4319, 1.0
    %v4321 = vrcp.pop %v4320
    %v4322 = vmul.f32 1.0, %v4321
    %v4323 = vxor.u32 %v4314, 2147483648
    %v4324 = vmul.f32 %v4323, 1.442695
    %v4325 = vpow.pop %v4324
    %v4326 = vadd.f32 %v4325, 1.0
    %v4327 = vrcp.pop %v4326
    %v4328 = vmul.f32 1.0, %v4327
    %v4329 = vtanh.pop %v4315
    %v4330 = vxor.u32 %v4316, 2147483648
    %v4331 = vmul.f32 %v4330, 1.442695
    %v4332 = vpow.pop %v4331
    %v4333 = vadd.f32 %v4332, 1.0
    %v4334 = vrcp.pop %v4333
    %v4335 = vmul.f32 1.0, %v4334
    %v4336 = vmul.f32 %v4328, %v4061
    %v4337 = vmul.f32 %v4322, %v4329
    %v4338 = vadd.f32 %v4336, %v4337
    %v4339 = vtanh.pop %v4338
    %v4340 = vmul.f32 %v4335, %v4339
    %v4341 = vld [vmem:[%s1096] sm:$0xff]
    %v4342 = vld [vmem:[%s1096 + $0x8] sm:$0xff]
    %v4343 = vunpack.c.l.bf16 %v4341
    %v4344 = vunpack.c.h.bf16 %v4341
    %v4345 = vunpack.c.l.bf16 %v4342
    %v4346 = vunpack.c.h.bf16 %v4342
    %v4347 = vpack.c.bf16 %v4340, %v4340
    %4348 = vmatprep.subr.bf16.mxu0 %v4196
    %4349 = vmatpush1.bf16.msra.mxu0 %v4195
    %4350 = vmatprep.subr.bf16.mxu0 %v4192
    %4351 = vmatpush1.bf16.msra.mxu0 %v4191
    %4352 = vmatprep.subr.bf16.mxu0 %v4188
    %4353 = vmatpush1.bf16.msra.mxu0 %v4187
    %4354 = vmatprep.subr.bf16.mxu0 %v4184
    %4355 = vmatpush1.bf16.msra.mxu0 %v4183
    %4356 = vmatprep.subr.bf16.mxu0 %v4180
    %4357 = vmatpush1.bf16.msra.mxu0 %v4179
    %4358 = vmatprep.subr.bf16.mxu0 %v4176
    %4359 = vmatpush1.bf16.msra.mxu0 %v4175
    %4360 = vmatprep.subr.bf16.mxu0 %v4172
    %4361 = vmatpush1.bf16.msra.mxu0 %v4171
    %4362 = vmatprep.subr.bf16.mxu0 %v4168
    %4363 = vmatpush1.bf16.msra.mxu0 %v4167
    %4364 = vmatprep.subr.bf16.mxu0 0
    %4365 = vmatpush2.bf16.msra.mxu0 0
    %4366 = vmatprep.subr.bf16.mxu0 0
    %4367 = vmatpush2.bf16.msra.mxu0 0
    %4368 = vmatprep.subr.bf16.mxu0 0
    %4369 = vmatpush2.bf16.msra.mxu0 0
    %4370 = vmatprep.subr.bf16.mxu0 0
    %4371 = vmatpush2.bf16.msra.mxu0 0
    %4372 = vmatprep.subr.bf16.mxu0 0
    %4373 = vmatpush2.bf16.msra.mxu0 0
    %4374 = vmatprep.subr.bf16.mxu0 0
    %4375 = vmatpush2.bf16.msra.mxu0 0
    %4376 = vmatprep.subr.bf16.mxu0 0
    %4377 = vmatpush2.bf16.msra.mxu0 0
    %4378 = vmatprep.subr.bf16.mxu0 0
    %4379 = vmatpush2.bf16.msra.mxu0 0
    %4380 = vmatprep.mubr.bf16.mxu0 0
    %4381 = vmatmul.mubr.bf16.gmra.mxu0 %v4347
    %v4382 = vpop.f32.mrf.mxu0
    %v4383 = vadd.f32 0.0, %v4382
    %v4384 = vpop.f32.mrf.mxu0
    %v4385 = vadd.f32 0.0, %v4384
    %v4386 = vpop.f32.mrf.mxu0
    %v4387 = vpop.f32.mrf.mxu0
    %4388 = vdwg.mxu0
    %4389 = vmatprep.subr.bf16.mxu0 %v4198
    %4390 = vmatpush1.bf16.msra.mxu0 %v4197
    %4391 = vmatprep.subr.bf16.mxu0 %v4194
    %4392 = vmatpush1.bf16.msra.mxu0 %v4193
    %4393 = vmatprep.subr.bf16.mxu0 %v4190
    %4394 = vmatpush1.bf16.msra.mxu0 %v4189
    %4395 = vmatprep.subr.bf16.mxu0 %v4186
    %4396 = vmatpush1.bf16.msra.mxu0 %v4185
    %4397 = vmatprep.subr.bf16.mxu0 %v4182
    %4398 = vmatpush1.bf16.msra.mxu0 %v4181
    %4399 = vmatprep.subr.bf16.mxu0 %v4178
    %4400 = vmatpush1.bf16.msra.mxu0 %v4177
    %4401 = vmatprep.subr.bf16.mxu0 %v4174
    %4402 = vmatpush1.bf16.msra.mxu0 %v4173
    %4403 = vmatprep.subr.bf16.mxu0 %v4170
    %4404 = vmatpush1.bf16.msra.mxu0 %v4169
    %4405 = vmatprep.subr.bf16.mxu0 0
    %4406 = vmatpush2.bf16.msra.mxu0 0
    %4407 = vmatprep.subr.bf16.mxu0 0
    %4408 = vmatpush2.bf16.msra.mxu0 0
    %4409 = vmatprep.subr.bf16.mxu0 0
    %4410 = vmatpush2.bf16.msra.mxu0 0
    %4411 = vmatprep.subr.bf16.mxu0 0
    %4412 = vmatpush2.bf16.msra.mxu0 0
    %4413 = vmatprep.subr.bf16.mxu0 0
    %4414 = vmatpush2.bf16.msra.mxu0 0
    %4415 = vmatprep.subr.bf16.mxu0 0
    %4416 = vmatpush2.bf16.msra.mxu0 0
    %4417 = vmatprep.subr.bf16.mxu0 0
    %4418 = vmatpush2.bf16.msra.mxu0 0
    %4419 = vmatprep.subr.bf16.mxu0 0
    %4420 = vmatpush2.bf16.msra.mxu0 0
    %4421 = vmatprep.mubr.bf16.mxu0 0
    %4422 = vmatmul.mubr.bf16.gmra.mxu0 %v4347
    %v4423 = vpop.f32.mrf.mxu0
    %v4424 = vadd.f32 0.0, %v4423
    %v4425 = vpop.f32.mrf.mxu0
    %v4426 = vadd.f32 0.0, %v4425
    %v4427 = vpop.f32.mrf.mxu0
    %v4428 = vpop.f32.mrf.mxu0
    %4429 = vdwg.mxu0
    %v4430 = vadd.f32 %v4343, %v4383
    %v4431 = vadd.f32 %v4344, %v4385
    %v4432 = vadd.f32 %v4345, %v4424
    %v4433 = vadd.f32 %v4346, %v4426
    %v4434 = vxor.u32 %v4430, 2147483648
    %v4435 = vmul.f32 %v4434, 1.442695
    %v4436 = vpow.pop %v4435
    %v4437 = vadd.f32 %v4436, 1.0
    %v4438 = vrcp.pop %v4437
    %v4439 = vmul.f32 1.0, %v4438
    %v4440 = vxor.u32 %v4431, 2147483648
    %v4441 = vmul.f32 %v4440, 1.442695
    %v4442 = vpow.pop %v4441
    %v4443 = vadd.f32 %v4442, 1.0
    %v4444 = vrcp.pop %v4443
    %v4445 = vmul.f32 1.0, %v4444
    %v4446 = vtanh.pop %v4432
    %v4447 = vxor.u32 %v4433, 2147483648
    %v4448 = vmul.f32 %v4447, 1.442695
    %v4449 = vpow.pop %v4448
    %v4450 = vadd.f32 %v4449, 1.0
    %v4451 = vrcp.pop %v4450
    %v4452 = vmul.f32 1.0, %v4451
    %v4453 = vmul.f32 %v4445, %v4338
    %v4454 = vmul.f32 %v4439, %v4446
    %v4455 = vadd.f32 %v4453, %v4454
    %v4456 = vtanh.pop %v4455
    %v4457 = vmul.f32 %v4452, %v4456
    %v4458 = vld [vmem:[%s1216] sm:$0xff]
    %v4459 = vld [vmem:[%s1216 + $0x8] sm:$0xff]
    %v4460 = vunpack.c.l.bf16 %v4458
    %v4461 = vunpack.c.h.bf16 %v4458
    %v4462 = vunpack.c.l.bf16 %v4459
    %v4463 = vunpack.c.h.bf16 %v4459
    %v4464 = vpack.c.bf16 %v4457, %v4457
    %4465 = vmatprep.subr.bf16.mxu0 %v4196
    %4466 = vmatpush1.bf16.msra.mxu0 %v4195
    %4467 = vmatprep.subr.bf16.mxu0 %v4192
    %4468 = vmatpush1.bf16.msra.mxu0 %v4191
    %4469 = vmatprep.subr.bf16.mxu0 %v4188
    %4470 = vmatpush1.bf16.msra.mxu0 %v4187
    %4471 = vmatprep.subr.bf16.mxu0 %v4184
    %4472 = vmatpush1.bf16.msra.mxu0 %v4183
    %4473 = vmatprep.subr.bf16.mxu0 %v4180
    %4474 = vmatpush1.bf16.msra.mxu0 %v4179
    %4475 = vmatprep.subr.bf16.mxu0 %v4176
    %4476 = vmatpush1.bf16.msra.mxu0 %v4175
    %4477 = vmatprep.subr.bf16.mxu0 %v4172
    %4478 = vmatpush1.bf16.msra.mxu0 %v4171
    %4479 = vmatprep.subr.bf16.mxu0 %v4168
    %4480 = vmatpush1.bf16.msra.mxu0 %v4167
    %4481 = vmatprep.subr.bf16.mxu0 0
    %4482 = vmatpush2.bf16.msra.mxu0 0
    %4483 = vmatprep.subr.bf16.mxu0 0
    %4484 = vmatpush2.bf16.msra.mxu0 0
    %4485 = vmatprep.subr.bf16.mxu0 0
    %4486 = vmatpush2.bf16.msra.mxu0 0
    %4487 = vmatprep.subr.bf16.mxu0 0
    %4488 = vmatpush2.bf16.msra.mxu0 0
    %4489 = vmatprep.subr.bf16.mxu0 0
    %4490 = vmatpush2.bf16.msra.mxu0 0
    %4491 = vmatprep.subr.bf16.mxu0 0
    %4492 = vmatpush2.bf16.msra.mxu0 0
    %4493 = vmatprep.subr.bf16.mxu0 0
    %4494 = vmatpush2.bf16.msra.mxu0 0
    %4495 = vmatprep.subr.bf16.mxu0 0
    %4496 = vmatpush2.bf16.msra.mxu0 0
    %4497 = vmatprep.mubr.bf16.mxu0 0
    %4498 = vmatmul.mubr.bf16.gmra.mxu0 %v4464
    %v4499 = vpop.f32.mrf.mxu0
    %v4500 = vadd.f32 0.0, %v4499
    %v4501 = vpop.f32.mrf.mxu0
    %v4502 = vadd.f32 0.0, %v4501
    %v4503 = vpop.f32.mrf.mxu0
    %v4504 = vpop.f32.mrf.mxu0
    %4505 = vdwg.mxu0
    %4506 = vmatprep.subr.bf16.mxu0 %v4198
    %4507 = vmatpush1.bf16.msra.mxu0 %v4197
    %4508 = vmatprep.subr.bf16.mxu0 %v4194
    %4509 = vmatpush1.bf16.msra.mxu0 %v4193
    %4510 = vmatprep.subr.bf16.mxu0 %v4190
    %4511 = vmatpush1.bf16.msra.mxu0 %v4189
    %4512 = vmatprep.subr.bf16.mxu0 %v4186
    %4513 = vmatpush1.bf16.msra.mxu0 %v4185
    %4514 = vmatprep.subr.bf16.mxu0 %v4182
    %4515 = vmatpush1.bf16.msra.mxu0 %v4181
    %4516 = vmatprep.subr.bf16.mxu0 %v4178
    %4517 = vmatpush1.bf16.msra.mxu0 %v4177
    %4518 = vmatprep.subr.bf16.mxu0 %v4174
    %4519 = vmatpush1.bf16.msra.mxu0 %v4173
    %4520 = vmatprep.subr.bf16.mxu0 %v4170
    %4521 = vmatpush1.bf16.msra.mxu0 %v4169
    %4522 = vmatprep.subr.bf16.mxu0 0
    %4523 = vmatpush2.bf16.msra.mxu0 0
    %4524 = vmatprep.subr.bf16.mxu0 0
    %4525 = vmatpush2.bf16.msra.mxu0 0
    %4526 = vmatprep.subr.bf16.mxu0 0
    %4527 = vmatpush2.bf16.msra.mxu0 0
    %4528 = vmatprep.subr.bf16.mxu0 0
    %4529 = vmatpush2.bf16.msra.mxu0 0
    %4530 = vmatprep.subr.bf16.mxu0 0
    %4531 = vmatpush2.bf16.msra.mxu0 0
    %4532 = vmatprep.subr.bf16.mxu0 0
    %4533 = vmatpush2.bf16.msra.mxu0 0
    %4534 = vmatprep.subr.bf16.mxu0 0
    %4535 = vmatpush2.bf16.msra.mxu0 0
    %4536 = vmatprep.subr.bf16.mxu0 0
    %4537 = vmatpush2.bf16.msra.mxu0 0
    %4538 = vmatprep.mubr.bf16.mxu0 0
    %4539 = vmatmul.mubr.bf16.gmra.mxu0 %v4464
    %v4540 = vpop.f32.mrf.mxu0
    %v4541 = vadd.f32 0.0, %v4540
    %v4542 = vpop.f32.mrf.mxu0
    %v4543 = vadd.f32 0.0, %v4542
    %v4544 = vpop.f32.mrf.mxu0
    %v4545 = vpop.f32.mrf.mxu0
    %4546 = vdwg.mxu0
    %v4547 = vadd.f32 %v4460, %v4500
    %v4548 = vadd.f32 %v4461, %v4502
    %v4549 = vadd.f32 %v4462, %v4541
    %v4550 = vadd.f32 %v4463, %v4543
    %v4551 = vxor.u32 %v4547, 2147483648
    %v4552 = vmul.f32 %v4551, 1.442695
    %v4553 = vpow.pop %v4552
    %v4554 = vadd.f32 %v4553, 1.0
    %v4555 = vrcp.pop %v4554
    %v4556 = vmul.f32 1.0, %v4555
    %v4557 = vxor.u32 %v4548, 2147483648
    %v4558 = vmul.f32 %v4557, 1.442695
    %v4559 = vpow.pop %v4558
    %v4560 = vadd.f32 %v4559, 1.0
    %v4561 = vrcp.pop %v4560
    %v4562 = vmul.f32 1.0, %v4561
    %v4563 = vtanh.pop %v4549
    %v4564 = vxor.u32 %v4550, 2147483648
    %v4565 = vmul.f32 %v4564, 1.442695
    %v4566 = vpow.pop %v4565
    %v4567 = vadd.f32 %v4566, 1.0
    %v4568 = vrcp.pop %v4567
    %v4569 = vmul.f32 1.0, %v4568
    %v4570 = vmul.f32 %v4562, %v4455
    %v4571 = vmul.f32 %v4556, %v4563
    %v4572 = vadd.f32 %v4570, %v4571
    %v4573 = vtanh.pop %v4572
    %v4574 = vmul.f32 %v4569, %v4573
    %v4575 = vld [vmem:[%s1336] sm:$0xff]
    %v4576 = vld [vmem:[%s1336 + $0x8] sm:$0xff]
    %v4577 = vunpack.c.l.bf16 %v4575
    %v4578 = vunpack.c.h.bf16 %v4575
    %v4579 = vunpack.c.l.bf16 %v4576
    %v4580 = vunpack.c.h.bf16 %v4576
    %v4581 = vpack.c.bf16 %v4574, %v4574
    %4582 = vmatprep.subr.bf16.mxu0 %v4196
    %4583 = vmatpush1.bf16.msra.mxu0 %v4195
    %4584 = vmatprep.subr.bf16.mxu0 %v4192
    %4585 = vmatpush1.bf16.msra.mxu0 %v4191
    %4586 = vmatprep.subr.bf16.mxu0 %v4188
    %4587 = vmatpush1.bf16.msra.mxu0 %v4187
    %4588 = vmatprep.subr.bf16.mxu0 %v4184
    %4589 = vmatpush1.bf16.msra.mxu0 %v4183
    %4590 = vmatprep.subr.bf16.mxu0 %v4180
    %4591 = vmatpush1.bf16.msra.mxu0 %v4179
    %4592 = vmatprep.subr.bf16.mxu0 %v4176
    %4593 = vmatpush1.bf16.msra.mxu0 %v4175
    %4594 = vmatprep.subr.bf16.mxu0 %v4172
    %4595 = vmatpush1.bf16.msra.mxu0 %v4171
    %4596 = vmatprep.subr.bf16.mxu0 %v4168
    %4597 = vmatpush1.bf16.msra.mxu0 %v4167
    %4598 = vmatprep.subr.bf16.mxu0 0
    %4599 = vmatpush2.bf16.msra.mxu0 0
    %4600 = vmatprep.subr.bf16.mxu0 0
    %4601 = vmatpush2.bf16.msra.mxu0 0
    %4602 = vmatprep.subr.bf16.mxu0 0
    %4603 = vmatpush2.bf16.msra.mxu0 0
    %4604 = vmatprep.subr.bf16.mxu0 0
    %4605 = vmatpush2.bf16.msra.mxu0 0
    %4606 = vmatprep.subr.bf16.mxu0 0
    %4607 = vmatpush2.bf16.msra.mxu0 0
    %4608 = vmatprep.subr.bf16.mxu0 0
    %4609 = vmatpush2.bf16.msra.mxu0 0
    %4610 = vmatprep.subr.bf16.mxu0 0
    %4611 = vmatpush2.bf16.msra.mxu0 0
    %4612 = vmatprep.subr.bf16.mxu0 0
    %4613 = vmatpush2.bf16.msra.mxu0 0
    %4614 = vmatprep.mubr.bf16.mxu0 0
    %4615 = vmatmul.mubr.bf16.gmra.mxu0 %v4581
    %v4616 = vpop.f32.mrf.mxu0
    %v4617 = vadd.f32 0.0, %v4616
    %v4618 = vpop.f32.mrf.mxu0
    %v4619 = vadd.f32 0.0, %v4618
    %v4620 = vpop.f32.mrf.mxu0
    %v4621 = vpop.f32.mrf.mxu0
    %4622 = vdwg.mxu0
    %4623 = vmatprep.subr.bf16.mxu0 %v4198
    %4624 = vmatpush1.bf16.msra.mxu0 %v4197
    %4625 = vmatprep.subr.bf16.mxu0 %v4194
    %4626 = vmatpush1.bf16.msra.mxu0 %v4193
    %4627 = vmatprep.subr.bf16.mxu0 %v4190
    %4628 = vmatpush1.bf16.msra.mxu0 %v4189
    %4629 = vmatprep.subr.bf16.mxu0 %v4186
    %4630 = vmatpush1.bf16.msra.mxu0 %v4185
    %4631 = vmatprep.subr.bf16.mxu0 %v4182
    %4632 = vmatpush1.bf16.msra.mxu0 %v4181
    %4633 = vmatprep.subr.bf16.mxu0 %v4178
    %4634 = vmatpush1.bf16.msra.mxu0 %v4177
    %4635 = vmatprep.subr.bf16.mxu0 %v4174
    %4636 = vmatpush1.bf16.msra.mxu0 %v4173
    %4637 = vmatprep.subr.bf16.mxu0 %v4170
    %4638 = vmatpush1.bf16.msra.mxu0 %v4169
    %4639 = vmatprep.subr.bf16.mxu0 0
    %4640 = vmatpush2.bf16.msra.mxu0 0
    %4641 = vmatprep.subr.bf16.mxu0 0
    %4642 = vmatpush2.bf16.msra.mxu0 0
    %4643 = vmatprep.subr.bf16.mxu0 0
    %4644 = vmatpush2.bf16.msra.mxu0 0
    %4645 = vmatprep.subr.bf16.mxu0 0
    %4646 = vmatpush2.bf16.msra.mxu0 0
    %4647 = vmatprep.subr.bf16.mxu0 0
    %4648 = vmatpush2.bf16.msra.mxu0 0
    %4649 = vmatprep.subr.bf16.mxu0 0
    %4650 = vmatpush2.bf16.msra.mxu0 0
    %4651 = vmatprep.subr.bf16.mxu0 0
    %4652 = vmatpush2.bf16.msra.mxu0 0
    %4653 = vmatprep.subr.bf16.mxu0 0
    %4654 = vmatpush2.bf16.msra.mxu0 0
    %4655 = vmatprep.mubr.bf16.mxu0 0
    %4656 = vmatmul.mubr.bf16.gmra.mxu0 %v4581
    %v4657 = vpop.f32.mrf.mxu0
    %v4658 = vadd.f32 0.0, %v4657
    %v4659 = vpop.f32.mrf.mxu0
    %v4660 = vadd.f32 0.0, %v4659
    %v4661 = vpop.f32.mrf.mxu0
    %v4662 = vpop.f32.mrf.mxu0
    %4663 = vdwg.mxu0
    %v4664 = vadd.f32 %v4577, %v4617
    %v4665 = vadd.f32 %v4578, %v4619
    %v4666 = vadd.f32 %v4579, %v4658
    %v4667 = vadd.f32 %v4580, %v4660
    %v4668 = vxor.u32 %v4664, 2147483648
    %v4669 = vmul.f32 %v4668, 1.442695
    %v4670 = vpow.pop %v4669
    %v4671 = vadd.f32 %v4670, 1.0
    %v4672 = vrcp.pop %v4671
    %v4673 = vmul.f32 1.0, %v4672
    %v4674 = vxor.u32 %v4665, 2147483648
    %v4675 = vmul.f32 %v4674, 1.442695
    %v4676 = vpow.pop %v4675
    %v4677 = vadd.f32 %v4676, 1.0
    %v4678 = vrcp.pop %v4677
    %v4679 = vmul.f32 1.0, %v4678
    %v4680 = vtanh.pop %v4666
    %v4681 = vxor.u32 %v4667, 2147483648
    %v4682 = vmul.f32 %v4681, 1.442695
    %v4683 = vpow.pop %v4682
    %v4684 = vadd.f32 %v4683, 1.0
    %v4685 = vrcp.pop %v4684
    %v4686 = vmul.f32 1.0, %v4685
    %v4687 = vmul.f32 %v4679, %v4572
    %v4688 = vmul.f32 %v4673, %v4680
    %v4689 = vadd.f32 %v4687, %v4688
    %v4690 = vtanh.pop %v4689
    %v4691 = vmul.f32 %v4686, %v4690
    %v4692 = vld [vmem:[%s1456] sm:$0xff]
    %v4693 = vld [vmem:[%s1456 + $0x8] sm:$0xff]
    %v4694 = vunpack.c.l.bf16 %v4692
    %v4695 = vunpack.c.h.bf16 %v4692
    %v4696 = vunpack.c.l.bf16 %v4693
    %v4697 = vunpack.c.h.bf16 %v4693
    %v4698 = vpack.c.bf16 %v4691, %v4691
    %4699 = vmatprep.subr.bf16.mxu0 %v4196
    %4700 = vmatpush1.bf16.msra.mxu0 %v4195
    %4701 = vmatprep.subr.bf16.mxu0 %v4192
    %4702 = vmatpush1.bf16.msra.mxu0 %v4191
    %4703 = vmatprep.subr.bf16.mxu0 %v4188
    %4704 = vmatpush1.bf16.msra.mxu0 %v4187
    %4705 = vmatprep.subr.bf16.mxu0 %v4184
    %4706 = vmatpush1.bf16.msra.mxu0 %v4183
    %4707 = vmatprep.subr.bf16.mxu0 %v4180
    %4708 = vmatpush1.bf16.msra.mxu0 %v4179
    %4709 = vmatprep.subr.bf16.mxu0 %v4176
    %4710 = vmatpush1.bf16.msra.mxu0 %v4175
    %4711 = vmatprep.subr.bf16.mxu0 %v4172
    %4712 = vmatpush1.bf16.msra.mxu0 %v4171
    %4713 = vmatprep.subr.bf16.mxu0 %v4168
    %4714 = vmatpush1.bf16.msra.mxu0 %v4167
    %4715 = vmatprep.subr.bf16.mxu0 0
    %4716 = vmatpush2.bf16.msra.mxu0 0
    %4717 = vmatprep.subr.bf16.mxu0 0
    %4718 = vmatpush2.bf16.msra.mxu0 0
    %4719 = vmatprep.subr.bf16.mxu0 0
    %4720 = vmatpush2.bf16.msra.mxu0 0
    %4721 = vmatprep.subr.bf16.mxu0 0
    %4722 = vmatpush2.bf16.msra.mxu0 0
    %4723 = vmatprep.subr.bf16.mxu0 0
    %4724 = vmatpush2.bf16.msra.mxu0 0
    %4725 = vmatprep.subr.bf16.mxu0 0
    %4726 = vmatpush2.bf16.msra.mxu0 0
    %4727 = vmatprep.subr.bf16.mxu0 0
    %4728 = vmatpush2.bf16.msra.mxu0 0
    %4729 = vmatprep.subr.bf16.mxu0 0
    %4730 = vmatpush2.bf16.msra.mxu0 0
    %4731 = vmatprep.mubr.bf16.mxu0 0
    %4732 = vmatmul.mubr.bf16.gmra.mxu0 %v4698
    %v4733 = vpop.f32.mrf.mxu0
    %v4734 = vadd.f32 0.0, %v4733
    %v4735 = vpop.f32.mrf.mxu0
    %v4736 = vadd.f32 0.0, %v4735
    %v4737 = vpop.f32.mrf.mxu0
    %v4738 = vpop.f32.mrf.mxu0
    %4739 = vdwg.mxu0
    %4740 = vmatprep.subr.bf16.mxu0 %v4198
    %4741 = vmatpush1.bf16.msra.mxu0 %v4197
    %4742 = vmatprep.subr.bf16.mxu0 %v4194
    %4743 = vmatpush1.bf16.msra.mxu0 %v4193
    %4744 = vmatprep.subr.bf16.mxu0 %v4190
    %4745 = vmatpush1.bf16.msra.mxu0 %v4189
    %4746 = vmatprep.subr.bf16.mxu0 %v4186
    %4747 = vmatpush1.bf16.msra.mxu0 %v4185
    %4748 = vmatprep.subr.bf16.mxu0 %v4182
    %4749 = vmatpush1.bf16.msra.mxu0 %v4181
    %4750 = vmatprep.subr.bf16.mxu0 %v4178
    %4751 = vmatpush1.bf16.msra.mxu0 %v4177
    %4752 = vmatprep.subr.bf16.mxu0 %v4174
    %4753 = vmatpush1.bf16.msra.mxu0 %v4173
    %4754 = vmatprep.subr.bf16.mxu0 %v4170
    %4755 = vmatpush1.bf16.msra.mxu0 %v4169
    %4756 = vmatprep.subr.bf16.mxu0 0
    %4757 = vmatpush2.bf16.msra.mxu0 0
    %4758 = vmatprep.subr.bf16.mxu0 0
    %4759 = vmatpush2.bf16.msra.mxu0 0
    %4760 = vmatprep.subr.bf16.mxu0 0
    %4761 = vmatpush2.bf16.msra.mxu0 0
    %4762 = vmatprep.subr.bf16.mxu0 0
    %4763 = vmatpush2.bf16.msra.mxu0 0
    %4764 = vmatprep.subr.bf16.mxu0 0
    %4765 = vmatpush2.bf16.msra.mxu0 0
    %4766 = vmatprep.subr.bf16.mxu0 0
    %4767 = vmatpush2.bf16.msra.mxu0 0
    %4768 = vmatprep.subr.bf16.mxu0 0
    %4769 = vmatpush2.bf16.msra.mxu0 0
    %4770 = vmatprep.subr.bf16.mxu0 0
    %4771 = vmatpush2.bf16.msra.mxu0 0
    %4772 = vmatprep.mubr.bf16.mxu0 0
    %4773 = vmatmul.mubr.bf16.gmra.mxu0 %v4698
    %v4774 = vpop.f32.mrf.mxu0
    %v4775 = vadd.f32 0.0, %v4774
    %v4776 = vpop.f32.mrf.mxu0
    %v4777 = vadd.f32 0.0, %v4776
    %v4778 = vpop.f32.mrf.mxu0
    %v4779 = vpop.f32.mrf.mxu0
    %4780 = vdwg.mxu0
    %v4781 = vadd.f32 %v4694, %v4734
    %v4782 = vadd.f32 %v4695, %v4736
    %v4783 = vadd.f32 %v4696, %v4775
    %v4784 = vadd.f32 %v4697, %v4777
    %v4785 = vxor.u32 %v4781, 2147483648
    %v4786 = vmul.f32 %v4785, 1.442695
    %v4787 = vpow.pop %v4786
    %v4788 = vadd.f32 %v4787, 1.0
    %v4789 = vrcp.pop %v4788
    %v4790 = vmul.f32 1.0, %v4789
    %v4791 = vxor.u32 %v4782, 2147483648
    %v4792 = vmul.f32 %v4791, 1.442695
    %v4793 = vpow.pop %v4792
    %v4794 = vadd.f32 %v4793, 1.0
    %v4795 = vrcp.pop %v4794
    %v4796 = vmul.f32 1.0, %v4795
    %v4797 = vtanh.pop %v4783
    %v4798 = vxor.u32 %v4784, 2147483648
    %v4799 = vmul.f32 %v4798, 1.442695
    %v4800 = vpow.pop %v4799
    %v4801 = vadd.f32 %v4800, 1.0
    %v4802 = vrcp.pop %v4801
    %v4803 = vmul.f32 1.0, %v4802
    %v4804 = vmul.f32 %v4796, %v4689
    %v4805 = vmul.f32 %v4790, %v4797
    %v4806 = vadd.f32 %v4804, %v4805
    %v4807 = vtanh.pop %v4806
    %v4808 = vmul.f32 %v4803, %v4807
    %v4809 = vld [vmem:[%s1576] sm:$0xff]
    %v4810 = vld [vmem:[%s1576 + $0x8] sm:$0xff]
    %v4811 = vunpack.c.l.bf16 %v4809
    %v4812 = vunpack.c.h.bf16 %v4809
    %v4813 = vunpack.c.l.bf16 %v4810
    %v4814 = vunpack.c.h.bf16 %v4810
    %v4815 = vpack.c.bf16 %v4808, %v4808
    %4816 = vmatprep.subr.bf16.mxu0 %v4196
    %4817 = vmatpush1.bf16.msra.mxu0 %v4195
    %4818 = vmatprep.subr.bf16.mxu0 %v4192
    %4819 = vmatpush1.bf16.msra.mxu0 %v4191
    %4820 = vmatprep.subr.bf16.mxu0 %v4188
    %4821 = vmatpush1.bf16.msra.mxu0 %v4187
    %4822 = vmatprep.subr.bf16.mxu0 %v4184
    %4823 = vmatpush1.bf16.msra.mxu0 %v4183
    %4824 = vmatprep.subr.bf16.mxu0 %v4180
    %4825 = vmatpush1.bf16.msra.mxu0 %v4179
    %4826 = vmatprep.subr.bf16.mxu0 %v4176
    %4827 = vmatpush1.bf16.msra.mxu0 %v4175
    %4828 = vmatprep.subr.bf16.mxu0 %v4172
    %4829 = vmatpush1.bf16.msra.mxu0 %v4171
    %4830 = vmatprep.subr.bf16.mxu0 %v4168
    %4831 = vmatpush1.bf16.msra.mxu0 %v4167
    %4832 = vmatprep.subr.bf16.mxu0 0
    %4833 = vmatpush2.bf16.msra.mxu0 0
    %4834 = vmatprep.subr.bf16.mxu0 0
    %4835 = vmatpush2.bf16.msra.mxu0 0
    %4836 = vmatprep.subr.bf16.mxu0 0
    %4837 = vmatpush2.bf16.msra.mxu0 0
    %4838 = vmatprep.subr.bf16.mxu0 0
    %4839 = vmatpush2.bf16.msra.mxu0 0
    %4840 = vmatprep.subr.bf16.mxu0 0
    %4841 = vmatpush2.bf16.msra.mxu0 0
    %4842 = vmatprep.subr.bf16.mxu0 0
    %4843 = vmatpush2.bf16.msra.mxu0 0
    %4844 = vmatprep.subr.bf16.mxu0 0
    %4845 = vmatpush2.bf16.msra.mxu0 0
    %4846 = vmatprep.subr.bf16.mxu0 0
    %4847 = vmatpush2.bf16.msra.mxu0 0
    %4848 = vmatprep.mubr.bf16.mxu0 0
    %4849 = vmatmul.mubr.bf16.gmra.mxu0 %v4815
    %v4850 = vpop.f32.mrf.mxu0
    %v4851 = vadd.f32 0.0, %v4850
    %v4852 = vpop.f32.mrf.mxu0
    %v4853 = vadd.f32 0.0, %v4852
    %v4854 = vpop.f32.mrf.mxu0
    %v4855 = vpop.f32.mrf.mxu0
    %4856 = vdwg.mxu0
    %4857 = vmatprep.subr.bf16.mxu0 %v4198
    %4858 = vmatpush1.bf16.msra.mxu0 %v4197
    %4859 = vmatprep.subr.bf16.mxu0 %v4194
    %4860 = vmatpush1.bf16.msra.mxu0 %v4193
    %4861 = vmatprep.subr.bf16.mxu0 %v4190
    %4862 = vmatpush1.bf16.msra.mxu0 %v4189
    %4863 = vmatprep.subr.bf16.mxu0 %v4186
    %4864 = vmatpush1.bf16.msra.mxu0 %v4185
    %4865 = vmatprep.subr.bf16.mxu0 %v4182
    %4866 = vmatpush1.bf16.msra.mxu0 %v4181
    %4867 = vmatprep.subr.bf16.mxu0 %v4178
    %4868 = vmatpush1.bf16.msra.mxu0 %v4177
    %4869 = vmatprep.subr.bf16.mxu0 %v4174
    %4870 = vmatpush1.bf16.msra.mxu0 %v4173
    %4871 = vmatprep.subr.bf16.mxu0 %v4170
    %4872 = vmatpush1.bf16.msra.mxu0 %v4169
    %4873 = vmatprep.subr.bf16.mxu0 0
    %4874 = vmatpush2.bf16.msra.mxu0 0
    %4875 = vmatprep.subr.bf16.mxu0 0
    %4876 = vmatpush2.bf16.msra.mxu0 0
    %4877 = vmatprep.subr.bf16.mxu0 0
    %4878 = vmatpush2.bf16.msra.mxu0 0
    %4879 = vmatprep.subr.bf16.mxu0 0
    %4880 = vmatpush2.bf16.msra.mxu0 0
    %4881 = vmatprep.subr.bf16.mxu0 0
    %4882 = vmatpush2.bf16.msra.mxu0 0
    %4883 = vmatprep.subr.bf16.mxu0 0
    %4884 = vmatpush2.bf16.msra.mxu0 0
    %4885 = vmatprep.subr.bf16.mxu0 0
    %4886 = vmatpush2.bf16.msra.mxu0 0
    %4887 = vmatprep.subr.bf16.mxu0 0
    %4888 = vmatpush2.bf16.msra.mxu0 0
    %4889 = vmatprep.mubr.bf16.mxu0 0
    %4890 = vmatmul.mubr.bf16.gmra.mxu0 %v4815
    %v4891 = vpop.f32.mrf.mxu0
    %v4892 = vadd.f32 0.0, %v4891
    %v4893 = vpop.f32.mrf.mxu0
    %v4894 = vadd.f32 0.0, %v4893
    %v4895 = vpop.f32.mrf.mxu0
    %v4896 = vpop.f32.mrf.mxu0
    %4897 = vdwg.mxu0
    %v4898 = vadd.f32 %v4811, %v4851
    %v4899 = vadd.f32 %v4812, %v4853
    %v4900 = vadd.f32 %v4813, %v4892
    %v4901 = vadd.f32 %v4814, %v4894
    %v4902 = vxor.u32 %v4898, 2147483648
    %v4903 = vmul.f32 %v4902, 1.442695
    %v4904 = vpow.pop %v4903
    %v4905 = vadd.f32 %v4904, 1.0
    %v4906 = vrcp.pop %v4905
    %v4907 = vmul.f32 1.0, %v4906
    %v4908 = vxor.u32 %v4899, 2147483648
    %v4909 = vmul.f32 %v4908, 1.442695
    %v4910 = vpow.pop %v4909
    %v4911 = vadd.f32 %v4910, 1.0
    %v4912 = vrcp.pop %v4911
    %v4913 = vmul.f32 1.0, %v4912
    %v4914 = vtanh.pop %v4900
    %v4915 = vxor.u32 %v4901, 2147483648
    %v4916 = vmul.f32 %v4915, 1.442695
    %v4917 = vpow.pop %v4916
    %v4918 = vadd.f32 %v4917, 1.0
    %v4919 = vrcp.pop %v4918
    %v4920 = vmul.f32 1.0, %v4919
    %v4921 = vmul.f32 %v4913, %v4806
    %v4922 = vmul.f32 %v4907, %v4914
    %v4923 = vadd.f32 %v4921, %v4922
    %v4924 = vtanh.pop %v4923
    %v4925 = vmul.f32 %v4920, %v4924
    %v4926 = vld [vmem:[%s1696] sm:$0xff]
    %v4927 = vld [vmem:[%s1696 + $0x8] sm:$0xff]
    %v4928 = vunpack.c.l.bf16 %v4926
    %v4929 = vunpack.c.h.bf16 %v4926
    %v4930 = vunpack.c.l.bf16 %v4927
    %v4931 = vunpack.c.h.bf16 %v4927
    %v4932 = vpack.c.bf16 %v4925, %v4925
    %4933 = vmatprep.subr.bf16.mxu0 %v4196
    %4934 = vmatpush1.bf16.msra.mxu0 %v4195
    %4935 = vmatprep.subr.bf16.mxu0 %v4192
    %4936 = vmatpush1.bf16.msra.mxu0 %v4191
    %4937 = vmatprep.subr.bf16.mxu0 %v4188
    %4938 = vmatpush1.bf16.msra.mxu0 %v4187
    %4939 = vmatprep.subr.bf16.mxu0 %v4184
    %4940 = vmatpush1.bf16.msra.mxu0 %v4183
    %4941 = vmatprep.subr.bf16.mxu0 %v4180
    %4942 = vmatpush1.bf16.msra.mxu0 %v4179
    %4943 = vmatprep.subr.bf16.mxu0 %v4176
    %4944 = vmatpush1.bf16.msra.mxu0 %v4175
    %4945 = vmatprep.subr.bf16.mxu0 %v4172
    %4946 = vmatpush1.bf16.msra.mxu0 %v4171
    %4947 = vmatprep.subr.bf16.mxu0 %v4168
    %4948 = vmatpush1.bf16.msra.mxu0 %v4167
    %4949 = vmatprep.subr.bf16.mxu0 0
    %4950 = vmatpush2.bf16.msra.mxu0 0
    %4951 = vmatprep.subr.bf16.mxu0 0
    %4952 = vmatpush2.bf16.msra.mxu0 0
    %4953 = vmatprep.subr.bf16.mxu0 0
    %4954 = vmatpush2.bf16.msra.mxu0 0
    %4955 = vmatprep.subr.bf16.mxu0 0
    %4956 = vmatpush2.bf16.msra.mxu0 0
    %4957 = vmatprep.subr.bf16.mxu0 0
    %4958 = vmatpush2.bf16.msra.mxu0 0
    %4959 = vmatprep.subr.bf16.mxu0 0
    %4960 = vmatpush2.bf16.msra.mxu0 0
    %4961 = vmatprep.subr.bf16.mxu0 0
    %4962 = vmatpush2.bf16.msra.mxu0 0
    %4963 = vmatprep.subr.bf16.mxu0 0
    %4964 = vmatpush2.bf16.msra.mxu0 0
    %4965 = vmatprep.mubr.bf16.mxu0 0
    %4966 = vmatmul.mubr.bf16.gmra.mxu0 %v4932
    %v4967 = vpop.f32.mrf.mxu0
    %v4968 = vadd.f32 0.0, %v4967
    %v4969 = vpop.f32.mrf.mxu0
    %v4970 = vadd.f32 0.0, %v4969
    %v4971 = vpop.f32.mrf.mxu0
    %v4972 = vpop.f32.mrf.mxu0
    %4973 = vdwg.mxu0
    %4974 = vmatprep.subr.bf16.mxu0 %v4198
    %4975 = vmatpush1.bf16.msra.mxu0 %v4197
    %4976 = vmatprep.subr.bf16.mxu0 %v4194
    %4977 = vmatpush1.bf16.msra.mxu0 %v4193
    %4978 = vmatprep.subr.bf16.mxu0 %v4190
    %4979 = vmatpush1.bf16.msra.mxu0 %v4189
    %4980 = vmatprep.subr.bf16.mxu0 %v4186
    %4981 = vmatpush1.bf16.msra.mxu0 %v4185
    %4982 = vmatprep.subr.bf16.mxu0 %v4182
    %4983 = vmatpush1.bf16.msra.mxu0 %v4181
    %4984 = vmatprep.subr.bf16.mxu0 %v4178
    %4985 = vmatpush1.bf16.msra.mxu0 %v4177
    %4986 = vmatprep.subr.bf16.mxu0 %v4174
    %4987 = vmatpush1.bf16.msra.mxu0 %v4173
    %4988 = vmatprep.subr.bf16.mxu0 %v4170
    %4989 = vmatpush1.bf16.msra.mxu0 %v4169
    %4990 = vmatprep.subr.bf16.mxu0 0
    %4991 = vmatpush2.bf16.msra.mxu0 0
    %4992 = vmatprep.subr.bf16.mxu0 0
    %4993 = vmatpush2.bf16.msra.mxu0 0
    %4994 = vmatprep.subr.bf16.mxu0 0
    %4995 = vmatpush2.bf16.msra.mxu0 0
    %4996 = vmatprep.subr.bf16.mxu0 0
    %4997 = vmatpush2.bf16.msra.mxu0 0
    %4998 = vmatprep.subr.bf16.mxu0 0
    %4999 = vmatpush2.bf16.msra.mxu0 0
    %5000 = vmatprep.subr.bf16.mxu0 0
    %5001 = vmatpush2.bf16.msra.mxu0 0
    %5002 = vmatprep.subr.bf16.mxu0 0
    %5003 = vmatpush2.bf16.msra.mxu0 0
    %5004 = vmatprep.subr.bf16.mxu0 0
    %5005 = vmatpush2.bf16.msra.mxu0 0
    %5006 = vmatprep.mubr.bf16.mxu0 0
    %5007 = vmatmul.mubr.bf16.gmra.mxu0 %v4932
    %v5008 = vpop.f32.mrf.mxu0
    %v5009 = vadd.f32 0.0, %v5008
    %v5010 = vpop.f32.mrf.mxu0
    %v5011 = vadd.f32 0.0, %v5010
    %v5012 = vpop.f32.mrf.mxu0
    %v5013 = vpop.f32.mrf.mxu0
    %5014 = vdwg.mxu0
    %v5015 = vadd.f32 %v4928, %v4968
    %v5016 = vadd.f32 %v4929, %v4970
    %v5017 = vadd.f32 %v4930, %v5009
    %v5018 = vadd.f32 %v4931, %v5011
    %v5019 = vxor.u32 %v5015, 2147483648
    %v5020 = vmul.f32 %v5019, 1.442695
    %v5021 = vpow.pop %v5020
    %v5022 = vadd.f32 %v5021, 1.0
    %v5023 = vrcp.pop %v5022
    %v5024 = vmul.f32 1.0, %v5023
    %v5025 = vxor.u32 %v5016, 2147483648
    %v5026 = vmul.f32 %v5025, 1.442695
    %v5027 = vpow.pop %v5026
    %v5028 = vadd.f32 %v5027, 1.0
    %v5029 = vrcp.pop %v5028
    %v5030 = vmul.f32 1.0, %v5029
    %v5031 = vtanh.pop %v5017
    %v5032 = vxor.u32 %v5018, 2147483648
    %v5033 = vmul.f32 %v5032, 1.442695
    %v5034 = vpow.pop %v5033
    %v5035 = vadd.f32 %v5034, 1.0
    %v5036 = vrcp.pop %v5035
    %v5037 = vmul.f32 1.0, %v5036
    %v5038 = vmul.f32 %v5030, %v4923
    %v5039 = vmul.f32 %v5024, %v5031
    %v5040 = vadd.f32 %v5038, %v5039
    %v5041 = vtanh.pop %v5040
    %v5042 = vmul.f32 %v5037, %v5041
    %v5043 = vpack.c.bf16 %v5042, %v5042
    %v5044 = vld [vmem:[%s12] sm:$0xf]
    %v5045 = vld [vmem:[%s12 + $0x4] sm:$0xf]
    %v5046 = vld [vmem:[%s12 + $0x8] sm:$0xf]
    %v5047 = vld [vmem:[%s12 + $0xc] sm:$0xf]
    %v5048 = vld [vmem:[%s12 + $0x10] sm:$0xf]
    %v5049 = vld [vmem:[%s12 + $0x14] sm:$0xf]
    %v5050 = vld [vmem:[%s12 + $0x18] sm:$0xf]
    %v5051 = vld [vmem:[%s12 + $0x1c] sm:$0xf]
    %v5052 = vld [vmem:[%s12 + $0x20] sm:$0xf]
    %v5053 = vld [vmem:[%s12 + $0x24] sm:$0xf]
    %v5054 = vld [vmem:[%s12 + $0x28] sm:$0xf]
    %v5055 = vld [vmem:[%s12 + $0x2c] sm:$0xf]
    %v5056 = vld [vmem:[%s12 + $0x30] sm:$0xf]
    %v5057 = vld [vmem:[%s12 + $0x34] sm:$0xf]
    %v5058 = vld [vmem:[%s12 + $0x38] sm:$0xf]
    %v5059 = vld [vmem:[%s12 + $0x3c] sm:$0xf]
    %v5060 = vld [vmem:[%s13] sm:$0x1]
    %v5062 = vlaneseq
    %v5063 = vshrl.u32 %v5062, 7
    %v5064 = vsub.s32 0, %v5063
    %v5065 = vrot.slane %v5060, %v5064
    %v5083 = vunpack.c.l.b16 %v5044
    %v5084 = vunpack.c.l.b16 %v5045
    %v5085 = vunpack.c.l.b16 %v5046
    %v5086 = vunpack.c.l.b16 %v5047
    %v5087 = vunpack.c.l.b16 %v5048
    %v5088 = vunpack.c.l.b16 %v5049
    %v5089 = vunpack.c.l.b16 %v5050
    %v5090 = vunpack.c.l.b16 %v5051
    %v5091 = vunpack.c.l.b16 %v5052
    %v5092 = vunpack.c.l.b16 %v5053
    %v5093 = vunpack.c.l.b16 %v5054
    %v5094 = vunpack.c.l.b16 %v5055
    %v5095 = vunpack.c.l.b16 %v5056
    %v5096 = vunpack.c.l.b16 %v5057
    %v5097 = vunpack.c.l.b16 %v5058
    %v5098 = vunpack.c.l.b16 %v5059
    %v5099 = vpack.c.b16 %v5084, %v5083
    %v5100 = vpack.c.b16 %v5086, %v5085
    %v5101 = vpack.c.b16 %v5088, %v5087
    %v5102 = vpack.c.b16 %v5090, %v5089
    %v5103 = vpack.c.b16 %v5092, %v5091
    %v5104 = vpack.c.b16 %v5094, %v5093
    %v5105 = vpack.c.b16 %v5096, %v5095
    %v5106 = vpack.c.b16 %v5098, %v5097
    %5115 = vmatprep.subr.bf16.mxu0 0
    %5116 = vmatpush1.bf16.msra.mxu0 %v5106
    %5117 = vmatprep.subr.bf16.mxu0 0
    %5118 = vmatpush1.bf16.msra.mxu0 %v5105
    %5119 = vmatprep.subr.bf16.mxu0 0
    %5120 = vmatpush1.bf16.msra.mxu0 %v5104
    %5121 = vmatprep.subr.bf16.mxu0 0
    %5122 = vmatpush1.bf16.msra.mxu0 %v5103
    %5123 = vmatprep.subr.bf16.mxu0 0
    %5124 = vmatpush1.bf16.msra.mxu0 %v5102
    %5125 = vmatprep.subr.bf16.mxu0 0
    %5126 = vmatpush1.bf16.msra.mxu0 %v5101
    %5127 = vmatprep.subr.bf16.mxu0 0
    %5128 = vmatpush1.bf16.msra.mxu0 %v5100
    %5129 = vmatprep.subr.bf16.mxu0 0
    %5130 = vmatpush1.bf16.msra.mxu0 %v5099
    %5131 = vmatprep.subr.bf16.mxu0 0
    %5132 = vmatpush2.bf16.msra.mxu0 0
    %5133 = vmatprep.subr.bf16.mxu0 0
    %5134 = vmatpush2.bf16.msra.mxu0 0
    %5135 = vmatprep.subr.bf16.mxu0 0
    %5136 = vmatpush2.bf16.msra.mxu0 0
    %5137 = vmatprep.subr.bf16.mxu0 0
    %5138 = vmatpush2.bf16.msra.mxu0 0
    %5139 = vmatprep.subr.bf16.mxu0 0
    %5140 = vmatpush2.bf16.msra.mxu0 0
    %5141 = vmatprep.subr.bf16.mxu0 0
    %5142 = vmatpush2.bf16.msra.mxu0 0
    %5143 = vmatprep.subr.bf16.mxu0 0
    %5144 = vmatpush2.bf16.msra.mxu0 0
    %5145 = vmatprep.subr.bf16.mxu0 0
    %5146 = vmatpush2.bf16.msra.mxu0 0
    %5147 = vmatprep.mubr.bf16.mxu0 0
    %5148 = vmatmul.mubr.bf16.gmra.mxu0 %v5043
    %v5149 = vpop.f32.mrf.mxu0
    %v5150 = vadd.f32 %v5065, %v5149
    %v5151 = vpop.f32.mrf.mxu0
    %v5152 = vpop.f32.mrf.mxu0
    %v5153 = vpop.f32.mrf.mxu0
    %5154 = vdwg.mxu0
    %vm5155 = vcmp.ge.f32.partialorder %v5150, 0.0
    %v5156 = vmul.f32 %v5150, 0.2
    %v5157 = vsel %vm5155, %v5150, %v5156
    %v5158 = vpack.c.bf16 %v5157, %v5157
    %v5159 = vld [vmem:[%s14] sm:$0xf]
    %v5160 = vld [vmem:[%s14 + $0x4] sm:$0xf]
    %v5161 = vld [vmem:[%s14 + $0x8] sm:$0xf]
    %v5162 = vld [vmem:[%s14 + $0xc] sm:$0xf]
    %v5163 = vld [vmem:[%s14 + $0x10] sm:$0xf]
    %v5164 = vld [vmem:[%s14 + $0x14] sm:$0xf]
    %v5165 = vld [vmem:[%s14 + $0x18] sm:$0xf]
    %v5166 = vld [vmem:[%s14 + $0x1c] sm:$0xf]
    %v5167 = vld [vmem:[%s14 + $0x20] sm:$0xf]
    %v5168 = vld [vmem:[%s14 + $0x24] sm:$0xf]
    %v5169 = vld [vmem:[%s14 + $0x28] sm:$0xf]
    %v5170 = vld [vmem:[%s14 + $0x2c] sm:$0xf]
    %v5171 = vld [vmem:[%s14 + $0x30] sm:$0xf]
    %v5172 = vld [vmem:[%s14 + $0x34] sm:$0xf]
    %v5173 = vld [vmem:[%s14 + $0x38] sm:$0xf]
    %v5174 = vld [vmem:[%s14 + $0x3c] sm:$0xf]
    %v5175 = vld [vmem:[#allocation20] sm:$0x1]
    %v5177 = vlaneseq
    %v5178 = vshrl.u32 %v5177, 7
    %v5179 = vsub.s32 0, %v5178
    %v5180 = vrot.slane %v5175, %v5179
    %v5198 = vunpack.c.l.b16 %v5159
    %v5199 = vunpack.c.l.b16 %v5160
    %v5200 = vunpack.c.l.b16 %v5161
    %v5201 = vunpack.c.l.b16 %v5162
    %v5202 = vunpack.c.l.b16 %v5163
    %v5203 = vunpack.c.l.b16 %v5164
    %v5204 = vunpack.c.l.b16 %v5165
    %v5205 = vunpack.c.l.b16 %v5166
    %v5206 = vunpack.c.l.b16 %v5167
    %v5207 = vunpack.c.l.b16 %v5168
    %v5208 = vunpack.c.l.b16 %v5169
    %v5209 = vunpack.c.l.b16 %v5170
    %v5210 = vunpack.c.l.b16 %v5171
    %v5211 = vunpack.c.l.b16 %v5172
    %v5212 = vunpack.c.l.b16 %v5173
    %v5213 = vunpack.c.l.b16 %v5174
    %v5214 = vpack.c.b16 %v5199, %v5198
    %v5215 = vpack.c.b16 %v5201, %v5200
    %v5216 = vpack.c.b16 %v5203, %v5202
    %v5217 = vpack.c.b16 %v5205, %v5204
    %v5218 = vpack.c.b16 %v5207, %v5206
    %v5219 = vpack.c.b16 %v5209, %v5208
    %v5220 = vpack.c.b16 %v5211, %v5210
    %v5221 = vpack.c.b16 %v5213, %v5212
    %5230 = vmatprep.subr.bf16.mxu0 0
    %5231 = vmatpush1.bf16.msra.mxu0 %v5221
    %5232 = vmatprep.subr.bf16.mxu0 0
    %5233 = vmatpush1.bf16.msra.mxu0 %v5220
    %5234 = vmatprep.subr.bf16.mxu0 0
    %5235 = vmatpush1.bf16.msra.mxu0 %v5219
    %5236 = vmatprep.subr.bf16.mxu0 0
    %5237 = vmatpush1.bf16.msra.mxu0 %v5218
    %5238 = vmatprep.subr.bf16.mxu0 0
    %5239 = vmatpush1.bf16.msra.mxu0 %v5217
    %5240 = vmatprep.subr.bf16.mxu0 0
    %5241 = vmatpush1.bf16.msra.mxu0 %v5216
    %5242 = vmatprep.subr.bf16.mxu0 0
    %5243 = vmatpush1.bf16.msra.mxu0 %v5215
    %5244 = vmatprep.subr.bf16.mxu0 0
    %5245 = vmatpush1.bf16.msra.mxu0 %v5214
    %5246 = vmatprep.subr.bf16.mxu0 0
    %5247 = vmatpush2.bf16.msra.mxu0 0
    %5248 = vmatprep.subr.bf16.mxu0 0
    %5249 = vmatpush2.bf16.msra.mxu0 0
    %5250 = vmatprep.subr.bf16.mxu0 0
    %5251 = vmatpush2.bf16.msra.mxu0 0
    %5252 = vmatprep.subr.bf16.mxu0 0
    %5253 = vmatpush2.bf16.msra.mxu0 0
    %5254 = vmatprep.subr.bf16.mxu0 0
    %5255 = vmatpush2.bf16.msra.mxu0 0
    %5256 = vmatprep.subr.bf16.mxu0 0
    %5257 = vmatpush2.bf16.msra.mxu0 0
    %5258 = vmatprep.subr.bf16.mxu0 0
    %5259 = vmatpush2.bf16.msra.mxu0 0
    %5260 = vmatprep.subr.bf16.mxu0 0
    %5261 = vmatpush2.bf16.msra.mxu0 0
    %5262 = vmatprep.mubr.bf16.mxu0 0
    %5263 = vmatmul.mubr.bf16.gmra.mxu0 %v5158
    %v5264 = vpop.f32.mrf.mxu0
    %v5265 = vadd.f32 %v5180, %v5264
    %v5266 = vpop.f32.mrf.mxu0
    %v5267 = vpop.f32.mrf.mxu0
    %v5268 = vpop.f32.mrf.mxu0
    %5269 = vdwg.mxu0
    %vm5270 = vcmp.ge.f32.partialorder %v5265, 0.0
    %v5271 = vmul.f32 %v5265, 0.2
    %v5272 = vsel %vm5270, %v5265, %v5271
    %v5273 = vpack.c.bf16 %v5272, %v5272
    %v5274 = vld [vmem:[#allocation21] sm:$0xf]
    %v5275 = vld [vmem:[#allocation21 + $0x4] sm:$0xf]
    %v5276 = vld [vmem:[#allocation21 + $0x8] sm:$0xf]
    %v5277 = vld [vmem:[#allocation21 + $0xc] sm:$0xf]
    %v5278 = vld [vmem:[#allocation21 + $0x10] sm:$0xf]
    %v5279 = vld [vmem:[#allocation21 + $0x14] sm:$0xf]
    %v5280 = vld [vmem:[#allocation21 + $0x18] sm:$0xf]
    %v5281 = vld [vmem:[#allocation21 + $0x1c] sm:$0xf]
    %v5282 = vld [vmem:[#allocation21 + $0x20] sm:$0xf]
    %v5283 = vld [vmem:[#allocation21 + $0x24] sm:$0xf]
    %v5284 = vld [vmem:[#allocation21 + $0x28] sm:$0xf]
    %v5285 = vld [vmem:[#allocation21 + $0x2c] sm:$0xf]
    %v5286 = vld [vmem:[#allocation21 + $0x30] sm:$0xf]
    %v5287 = vld [vmem:[#allocation21 + $0x34] sm:$0xf]
    %v5288 = vld [vmem:[#allocation21 + $0x38] sm:$0xf]
    %v5289 = vld [vmem:[#allocation21 + $0x3c] sm:$0xf]
    %v5290 = vld [vmem:[#allocation23] sm:$0x1]
    %v5292 = vlaneseq
    %v5293 = vshrl.u32 %v5292, 7
    %v5294 = vsub.s32 0, %v5293
    %v5295 = vrot.slane %v5290, %v5294
    %v5313 = vunpack.c.l.b16 %v5274
    %v5314 = vunpack.c.l.b16 %v5275
    %v5315 = vunpack.c.l.b16 %v5276
    %v5316 = vunpack.c.l.b16 %v5277
    %v5317 = vunpack.c.l.b16 %v5278
    %v5318 = vunpack.c.l.b16 %v5279
    %v5319 = vunpack.c.l.b16 %v5280
    %v5320 = vunpack.c.l.b16 %v5281
    %v5321 = vunpack.c.l.b16 %v5282
    %v5322 = vunpack.c.l.b16 %v5283
    %v5323 = vunpack.c.l.b16 %v5284
    %v5324 = vunpack.c.l.b16 %v5285
    %v5325 = vunpack.c.l.b16 %v5286
    %v5326 = vunpack.c.l.b16 %v5287
    %v5327 = vunpack.c.l.b16 %v5288
    %v5328 = vunpack.c.l.b16 %v5289
    %v5329 = vpack.c.b16 %v5314, %v5313
    %v5330 = vpack.c.b16 %v5316, %v5315
    %v5331 = vpack.c.b16 %v5318, %v5317
    %v5332 = vpack.c.b16 %v5320, %v5319
    %v5333 = vpack.c.b16 %v5322, %v5321
    %v5334 = vpack.c.b16 %v5324, %v5323
    %v5335 = vpack.c.b16 %v5326, %v5325
    %v5336 = vpack.c.b16 %v5328, %v5327
    %5345 = vmatprep.subr.bf16.mxu0 0
    %5346 = vmatpush1.bf16.msra.mxu0 %v5336
    %5347 = vmatprep.subr.bf16.mxu0 0
    %5348 = vmatpush1.bf16.msra.mxu0 %v5335
    %5349 = vmatprep.subr.bf16.mxu0 0
    %5350 = vmatpush1.bf16.msra.mxu0 %v5334
    %5351 = vmatprep.subr.bf16.mxu0 0
    %5352 = vmatpush1.bf16.msra.mxu0 %v5333
    %5353 = vmatprep.subr.bf16.mxu0 0
    %5354 = vmatpush1.bf16.msra.mxu0 %v5332
    %5355 = vmatprep.subr.bf16.mxu0 0
    %5356 = vmatpush1.bf16.msra.mxu0 %v5331
    %5357 = vmatprep.subr.bf16.mxu0 0
    %5358 = vmatpush1.bf16.msra.mxu0 %v5330
    %5359 = vmatprep.subr.bf16.mxu0 0
    %5360 = vmatpush1.bf16.msra.mxu0 %v5329
    %5361 = vmatprep.subr.bf16.mxu0 0
    %5362 = vmatpush2.bf16.msra.mxu0 0
    %5363 = vmatprep.subr.bf16.mxu0 0
    %5364 = vmatpush2.bf16.msra.mxu0 0
    %5365 = vmatprep.subr.bf16.mxu0 0
    %5366 = vmatpush2.bf16.msra.mxu0 0
    %5367 = vmatprep.subr.bf16.mxu0 0
    %5368 = vmatpush2.bf16.msra.mxu0 0
    %5369 = vmatprep.subr.bf16.mxu0 0
    %5370 = vmatpush2.bf16.msra.mxu0 0
    %5371 = vmatprep.subr.bf16.mxu0 0
    %5372 = vmatpush2.bf16.msra.mxu0 0
    %5373 = vmatprep.subr.bf16.mxu0 0
    %5374 = vmatpush2.bf16.msra.mxu0 0
    %5375 = vmatprep.subr.bf16.mxu0 0
    %5376 = vmatpush2.bf16.msra.mxu0 0
    %5377 = vmatprep.mubr.bf16.mxu0 0
    %5378 = vmatmul.mubr.bf16.gmra.mxu0 %v5273
    %v5379 = vpop.f32.mrf.mxu0
    %v5380 = vadd.f32 %v5295, %v5379
    %v5381 = vpop.f32.mrf.mxu0
    %v5382 = vpop.f32.mrf.mxu0
    %v5383 = vpop.f32.mrf.mxu0
    %5384 = vdwg.mxu0
    %5385 = vst [vmem:[%s18] sm:$0xff] %v5380
    // Predicated region
    $region126: #{discriminator_forward.1} parent=1 // pred_check
      _
    $region127: #{discriminator_forward.1} parent=1 // pred_check_branch
      %5387 = sbr.rel (0) target = $region129
    $region128: #{discriminator_forward.1} parent=1 // pred_region
      _
    $region129: #{discriminator_forward.1} parent=1 // pred_fallthru
      _
    // Predicated region
    $region130: #{discriminator_forward.1} parent=1 // pred_check
      _
    $region131: #{discriminator_forward.1} parent=1 // pred_check_branch
      %5389 = sbr.rel (0) target = $region133
    $region132: #{discriminator_forward.1} parent=1 // pred_region
      _
    $region133: #{discriminator_forward.1} parent=1 // pred_fallthru
      _
    %5390 = vsyncpa [#allocation5], 1
    %5391 = vsyncpa [#allocation7], 1
    %5392 = vsyncpa [#allocation10], 1
    %5393 = vsyncpa [#allocation13], 1
    %5394 = vsyncpa [#allocation16], 1
    %5395 = vsyncpa [#allocation19], 1
    %5396 = vsyncpa [#allocation22], 1

</llo_original>
